<compile_context>
chip_gen: v5e
topology: v5e:2x2
jax: 0.10.0
libtpu: 0.0.40
codegen_flags: <defaults>
</compile_context>

<pallas_src>
import functools

import jax
import jax.numpy as jnp
from jax.experimental import pallas as pl
from jax.experimental.pallas import tpu as pltpu

_TAPS = tuple((dh, dw) for dh in range(3) for dw in range(3))


# ---------------------------------------------------------------------------
# Fused whole-network kernel (one grid step == one batch tile)
# ---------------------------------------------------------------------------

def _fused_kernel(xcol_ref,
                  l1w1, l1b1, l1w2, l1b2,
                  l2w1, l2b1, l2w2, l2b2,
                  l3w1, l3b1, l3w2, l3b2,
                  l4w1, l4b1, l4w2, l4b2,
                  l5w1, l5b1, l5w2, l5b2,
                  f1w, f1b, f2w, f2b,
                  o_ref,
                  y1h1, xh2, y1h2, xh3, y1h3, xh4, y1h4):
    B = xcol_ref.shape[0]

    def gemm(lhs_bf16, w_ref, b_ref):
        # bf16 x bf16 -> f32 accumulate on the MXU, f32 bias add.
        return jnp.dot(lhs_bf16, w_ref[...],
                       preferred_element_type=jnp.float32) + b_ref[...]

    def im2col(src_ref, H, W):
        # 9 shifted slices of the zero-haloed activation, concatenated along K.
        Bc, _, _, C = src_ref.shape
        M = Bc * H * W
        cols = [src_ref[:, dh:dh + H, dw:dw + W, :].reshape(M, C)
                for dh, dw in _TAPS]
        return jnp.concatenate(cols, axis=1).astype(jnp.bfloat16)   # (M, 9*C)

    def halo_store(dst_ref, val):
        # Halo ring stays zero; interior written with one dense store.
        H, W = val.shape[1], val.shape[2]
        dst_ref[...] = jnp.zeros_like(dst_ref)
        dst_ref[:, 1:H + 1, 1:W + 1, :] = val.astype(dst_ref.dtype)

    def maxpool2x2(y_flat, H, W, C):
        # y_flat: (B*H*W, C) f32, rows ordered (b, h, w)  ->  (B, H/2, W/2, C)
        Ho, Wo = H // 2, W // 2
        yw = jnp.max(y_flat.reshape(B * H * Wo, 2, C), axis=1)   # pool over w
        return jnp.max(yw.reshape(B, Ho, 2, Wo, C), axis=2)      # pool over h

    # ---- layer1 + pool1 : 16x16x3 -> 8x8x32 --------------------------------
    M1 = B * 256
    x1 = xcol_ref[...].reshape(M1, 27)                # bf16, pre-im2col'ed K=27
    a = jnp.maximum(gemm(x1, l1w1, l1b1), 0.0)        # conv1 + BN + ReLU
    halo_store(y1h1, a.reshape(B, 16, 16, 32))
    lhs = jnp.concatenate([im2col(y1h1, 16, 16), x1[:, 12:15]], axis=1)
    y = jnp.maximum(gemm(lhs, l1w2, l1b2), 0.0)       # conv2+BN + 1x1 skip + ReLU
    p1 = maxpool2x2(y, 16, 16, 32)
    halo_store(xh2, p1)

    # ---- layer2 + pool2 : 8x8x32 -> 4x4x64 ----------------------------------
    M2 = B * 64
    a = jnp.maximum(gemm(im2col(xh2, 8, 8), l2w1, l2b1), 0.0)
    halo_store(y1h2, a.reshape(B, 8, 8, 64))
    xc = xh2[:, 1:9, 1:9, :].reshape(M2, 32).astype(jnp.bfloat16)
    lhs = jnp.concatenate([im2col(y1h2, 8, 8), xc], axis=1)
    y = jnp.maximum(gemm(lhs, l2w2, l2b2), 0.0)
    p2 = maxpool2x2(y, 8, 8, 64)
    halo_store(xh3, p2)

    # ---- layer3 + pool3 : 4x4x64 -> 2x2x128 ---------------------------------
    M3 = B * 16
    a = jnp.maximum(gemm(im2col(xh3, 4, 4), l3w1, l3b1), 0.0)
    halo_store(y1h3, a.reshape(B, 4, 4, 128))
    xc = xh3[:, 1:5, 1:5, :].reshape(M3, 64).astype(jnp.bfloat16)
    lhs = jnp.concatenate([im2col(y1h3, 4, 4), xc], axis=1)
    y = jnp.maximum(gemm(lhs, l3w2, l3b2), 0.0)
    p3 = maxpool2x2(y, 4, 4, 128)                      # (B, 2, 2, 128) f32
    halo_store(xh4, p3)

    # ---- layer4 (identity skip) + pool4 : 2x2x128 -> 1x1x128 ----------------
    M4 = B * 4
    a = jnp.maximum(gemm(im2col(xh4, 2, 2), l4w1, l4b1), 0.0)
    halo_store(y1h4, a.reshape(B, 2, 2, 128))
    y = jnp.maximum(gemm(im2col(y1h4, 2, 2), l4w2, l4b2)
                    + p3.reshape(M4, 128), 0.0)        # identity skip in f32
    x5 = jnp.max(y.reshape(B, 4, 128), axis=1)         # pool4: max over 2x2

    # ---- layer5 (1x1 map: only center tap) + GAP + classifier ---------------
    z = jnp.maximum(gemm(x5.astype(jnp.bfloat16), l5w1, l5b1), 0.0)
    z = gemm(z.astype(jnp.bfloat16), l5w2, l5b2)
    y5 = jnp.maximum(z + x5, 0.0)                      # GAP over 1x1 == identity
    h = jnp.maximum(gemm(y5.astype(jnp.bfloat16), f1w, f1b), 0.0)
    logits = gemm(h.astype(jnp.bfloat16), f2w, f2b)    # (B, 128) lane-dense
    o_ref[...] = logits.reshape(B, 1, 128)


# ---------------------------------------------------------------------------
# pallas_call wrapper
# ---------------------------------------------------------------------------

def _pick_batch_tile(n, max_tile=16):
    """Largest batch tile that (a) divides n, (b) keeps per-step VMEM modest
    (<= max_tile images) and (c) leaves >= 2 grid steps whenever n >= 2 so both
    v7x TensorCores get work (few, large steps also suit single-TC v5e/v6e)."""
    best = 1
    for bt in range(1, min(n, max_tile) + 1):
        if n % bt == 0 and (n == 1 or n // bt >= 2):
            best = bt
    return best


def _fused_forward(xcol, params):
    n = xcol.shape[0]
    bt = _pick_batch_tile(n)
    steps = n // bt
    p = params
    weights = (
        p["layer1"]["w1"], p["layer1"]["b1"], p["layer1"]["w2"], p["layer1"]["b2"],
        p["layer2"]["w1"], p["layer2"]["b1"], p["layer2"]["w2"], p["layer2"]["b2"],
        p["layer3"]["w1"], p["layer3"]["b1"], p["layer3"]["w2"], p["layer3"]["b2"],
        p["layer4"]["w1"], p["layer4"]["b1"], p["layer4"]["w2"], p["layer4"]["b2"],
        p["layer5"]["w1"], p["layer5"]["b1"], p["layer5"]["w2"], p["layer5"]["b2"],
        p["fc1_w"], p["fc1_b"], p["fc2_w"], p["fc2_b"])

    def wspec(shape):
        return pl.BlockSpec(shape, lambda i: (0,) * len(shape))

    return pl.pallas_call(
        _fused_kernel,
        out_shape=jax.ShapeDtypeStruct((n, 1, 128), jnp.float32),
        grid=(steps,),
        in_specs=[pl.BlockSpec((bt, 16, 16, 27), lambda i: (i, 0, 0, 0))]
                 + [wspec(w.shape) for w in weights],
        out_specs=pl.BlockSpec((bt, 1, 128), lambda i: (i, 0, 0)),
        scratch_shapes=[
            pltpu.VMEM((bt, 18, 18, 32), jnp.float32),    # layer1 conv2 input
            pltpu.VMEM((bt, 10, 10, 32), jnp.float32),    # layer2 input (haloed)
            pltpu.VMEM((bt, 10, 10, 64), jnp.float32),    # layer2 conv2 input
            pltpu.VMEM((bt, 6, 6, 64), jnp.float32),      # layer3 input (haloed)
            pltpu.VMEM((bt, 6, 6, 128), jnp.float32),     # layer3 conv2 input
            pltpu.VMEM((bt, 4, 4, 128), jnp.float32),     # layer4 input (haloed)
            pltpu.VMEM((bt, 4, 4, 128), jnp.float32),     # layer4 conv2 input
        ],
        compiler_params=pltpu.CompilerParams(
            dimension_semantics=("parallel",)),
    )(xcol, *weights)


# ---------------------------------------------------------------------------
# Model wrapper (only one-time layout glue lives in XLA)
# ---------------------------------------------------------------------------

def mini_resnet(x_nchw, params, *, num_classes):
    n, c, h, w = x_nchw.shape
    assert (c, h, w) == (3, 16, 16), "fused kernel is specialized for 3x16x16"
    assert num_classes <= 128
    x = jnp.transpose(x_nchw, (0, 2, 3, 1)).astype(jnp.bfloat16)   # NHWC bf16
    xp = jnp.pad(x, ((0, 0), (1, 1), (1, 1), (0, 0)))              # one-time halo
    # One-time layer1 im2col in XLA (K = 9 taps x 3 ch = 27, ~14 KB/image).
    xcol = jnp.concatenate(
        [xp[:, dh:dh + 16, dw:dw + 16, :] for dh, dw in _TAPS], axis=-1)
    logits = _fused_forward(xcol, params)                          # (N, 1, 128)
    return logits[:, 0, :num_classes]


# ---------------------------------------------------------------------------
# Deterministic parameter init (BN scale folded, skip conv folded into conv2)
# ---------------------------------------------------------------------------

def _conv3x3_bn_folded(key, cin, cout, eps=1e-5):
    ks = jax.random.split(key, 6)
    w = jax.random.normal(ks[0], (3, 3, cin, cout), jnp.float32) / jnp.sqrt(9.0 * cin)
    cb = 0.05 * jax.random.normal(ks[1], (cout,), jnp.float32)
    gamma = 1.0 + 0.1 * jax.random.normal(ks[2], (cout,), jnp.float32)
    beta = 0.05 * jax.random.normal(ks[3], (cout,), jnp.float32)
    mean = 0.05 * jax.random.normal(ks[4], (cout,), jnp.float32)
    var = 0.5 + jax.nn.softplus(jax.random.normal(ks[5], (cout,), jnp.float32))
    s = gamma / jnp.sqrt(var + eps)
    w_folded = (w * s).reshape(9 * cin, cout).astype(jnp.bfloat16)  # (9*cin, cout)
    b_folded = (beta + (cb - mean) * s).reshape(1, cout)            # f32 bias
    return w_folded, b_folded


def init_block(key, cin, cout):
    """Block with a 1x1 skip conv; the skip is folded into conv2's GEMM as
    `cin` extra contraction rows (the kernel appends the block input's center
    tap to conv2's lhs), its bias folded into conv2's bias."""
    k1, k2, k3, k4 = jax.random.split(key, 4)
    w1, b1 = _conv3x3_bn_folded(k1, cin, cout)
    w2, b2 = _conv3x3_bn_folded(k2, cout, cout)
    ws = (jax.random.normal(k3, (cin, cout), jnp.float32)
          / jnp.sqrt(1.0 * cin)).astype(jnp.bfloat16)
    bs = (0.05 * jax.random.normal(k4, (cout,), jnp.float32)).reshape(1, cout)
    return dict(w1=w1, b1=b1,
                w2=jnp.concatenate([w2, ws], axis=0),    # (9*cout + cin, cout)
                b2=b2 + bs)


def init_identity_block(key, c):
    k1, k2 = jax.random.split(key)
    w1, b1 = _conv3x3_bn_folded(k1, c, c)
    w2, b2 = _conv3x3_bn_folded(k2, c, c)
    return dict(w1=w1, b1=b1, w2=w2, b2=b2)


def init_center_block(key, c):
    # layer5 sees a 1x1 spatial map (pad=1): only the 3x3 center tap touches
    # real data, so keep just those (c, c) rows of the folded weight.
    k1, k2 = jax.random.split(key)
    w1, b1 = _conv3x3_bn_folded(k1, c, c)
    w2, b2 = _conv3x3_bn_folded(k2, c, c)
    return dict(w1=w1[4 * c:5 * c], b1=b1, w2=w2[4 * c:5 * c], b2=b2)


def init_params(key, num_classes):
    ks = jax.random.split(key, 9)
    fc2_w = jax.random.normal(ks[7], (128, num_classes), jnp.float32) / jnp.sqrt(128.0)
    fc2_b = 0.05 * jax.random.normal(ks[8], (num_classes,), jnp.float32)
    fc2_w_pad = jnp.zeros((128, 128), jnp.float32).at[:, :num_classes].set(fc2_w)
    fc2_b_pad = jnp.zeros((128,), jnp.float32).at[:num_classes].set(fc2_b)
    return {
        "layer1": init_block(ks[0], 3, 32),
        "layer2": init_block(ks[1], 32, 64),
        "layer3": init_block(ks[2], 64, 128),
        "layer4": init_identity_block(ks[3], 128),
        "layer5": init_center_block(ks[4], 128),
        "fc1_w": (jax.random.normal(ks[5], (128, 128), jnp.float32)
                  / jnp.sqrt(128.0)).astype(jnp.bfloat16),
        "fc1_b": (0.05 * jax.random.normal(ks[6], (128,), jnp.float32)).reshape(1, 128),
        "fc2_w": fc2_w_pad.astype(jnp.bfloat16),       # lane-dense (padded) head
        "fc2_b": fc2_b_pad.reshape(1, 128),
    }


# ---------------------------------------------------------------------------

if __name__ == "__main__":
    num_classes = 10
    key = jax.random.PRNGKey(0)
    kx, kp = jax.random.split(key)
    x = jax.random.normal(kx, (2, 3, 16, 16), jnp.float32)  # NCHW, like PyTorch
    params = init_params(kp, num_classes)

    fwd = jax.jit(functools.partial(mini_resnet, num_classes=num_classes))
    out = jax.block_until_ready(fwd(x, params))

    assert out.shape == (2, num_classes)
    assert bool(jnp.all(jnp.isfinite(out)))
    print("KERNEL_OK")
</pallas_src>

<mosaic_0001>
module attributes {stable_mosaic.version = 11 : i64} {
  func.func @_fused_kernel(%arg0: i32, %arg1: memref<1x16x16x27xbf16, #tpu.memory_space<vmem>>, %arg2: memref<27x32xbf16, #tpu.memory_space<vmem>>, %arg3: memref<1x32xf32, #tpu.memory_space<vmem>>, %arg4: memref<291x32xbf16, #tpu.memory_space<vmem>>, %arg5: memref<1x32xf32, #tpu.memory_space<vmem>>, %arg6: memref<288x64xbf16, #tpu.memory_space<vmem>>, %arg7: memref<1x64xf32, #tpu.memory_space<vmem>>, %arg8: memref<608x64xbf16, #tpu.memory_space<vmem>>, %arg9: memref<1x64xf32, #tpu.memory_space<vmem>>, %arg10: memref<576x128xbf16, #tpu.memory_space<vmem>>, %arg11: memref<1x128xf32, #tpu.memory_space<vmem>>, %arg12: memref<1216x128xbf16, #tpu.memory_space<vmem>>, %arg13: memref<1x128xf32, #tpu.memory_space<vmem>>, %arg14: memref<1152x128xbf16, #tpu.memory_space<vmem>>, %arg15: memref<1x128xf32, #tpu.memory_space<vmem>>, %arg16: memref<1152x128xbf16, #tpu.memory_space<vmem>>, %arg17: memref<1x128xf32, #tpu.memory_space<vmem>>, %arg18: memref<128x128xbf16, #tpu.memory_space<vmem>>, %arg19: memref<1x128xf32, #tpu.memory_space<vmem>>, %arg20: memref<128x128xbf16, #tpu.memory_space<vmem>>, %arg21: memref<1x128xf32, #tpu.memory_space<vmem>>, %arg22: memref<128x128xbf16, #tpu.memory_space<vmem>>, %arg23: memref<1x128xf32, #tpu.memory_space<vmem>>, %arg24: memref<128x128xbf16, #tpu.memory_space<vmem>>, %arg25: memref<1x128xf32, #tpu.memory_space<vmem>>, %arg26: memref<1x1x128xf32, #tpu.memory_space<vmem>>, %arg27: memref<1x18x18x32xf32, #tpu.memory_space<vmem>>, %arg28: memref<1x10x10x32xf32, #tpu.memory_space<vmem>>, %arg29: memref<1x10x10x64xf32, #tpu.memory_space<vmem>>, %arg30: memref<1x6x6x64xf32, #tpu.memory_space<vmem>>, %arg31: memref<1x6x6x128xf32, #tpu.memory_space<vmem>>, %arg32: memref<1x4x4x128xf32, #tpu.memory_space<vmem>>, %arg33: memref<1x4x4x128xf32, #tpu.memory_space<vmem>>) attributes {dimension_semantics = [#tpu.dimension_semantics<parallel>], iteration_bounds = array<i64: 2>, scalar_prefetch = 0 : i64, scratch_operands = 7 : i64, tpu.core_type = #tpu.core_type<tc>, window_params = [{transform_indices = @transform_0, window_bounds = array<i64: 1, 16, 16, 27>}, {pipeline_mode = #tpu.pipeline_mode<synchronous>, transform_indices = @transform_1, window_bounds = array<i64: 27, 32>}, {pipeline_mode = #tpu.pipeline_mode<synchronous>, transform_indices = @transform_2, window_bounds = array<i64: 1, 32>}, {pipeline_mode = #tpu.pipeline_mode<synchronous>, transform_indices = @transform_3, window_bounds = array<i64: 291, 32>}, {pipeline_mode = #tpu.pipeline_mode<synchronous>, transform_indices = @transform_4, window_bounds = array<i64: 1, 32>}, {pipeline_mode = #tpu.pipeline_mode<synchronous>, transform_indices = @transform_5, window_bounds = array<i64: 288, 64>}, {pipeline_mode = #tpu.pipeline_mode<synchronous>, transform_indices = @transform_6, window_bounds = array<i64: 1, 64>}, {pipeline_mode = #tpu.pipeline_mode<synchronous>, transform_indices = @transform_7, window_bounds = array<i64: 608, 64>}, {pipeline_mode = #tpu.pipeline_mode<synchronous>, transform_indices = @transform_8, window_bounds = array<i64: 1, 64>}, {pipeline_mode = #tpu.pipeline_mode<synchronous>, transform_indices = @transform_9, window_bounds = array<i64: 576, 128>}, {pipeline_mode = #tpu.pipeline_mode<synchronous>, transform_indices = @transform_10, window_bounds = array<i64: 1, 128>}, {pipeline_mode = #tpu.pipeline_mode<synchronous>, transform_indices = @transform_11, window_bounds = array<i64: 1216, 128>}, {pipeline_mode = #tpu.pipeline_mode<synchronous>, transform_indices = @transform_12, window_bounds = array<i64: 1, 128>}, {pipeline_mode = #tpu.pipeline_mode<synchronous>, transform_indices = @transform_13, window_bounds = array<i64: 1152, 128>}, {pipeline_mode = #tpu.pipeline_mode<synchronous>, transform_indices = @transform_14, window_bounds = array<i64: 1, 128>}, {pipeline_mode = #tpu.pipeline_mode<synchronous>, transform_indices = @transform_15, window_bounds = array<i64: 1152, 128>}, {pipeline_mode = #tpu.pipeline_mode<synchronous>, transform_indices = @transform_16, window_bounds = array<i64: 1, 128>}, {pipeline_mode = #tpu.pipeline_mode<synchronous>, transform_indices = @transform_17, window_bounds = array<i64: 128, 128>}, {pipeline_mode = #tpu.pipeline_mode<synchronous>, transform_indices = @transform_18, window_bounds = array<i64: 1, 128>}, {pipeline_mode = #tpu.pipeline_mode<synchronous>, transform_indices = @transform_19, window_bounds = array<i64: 128, 128>}, {pipeline_mode = #tpu.pipeline_mode<synchronous>, transform_indices = @transform_20, window_bounds = array<i64: 1, 128>}, {pipeline_mode = #tpu.pipeline_mode<synchronous>, transform_indices = @transform_21, window_bounds = array<i64: 128, 128>}, {pipeline_mode = #tpu.pipeline_mode<synchronous>, transform_indices = @transform_22, window_bounds = array<i64: 1, 128>}, {pipeline_mode = #tpu.pipeline_mode<synchronous>, transform_indices = @transform_23, window_bounds = array<i64: 128, 128>}, {pipeline_mode = #tpu.pipeline_mode<synchronous>, transform_indices = @transform_24, window_bounds = array<i64: 1, 128>}, {transform_indices = @transform_25, window_bounds = array<i64: 1, 1, 128>}]} {
    %c0 = arith.constant 0 : index
    %c0_0 = arith.constant 0 : index
    %c0_1 = arith.constant 0 : index
    %c0_2 = arith.constant 0 : index
    %0 = vector.load %arg1[%c0, %c0_0, %c0_1, %c0_2] : memref<1x16x16x27xbf16, #tpu.memory_space<vmem>>, vector<1x16x16x27xbf16>
    %1 = vector.shape_cast %0 : vector<1x16x16x27xbf16> to vector<256x27xbf16>
    %c0_3 = arith.constant 0 : index
    %c0_4 = arith.constant 0 : index
    %2 = vector.load %arg2[%c0_3, %c0_4] : memref<27x32xbf16, #tpu.memory_space<vmem>>, vector<27x32xbf16>
    %cst = arith.constant dense<0.000000e+00> : vector<256x32xf32>
    %3 = tpu.matmul %1, %2, %cst {dimension_numbers = #tpu.dot_dimension_numbers<[1], [0], [0], [1], [0, 0, 1, 1], [], []>} : vector<256x27xbf16>, vector<27x32xbf16>, vector<256x32xf32> -> vector<256x32xf32>
    %c0_5 = arith.constant 0 : index
    %c0_6 = arith.constant 0 : index
    %4 = vector.load %arg3[%c0_5, %c0_6] : memref<1x32xf32, #tpu.memory_space<vmem>>, vector<1x32xf32>
    %5 = vector.broadcast %4 : vector<1x32xf32> to vector<256x32xf32>
    %6 = arith.addf %3, %5 : vector<256x32xf32>
    %cst_7 = arith.constant 0.000000e+00 : f32
    %7 = vector.broadcast %cst_7 : f32 to vector<256x32xf32>
    %8 = arith.maximumf %6, %7 : vector<256x32xf32>
    %9 = vector.shape_cast %8 : vector<256x32xf32> to vector<1x16x16x32xf32>
    %cst_8 = arith.constant 0.000000e+00 : f32
    %10 = vector.broadcast %cst_8 : f32 to vector<1x18x18x32xf32>
    %c0_9 = arith.constant 0 : index
    %c0_10 = arith.constant 0 : index
    %c0_11 = arith.constant 0 : index
    %c0_12 = arith.constant 0 : index
    %11 = vector.load %arg27[%c0_9, %c0_10, %c0_11, %c0_12] : memref<1x18x18x32xf32, #tpu.memory_space<vmem>>, vector<1x18x18x32xf32>
    tpu.vector_store %arg27[%c0_9, %c0_10, %c0_11, %c0_12], %10 {strides = array<i32>} : memref<1x18x18x32xf32, #tpu.memory_space<vmem>>, vector<1x18x18x32xf32>,
    %c0_13 = arith.constant 0 : index
    %c1 = arith.constant 1 : index
    %c1_14 = arith.constant 1 : index
    %c0_15 = arith.constant 0 : index
    %12 = vector.load %arg27[%c0_13, %c1, %c1_14, %c0_15] : memref<1x18x18x32xf32, #tpu.memory_space<vmem>>, vector<1x16x16x32xf32>
    tpu.vector_store %arg27[%c0_13, %c1, %c1_14, %c0_15], %9 {strides = array<i32>} : memref<1x18x18x32xf32, #tpu.memory_space<vmem>>, vector<1x16x16x32xf32>,
    %c0_16 = arith.constant 0 : index
    %c0_17 = arith.constant 0 : index
    %c0_18 = arith.constant 0 : index
    %c0_19 = arith.constant 0 : index
    %13 = vector.load %arg27[%c0_16, %c0_17, %c0_18, %c0_19] : memref<1x18x18x32xf32, #tpu.memory_space<vmem>>, vector<1x16x16x32xf32>
    %14 = vector.shape_cast %13 : vector<1x16x16x32xf32> to vector<256x32xf32>
    %c0_20 = arith.constant 0 : index
    %c0_21 = arith.constant 0 : index
    %c1_22 = arith.constant 1 : index
    %c0_23 = arith.constant 0 : index
    %15 = vector.load %arg27[%c0_20, %c0_21, %c1_22, %c0_23] : memref<1x18x18x32xf32, #tpu.memory_space<vmem>>, vector<1x16x16x32xf32>
    %16 = vector.shape_cast %15 : vector<1x16x16x32xf32> to vector<256x32xf32>
    %c0_24 = arith.constant 0 : index
    %c0_25 = arith.constant 0 : index
    %c2 = arith.constant 2 : index
    %c0_26 = arith.constant 0 : index
    %17 = vector.load %arg27[%c0_24, %c0_25, %c2, %c0_26] : memref<1x18x18x32xf32, #tpu.memory_space<vmem>>, vector<1x16x16x32xf32>
    %18 = vector.shape_cast %17 : vector<1x16x16x32xf32> to vector<256x32xf32>
    %c0_27 = arith.constant 0 : index
    %c1_28 = arith.constant 1 : index
    %c0_29 = arith.constant 0 : index
    %c0_30 = arith.constant 0 : index
    %19 = vector.load %arg27[%c0_27, %c1_28, %c0_29, %c0_30] : memref<1x18x18x32xf32, #tpu.memory_space<vmem>>, vector<1x16x16x32xf32>
    %20 = vector.shape_cast %19 : vector<1x16x16x32xf32> to vector<256x32xf32>
    %c0_31 = arith.constant 0 : index
    %c1_32 = arith.constant 1 : index
    %c1_33 = arith.constant 1 : index
    %c0_34 = arith.constant 0 : index
    %21 = vector.load %arg27[%c0_31, %c1_32, %c1_33, %c0_34] : memref<1x18x18x32xf32, #tpu.memory_space<vmem>>, vector<1x16x16x32xf32>
    %22 = vector.shape_cast %21 : vector<1x16x16x32xf32> to vector<256x32xf32>
    %c0_35 = arith.constant 0 : index
    %c1_36 = arith.constant 1 : index
    %c2_37 = arith.constant 2 : index
    %c0_38 = arith.constant 0 : index
    %23 = vector.load %arg27[%c0_35, %c1_36, %c2_37, %c0_38] : memref<1x18x18x32xf32, #tpu.memory_space<vmem>>, vector<1x16x16x32xf32>
    %24 = vector.shape_cast %23 : vector<1x16x16x32xf32> to vector<256x32xf32>
    %c0_39 = arith.constant 0 : index
    %c2_40 = arith.constant 2 : index
    %c0_41 = arith.constant 0 : index
    %c0_42 = arith.constant 0 : index
    %25 = vector.load %arg27[%c0_39, %c2_40, %c0_41, %c0_42] : memref<1x18x18x32xf32, #tpu.memory_space<vmem>>, vector<1x16x16x32xf32>
    %26 = vector.shape_cast %25 : vector<1x16x16x32xf32> to vector<256x32xf32>
    %c0_43 = arith.constant 0 : index
    %c2_44 = arith.constant 2 : index
    %c1_45 = arith.constant 1 : index
    %c0_46 = arith.constant 0 : index
    %27 = vector.load %arg27[%c0_43, %c2_44, %c1_45, %c0_46] : memref<1x18x18x32xf32, #tpu.memory_space<vmem>>, vector<1x16x16x32xf32>
    %28 = vector.shape_cast %27 : vector<1x16x16x32xf32> to vector<256x32xf32>
    %c0_47 = arith.constant 0 : index
    %c2_48 = arith.constant 2 : index
    %c2_49 = arith.constant 2 : index
    %c0_50 = arith.constant 0 : index
    %29 = vector.load %arg27[%c0_47, %c2_48, %c2_49, %c0_50] : memref<1x18x18x32xf32, #tpu.memory_space<vmem>>, vector<1x16x16x32xf32>
    %30 = vector.shape_cast %29 : vector<1x16x16x32xf32> to vector<256x32xf32>
    %31 = tpu.concatenate %14, %16, %18, %20, %22, %24, %26, %28, %30 in 1 : vector<256x32xf32>, vector<256x32xf32>, vector<256x32xf32>, vector<256x32xf32>, vector<256x32xf32>, vector<256x32xf32>, vector<256x32xf32>, vector<256x32xf32>, vector<256x32xf32> -> vector<256x288xf32>
    %32 = arith.truncf %31 : vector<256x288xf32> to vector<256x288xbf16>
    %33 = vector.extract_strided_slice %1 {offsets = [0, 12], sizes = [256, 3], strides = [1, 1]} : vector<256x27xbf16> to vector<256x3xbf16>
    %34 = tpu.concatenate %32, %33 in 1 : vector<256x288xbf16>, vector<256x3xbf16> -> vector<256x291xbf16>
    %c0_51 = arith.constant 0 : index
    %c0_52 = arith.constant 0 : index
    %35 = vector.load %arg4[%c0_51, %c0_52] : memref<291x32xbf16, #tpu.memory_space<vmem>>, vector<291x32xbf16>
    %cst_53 = arith.constant dense<0.000000e+00> : vector<256x32xf32>
    %36 = tpu.matmul %34, %35, %cst_53 {dimension_numbers = #tpu.dot_dimension_numbers<[1], [0], [0], [1], [0, 0, 1, 1], [], []>} : vector<256x291xbf16>, vector<291x32xbf16>, vector<256x32xf32> -> vector<256x32xf32>
    %c0_54 = arith.constant 0 : index
    %c0_55 = arith.constant 0 : index
    %37 = vector.load %arg5[%c0_54, %c0_55] : memref<1x32xf32, #tpu.memory_space<vmem>>, vector<1x32xf32>
    %38 = vector.broadcast %37 : vector<1x32xf32> to vector<256x32xf32>
    %39 = arith.addf %36, %38 : vector<256x32xf32>
    %cst_56 = arith.constant 0.000000e+00 : f32
    %40 = vector.broadcast %cst_56 : f32 to vector<256x32xf32>
    %41 = arith.maximumf %39, %40 : vector<256x32xf32>
    %42 = vector.shape_cast %41 : vector<256x32xf32> to vector<128x2x32xf32>
    %cst_57 = arith.constant dense<0xFF800000> : vector<128x32xf32>
    %43 = vector.multi_reduction <maximumf>, %42, %cst_57 [1] : vector<128x2x32xf32> to vector<128x32xf32>
    %44 = vector.shape_cast %43 : vector<128x32xf32> to vector<1x8x2x8x32xf32>
    %cst_58 = arith.constant dense<0xFF800000> : vector<1x8x8x32xf32>
    %45 = vector.multi_reduction <maximumf>, %44, %cst_58 [2] : vector<1x8x2x8x32xf32> to vector<1x8x8x32xf32>
    %cst_59 = arith.constant 0.000000e+00 : f32
    %46 = vector.broadcast %cst_59 : f32 to vector<1x10x10x32xf32>
    %c0_60 = arith.constant 0 : index
    %c0_61 = arith.constant 0 : index
    %c0_62 = arith.constant 0 : index
    %c0_63 = arith.constant 0 : index
    %47 = vector.load %arg28[%c0_60, %c0_61, %c0_62, %c0_63] : memref<1x10x10x32xf32, #tpu.memory_space<vmem>>, vector<1x10x10x32xf32>
    tpu.vector_store %arg28[%c0_60, %c0_61, %c0_62, %c0_63], %46 {strides = array<i32>} : memref<1x10x10x32xf32, #tpu.memory_space<vmem>>, vector<1x10x10x32xf32>,
    %c0_64 = arith.constant 0 : index
    %c1_65 = arith.constant 1 : index
    %c1_66 = arith.constant 1 : index
    %c0_67 = arith.constant 0 : index
    %48 = vector.load %arg28[%c0_64, %c1_65, %c1_66, %c0_67] : memref<1x10x10x32xf32, #tpu.memory_space<vmem>>, vector<1x8x8x32xf32>
    tpu.vector_store %arg28[%c0_64, %c1_65, %c1_66, %c0_67], %45 {strides = array<i32>} : memref<1x10x10x32xf32, #tpu.memory_space<vmem>>, vector<1x8x8x32xf32>,
    %c0_68 = arith.constant 0 : index
    %c0_69 = arith.constant 0 : index
    %c0_70 = arith.constant 0 : index
    %c0_71 = arith.constant 0 : index
    %49 = vector.load %arg28[%c0_68, %c0_69, %c0_70, %c0_71] : memref<1x10x10x32xf32, #tpu.memory_space<vmem>>, vector<1x8x8x32xf32>
    %50 = vector.shape_cast %49 : vector<1x8x8x32xf32> to vector<64x32xf32>
    %c0_72 = arith.constant 0 : index
    %c0_73 = arith.constant 0 : index
    %c1_74 = arith.constant 1 : index
    %c0_75 = arith.constant 0 : index
    %51 = vector.load %arg28[%c0_72, %c0_73, %c1_74, %c0_75] : memref<1x10x10x32xf32, #tpu.memory_space<vmem>>, vector<1x8x8x32xf32>
    %52 = vector.shape_cast %51 : vector<1x8x8x32xf32> to vector<64x32xf32>
    %c0_76 = arith.constant 0 : index
    %c0_77 = arith.constant 0 : index
    %c2_78 = arith.constant 2 : index
    %c0_79 = arith.constant 0 : index
    %53 = vector.load %arg28[%c0_76, %c0_77, %c2_78, %c0_79] : memref<1x10x10x32xf32, #tpu.memory_space<vmem>>, vector<1x8x8x32xf32>
    %54 = vector.shape_cast %53 : vector<1x8x8x32xf32> to vector<64x32xf32>
    %c0_80 = arith.constant 0 : index
    %c1_81 = arith.constant 1 : index
    %c0_82 = arith.constant 0 : index
    %c0_83 = arith.constant 0 : index
    %55 = vector.load %arg28[%c0_80, %c1_81, %c0_82, %c0_83] : memref<1x10x10x32xf32, #tpu.memory_space<vmem>>, vector<1x8x8x32xf32>
    %56 = vector.shape_cast %55 : vector<1x8x8x32xf32> to vector<64x32xf32>
    %c0_84 = arith.constant 0 : index
    %c1_85 = arith.constant 1 : index
    %c1_86 = arith.constant 1 : index
    %c0_87 = arith.constant 0 : index
    %57 = vector.load %arg28[%c0_84, %c1_85, %c1_86, %c0_87] : memref<1x10x10x32xf32, #tpu.memory_space<vmem>>, vector<1x8x8x32xf32>
    %58 = vector.shape_cast %57 : vector<1x8x8x32xf32> to vector<64x32xf32>
    %c0_88 = arith.constant 0 : index
    %c1_89 = arith.constant 1 : index
    %c2_90 = arith.constant 2 : index
    %c0_91 = arith.constant 0 : index
    %59 = vector.load %arg28[%c0_88, %c1_89, %c2_90, %c0_91] : memref<1x10x10x32xf32, #tpu.memory_space<vmem>>, vector<1x8x8x32xf32>
    %60 = vector.shape_cast %59 : vector<1x8x8x32xf32> to vector<64x32xf32>
    %c0_92 = arith.constant 0 : index
    %c2_93 = arith.constant 2 : index
    %c0_94 = arith.constant 0 : index
    %c0_95 = arith.constant 0 : index
    %61 = vector.load %arg28[%c0_92, %c2_93, %c0_94, %c0_95] : memref<1x10x10x32xf32, #tpu.memory_space<vmem>>, vector<1x8x8x32xf32>
    %62 = vector.shape_cast %61 : vector<1x8x8x32xf32> to vector<64x32xf32>
    %c0_96 = arith.constant 0 : index
    %c2_97 = arith.constant 2 : index
    %c1_98 = arith.constant 1 : index
    %c0_99 = arith.constant 0 : index
    %63 = vector.load %arg28[%c0_96, %c2_97, %c1_98, %c0_99] : memref<1x10x10x32xf32, #tpu.memory_space<vmem>>, vector<1x8x8x32xf32>
    %64 = vector.shape_cast %63 : vector<1x8x8x32xf32> to vector<64x32xf32>
    %c0_100 = arith.constant 0 : index
    %c2_101 = arith.constant 2 : index
    %c2_102 = arith.constant 2 : index
    %c0_103 = arith.constant 0 : index
    %65 = vector.load %arg28[%c0_100, %c2_101, %c2_102, %c0_103] : memref<1x10x10x32xf32, #tpu.memory_space<vmem>>, vector<1x8x8x32xf32>
    %66 = vector.shape_cast %65 : vector<1x8x8x32xf32> to vector<64x32xf32>
    %67 = tpu.concatenate %50, %52, %54, %56, %58, %60, %62, %64, %66 in 1 : vector<64x32xf32>, vector<64x32xf32>, vector<64x32xf32>, vector<64x32xf32>, vector<64x32xf32>, vector<64x32xf32>, vector<64x32xf32>, vector<64x32xf32>, vector<64x32xf32> -> vector<64x288xf32>
    %68 = arith.truncf %67 : vector<64x288xf32> to vector<64x288xbf16>
    %c0_104 = arith.constant 0 : index
    %c0_105 = arith.constant 0 : index
    %69 = vector.load %arg6[%c0_104, %c0_105] : memref<288x64xbf16, #tpu.memory_space<vmem>>, vector<288x64xbf16>
    %cst_106 = arith.constant dense<0.000000e+00> : vector<64x64xf32>
    %70 = tpu.matmul %68, %69, %cst_106 {dimension_numbers = #tpu.dot_dimension_numbers<[1], [0], [0], [1], [0, 0, 1, 1], [], []>} : vector<64x288xbf16>, vector<288x64xbf16>, vector<64x64xf32> -> vector<64x64xf32>
    %c0_107 = arith.constant 0 : index
    %c0_108 = arith.constant 0 : index
    %71 = vector.load %arg7[%c0_107, %c0_108] : memref<1x64xf32, #tpu.memory_space<vmem>>, vector<1x64xf32>
    %72 = vector.broadcast %71 : vector<1x64xf32> to vector<64x64xf32>
    %73 = arith.addf %70, %72 : vector<64x64xf32>
    %cst_109 = arith.constant 0.000000e+00 : f32
    %74 = vector.broadcast %cst_109 : f32 to vector<64x64xf32>
    %75 = arith.maximumf %73, %74 : vector<64x64xf32>
    %76 = vector.shape_cast %75 : vector<64x64xf32> to vector<1x8x8x64xf32>
    %cst_110 = arith.constant 0.000000e+00 : f32
    %77 = vector.broadcast %cst_110 : f32 to vector<1x10x10x64xf32>
    %c0_111 = arith.constant 0 : index
    %c0_112 = arith.constant 0 : index
    %c0_113 = arith.constant 0 : index
    %c0_114 = arith.constant 0 : index
    %78 = vector.load %arg29[%c0_111, %c0_112, %c0_113, %c0_114] : memref<1x10x10x64xf32, #tpu.memory_space<vmem>>, vector<1x10x10x64xf32>
    tpu.vector_store %arg29[%c0_111, %c0_112, %c0_113, %c0_114], %77 {strides = array<i32>} : memref<1x10x10x64xf32, #tpu.memory_space<vmem>>, vector<1x10x10x64xf32>,
    %c0_115 = arith.constant 0 : index
    %c1_116 = arith.constant 1 : index
    %c1_117 = arith.constant 1 : index
    %c0_118 = arith.constant 0 : index
    %79 = vector.load %arg29[%c0_115, %c1_116, %c1_117, %c0_118] : memref<1x10x10x64xf32, #tpu.memory_space<vmem>>, vector<1x8x8x64xf32>
    tpu.vector_store %arg29[%c0_115, %c1_116, %c1_117, %c0_118], %76 {strides = array<i32>} : memref<1x10x10x64xf32, #tpu.memory_space<vmem>>, vector<1x8x8x64xf32>,
    %c0_119 = arith.constant 0 : index
    %c1_120 = arith.constant 1 : index
    %c1_121 = arith.constant 1 : index
    %c0_122 = arith.constant 0 : index
    %80 = vector.load %arg28[%c0_119, %c1_120, %c1_121, %c0_122] : memref<1x10x10x32xf32, #tpu.memory_space<vmem>>, vector<1x8x8x32xf32>
    %81 = vector.shape_cast %80 : vector<1x8x8x32xf32> to vector<64x32xf32>
    %82 = arith.truncf %81 : vector<64x32xf32> to vector<64x32xbf16>
    %c0_123 = arith.constant 0 : index
    %c0_124 = arith.constant 0 : index
    %c0_125 = arith.constant 0 : index
    %c0_126 = arith.constant 0 : index
    %83 = vector.load %arg29[%c0_123, %c0_124, %c0_125, %c0_126] : memref<1x10x10x64xf32, #tpu.memory_space<vmem>>, vector<1x8x8x64xf32>
    %84 = vector.shape_cast %83 : vector<1x8x8x64xf32> to vector<64x64xf32>
    %c0_127 = arith.constant 0 : index
    %c0_128 = arith.constant 0 : index
    %c1_129 = arith.constant 1 : index
    %c0_130 = arith.constant 0 : index
    %85 = vector.load %arg29[%c0_127, %c0_128, %c1_129, %c0_130] : memref<1x10x10x64xf32, #tpu.memory_space<vmem>>, vector<1x8x8x64xf32>
    %86 = vector.shape_cast %85 : vector<1x8x8x64xf32> to vector<64x64xf32>
    %c0_131 = arith.constant 0 : index
    %c0_132 = arith.constant 0 : index
    %c2_133 = arith.constant 2 : index
    %c0_134 = arith.constant 0 : index
    %87 = vector.load %arg29[%c0_131, %c0_132, %c2_133, %c0_134] : memref<1x10x10x64xf32, #tpu.memory_space<vmem>>, vector<1x8x8x64xf32>
    %88 = vector.shape_cast %87 : vector<1x8x8x64xf32> to vector<64x64xf32>
    %c0_135 = arith.constant 0 : index
    %c1_136 = arith.constant 1 : index
    %c0_137 = arith.constant 0 : index
    %c0_138 = arith.constant 0 : index
    %89 = vector.load %arg29[%c0_135, %c1_136, %c0_137, %c0_138] : memref<1x10x10x64xf32, #tpu.memory_space<vmem>>, vector<1x8x8x64xf32>
    %90 = vector.shape_cast %89 : vector<1x8x8x64xf32> to vector<64x64xf32>
    %c0_139 = arith.constant 0 : index
    %c1_140 = arith.constant 1 : index
    %c1_141 = arith.constant 1 : index
    %c0_142 = arith.constant 0 : index
    %91 = vector.load %arg29[%c0_139, %c1_140, %c1_141, %c0_142] : memref<1x10x10x64xf32, #tpu.memory_space<vmem>>, vector<1x8x8x64xf32>
    %92 = vector.shape_cast %91 : vector<1x8x8x64xf32> to vector<64x64xf32>
    %c0_143 = arith.constant 0 : index
    %c1_144 = arith.constant 1 : index
    %c2_145 = arith.constant 2 : index
    %c0_146 = arith.constant 0 : index
    %93 = vector.load %arg29[%c0_143, %c1_144, %c2_145, %c0_146] : memref<1x10x10x64xf32, #tpu.memory_space<vmem>>, vector<1x8x8x64xf32>
    %94 = vector.shape_cast %93 : vector<1x8x8x64xf32> to vector<64x64xf32>
    %c0_147 = arith.constant 0 : index
    %c2_148 = arith.constant 2 : index
    %c0_149 = arith.constant 0 : index
    %c0_150 = arith.constant 0 : index
    %95 = vector.load %arg29[%c0_147, %c2_148, %c0_149, %c0_150] : memref<1x10x10x64xf32, #tpu.memory_space<vmem>>, vector<1x8x8x64xf32>
    %96 = vector.shape_cast %95 : vector<1x8x8x64xf32> to vector<64x64xf32>
    %c0_151 = arith.constant 0 : index
    %c2_152 = arith.constant 2 : index
    %c1_153 = arith.constant 1 : index
    %c0_154 = arith.constant 0 : index
    %97 = vector.load %arg29[%c0_151, %c2_152, %c1_153, %c0_154] : memref<1x10x10x64xf32, #tpu.memory_space<vmem>>, vector<1x8x8x64xf32>
    %98 = vector.shape_cast %97 : vector<1x8x8x64xf32> to vector<64x64xf32>
    %c0_155 = arith.constant 0 : index
    %c2_156 = arith.constant 2 : index
    %c2_157 = arith.constant 2 : index
    %c0_158 = arith.constant 0 : index
    %99 = vector.load %arg29[%c0_155, %c2_156, %c2_157, %c0_158] : memref<1x10x10x64xf32, #tpu.memory_space<vmem>>, vector<1x8x8x64xf32>
    %100 = vector.shape_cast %99 : vector<1x8x8x64xf32> to vector<64x64xf32>
    %101 = tpu.concatenate %84, %86, %88, %90, %92, %94, %96, %98, %100 in 1 : vector<64x64xf32>, vector<64x64xf32>, vector<64x64xf32>, vector<64x64xf32>, vector<64x64xf32>, vector<64x64xf32>, vector<64x64xf32>, vector<64x64xf32>, vector<64x64xf32> -> vector<64x576xf32>
    %102 = arith.truncf %101 : vector<64x576xf32> to vector<64x576xbf16>
    %103 = tpu.concatenate %102, %82 in 1 : vector<64x576xbf16>, vector<64x32xbf16> -> vector<64x608xbf16>
    %c0_159 = arith.constant 0 : index
    %c0_160 = arith.constant 0 : index
    %104 = vector.load %arg8[%c0_159, %c0_160] : memref<608x64xbf16, #tpu.memory_space<vmem>>, vector<608x64xbf16>
    %cst_161 = arith.constant dense<0.000000e+00> : vector<64x64xf32>
    %105 = tpu.matmul %103, %104, %cst_161 {dimension_numbers = #tpu.dot_dimension_numbers<[1], [0], [0], [1], [0, 0, 1, 1], [], []>} : vector<64x608xbf16>, vector<608x64xbf16>, vector<64x64xf32> -> vector<64x64xf32>
    %c0_162 = arith.constant 0 : index
    %c0_163 = arith.constant 0 : index
    %106 = vector.load %arg9[%c0_162, %c0_163] : memref<1x64xf32, #tpu.memory_space<vmem>>, vector<1x64xf32>
    %107 = vector.broadcast %106 : vector<1x64xf32> to vector<64x64xf32>
    %108 = arith.addf %105, %107 : vector<64x64xf32>
    %cst_164 = arith.constant 0.000000e+00 : f32
    %109 = vector.broadcast %cst_164 : f32 to vector<64x64xf32>
    %110 = arith.maximumf %108, %109 : vector<64x64xf32>
    %111 = vector.shape_cast %110 : vector<64x64xf32> to vector<32x2x64xf32>
    %cst_165 = arith.constant dense<0xFF800000> : vector<32x64xf32>
    %112 = vector.multi_reduction <maximumf>, %111, %cst_165 [1] : vector<32x2x64xf32> to vector<32x64xf32>
    %113 = vector.shape_cast %112 : vector<32x64xf32> to vector<1x4x2x4x64xf32>
    %cst_166 = arith.constant dense<0xFF800000> : vector<1x4x4x64xf32>
    %114 = vector.multi_reduction <maximumf>, %113, %cst_166 [2] : vector<1x4x2x4x64xf32> to vector<1x4x4x64xf32>
    %cst_167 = arith.constant 0.000000e+00 : f32
    %115 = vector.broadcast %cst_167 : f32 to vector<1x6x6x64xf32>
    %c0_168 = arith.constant 0 : index
    %c0_169 = arith.constant 0 : index
    %c0_170 = arith.constant 0 : index
    %c0_171 = arith.constant 0 : index
    %116 = vector.load %arg30[%c0_168, %c0_169, %c0_170, %c0_171] : memref<1x6x6x64xf32, #tpu.memory_space<vmem>>, vector<1x6x6x64xf32>
    tpu.vector_store %arg30[%c0_168, %c0_169, %c0_170, %c0_171], %115 {strides = array<i32>} : memref<1x6x6x64xf32, #tpu.memory_space<vmem>>, vector<1x6x6x64xf32>,
    %c0_172 = arith.constant 0 : index
    %c1_173 = arith.constant 1 : index
    %c1_174 = arith.constant 1 : index
    %c0_175 = arith.constant 0 : index
    %117 = vector.load %arg30[%c0_172, %c1_173, %c1_174, %c0_175] : memref<1x6x6x64xf32, #tpu.memory_space<vmem>>, vector<1x4x4x64xf32>
    tpu.vector_store %arg30[%c0_172, %c1_173, %c1_174, %c0_175], %114 {strides = array<i32>} : memref<1x6x6x64xf32, #tpu.memory_space<vmem>>, vector<1x4x4x64xf32>,
    %c0_176 = arith.constant 0 : index
    %c0_177 = arith.constant 0 : index
    %c0_178 = arith.constant 0 : index
    %c0_179 = arith.constant 0 : index
    %118 = vector.load %arg30[%c0_176, %c0_177, %c0_178, %c0_179] : memref<1x6x6x64xf32, #tpu.memory_space<vmem>>, vector<1x4x4x64xf32>
    %119 = vector.shape_cast %118 : vector<1x4x4x64xf32> to vector<16x64xf32>
    %c0_180 = arith.constant 0 : index
    %c0_181 = arith.constant 0 : index
    %c1_182 = arith.constant 1 : index
    %c0_183 = arith.constant 0 : index
    %120 = vector.load %arg30[%c0_180, %c0_181, %c1_182, %c0_183] : memref<1x6x6x64xf32, #tpu.memory_space<vmem>>, vector<1x4x4x64xf32>
    %121 = vector.shape_cast %120 : vector<1x4x4x64xf32> to vector<16x64xf32>
    %c0_184 = arith.constant 0 : index
    %c0_185 = arith.constant 0 : index
    %c2_186 = arith.constant 2 : index
    %c0_187 = arith.constant 0 : index
    %122 = vector.load %arg30[%c0_184, %c0_185, %c2_186, %c0_187] : memref<1x6x6x64xf32, #tpu.memory_space<vmem>>, vector<1x4x4x64xf32>
    %123 = vector.shape_cast %122 : vector<1x4x4x64xf32> to vector<16x64xf32>
    %c0_188 = arith.constant 0 : index
    %c1_189 = arith.constant 1 : index
    %c0_190 = arith.constant 0 : index
    %c0_191 = arith.constant 0 : index
    %124 = vector.load %arg30[%c0_188, %c1_189, %c0_190, %c0_191] : memref<1x6x6x64xf32, #tpu.memory_space<vmem>>, vector<1x4x4x64xf32>
    %125 = vector.shape_cast %124 : vector<1x4x4x64xf32> to vector<16x64xf32>
    %c0_192 = arith.constant 0 : index
    %c1_193 = arith.constant 1 : index
    %c1_194 = arith.constant 1 : index
    %c0_195 = arith.constant 0 : index
    %126 = vector.load %arg30[%c0_192, %c1_193, %c1_194, %c0_195] : memref<1x6x6x64xf32, #tpu.memory_space<vmem>>, vector<1x4x4x64xf32>
    %127 = vector.shape_cast %126 : vector<1x4x4x64xf32> to vector<16x64xf32>
    %c0_196 = arith.constant 0 : index
    %c1_197 = arith.constant 1 : index
    %c2_198 = arith.constant 2 : index
    %c0_199 = arith.constant 0 : index
    %128 = vector.load %arg30[%c0_196, %c1_197, %c2_198, %c0_199] : memref<1x6x6x64xf32, #tpu.memory_space<vmem>>, vector<1x4x4x64xf32>
    %129 = vector.shape_cast %128 : vector<1x4x4x64xf32> to vector<16x64xf32>
    %c0_200 = arith.constant 0 : index
    %c2_201 = arith.constant 2 : index
    %c0_202 = arith.constant 0 : index
    %c0_203 = arith.constant 0 : index
    %130 = vector.load %arg30[%c0_200, %c2_201, %c0_202, %c0_203] : memref<1x6x6x64xf32, #tpu.memory_space<vmem>>, vector<1x4x4x64xf32>
    %131 = vector.shape_cast %130 : vector<1x4x4x64xf32> to vector<16x64xf32>
    %c0_204 = arith.constant 0 : index
    %c2_205 = arith.constant 2 : index
    %c1_206 = arith.constant 1 : index
    %c0_207 = arith.constant 0 : index
    %132 = vector.load %arg30[%c0_204, %c2_205, %c1_206, %c0_207] : memref<1x6x6x64xf32, #tpu.memory_space<vmem>>, vector<1x4x4x64xf32>
    %133 = vector.shape_cast %132 : vector<1x4x4x64xf32> to vector<16x64xf32>
    %c0_208 = arith.constant 0 : index
    %c2_209 = arith.constant 2 : index
    %c2_210 = arith.constant 2 : index
    %c0_211 = arith.constant 0 : index
    %134 = vector.load %arg30[%c0_208, %c2_209, %c2_210, %c0_211] : memref<1x6x6x64xf32, #tpu.memory_space<vmem>>, vector<1x4x4x64xf32>
    %135 = vector.shape_cast %134 : vector<1x4x4x64xf32> to vector<16x64xf32>
    %136 = tpu.concatenate %119, %121, %123, %125, %127, %129, %131, %133, %135 in 1 : vector<16x64xf32>, vector<16x64xf32>, vector<16x64xf32>, vector<16x64xf32>, vector<16x64xf32>, vector<16x64xf32>, vector<16x64xf32>, vector<16x64xf32>, vector<16x64xf32> -> vector<16x576xf32>
    %137 = arith.truncf %136 : vector<16x576xf32> to vector<16x576xbf16>
    %c0_212 = arith.constant 0 : index
    %c0_213 = arith.constant 0 : index
    %138 = vector.load %arg10[%c0_212, %c0_213] : memref<576x128xbf16, #tpu.memory_space<vmem>>, vector<576x128xbf16>
    %cst_214 = arith.constant dense<0.000000e+00> : vector<16x128xf32>
    %139 = tpu.matmul %137, %138, %cst_214 {dimension_numbers = #tpu.dot_dimension_numbers<[1], [0], [0], [1], [0, 0, 1, 1], [], []>} : vector<16x576xbf16>, vector<576x128xbf16>, vector<16x128xf32> -> vector<16x128xf32>
    %c0_215 = arith.constant 0 : index
    %c0_216 = arith.constant 0 : index
    %140 = vector.load %arg11[%c0_215, %c0_216] : memref<1x128xf32, #tpu.memory_space<vmem>>, vector<1x128xf32>
    %141 = vector.broadcast %140 : vector<1x128xf32> to vector<16x128xf32>
    %142 = arith.addf %139, %141 : vector<16x128xf32>
    %cst_217 = arith.constant 0.000000e+00 : f32
    %143 = vector.broadcast %cst_217 : f32 to vector<16x128xf32>
    %144 = arith.maximumf %142, %143 : vector<16x128xf32>
    %145 = vector.shape_cast %144 : vector<16x128xf32> to vector<1x4x4x128xf32>
    %cst_218 = arith.constant 0.000000e+00 : f32
    %146 = vector.broadcast %cst_218 : f32 to vector<1x6x6x128xf32>
    %c0_219 = arith.constant 0 : index
    %c0_220 = arith.constant 0 : index
    %c0_221 = arith.constant 0 : index
    %c0_222 = arith.constant 0 : index
    %147 = vector.load %arg31[%c0_219, %c0_220, %c0_221, %c0_222] : memref<1x6x6x128xf32, #tpu.memory_space<vmem>>, vector<1x6x6x128xf32>
    tpu.vector_store %arg31[%c0_219, %c0_220, %c0_221, %c0_222], %146 {strides = array<i32>} : memref<1x6x6x128xf32, #tpu.memory_space<vmem>>, vector<1x6x6x128xf32>,
    %c0_223 = arith.constant 0 : index
    %c1_224 = arith.constant 1 : index
    %c1_225 = arith.constant 1 : index
    %c0_226 = arith.constant 0 : index
    %148 = vector.load %arg31[%c0_223, %c1_224, %c1_225, %c0_226] : memref<1x6x6x128xf32, #tpu.memory_space<vmem>>, vector<1x4x4x128xf32>
    tpu.vector_store %arg31[%c0_223, %c1_224, %c1_225, %c0_226], %145 {strides = array<i32>} : memref<1x6x6x128xf32, #tpu.memory_space<vmem>>, vector<1x4x4x128xf32>,
    %c0_227 = arith.constant 0 : index
    %c1_228 = arith.constant 1 : index
    %c1_229 = arith.constant 1 : index
    %c0_230 = arith.constant 0 : index
    %149 = vector.load %arg30[%c0_227, %c1_228, %c1_229, %c0_230] : memref<1x6x6x64xf32, #tpu.memory_space<vmem>>, vector<1x4x4x64xf32>
    %150 = vector.shape_cast %149 : vector<1x4x4x64xf32> to vector<16x64xf32>
    %151 = arith.truncf %150 : vector<16x64xf32> to vector<16x64xbf16>
    %c0_231 = arith.constant 0 : index
    %c0_232 = arith.constant 0 : index
    %c0_233 = arith.constant 0 : index
    %c0_234 = arith.constant 0 : index
    %152 = vector.load %arg31[%c0_231, %c0_232, %c0_233, %c0_234] : memref<1x6x6x128xf32, #tpu.memory_space<vmem>>, vector<1x4x4x128xf32>
    %153 = vector.shape_cast %152 : vector<1x4x4x128xf32> to vector<16x128xf32>
    %c0_235 = arith.constant 0 : index
    %c0_236 = arith.constant 0 : index
    %c1_237 = arith.constant 1 : index
    %c0_238 = arith.constant 0 : index
    %154 = vector.load %arg31[%c0_235, %c0_236, %c1_237, %c0_238] : memref<1x6x6x128xf32, #tpu.memory_space<vmem>>, vector<1x4x4x128xf32>
    %155 = vector.shape_cast %154 : vector<1x4x4x128xf32> to vector<16x128xf32>
    %c0_239 = arith.constant 0 : index
    %c0_240 = arith.constant 0 : index
    %c2_241 = arith.constant 2 : index
    %c0_242 = arith.constant 0 : index
    %156 = vector.load %arg31[%c0_239, %c0_240, %c2_241, %c0_242] : memref<1x6x6x128xf32, #tpu.memory_space<vmem>>, vector<1x4x4x128xf32>
    %157 = vector.shape_cast %156 : vector<1x4x4x128xf32> to vector<16x128xf32>
    %c0_243 = arith.constant 0 : index
    %c1_244 = arith.constant 1 : index
    %c0_245 = arith.constant 0 : index
    %c0_246 = arith.constant 0 : index
    %158 = vector.load %arg31[%c0_243, %c1_244, %c0_245, %c0_246] : memref<1x6x6x128xf32, #tpu.memory_space<vmem>>, vector<1x4x4x128xf32>
    %159 = vector.shape_cast %158 : vector<1x4x4x128xf32> to vector<16x128xf32>
    %c0_247 = arith.constant 0 : index
    %c1_248 = arith.constant 1 : index
    %c1_249 = arith.constant 1 : index
    %c0_250 = arith.constant 0 : index
    %160 = vector.load %arg31[%c0_247, %c1_248, %c1_249, %c0_250] : memref<1x6x6x128xf32, #tpu.memory_space<vmem>>, vector<1x4x4x128xf32>
    %161 = vector.shape_cast %160 : vector<1x4x4x128xf32> to vector<16x128xf32>
    %c0_251 = arith.constant 0 : index
    %c1_252 = arith.constant 1 : index
    %c2_253 = arith.constant 2 : index
    %c0_254 = arith.constant 0 : index
    %162 = vector.load %arg31[%c0_251, %c1_252, %c2_253, %c0_254] : memref<1x6x6x128xf32, #tpu.memory_space<vmem>>, vector<1x4x4x128xf32>
    %163 = vector.shape_cast %162 : vector<1x4x4x128xf32> to vector<16x128xf32>
    %c0_255 = arith.constant 0 : index
    %c2_256 = arith.constant 2 : index
    %c0_257 = arith.constant 0 : index
    %c0_258 = arith.constant 0 : index
    %164 = vector.load %arg31[%c0_255, %c2_256, %c0_257, %c0_258] : memref<1x6x6x128xf32, #tpu.memory_space<vmem>>, vector<1x4x4x128xf32>
    %165 = vector.shape_cast %164 : vector<1x4x4x128xf32> to vector<16x128xf32>
    %c0_259 = arith.constant 0 : index
    %c2_260 = arith.constant 2 : index
    %c1_261 = arith.constant 1 : index
    %c0_262 = arith.constant 0 : index
    %166 = vector.load %arg31[%c0_259, %c2_260, %c1_261, %c0_262] : memref<1x6x6x128xf32, #tpu.memory_space<vmem>>, vector<1x4x4x128xf32>
    %167 = vector.shape_cast %166 : vector<1x4x4x128xf32> to vector<16x128xf32>
    %c0_263 = arith.constant 0 : index
    %c2_264 = arith.constant 2 : index
    %c2_265 = arith.constant 2 : index
    %c0_266 = arith.constant 0 : index
    %168 = vector.load %arg31[%c0_263, %c2_264, %c2_265, %c0_266] : memref<1x6x6x128xf32, #tpu.memory_space<vmem>>, vector<1x4x4x128xf32>
    %169 = vector.shape_cast %168 : vector<1x4x4x128xf32> to vector<16x128xf32>
    %170 = tpu.concatenate %153, %155, %157, %159, %161, %163, %165, %167, %169 in 1 : vector<16x128xf32>, vector<16x128xf32>, vector<16x128xf32>, vector<16x128xf32>, vector<16x128xf32>, vector<16x128xf32>, vector<16x128xf32>, vector<16x128xf32>, vector<16x128xf32> -> vector<16x1152xf32>
    %171 = arith.truncf %170 : vector<16x1152xf32> to vector<16x1152xbf16>
    %172 = tpu.concatenate %171, %151 in 1 : vector<16x1152xbf16>, vector<16x64xbf16> -> vector<16x1216xbf16>
    %c0_267 = arith.constant 0 : index
    %c0_268 = arith.constant 0 : index
    %173 = vector.load %arg12[%c0_267, %c0_268] : memref<1216x128xbf16, #tpu.memory_space<vmem>>, vector<1216x128xbf16>
    %cst_269 = arith.constant dense<0.000000e+00> : vector<16x128xf32>
    %174 = tpu.matmul %172, %173, %cst_269 {dimension_numbers = #tpu.dot_dimension_numbers<[1], [0], [0], [1], [0, 0, 1, 1], [], []>} : vector<16x1216xbf16>, vector<1216x128xbf16>, vector<16x128xf32> -> vector<16x128xf32>
    %c0_270 = arith.constant 0 : index
    %c0_271 = arith.constant 0 : index
    %175 = vector.load %arg13[%c0_270, %c0_271] : memref<1x128xf32, #tpu.memory_space<vmem>>, vector<1x128xf32>
    %176 = vector.broadcast %175 : vector<1x128xf32> to vector<16x128xf32>
    %177 = arith.addf %174, %176 : vector<16x128xf32>
    %cst_272 = arith.constant 0.000000e+00 : f32
    %178 = vector.broadcast %cst_272 : f32 to vector<16x128xf32>
    %179 = arith.maximumf %177, %178 : vector<16x128xf32>
    %180 = vector.shape_cast %179 : vector<16x128xf32> to vector<8x2x128xf32>
    %cst_273 = arith.constant dense<0xFF800000> : vector<8x128xf32>
    %181 = vector.multi_reduction <maximumf>, %180, %cst_273 [1] : vector<8x2x128xf32> to vector<8x128xf32>
    %182 = vector.shape_cast %181 : vector<8x128xf32> to vector<1x2x2x2x128xf32>
    %cst_274 = arith.constant dense<0xFF800000> : vector<1x2x2x128xf32>
    %183 = vector.multi_reduction <maximumf>, %182, %cst_274 [2] : vector<1x2x2x2x128xf32> to vector<1x2x2x128xf32>
    %cst_275 = arith.constant 0.000000e+00 : f32
    %184 = vector.broadcast %cst_275 : f32 to vector<1x4x4x128xf32>
    %c0_276 = arith.constant 0 : index
    %c0_277 = arith.constant 0 : index
    %c0_278 = arith.constant 0 : index
    %c0_279 = arith.constant 0 : index
    %185 = vector.load %arg32[%c0_276, %c0_277, %c0_278, %c0_279] : memref<1x4x4x128xf32, #tpu.memory_space<vmem>>, vector<1x4x4x128xf32>
    tpu.vector_store %arg32[%c0_276, %c0_277, %c0_278, %c0_279], %184 {strides = array<i32>} : memref<1x4x4x128xf32, #tpu.memory_space<vmem>>, vector<1x4x4x128xf32>,
    %c0_280 = arith.constant 0 : index
    %c1_281 = arith.constant 1 : index
    %c1_282 = arith.constant 1 : index
    %c0_283 = arith.constant 0 : index
    %186 = vector.load %arg32[%c0_280, %c1_281, %c1_282, %c0_283] : memref<1x4x4x128xf32, #tpu.memory_space<vmem>>, vector<1x2x2x128xf32>
    tpu.vector_store %arg32[%c0_280, %c1_281, %c1_282, %c0_283], %183 {strides = array<i32>} : memref<1x4x4x128xf32, #tpu.memory_space<vmem>>, vector<1x2x2x128xf32>,
    %c0_284 = arith.constant 0 : index
    %c0_285 = arith.constant 0 : index
    %c0_286 = arith.constant 0 : index
    %c0_287 = arith.constant 0 : index
    %187 = vector.load %arg32[%c0_284, %c0_285, %c0_286, %c0_287] : memref<1x4x4x128xf32, #tpu.memory_space<vmem>>, vector<1x2x2x128xf32>
    %188 = vector.shape_cast %187 : vector<1x2x2x128xf32> to vector<4x128xf32>
    %c0_288 = arith.constant 0 : index
    %c0_289 = arith.constant 0 : index
    %c1_290 = arith.constant 1 : index
    %c0_291 = arith.constant 0 : index
    %189 = vector.load %arg32[%c0_288, %c0_289, %c1_290, %c0_291] : memref<1x4x4x128xf32, #tpu.memory_space<vmem>>, vector<1x2x2x128xf32>
    %190 = vector.shape_cast %189 : vector<1x2x2x128xf32> to vector<4x128xf32>
    %c0_292 = arith.constant 0 : index
    %c0_293 = arith.constant 0 : index
    %c2_294 = arith.constant 2 : index
    %c0_295 = arith.constant 0 : index
    %191 = vector.load %arg32[%c0_292, %c0_293, %c2_294, %c0_295] : memref<1x4x4x128xf32, #tpu.memory_space<vmem>>, vector<1x2x2x128xf32>
    %192 = vector.shape_cast %191 : vector<1x2x2x128xf32> to vector<4x128xf32>
    %c0_296 = arith.constant 0 : index
    %c1_297 = arith.constant 1 : index
    %c0_298 = arith.constant 0 : index
    %c0_299 = arith.constant 0 : index
    %193 = vector.load %arg32[%c0_296, %c1_297, %c0_298, %c0_299] : memref<1x4x4x128xf32, #tpu.memory_space<vmem>>, vector<1x2x2x128xf32>
    %194 = vector.shape_cast %193 : vector<1x2x2x128xf32> to vector<4x128xf32>
    %c0_300 = arith.constant 0 : index
    %c1_301 = arith.constant 1 : index
    %c1_302 = arith.constant 1 : index
    %c0_303 = arith.constant 0 : index
    %195 = vector.load %arg32[%c0_300, %c1_301, %c1_302, %c0_303] : memref<1x4x4x128xf32, #tpu.memory_space<vmem>>, vector<1x2x2x128xf32>
    %196 = vector.shape_cast %195 : vector<1x2x2x128xf32> to vector<4x128xf32>
    %c0_304 = arith.constant 0 : index
    %c1_305 = arith.constant 1 : index
    %c2_306 = arith.constant 2 : index
    %c0_307 = arith.constant 0 : index
    %197 = vector.load %arg32[%c0_304, %c1_305, %c2_306, %c0_307] : memref<1x4x4x128xf32, #tpu.memory_space<vmem>>, vector<1x2x2x128xf32>
    %198 = vector.shape_cast %197 : vector<1x2x2x128xf32> to vector<4x128xf32>
    %c0_308 = arith.constant 0 : index
    %c2_309 = arith.constant 2 : index
    %c0_310 = arith.constant 0 : index
    %c0_311 = arith.constant 0 : index
    %199 = vector.load %arg32[%c0_308, %c2_309, %c0_310, %c0_311] : memref<1x4x4x128xf32, #tpu.memory_space<vmem>>, vector<1x2x2x128xf32>
    %200 = vector.shape_cast %199 : vector<1x2x2x128xf32> to vector<4x128xf32>
    %c0_312 = arith.constant 0 : index
    %c2_313 = arith.constant 2 : index
    %c1_314 = arith.constant 1 : index
    %c0_315 = arith.constant 0 : index
    %201 = vector.load %arg32[%c0_312, %c2_313, %c1_314, %c0_315] : memref<1x4x4x128xf32, #tpu.memory_space<vmem>>, vector<1x2x2x128xf32>
    %202 = vector.shape_cast %201 : vector<1x2x2x128xf32> to vector<4x128xf32>
    %c0_316 = arith.constant 0 : index
    %c2_317 = arith.constant 2 : index
    %c2_318 = arith.constant 2 : index
    %c0_319 = arith.constant 0 : index
    %203 = vector.load %arg32[%c0_316, %c2_317, %c2_318, %c0_319] : memref<1x4x4x128xf32, #tpu.memory_space<vmem>>, vector<1x2x2x128xf32>
    %204 = vector.shape_cast %203 : vector<1x2x2x128xf32> to vector<4x128xf32>
    %205 = tpu.concatenate %188, %190, %192, %194, %196, %198, %200, %202, %204 in 1 : vector<4x128xf32>, vector<4x128xf32>, vector<4x128xf32>, vector<4x128xf32>, vector<4x128xf32>, vector<4x128xf32>, vector<4x128xf32>, vector<4x128xf32>, vector<4x128xf32> -> vector<4x1152xf32>
    %206 = arith.truncf %205 : vector<4x1152xf32> to vector<4x1152xbf16>
    %c0_320 = arith.constant 0 : index
    %c0_321 = arith.constant 0 : index
    %207 = vector.load %arg14[%c0_320, %c0_321] : memref<1152x128xbf16, #tpu.memory_space<vmem>>, vector<1152x128xbf16>
    %cst_322 = arith.constant dense<0.000000e+00> : vector<4x128xf32>
    %208 = tpu.matmul %206, %207, %cst_322 {dimension_numbers = #tpu.dot_dimension_numbers<[1], [0], [0], [1], [0, 0, 1, 1], [], []>} : vector<4x1152xbf16>, vector<1152x128xbf16>, vector<4x128xf32> -> vector<4x128xf32>
    %c0_323 = arith.constant 0 : index
    %c0_324 = arith.constant 0 : index
    %209 = vector.load %arg15[%c0_323, %c0_324] : memref<1x128xf32, #tpu.memory_space<vmem>>, vector<1x128xf32>
    %210 = vector.broadcast %209 : vector<1x128xf32> to vector<4x128xf32>
    %211 = arith.addf %208, %210 : vector<4x128xf32>
    %cst_325 = arith.constant 0.000000e+00 : f32
    %212 = vector.broadcast %cst_325 : f32 to vector<4x128xf32>
    %213 = arith.maximumf %211, %212 : vector<4x128xf32>
    %214 = vector.shape_cast %213 : vector<4x128xf32> to vector<1x2x2x128xf32>
    %cst_326 = arith.constant 0.000000e+00 : f32
    %215 = vector.broadcast %cst_326 : f32 to vector<1x4x4x128xf32>
    %c0_327 = arith.constant 0 : index
    %c0_328 = arith.constant 0 : index
    %c0_329 = arith.constant 0 : index
    %c0_330 = arith.constant 0 : index
    %216 = vector.load %arg33[%c0_327, %c0_328, %c0_329, %c0_330] : memref<1x4x4x128xf32, #tpu.memory_space<vmem>>, vector<1x4x4x128xf32>
    tpu.vector_store %arg33[%c0_327, %c0_328, %c0_329, %c0_330], %215 {strides = array<i32>} : memref<1x4x4x128xf32, #tpu.memory_space<vmem>>, vector<1x4x4x128xf32>,
    %c0_331 = arith.constant 0 : index
    %c1_332 = arith.constant 1 : index
    %c1_333 = arith.constant 1 : index
    %c0_334 = arith.constant 0 : index
    %217 = vector.load %arg33[%c0_331, %c1_332, %c1_333, %c0_334] : memref<1x4x4x128xf32, #tpu.memory_space<vmem>>, vector<1x2x2x128xf32>
    tpu.vector_store %arg33[%c0_331, %c1_332, %c1_333, %c0_334], %214 {strides = array<i32>} : memref<1x4x4x128xf32, #tpu.memory_space<vmem>>, vector<1x2x2x128xf32>,
    %c0_335 = arith.constant 0 : index
    %c0_336 = arith.constant 0 : index
    %c0_337 = arith.constant 0 : index
    %c0_338 = arith.constant 0 : index
    %218 = vector.load %arg33[%c0_335, %c0_336, %c0_337, %c0_338] : memref<1x4x4x128xf32, #tpu.memory_space<vmem>>, vector<1x2x2x128xf32>
    %219 = vector.shape_cast %218 : vector<1x2x2x128xf32> to vector<4x128xf32>
    %c0_339 = arith.constant 0 : index
    %c0_340 = arith.constant 0 : index
    %c1_341 = arith.constant 1 : index
    %c0_342 = arith.constant 0 : index
    %220 = vector.load %arg33[%c0_339, %c0_340, %c1_341, %c0_342] : memref<1x4x4x128xf32, #tpu.memory_space<vmem>>, vector<1x2x2x128xf32>
    %221 = vector.shape_cast %220 : vector<1x2x2x128xf32> to vector<4x128xf32>
    %c0_343 = arith.constant 0 : index
    %c0_344 = arith.constant 0 : index
    %c2_345 = arith.constant 2 : index
    %c0_346 = arith.constant 0 : index
    %222 = vector.load %arg33[%c0_343, %c0_344, %c2_345, %c0_346] : memref<1x4x4x128xf32, #tpu.memory_space<vmem>>, vector<1x2x2x128xf32>
    %223 = vector.shape_cast %222 : vector<1x2x2x128xf32> to vector<4x128xf32>
    %c0_347 = arith.constant 0 : index
    %c1_348 = arith.constant 1 : index
    %c0_349 = arith.constant 0 : index
    %c0_350 = arith.constant 0 : index
    %224 = vector.load %arg33[%c0_347, %c1_348, %c0_349, %c0_350] : memref<1x4x4x128xf32, #tpu.memory_space<vmem>>, vector<1x2x2x128xf32>
    %225 = vector.shape_cast %224 : vector<1x2x2x128xf32> to vector<4x128xf32>
    %c0_351 = arith.constant 0 : index
    %c1_352 = arith.constant 1 : index
    %c1_353 = arith.constant 1 : index
    %c0_354 = arith.constant 0 : index
    %226 = vector.load %arg33[%c0_351, %c1_352, %c1_353, %c0_354] : memref<1x4x4x128xf32, #tpu.memory_space<vmem>>, vector<1x2x2x128xf32>
    %227 = vector.shape_cast %226 : vector<1x2x2x128xf32> to vector<4x128xf32>
    %c0_355 = arith.constant 0 : index
    %c1_356 = arith.constant 1 : index
    %c2_357 = arith.constant 2 : index
    %c0_358 = arith.constant 0 : index
    %228 = vector.load %arg33[%c0_355, %c1_356, %c2_357, %c0_358] : memref<1x4x4x128xf32, #tpu.memory_space<vmem>>, vector<1x2x2x128xf32>
    %229 = vector.shape_cast %228 : vector<1x2x2x128xf32> to vector<4x128xf32>
    %c0_359 = arith.constant 0 : index
    %c2_360 = arith.constant 2 : index
    %c0_361 = arith.constant 0 : index
    %c0_362 = arith.constant 0 : index
    %230 = vector.load %arg33[%c0_359, %c2_360, %c0_361, %c0_362] : memref<1x4x4x128xf32, #tpu.memory_space<vmem>>, vector<1x2x2x128xf32>
    %231 = vector.shape_cast %230 : vector<1x2x2x128xf32> to vector<4x128xf32>
    %c0_363 = arith.constant 0 : index
    %c2_364 = arith.constant 2 : index
    %c1_365 = arith.constant 1 : index
    %c0_366 = arith.constant 0 : index
    %232 = vector.load %arg33[%c0_363, %c2_364, %c1_365, %c0_366] : memref<1x4x4x128xf32, #tpu.memory_space<vmem>>, vector<1x2x2x128xf32>
    %233 = vector.shape_cast %232 : vector<1x2x2x128xf32> to vector<4x128xf32>
    %c0_367 = arith.constant 0 : index
    %c2_368 = arith.constant 2 : index
    %c2_369 = arith.constant 2 : index
    %c0_370 = arith.constant 0 : index
    %234 = vector.load %arg33[%c0_367, %c2_368, %c2_369, %c0_370] : memref<1x4x4x128xf32, #tpu.memory_space<vmem>>, vector<1x2x2x128xf32>
    %235 = vector.shape_cast %234 : vector<1x2x2x128xf32> to vector<4x128xf32>
    %236 = tpu.concatenate %219, %221, %223, %225, %227, %229, %231, %233, %235 in 1 : vector<4x128xf32>, vector<4x128xf32>, vector<4x128xf32>, vector<4x128xf32>, vector<4x128xf32>, vector<4x128xf32>, vector<4x128xf32>, vector<4x128xf32>, vector<4x128xf32> -> vector<4x1152xf32>
    %237 = arith.truncf %236 : vector<4x1152xf32> to vector<4x1152xbf16>
    %c0_371 = arith.constant 0 : index
    %c0_372 = arith.constant 0 : index
    %238 = vector.load %arg16[%c0_371, %c0_372] : memref<1152x128xbf16, #tpu.memory_space<vmem>>, vector<1152x128xbf16>
    %cst_373 = arith.constant dense<0.000000e+00> : vector<4x128xf32>
    %239 = tpu.matmul %237, %238, %cst_373 {dimension_numbers = #tpu.dot_dimension_numbers<[1], [0], [0], [1], [0, 0, 1, 1], [], []>} : vector<4x1152xbf16>, vector<1152x128xbf16>, vector<4x128xf32> -> vector<4x128xf32>
    %c0_374 = arith.constant 0 : index
    %c0_375 = arith.constant 0 : index
    %240 = vector.load %arg17[%c0_374, %c0_375] : memref<1x128xf32, #tpu.memory_space<vmem>>, vector<1x128xf32>
    %241 = vector.broadcast %240 : vector<1x128xf32> to vector<4x128xf32>
    %242 = arith.addf %239, %241 : vector<4x128xf32>
    %243 = vector.shape_cast %183 : vector<1x2x2x128xf32> to vector<4x128xf32>
    %244 = arith.addf %242, %243 : vector<4x128xf32>
    %cst_376 = arith.constant 0.000000e+00 : f32
    %245 = vector.broadcast %cst_376 : f32 to vector<4x128xf32>
    %246 = arith.maximumf %244, %245 : vector<4x128xf32>
    %247 = vector.shape_cast %246 : vector<4x128xf32> to vector<1x4x128xf32>
    %cst_377 = arith.constant dense<0xFF800000> : vector<1x128xf32>
    %248 = vector.multi_reduction <maximumf>, %247, %cst_377 [1] : vector<1x4x128xf32> to vector<1x128xf32>
    %249 = arith.truncf %248 : vector<1x128xf32> to vector<1x128xbf16>
    %c0_378 = arith.constant 0 : index
    %c0_379 = arith.constant 0 : index
    %250 = vector.load %arg18[%c0_378, %c0_379] : memref<128x128xbf16, #tpu.memory_space<vmem>>, vector<128x128xbf16>
    %cst_380 = arith.constant dense<0.000000e+00> : vector<1x128xf32>
    %251 = tpu.matmul %249, %250, %cst_380 {dimension_numbers = #tpu.dot_dimension_numbers<[1], [0], [0], [1], [0, 0, 1, 1], [], []>} : vector<1x128xbf16>, vector<128x128xbf16>, vector<1x128xf32> -> vector<1x128xf32>
    %c0_381 = arith.constant 0 : index
    %c0_382 = arith.constant 0 : index
    %252 = vector.load %arg19[%c0_381, %c0_382] : memref<1x128xf32, #tpu.memory_space<vmem>>, vector<1x128xf32>
    %253 = arith.addf %251, %252 : vector<1x128xf32>
    %cst_383 = arith.constant 0.000000e+00 : f32
    %254 = vector.broadcast %cst_383 : f32 to vector<1x128xf32>
    %255 = arith.maximumf %253, %254 : vector<1x128xf32>
    %256 = arith.truncf %255 : vector<1x128xf32> to vector<1x128xbf16>
    %c0_384 = arith.constant 0 : index
    %c0_385 = arith.constant 0 : index
    %257 = vector.load %arg20[%c0_384, %c0_385] : memref<128x128xbf16, #tpu.memory_space<vmem>>, vector<128x128xbf16>
    %cst_386 = arith.constant dense<0.000000e+00> : vector<1x128xf32>
    %258 = tpu.matmul %256, %257, %cst_386 {dimension_numbers = #tpu.dot_dimension_numbers<[1], [0], [0], [1], [0, 0, 1, 1], [], []>} : vector<1x128xbf16>, vector<128x128xbf16>, vector<1x128xf32> -> vector<1x128xf32>
    %c0_387 = arith.constant 0 : index
    %c0_388 = arith.constant 0 : index
    %259 = vector.load %arg21[%c0_387, %c0_388] : memref<1x128xf32, #tpu.memory_space<vmem>>, vector<1x128xf32>
    %260 = arith.addf %258, %259 : vector<1x128xf32>
    %261 = arith.addf %260, %248 : vector<1x128xf32>
    %cst_389 = arith.constant 0.000000e+00 : f32
    %262 = vector.broadcast %cst_389 : f32 to vector<1x128xf32>
    %263 = arith.maximumf %261, %262 : vector<1x128xf32>
    %264 = arith.truncf %263 : vector<1x128xf32> to vector<1x128xbf16>
    %c0_390 = arith.constant 0 : index
    %c0_391 = arith.constant 0 : index
    %265 = vector.load %arg22[%c0_390, %c0_391] : memref<128x128xbf16, #tpu.memory_space<vmem>>, vector<128x128xbf16>
    %cst_392 = arith.constant dense<0.000000e+00> : vector<1x128xf32>
    %266 = tpu.matmul %264, %265, %cst_392 {dimension_numbers = #tpu.dot_dimension_numbers<[1], [0], [0], [1], [0, 0, 1, 1], [], []>} : vector<1x128xbf16>, vector<128x128xbf16>, vector<1x128xf32> -> vector<1x128xf32>
    %c0_393 = arith.constant 0 : index
    %c0_394 = arith.constant 0 : index
    %267 = vector.load %arg23[%c0_393, %c0_394] : memref<1x128xf32, #tpu.memory_space<vmem>>, vector<1x128xf32>
    %268 = arith.addf %266, %267 : vector<1x128xf32>
    %cst_395 = arith.constant 0.000000e+00 : f32
    %269 = vector.broadcast %cst_395 : f32 to vector<1x128xf32>
    %270 = arith.maximumf %268, %269 : vector<1x128xf32>
    %271 = arith.truncf %270 : vector<1x128xf32> to vector<1x128xbf16>
    %c0_396 = arith.constant 0 : index
    %c0_397 = arith.constant 0 : index
    %272 = vector.load %arg24[%c0_396, %c0_397] : memref<128x128xbf16, #tpu.memory_space<vmem>>, vector<128x128xbf16>
    %cst_398 = arith.constant dense<0.000000e+00> : vector<1x128xf32>
    %273 = tpu.matmul %271, %272, %cst_398 {dimension_numbers = #tpu.dot_dimension_numbers<[1], [0], [0], [1], [0, 0, 1, 1], [], []>} : vector<1x128xbf16>, vector<128x128xbf16>, vector<1x128xf32> -> vector<1x128xf32>
    %c0_399 = arith.constant 0 : index
    %c0_400 = arith.constant 0 : index
    %274 = vector.load %arg25[%c0_399, %c0_400] : memref<1x128xf32, #tpu.memory_space<vmem>>, vector<1x128xf32>
    %275 = arith.addf %273, %274 : vector<1x128xf32>
    %276 = vector.shape_cast %275 : vector<1x128xf32> to vector<1x1x128xf32>
    %c0_401 = arith.constant 0 : index
    %c0_402 = arith.constant 0 : index
    %c0_403 = arith.constant 0 : index
    %277 = vector.load %arg26[%c0_401, %c0_402, %c0_403] : memref<1x1x128xf32, #tpu.memory_space<vmem>>, vector<1x1x128xf32>
    tpu.vector_store %arg26[%c0_401, %c0_402, %c0_403], %276 {strides = array<i32>} : memref<1x1x128xf32, #tpu.memory_space<vmem>>, vector<1x1x128xf32>,
    return
  }
  func.func @transform_0(%arg0: i32) -> (i32, i32, i32, i32) {
    %c0_i32 = arith.constant 0 : i32
    %c0_i32_0 = arith.constant 0 : i32
    %c0_i32_1 = arith.constant 0 : i32
    %c0_i32_2 = arith.constant 0 : i32
    return %arg0, %c0_i32, %c0_i32_0, %c0_i32_1 : i32, i32, i32, i32
  }
  func.func @transform_1(%arg0: i32) -> (i32, i32) {
    %c0_i32 = arith.constant 0 : i32
    %c0_i32_0 = arith.constant 0 : i32
    %c0_i32_1 = arith.constant 0 : i32
    return %c0_i32, %c0_i32_0 : i32, i32
  }
  func.func @transform_2(%arg0: i32) -> (i32, i32) {
    %c0_i32 = arith.constant 0 : i32
    %c0_i32_0 = arith.constant 0 : i32
    %c0_i32_1 = arith.constant 0 : i32
    return %c0_i32, %c0_i32_0 : i32, i32
  }
  func.func @transform_3(%arg0: i32) -> (i32, i32) {
    %c0_i32 = arith.constant 0 : i32
    %c0_i32_0 = arith.constant 0 : i32
    %c0_i32_1 = arith.constant 0 : i32
    return %c0_i32, %c0_i32_0 : i32, i32
  }
  func.func @transform_4(%arg0: i32) -> (i32, i32) {
    %c0_i32 = arith.constant 0 : i32
    %c0_i32_0 = arith.constant 0 : i32
    %c0_i32_1 = arith.constant 0 : i32
    return %c0_i32, %c0_i32_0 : i32, i32
  }
  func.func @transform_5(%arg0: i32) -> (i32, i32) {
    %c0_i32 = arith.constant 0 : i32
    %c0_i32_0 = arith.constant 0 : i32
    %c0_i32_1 = arith.constant 0 : i32
    return %c0_i32, %c0_i32_0 : i32, i32
  }
  func.func @transform_6(%arg0: i32) -> (i32, i32) {
    %c0_i32 = arith.constant 0 : i32
    %c0_i32_0 = arith.constant 0 : i32
    %c0_i32_1 = arith.constant 0 : i32
    return %c0_i32, %c0_i32_0 : i32, i32
  }
  func.func @transform_7(%arg0: i32) -> (i32, i32) {
    %c0_i32 = arith.constant 0 : i32
    %c0_i32_0 = arith.constant 0 : i32
    %c0_i32_1 = arith.constant 0 : i32
    return %c0_i32, %c0_i32_0 : i32, i32
  }
  func.func @transform_8(%arg0: i32) -> (i32, i32) {
    %c0_i32 = arith.constant 0 : i32
    %c0_i32_0 = arith.constant 0 : i32
    %c0_i32_1 = arith.constant 0 : i32
    return %c0_i32, %c0_i32_0 : i32, i32
  }
  func.func @transform_9(%arg0: i32) -> (i32, i32) {
    %c0_i32 = arith.constant 0 : i32
    %c0_i32_0 = arith.constant 0 : i32
    %c0_i32_1 = arith.constant 0 : i32
    return %c0_i32, %c0_i32_0 : i32, i32
  }
  func.func @transform_10(%arg0: i32) -> (i32, i32) {
    %c0_i32 = arith.constant 0 : i32
    %c0_i32_0 = arith.constant 0 : i32
    %c0_i32_1 = arith.constant 0 : i32
    return %c0_i32, %c0_i32_0 : i32, i32
  }
  func.func @transform_11(%arg0: i32) -> (i32, i32) {
    %c0_i32 = arith.constant 0 : i32
    %c0_i32_0 = arith.constant 0 : i32
    %c0_i32_1 = arith.constant 0 : i32
    return %c0_i32, %c0_i32_0 : i32, i32
  }
  func.func @transform_12(%arg0: i32) -> (i32, i32) {
    %c0_i32 = arith.constant 0 : i32
    %c0_i32_0 = arith.constant 0 : i32
    %c0_i32_1 = arith.constant 0 : i32
    return %c0_i32, %c0_i32_0 : i32, i32
  }
  func.func @transform_13(%arg0: i32) -> (i32, i32) {
    %c0_i32 = arith.constant 0 : i32
    %c0_i32_0 = arith.constant 0 : i32
    %c0_i32_1 = arith.constant 0 : i32
    return %c0_i32, %c0_i32_0 : i32, i32
  }
  func.func @transform_14(%arg0: i32) -> (i32, i32) {
    %c0_i32 = arith.constant 0 : i32
    %c0_i32_0 = arith.constant 0 : i32
    %c0_i32_1 = arith.constant 0 : i32
    return %c0_i32, %c0_i32_0 : i32, i32
  }
  func.func @transform_15(%arg0: i32) -> (i32, i32) {
    %c0_i32 = arith.constant 0 : i32
    %c0_i32_0 = arith.constant 0 : i32
    %c0_i32_1 = arith.constant 0 : i32
    return %c0_i32, %c0_i32_0 : i32, i32
  }
  func.func @transform_16(%arg0: i32) -> (i32, i32) {
    %c0_i32 = arith.constant 0 : i32
    %c0_i32_0 = arith.constant 0 : i32
    %c0_i32_1 = arith.constant 0 : i32
    return %c0_i32, %c0_i32_0 : i32, i32
  }
  func.func @transform_17(%arg0: i32) -> (i32, i32) {
    %c0_i32 = arith.constant 0 : i32
    %c0_i32_0 = arith.constant 0 : i32
    %c0_i32_1 = arith.constant 0 : i32
    return %c0_i32, %c0_i32_0 : i32, i32
  }
  func.func @transform_18(%arg0: i32) -> (i32, i32) {
    %c0_i32 = arith.constant 0 : i32
    %c0_i32_0 = arith.constant 0 : i32
    %c0_i32_1 = arith.constant 0 : i32
    return %c0_i32, %c0_i32_0 : i32, i32
  }
  func.func @transform_19(%arg0: i32) -> (i32, i32) {
    %c0_i32 = arith.constant 0 : i32
    %c0_i32_0 = arith.constant 0 : i32
    %c0_i32_1 = arith.constant 0 : i32
    return %c0_i32, %c0_i32_0 : i32, i32
  }
  func.func @transform_20(%arg0: i32) -> (i32, i32) {
    %c0_i32 = arith.constant 0 : i32
    %c0_i32_0 = arith.constant 0 : i32
    %c0_i32_1 = arith.constant 0 : i32
    return %c0_i32, %c0_i32_0 : i32, i32
  }
  func.func @transform_21(%arg0: i32) -> (i32, i32) {
    %c0_i32 = arith.constant 0 : i32
    %c0_i32_0 = arith.constant 0 : i32
    %c0_i32_1 = arith.constant 0 : i32
    return %c0_i32, %c0_i32_0 : i32, i32
  }
  func.func @transform_22(%arg0: i32) -> (i32, i32) {
    %c0_i32 = arith.constant 0 : i32
    %c0_i32_0 = arith.constant 0 : i32
    %c0_i32_1 = arith.constant 0 : i32
    return %c0_i32, %c0_i32_0 : i32, i32
  }
  func.func @transform_23(%arg0: i32) -> (i32, i32) {
    %c0_i32 = arith.constant 0 : i32
    %c0_i32_0 = arith.constant 0 : i32
    %c0_i32_1 = arith.constant 0 : i32
    return %c0_i32, %c0_i32_0 : i32, i32
  }
  func.func @transform_24(%arg0: i32) -> (i32, i32) {
    %c0_i32 = arith.constant 0 : i32
    %c0_i32_0 = arith.constant 0 : i32
    %c0_i32_1 = arith.constant 0 : i32
    return %c0_i32, %c0_i32_0 : i32, i32
  }
  func.func @transform_25(%arg0: i32) -> (i32, i32, i32) {
    %c0_i32 = arith.constant 0 : i32
    %c0_i32_0 = arith.constant 0 : i32
    %c0_i32_1 = arith.constant 0 : i32
    return %arg0, %c0_i32, %c0_i32_0 : i32, i32, i32
  }
}

</mosaic_0001>

<llo_original>
// kernel: mini_resnet.1
$region0: #{mini_resnet.1}
  #allocation0 [shape = 'u32[]', space=smem, size = 0x4, offset = 0x4, fixed_abs, tag = 'smem constant byte address 0x4 - core index']
  #allocation1 [shape = 'u32[72,128]{1,0:T(1,128)}', space=vmem, size = 0x9000, scoped, tag = 'internal scratch']
  #allocation2 [shape = 'f32[1,18,18,32]{3,2,1,0:T(8,128)}', space=vmem, size = 0x36000, scoped, tag = 'scratch operand']
  #allocation3 [shape = 'f32[1,10,10,32]{3,2,1,0:T(8,128)}', space=vmem, size = 0x14000, scoped, tag = 'scratch operand']
  #allocation4 [shape = 'f32[1,10,10,64]{3,2,1,0:T(8,128)}', space=vmem, size = 0x14000, scoped, tag = 'scratch operand']
  #allocation5 [shape = 'f32[1,6,6,64]{3,2,1,0:T(8,128)}', space=vmem, size = 0x6000, scoped, tag = 'scratch operand']
  #allocation6 [shape = 'f32[1,6,6,128]{3,2,1,0:T(8,128)}', space=vmem, size = 0x6000, scoped, tag = 'scratch operand']
  #allocation7 [shape = 'f32[1,4,4,128]{3,2,1,0:T(4,128)}', space=vmem, size = 0x2000, scoped, tag = 'scratch operand']
  #allocation8 [shape = 'f32[1,4,4,128]{3,2,1,0:T(4,128)}', space=vmem, size = 0x2000, scoped, tag = 'scratch operand']
  %s0 = inlined_call_operand.vmem [shape: bf16[2,16,16,27], index: 0, kind: input, shape index: {}]
  %s1 = inlined_call_operand.vmem [shape: bf16[27,32], index: 1, kind: input, shape index: {}]
  %s2 = inlined_call_operand.vmem [shape: f32[1,32], index: 2, kind: input, shape index: {}]
  %s3 = inlined_call_operand.vmem [shape: bf16[291,32], index: 3, kind: input, shape index: {}]
  %s4 = inlined_call_operand.vmem [shape: f32[1,32], index: 4, kind: input, shape index: {}]
  %s5 = inlined_call_operand.vmem [shape: bf16[288,64], index: 5, kind: input, shape index: {}]
  %s6 = inlined_call_operand.vmem [shape: f32[1,64], index: 6, kind: input, shape index: {}]
  %s7 = inlined_call_operand.vmem [shape: bf16[608,64], index: 7, kind: input, shape index: {}]
  %s8 = inlined_call_operand.vmem [shape: f32[1,64], index: 8, kind: input, shape index: {}]
  %s9 = inlined_call_operand.vmem [shape: bf16[576,128], index: 9, kind: input, shape index: {}]
  %s10 = inlined_call_operand.vmem [shape: f32[1,128], index: 10, kind: input, shape index: {}]
  %s11 = inlined_call_operand.vmem [shape: bf16[1216,128], index: 11, kind: input, shape index: {}]
  %s12 = inlined_call_operand.vmem [shape: f32[1,128], index: 12, kind: input, shape index: {}]
  %s13 = inlined_call_operand.vmem [shape: bf16[1152,128], index: 13, kind: input, shape index: {}]
  %s14 = inlined_call_operand.vmem [shape: f32[1,128], index: 14, kind: input, shape index: {}]
  %s15 = inlined_call_operand.vmem [shape: bf16[1152,128], index: 15, kind: input, shape index: {}]
  %s16 = inlined_call_operand.vmem [shape: f32[1,128], index: 16, kind: input, shape index: {}]
  %s17 = inlined_call_operand.vmem [shape: bf16[128,128], index: 17, kind: input, shape index: {}]
  %s18 = inlined_call_operand.vmem [shape: f32[1,128], index: 18, kind: input, shape index: {}]
  %s19 = inlined_call_operand.vmem [shape: bf16[128,128], index: 19, kind: input, shape index: {}]
  %s20 = inlined_call_operand.vmem [shape: f32[1,128], index: 20, kind: input, shape index: {}]
  %s21 = inlined_call_operand.vmem [shape: bf16[128,128], index: 21, kind: input, shape index: {}]
  %s22 = inlined_call_operand.vmem [shape: f32[1,128], index: 22, kind: input, shape index: {}]
  %s23 = inlined_call_operand.vmem [shape: bf16[128,128], index: 23, kind: input, shape index: {}]
  %s24 = inlined_call_operand.vmem [shape: f32[1,128], index: 24, kind: input, shape index: {}]
  %s25 = inlined_call_operand.hbm [shape: f32[2,1,128], index: 25, kind: output, shape index: {}]
  %s26 = sld [smem:[#allocation0]]
  $region133: #{mini_resnet.1} parent=0
    _
  %s28 = ssub.s32 1, %s26
  %s29 = scalar_select 0, %s28, %s26
  $region1: #{mini_resnet.1} parent=0
    #allocation9 [shape = 'u8[1024]{0}', space=vmem, size = 0x400, scoped, tag = 'output window, operand 0']
    #allocation10 [shape = 's32[2]{0}', space=sflag, size = 0x8, scoped, tag = 'scoped memory for mini_resnet.1']
    %30 = vsyncpa [#allocation10], 0
    %s31 = scalar_lea.sflag [#allocation10], 1
    %32 = vsyncpa %s31, 0
    loop: start=0, step=1, limit=4
    $region2: #{mini_resnet.1} parent=1 // loop_pre_header
      _
    $region3: #{mini_resnet.1} parent=1 // loop_header
      %s34 = sphi 0, %s38
      %p35 = scmp.ge.s32.totalorder %s34, 4
      %s44 = sphi 0, %s46
      %s47 = sphi 0, %s44
      %s48 = sphi 0, %s47
      %s64 = sphi 0, %s48
      %s68 = sphi 0, %s68
      %s70 = sphi 0, %s68
      %s71 = sphi 0, %s70
      %s85 = sphi 0, %s71
      %s89 = sphi 0, %s89
      %s91 = sphi 0, %s89
      %s92 = sphi 0, %s91
      %s106 = sphi 0, %s92
      %s110 = sphi 0, %s110
      %s112 = sphi 0, %s110
      %s113 = sphi 0, %s112
      %s127 = sphi 0, %s113
      %s131 = sphi 0, %s131
      %s133 = sphi 0, %s131
      %s134 = sphi 0, %s133
      %s148 = sphi 0, %s134
      %s152 = sphi 0, %s152
      %s154 = sphi 0, %s152
      %s155 = sphi 0, %s154
      %s169 = sphi 0, %s155
      %s173 = sphi 0, %s173
      %s175 = sphi 0, %s173
      %s176 = sphi 0, %s175
      %s190 = sphi 0, %s176
      %s194 = sphi 0, %s194
      %s196 = sphi 0, %s194
      %s197 = sphi 0, %s196
      %s211 = sphi 0, %s197
      %s215 = sphi 0, %s215
      %s217 = sphi 0, %s215
      %s218 = sphi 0, %s217
      %s232 = sphi 0, %s218
      %s236 = sphi 0, %s236
      %s238 = sphi 0, %s236
      %s239 = sphi 0, %s238
      %s253 = sphi 0, %s239
      %s257 = sphi 0, %s257
      %s259 = sphi 0, %s257
      %s260 = sphi 0, %s259
      %s274 = sphi 0, %s260
      %s278 = sphi 0, %s278
      %s280 = sphi 0, %s278
      %s281 = sphi 0, %s280
      %s295 = sphi 0, %s281
      %s299 = sphi 0, %s299
      %s301 = sphi 0, %s299
      %s302 = sphi 0, %s301
      %s316 = sphi 0, %s302
      %s320 = sphi 0, %s320
      %s322 = sphi 0, %s320
      %s323 = sphi 0, %s322
      %s337 = sphi 0, %s323
      %s341 = sphi 0, %s341
      %s343 = sphi 0, %s341
      %s344 = sphi 0, %s343
      %s358 = sphi 0, %s344
      %s362 = sphi 0, %s362
      %s364 = sphi 0, %s362
      %s365 = sphi 0, %s364
      %s379 = sphi 0, %s365
      %s383 = sphi 0, %s383
      %s385 = sphi 0, %s383
      %s386 = sphi 0, %s385
      %s400 = sphi 0, %s386
      %s404 = sphi 0, %s404
      %s406 = sphi 0, %s404
      %s407 = sphi 0, %s406
      %s421 = sphi 0, %s407
      %s425 = sphi 0, %s425
      %s427 = sphi 0, %s425
      %s428 = sphi 0, %s427
      %s442 = sphi 0, %s428
      %s446 = sphi 0, %s446
      %s448 = sphi 0, %s446
      %s449 = sphi 0, %s448
      %s463 = sphi 0, %s449
      %s467 = sphi 0, %s467
      %s469 = sphi 0, %s467
      %s470 = sphi 0, %s469
      %s484 = sphi 0, %s470
      %s488 = sphi 0, %s488
      %s490 = sphi 0, %s488
      %s491 = sphi 0, %s490
      %s505 = sphi 0, %s491
      %s509 = sphi 0, %s509
      %s511 = sphi 0, %s509
      %s512 = sphi 0, %s511
      %s526 = sphi 0, %s512
      %s530 = sphi 0, %s530
      %s532 = sphi 0, %s530
      %s533 = sphi 0, %s532
      %s547 = sphi 0, %s533
      %s551 = sphi 0, %s551
      %s553 = sphi 0, %s551
      %s554 = sphi 0, %s553
      %s568 = sphi 0, %s554
      %s574 = sphi 0, %s576
      %s577 = sphi 0, %s574
      %s578 = sphi 0, %s577
      %s594 = sphi 0, %s578
    $region4: #{mini_resnet.1} parent=1 // loop_header_branch
      %37 = sbr.rel (%p35) target = $region8
    $region5: #{mini_resnet.1} parent=1 // loop_body
      %s39 = ssub.s32 %s34, 1
      %s40 = ssub.s32 %s34, 2
      %s41 = sadd.s32 %s34, 1
      %s42 = ssub.s32 %s34, %s41
      %p43 = scmp.eq.s32.totalorder %s42, 0
      %s45 = sadd.s32 %s44, 1
      %s46 = scalar_select %p43, %s44, %s45
      %p49 = pneg %p43
      %p50 = scmp.eq.s32.totalorder %s34, 1
      %p51 = por %p49, %p50
      %p52 = scmp.ne.s32.totalorder %s44, %s47
      %p53 = scmp.eq.s32.totalorder %s34, 0
      %p54 = por %p52, %p53
      %p55 = scmp.ne.s32.totalorder %s44, %s47
      %p56 = scmp.eq.s32.totalorder %s39, 1
      %p57 = por %p55, %p56
      %p58 = scmp.ne.s32.totalorder %s47, %s48
      %p59 = scmp.eq.s32.totalorder %s39, 0
      %p60 = por %p58, %p59
      %p61 = scmp.ne.s32.totalorder %s47, %s48
      %p62 = scmp.eq.s32.totalorder %s40, 1
      %p63 = por %p61, %p62
      %p65 = scmp.ne.s32.totalorder %s48, %s64
      %p66 = scmp.eq.s32.totalorder %s40, 0
      %p67 = por %p65, %p66
      %s69 = sadd.s32 %s68, 1
      %p72 = scmp.eq.s32.totalorder %s34, 1
      %p73 = scmp.ne.s32.totalorder %s68, %s70
      %p74 = scmp.eq.s32.totalorder %s34, 0
      %p75 = por %p73, %p74
      %p76 = scmp.ne.s32.totalorder %s68, %s70
      %p77 = scmp.eq.s32.totalorder %s39, 1
      %p78 = por %p76, %p77
      %p79 = scmp.ne.s32.totalorder %s70, %s71
      %p80 = scmp.eq.s32.totalorder %s39, 0
      %p81 = por %p79, %p80
      %p82 = scmp.ne.s32.totalorder %s70, %s71
      %p83 = scmp.eq.s32.totalorder %s40, 1
      %p84 = por %p82, %p83
      %p86 = scmp.ne.s32.totalorder %s71, %s85
      %p87 = scmp.eq.s32.totalorder %s40, 0
      %p88 = por %p86, %p87
      %s90 = sadd.s32 %s89, 1
      %p93 = scmp.eq.s32.totalorder %s34, 1
      %p94 = scmp.ne.s32.totalorder %s89, %s91
      %p95 = scmp.eq.s32.totalorder %s34, 0
      %p96 = por %p94, %p95
      %p97 = scmp.ne.s32.totalorder %s89, %s91
      %p98 = scmp.eq.s32.totalorder %s39, 1
      %p99 = por %p97, %p98
      %p100 = scmp.ne.s32.totalorder %s91, %s92
      %p101 = scmp.eq.s32.totalorder %s39, 0
      %p102 = por %p100, %p101
      %p103 = scmp.ne.s32.totalorder %s91, %s92
      %p104 = scmp.eq.s32.totalorder %s40, 1
      %p105 = por %p103, %p104
      %p107 = scmp.ne.s32.totalorder %s92, %s106
      %p108 = scmp.eq.s32.totalorder %s40, 0
      %p109 = por %p107, %p108
      %s111 = sadd.s32 %s110, 1
      %p114 = scmp.eq.s32.totalorder %s34, 1
      %p115 = scmp.ne.s32.totalorder %s110, %s112
      %p116 = scmp.eq.s32.totalorder %s34, 0
      %p117 = por %p115, %p116
      %p118 = scmp.ne.s32.totalorder %s110, %s112
      %p119 = scmp.eq.s32.totalorder %s39, 1
      %p120 = por %p118, %p119
      %p121 = scmp.ne.s32.totalorder %s112, %s113
      %p122 = scmp.eq.s32.totalorder %s39, 0
      %p123 = por %p121, %p122
      %p124 = scmp.ne.s32.totalorder %s112, %s113
      %p125 = scmp.eq.s32.totalorder %s40, 1
      %p126 = por %p124, %p125
      %p128 = scmp.ne.s32.totalorder %s113, %s127
      %p129 = scmp.eq.s32.totalorder %s40, 0
      %p130 = por %p128, %p129
      %s132 = sadd.s32 %s131, 1
      %p135 = scmp.eq.s32.totalorder %s34, 1
      %p136 = scmp.ne.s32.totalorder %s131, %s133
      %p137 = scmp.eq.s32.totalorder %s34, 0
      %p138 = por %p136, %p137
      %p139 = scmp.ne.s32.totalorder %s131, %s133
      %p140 = scmp.eq.s32.totalorder %s39, 1
      %p141 = por %p139, %p140
      %p142 = scmp.ne.s32.totalorder %s133, %s134
      %p143 = scmp.eq.s32.totalorder %s39, 0
      %p144 = por %p142, %p143
      %p145 = scmp.ne.s32.totalorder %s133, %s134
      %p146 = scmp.eq.s32.totalorder %s40, 1
      %p147 = por %p145, %p146
      %p149 = scmp.ne.s32.totalorder %s134, %s148
      %p150 = scmp.eq.s32.totalorder %s40, 0
      %p151 = por %p149, %p150
      %s153 = sadd.s32 %s152, 1
      %p156 = scmp.eq.s32.totalorder %s34, 1
      %p157 = scmp.ne.s32.totalorder %s152, %s154
      %p158 = scmp.eq.s32.totalorder %s34, 0
      %p159 = por %p157, %p158
      %p160 = scmp.ne.s32.totalorder %s152, %s154
      %p161 = scmp.eq.s32.totalorder %s39, 1
      %p162 = por %p160, %p161
      %p163 = scmp.ne.s32.totalorder %s154, %s155
      %p164 = scmp.eq.s32.totalorder %s39, 0
      %p165 = por %p163, %p164
      %p166 = scmp.ne.s32.totalorder %s154, %s155
      %p167 = scmp.eq.s32.totalorder %s40, 1
      %p168 = por %p166, %p167
      %p170 = scmp.ne.s32.totalorder %s155, %s169
      %p171 = scmp.eq.s32.totalorder %s40, 0
      %p172 = por %p170, %p171
      %s174 = sadd.s32 %s173, 1
      %p177 = scmp.eq.s32.totalorder %s34, 1
      %p178 = scmp.ne.s32.totalorder %s173, %s175
      %p179 = scmp.eq.s32.totalorder %s34, 0
      %p180 = por %p178, %p179
      %p181 = scmp.ne.s32.totalorder %s173, %s175
      %p182 = scmp.eq.s32.totalorder %s39, 1
      %p183 = por %p181, %p182
      %p184 = scmp.ne.s32.totalorder %s175, %s176
      %p185 = scmp.eq.s32.totalorder %s39, 0
      %p186 = por %p184, %p185
      %p187 = scmp.ne.s32.totalorder %s175, %s176
      %p188 = scmp.eq.s32.totalorder %s40, 1
      %p189 = por %p187, %p188
      %p191 = scmp.ne.s32.totalorder %s176, %s190
      %p192 = scmp.eq.s32.totalorder %s40, 0
      %p193 = por %p191, %p192
      %s195 = sadd.s32 %s194, 1
      %p198 = scmp.eq.s32.totalorder %s34, 1
      %p199 = scmp.ne.s32.totalorder %s194, %s196
      %p200 = scmp.eq.s32.totalorder %s34, 0
      %p201 = por %p199, %p200
      %p202 = scmp.ne.s32.totalorder %s194, %s196
      %p203 = scmp.eq.s32.totalorder %s39, 1
      %p204 = por %p202, %p203
      %p205 = scmp.ne.s32.totalorder %s196, %s197
      %p206 = scmp.eq.s32.totalorder %s39, 0
      %p207 = por %p205, %p206
      %p208 = scmp.ne.s32.totalorder %s196, %s197
      %p209 = scmp.eq.s32.totalorder %s40, 1
      %p210 = por %p208, %p209
      %p212 = scmp.ne.s32.totalorder %s197, %s211
      %p213 = scmp.eq.s32.totalorder %s40, 0
      %p214 = por %p212, %p213
      %s216 = sadd.s32 %s215, 1
      %p219 = scmp.eq.s32.totalorder %s34, 1
      %p220 = scmp.ne.s32.totalorder %s215, %s217
      %p221 = scmp.eq.s32.totalorder %s34, 0
      %p222 = por %p220, %p221
      %p223 = scmp.ne.s32.totalorder %s215, %s217
      %p224 = scmp.eq.s32.totalorder %s39, 1
      %p225 = por %p223, %p224
      %p226 = scmp.ne.s32.totalorder %s217, %s218
      %p227 = scmp.eq.s32.totalorder %s39, 0
      %p228 = por %p226, %p227
      %p229 = scmp.ne.s32.totalorder %s217, %s218
      %p230 = scmp.eq.s32.totalorder %s40, 1
      %p231 = por %p229, %p230
      %p233 = scmp.ne.s32.totalorder %s218, %s232
      %p234 = scmp.eq.s32.totalorder %s40, 0
      %p235 = por %p233, %p234
      %s237 = sadd.s32 %s236, 1
      %p240 = scmp.eq.s32.totalorder %s34, 1
      %p241 = scmp.ne.s32.totalorder %s236, %s238
      %p242 = scmp.eq.s32.totalorder %s34, 0
      %p243 = por %p241, %p242
      %p244 = scmp.ne.s32.totalorder %s236, %s238
      %p245 = scmp.eq.s32.totalorder %s39, 1
      %p246 = por %p244, %p245
      %p247 = scmp.ne.s32.totalorder %s238, %s239
      %p248 = scmp.eq.s32.totalorder %s39, 0
      %p249 = por %p247, %p248
      %p250 = scmp.ne.s32.totalorder %s238, %s239
      %p251 = scmp.eq.s32.totalorder %s40, 1
      %p252 = por %p250, %p251
      %p254 = scmp.ne.s32.totalorder %s239, %s253
      %p255 = scmp.eq.s32.totalorder %s40, 0
      %p256 = por %p254, %p255
      %s258 = sadd.s32 %s257, 1
      %p261 = scmp.eq.s32.totalorder %s34, 1
      %p262 = scmp.ne.s32.totalorder %s257, %s259
      %p263 = scmp.eq.s32.totalorder %s34, 0
      %p264 = por %p262, %p263
      %p265 = scmp.ne.s32.totalorder %s257, %s259
      %p266 = scmp.eq.s32.totalorder %s39, 1
      %p267 = por %p265, %p266
      %p268 = scmp.ne.s32.totalorder %s259, %s260
      %p269 = scmp.eq.s32.totalorder %s39, 0
      %p270 = por %p268, %p269
      %p271 = scmp.ne.s32.totalorder %s259, %s260
      %p272 = scmp.eq.s32.totalorder %s40, 1
      %p273 = por %p271, %p272
      %p275 = scmp.ne.s32.totalorder %s260, %s274
      %p276 = scmp.eq.s32.totalorder %s40, 0
      %p277 = por %p275, %p276
      %s279 = sadd.s32 %s278, 1
      %p282 = scmp.eq.s32.totalorder %s34, 1
      %p283 = scmp.ne.s32.totalorder %s278, %s280
      %p284 = scmp.eq.s32.totalorder %s34, 0
      %p285 = por %p283, %p284
      %p286 = scmp.ne.s32.totalorder %s278, %s280
      %p287 = scmp.eq.s32.totalorder %s39, 1
      %p288 = por %p286, %p287
      %p289 = scmp.ne.s32.totalorder %s280, %s281
      %p290 = scmp.eq.s32.totalorder %s39, 0
      %p291 = por %p289, %p290
      %p292 = scmp.ne.s32.totalorder %s280, %s281
      %p293 = scmp.eq.s32.totalorder %s40, 1
      %p294 = por %p292, %p293
      %p296 = scmp.ne.s32.totalorder %s281, %s295
      %p297 = scmp.eq.s32.totalorder %s40, 0
      %p298 = por %p296, %p297
      %s300 = sadd.s32 %s299, 1
      %p303 = scmp.eq.s32.totalorder %s34, 1
      %p304 = scmp.ne.s32.totalorder %s299, %s301
      %p305 = scmp.eq.s32.totalorder %s34, 0
      %p306 = por %p304, %p305
      %p307 = scmp.ne.s32.totalorder %s299, %s301
      %p308 = scmp.eq.s32.totalorder %s39, 1
      %p309 = por %p307, %p308
      %p310 = scmp.ne.s32.totalorder %s301, %s302
      %p311 = scmp.eq.s32.totalorder %s39, 0
      %p312 = por %p310, %p311
      %p313 = scmp.ne.s32.totalorder %s301, %s302
      %p314 = scmp.eq.s32.totalorder %s40, 1
      %p315 = por %p313, %p314
      %p317 = scmp.ne.s32.totalorder %s302, %s316
      %p318 = scmp.eq.s32.totalorder %s40, 0
      %p319 = por %p317, %p318
      %s321 = sadd.s32 %s320, 1
      %p324 = scmp.eq.s32.totalorder %s34, 1
      %p325 = scmp.ne.s32.totalorder %s320, %s322
      %p326 = scmp.eq.s32.totalorder %s34, 0
      %p327 = por %p325, %p326
      %p328 = scmp.ne.s32.totalorder %s320, %s322
      %p329 = scmp.eq.s32.totalorder %s39, 1
      %p330 = por %p328, %p329
      %p331 = scmp.ne.s32.totalorder %s322, %s323
      %p332 = scmp.eq.s32.totalorder %s39, 0
      %p333 = por %p331, %p332
      %p334 = scmp.ne.s32.totalorder %s322, %s323
      %p335 = scmp.eq.s32.totalorder %s40, 1
      %p336 = por %p334, %p335
      %p338 = scmp.ne.s32.totalorder %s323, %s337
      %p339 = scmp.eq.s32.totalorder %s40, 0
      %p340 = por %p338, %p339
      %s342 = sadd.s32 %s341, 1
      %p345 = scmp.eq.s32.totalorder %s34, 1
      %p346 = scmp.ne.s32.totalorder %s341, %s343
      %p347 = scmp.eq.s32.totalorder %s34, 0
      %p348 = por %p346, %p347
      %p349 = scmp.ne.s32.totalorder %s341, %s343
      %p350 = scmp.eq.s32.totalorder %s39, 1
      %p351 = por %p349, %p350
      %p352 = scmp.ne.s32.totalorder %s343, %s344
      %p353 = scmp.eq.s32.totalorder %s39, 0
      %p354 = por %p352, %p353
      %p355 = scmp.ne.s32.totalorder %s343, %s344
      %p356 = scmp.eq.s32.totalorder %s40, 1
      %p357 = por %p355, %p356
      %p359 = scmp.ne.s32.totalorder %s344, %s358
      %p360 = scmp.eq.s32.totalorder %s40, 0
      %p361 = por %p359, %p360
      %s363 = sadd.s32 %s362, 1
      %p366 = scmp.eq.s32.totalorder %s34, 1
      %p367 = scmp.ne.s32.totalorder %s362, %s364
      %p368 = scmp.eq.s32.totalorder %s34, 0
      %p369 = por %p367, %p368
      %p370 = scmp.ne.s32.totalorder %s362, %s364
      %p371 = scmp.eq.s32.totalorder %s39, 1
      %p372 = por %p370, %p371
      %p373 = scmp.ne.s32.totalorder %s364, %s365
      %p374 = scmp.eq.s32.totalorder %s39, 0
      %p375 = por %p373, %p374
      %p376 = scmp.ne.s32.totalorder %s364, %s365
      %p377 = scmp.eq.s32.totalorder %s40, 1
      %p378 = por %p376, %p377
      %p380 = scmp.ne.s32.totalorder %s365, %s379
      %p381 = scmp.eq.s32.totalorder %s40, 0
      %p382 = por %p380, %p381
      %s384 = sadd.s32 %s383, 1
      %p387 = scmp.eq.s32.totalorder %s34, 1
      %p388 = scmp.ne.s32.totalorder %s383, %s385
      %p389 = scmp.eq.s32.totalorder %s34, 0
      %p390 = por %p388, %p389
      %p391 = scmp.ne.s32.totalorder %s383, %s385
      %p392 = scmp.eq.s32.totalorder %s39, 1
      %p393 = por %p391, %p392
      %p394 = scmp.ne.s32.totalorder %s385, %s386
      %p395 = scmp.eq.s32.totalorder %s39, 0
      %p396 = por %p394, %p395
      %p397 = scmp.ne.s32.totalorder %s385, %s386
      %p398 = scmp.eq.s32.totalorder %s40, 1
      %p399 = por %p397, %p398
      %p401 = scmp.ne.s32.totalorder %s386, %s400
      %p402 = scmp.eq.s32.totalorder %s40, 0
      %p403 = por %p401, %p402
      %s405 = sadd.s32 %s404, 1
      %p408 = scmp.eq.s32.totalorder %s34, 1
      %p409 = scmp.ne.s32.totalorder %s404, %s406
      %p410 = scmp.eq.s32.totalorder %s34, 0
      %p411 = por %p409, %p410
      %p412 = scmp.ne.s32.totalorder %s404, %s406
      %p413 = scmp.eq.s32.totalorder %s39, 1
      %p414 = por %p412, %p413
      %p415 = scmp.ne.s32.totalorder %s406, %s407
      %p416 = scmp.eq.s32.totalorder %s39, 0
      %p417 = por %p415, %p416
      %p418 = scmp.ne.s32.totalorder %s406, %s407
      %p419 = scmp.eq.s32.totalorder %s40, 1
      %p420 = por %p418, %p419
      %p422 = scmp.ne.s32.totalorder %s407, %s421
      %p423 = scmp.eq.s32.totalorder %s40, 0
      %p424 = por %p422, %p423
      %s426 = sadd.s32 %s425, 1
      %p429 = scmp.eq.s32.totalorder %s34, 1
      %p430 = scmp.ne.s32.totalorder %s425, %s427
      %p431 = scmp.eq.s32.totalorder %s34, 0
      %p432 = por %p430, %p431
      %p433 = scmp.ne.s32.totalorder %s425, %s427
      %p434 = scmp.eq.s32.totalorder %s39, 1
      %p435 = por %p433, %p434
      %p436 = scmp.ne.s32.totalorder %s427, %s428
      %p437 = scmp.eq.s32.totalorder %s39, 0
      %p438 = por %p436, %p437
      %p439 = scmp.ne.s32.totalorder %s427, %s428
      %p440 = scmp.eq.s32.totalorder %s40, 1
      %p441 = por %p439, %p440
      %p443 = scmp.ne.s32.totalorder %s428, %s442
      %p444 = scmp.eq.s32.totalorder %s40, 0
      %p445 = por %p443, %p444
      %s447 = sadd.s32 %s446, 1
      %p450 = scmp.eq.s32.totalorder %s34, 1
      %p451 = scmp.ne.s32.totalorder %s446, %s448
      %p452 = scmp.eq.s32.totalorder %s34, 0
      %p453 = por %p451, %p452
      %p454 = scmp.ne.s32.totalorder %s446, %s448
      %p455 = scmp.eq.s32.totalorder %s39, 1
      %p456 = por %p454, %p455
      %p457 = scmp.ne.s32.totalorder %s448, %s449
      %p458 = scmp.eq.s32.totalorder %s39, 0
      %p459 = por %p457, %p458
      %p460 = scmp.ne.s32.totalorder %s448, %s449
      %p461 = scmp.eq.s32.totalorder %s40, 1
      %p462 = por %p460, %p461
      %p464 = scmp.ne.s32.totalorder %s449, %s463
      %p465 = scmp.eq.s32.totalorder %s40, 0
      %p466 = por %p464, %p465
      %s468 = sadd.s32 %s467, 1
      %p471 = scmp.eq.s32.totalorder %s34, 1
      %p472 = scmp.ne.s32.totalorder %s467, %s469
      %p473 = scmp.eq.s32.totalorder %s34, 0
      %p474 = por %p472, %p473
      %p475 = scmp.ne.s32.totalorder %s467, %s469
      %p476 = scmp.eq.s32.totalorder %s39, 1
      %p477 = por %p475, %p476
      %p478 = scmp.ne.s32.totalorder %s469, %s470
      %p479 = scmp.eq.s32.totalorder %s39, 0
      %p480 = por %p478, %p479
      %p481 = scmp.ne.s32.totalorder %s469, %s470
      %p482 = scmp.eq.s32.totalorder %s40, 1
      %p483 = por %p481, %p482
      %p485 = scmp.ne.s32.totalorder %s470, %s484
      %p486 = scmp.eq.s32.totalorder %s40, 0
      %p487 = por %p485, %p486
      %s489 = sadd.s32 %s488, 1
      %p492 = scmp.eq.s32.totalorder %s34, 1
      %p493 = scmp.ne.s32.totalorder %s488, %s490
      %p494 = scmp.eq.s32.totalorder %s34, 0
      %p495 = por %p493, %p494
      %p496 = scmp.ne.s32.totalorder %s488, %s490
      %p497 = scmp.eq.s32.totalorder %s39, 1
      %p498 = por %p496, %p497
      %p499 = scmp.ne.s32.totalorder %s490, %s491
      %p500 = scmp.eq.s32.totalorder %s39, 0
      %p501 = por %p499, %p500
      %p502 = scmp.ne.s32.totalorder %s490, %s491
      %p503 = scmp.eq.s32.totalorder %s40, 1
      %p504 = por %p502, %p503
      %p506 = scmp.ne.s32.totalorder %s491, %s505
      %p507 = scmp.eq.s32.totalorder %s40, 0
      %p508 = por %p506, %p507
      %s510 = sadd.s32 %s509, 1
      %p513 = scmp.eq.s32.totalorder %s34, 1
      %p514 = scmp.ne.s32.totalorder %s509, %s511
      %p515 = scmp.eq.s32.totalorder %s34, 0
      %p516 = por %p514, %p515
      %p517 = scmp.ne.s32.totalorder %s509, %s511
      %p518 = scmp.eq.s32.totalorder %s39, 1
      %p519 = por %p517, %p518
      %p520 = scmp.ne.s32.totalorder %s511, %s512
      %p521 = scmp.eq.s32.totalorder %s39, 0
      %p522 = por %p520, %p521
      %p523 = scmp.ne.s32.totalorder %s511, %s512
      %p524 = scmp.eq.s32.totalorder %s40, 1
      %p525 = por %p523, %p524
      %p527 = scmp.ne.s32.totalorder %s512, %s526
      %p528 = scmp.eq.s32.totalorder %s40, 0
      %p529 = por %p527, %p528
      %s531 = sadd.s32 %s530, 1
      %p534 = scmp.eq.s32.totalorder %s34, 1
      %p535 = scmp.ne.s32.totalorder %s530, %s532
      %p536 = scmp.eq.s32.totalorder %s34, 0
      %p537 = por %p535, %p536
      %p538 = scmp.ne.s32.totalorder %s530, %s532
      %p539 = scmp.eq.s32.totalorder %s39, 1
      %p540 = por %p538, %p539
      %p541 = scmp.ne.s32.totalorder %s532, %s533
      %p542 = scmp.eq.s32.totalorder %s39, 0
      %p543 = por %p541, %p542
      %p544 = scmp.ne.s32.totalorder %s532, %s533
      %p545 = scmp.eq.s32.totalorder %s40, 1
      %p546 = por %p544, %p545
      %p548 = scmp.ne.s32.totalorder %s533, %s547
      %p549 = scmp.eq.s32.totalorder %s40, 0
      %p550 = por %p548, %p549
      %s552 = sadd.s32 %s551, 1
      %p555 = scmp.eq.s32.totalorder %s34, 1
      %p556 = scmp.ne.s32.totalorder %s551, %s553
      %p557 = scmp.eq.s32.totalorder %s34, 0
      %p558 = por %p556, %p557
      %p559 = scmp.ne.s32.totalorder %s551, %s553
      %p560 = scmp.eq.s32.totalorder %s39, 1
      %p561 = por %p559, %p560
      %p562 = scmp.ne.s32.totalorder %s553, %s554
      %p563 = scmp.eq.s32.totalorder %s39, 0
      %p564 = por %p562, %p563
      %p565 = scmp.ne.s32.totalorder %s553, %s554
      %p566 = scmp.eq.s32.totalorder %s40, 1
      %p567 = por %p565, %p566
      %p569 = scmp.ne.s32.totalorder %s554, %s568
      %p570 = scmp.eq.s32.totalorder %s40, 0
      %p571 = por %p569, %p570
      %s572 = ssub.s32 %s34, %s41
      %p573 = scmp.eq.s32.totalorder %s572, 0
      %s575 = sadd.s32 %s574, 1
      %s576 = scalar_select %p573, %s574, %s575
      %p579 = pneg %p573
      %p580 = scmp.eq.s32.totalorder %s34, 1
      %p581 = por %p579, %p580
      %p582 = scmp.ne.s32.totalorder %s574, %s577
      %p583 = scmp.eq.s32.totalorder %s34, 0
      %p584 = por %p582, %p583
      %p585 = scmp.ne.s32.totalorder %s574, %s577
      %p586 = scmp.eq.s32.totalorder %s39, 1
      %p587 = por %p585, %p586
      %p588 = scmp.ne.s32.totalorder %s577, %s578
      %p589 = scmp.eq.s32.totalorder %s39, 0
      %p590 = por %p588, %p589
      %p591 = scmp.ne.s32.totalorder %s577, %s578
      %p592 = scmp.eq.s32.totalorder %s40, 1
      %p593 = por %p591, %p592
      %p595 = scmp.ne.s32.totalorder %s578, %s594
      %p596 = scmp.eq.s32.totalorder %s40, 0
      %p597 = por %p595, %p596
      %p598 = scmp.le.s32.totalorder 1, %s34
      %p599 = scmp.lt.s32.totalorder %s34, 3
      %p600 = pnand %p598, %p599
      %p601 = pneg %p600
      // Predicated region
      $region9: #{mini_resnet.1} parent=5 // pred_check
        _
      $region10: #{mini_resnet.1} parent=5 // pred_check_branch
        %603 = sbr.rel (%p600) target = $region12
      $region11: #{mini_resnet.1} parent=5 // pred_region
        %s604 = ssub.s32 %s34, 1
        // Predicated region
        $region13: #{mini_resnet.1} parent=11 // pred_check
          %p605 = pneg %p81
        $region14: #{mini_resnet.1} parent=11 // pred_check_branch
          %607 = sbr.rel (%p605) target = $region16
        $region15: #{mini_resnet.1} parent=11 // pred_region
          _
        $region16: #{mini_resnet.1} parent=11 // pred_fallthru
          _
        // Predicated region
        $region17: #{mini_resnet.1} parent=11 // pred_check
          %p608 = pneg %p102
        $region18: #{mini_resnet.1} parent=11 // pred_check_branch
          %610 = sbr.rel (%p608) target = $region20
        $region19: #{mini_resnet.1} parent=11 // pred_region
          _
        $region20: #{mini_resnet.1} parent=11 // pred_fallthru
          _
        // Predicated region
        $region21: #{mini_resnet.1} parent=11 // pred_check
          %p611 = pneg %p123
        $region22: #{mini_resnet.1} parent=11 // pred_check_branch
          %613 = sbr.rel (%p611) target = $region24
        $region23: #{mini_resnet.1} parent=11 // pred_region
          _
        $region24: #{mini_resnet.1} parent=11 // pred_fallthru
          _
        // Predicated region
        $region25: #{mini_resnet.1} parent=11 // pred_check
          %p614 = pneg %p144
        $region26: #{mini_resnet.1} parent=11 // pred_check_branch
          %616 = sbr.rel (%p614) target = $region28
        $region27: #{mini_resnet.1} parent=11 // pred_region
          _
        $region28: #{mini_resnet.1} parent=11 // pred_fallthru
          _
        // Predicated region
        $region29: #{mini_resnet.1} parent=11 // pred_check
          %p617 = pneg %p165
        $region30: #{mini_resnet.1} parent=11 // pred_check_branch
          %619 = sbr.rel (%p617) target = $region32
        $region31: #{mini_resnet.1} parent=11 // pred_region
          _
        $region32: #{mini_resnet.1} parent=11 // pred_fallthru
          _
        // Predicated region
        $region33: #{mini_resnet.1} parent=11 // pred_check
          %p620 = pneg %p186
        $region34: #{mini_resnet.1} parent=11 // pred_check_branch
          %622 = sbr.rel (%p620) target = $region36
        $region35: #{mini_resnet.1} parent=11 // pred_region
          _
        $region36: #{mini_resnet.1} parent=11 // pred_fallthru
          _
        // Predicated region
        $region37: #{mini_resnet.1} parent=11 // pred_check
          %p623 = pneg %p207
        $region38: #{mini_resnet.1} parent=11 // pred_check_branch
          %625 = sbr.rel (%p623) target = $region40
        $region39: #{mini_resnet.1} parent=11 // pred_region
          _
        $region40: #{mini_resnet.1} parent=11 // pred_fallthru
          _
        // Predicated region
        $region41: #{mini_resnet.1} parent=11 // pred_check
          %p626 = pneg %p228
        $region42: #{mini_resnet.1} parent=11 // pred_check_branch
          %628 = sbr.rel (%p626) target = $region44
        $region43: #{mini_resnet.1} parent=11 // pred_region
          _
        $region44: #{mini_resnet.1} parent=11 // pred_fallthru
          _
        // Predicated region
        $region45: #{mini_resnet.1} parent=11 // pred_check
          %p629 = pneg %p249
        $region46: #{mini_resnet.1} parent=11 // pred_check_branch
          %631 = sbr.rel (%p629) target = $region48
        $region47: #{mini_resnet.1} parent=11 // pred_region
          _
        $region48: #{mini_resnet.1} parent=11 // pred_fallthru
          _
        // Predicated region
        $region49: #{mini_resnet.1} parent=11 // pred_check
          %p632 = pneg %p270
        $region50: #{mini_resnet.1} parent=11 // pred_check_branch
          %634 = sbr.rel (%p632) target = $region52
        $region51: #{mini_resnet.1} parent=11 // pred_region
          _
        $region52: #{mini_resnet.1} parent=11 // pred_fallthru
          _
        // Predicated region
        $region53: #{mini_resnet.1} parent=11 // pred_check
          %p635 = pneg %p291
        $region54: #{mini_resnet.1} parent=11 // pred_check_branch
          %637 = sbr.rel (%p635) target = $region56
        $region55: #{mini_resnet.1} parent=11 // pred_region
          _
        $region56: #{mini_resnet.1} parent=11 // pred_fallthru
          _
        // Predicated region
        $region57: #{mini_resnet.1} parent=11 // pred_check
          %p638 = pneg %p312
        $region58: #{mini_resnet.1} parent=11 // pred_check_branch
          %640 = sbr.rel (%p638) target = $region60
        $region59: #{mini_resnet.1} parent=11 // pred_region
          _
        $region60: #{mini_resnet.1} parent=11 // pred_fallthru
          _
        // Predicated region
        $region61: #{mini_resnet.1} parent=11 // pred_check
          %p641 = pneg %p333
        $region62: #{mini_resnet.1} parent=11 // pred_check_branch
          %643 = sbr.rel (%p641) target = $region64
        $region63: #{mini_resnet.1} parent=11 // pred_region
          _
        $region64: #{mini_resnet.1} parent=11 // pred_fallthru
          _
        // Predicated region
        $region65: #{mini_resnet.1} parent=11 // pred_check
          %p644 = pneg %p354
        $region66: #{mini_resnet.1} parent=11 // pred_check_branch
          %646 = sbr.rel (%p644) target = $region68
        $region67: #{mini_resnet.1} parent=11 // pred_region
          _
        $region68: #{mini_resnet.1} parent=11 // pred_fallthru
          _
        // Predicated region
        $region69: #{mini_resnet.1} parent=11 // pred_check
          %p647 = pneg %p375
        $region70: #{mini_resnet.1} parent=11 // pred_check_branch
          %649 = sbr.rel (%p647) target = $region72
        $region71: #{mini_resnet.1} parent=11 // pred_region
          _
        $region72: #{mini_resnet.1} parent=11 // pred_fallthru
          _
        // Predicated region
        $region73: #{mini_resnet.1} parent=11 // pred_check
          %p650 = pneg %p396
        $region74: #{mini_resnet.1} parent=11 // pred_check_branch
          %652 = sbr.rel (%p650) target = $region76
        $region75: #{mini_resnet.1} parent=11 // pred_region
          _
        $region76: #{mini_resnet.1} parent=11 // pred_fallthru
          _
        // Predicated region
        $region77: #{mini_resnet.1} parent=11 // pred_check
          %p653 = pneg %p417
        $region78: #{mini_resnet.1} parent=11 // pred_check_branch
          %655 = sbr.rel (%p653) target = $region80
        $region79: #{mini_resnet.1} parent=11 // pred_region
          _
        $region80: #{mini_resnet.1} parent=11 // pred_fallthru
          _
        // Predicated region
        $region81: #{mini_resnet.1} parent=11 // pred_check
          %p656 = pneg %p438
        $region82: #{mini_resnet.1} parent=11 // pred_check_branch
          %658 = sbr.rel (%p656) target = $region84
        $region83: #{mini_resnet.1} parent=11 // pred_region
          _
        $region84: #{mini_resnet.1} parent=11 // pred_fallthru
          _
        // Predicated region
        $region85: #{mini_resnet.1} parent=11 // pred_check
          %p659 = pneg %p459
        $region86: #{mini_resnet.1} parent=11 // pred_check_branch
          %661 = sbr.rel (%p659) target = $region88
        $region87: #{mini_resnet.1} parent=11 // pred_region
          _
        $region88: #{mini_resnet.1} parent=11 // pred_fallthru
          _
        // Predicated region
        $region89: #{mini_resnet.1} parent=11 // pred_check
          %p662 = pneg %p480
        $region90: #{mini_resnet.1} parent=11 // pred_check_branch
          %664 = sbr.rel (%p662) target = $region92
        $region91: #{mini_resnet.1} parent=11 // pred_region
          _
        $region92: #{mini_resnet.1} parent=11 // pred_fallthru
          _
        // Predicated region
        $region93: #{mini_resnet.1} parent=11 // pred_check
          %p665 = pneg %p501
        $region94: #{mini_resnet.1} parent=11 // pred_check_branch
          %667 = sbr.rel (%p665) target = $region96
        $region95: #{mini_resnet.1} parent=11 // pred_region
          _
        $region96: #{mini_resnet.1} parent=11 // pred_fallthru
          _
        // Predicated region
        $region97: #{mini_resnet.1} parent=11 // pred_check
          %p668 = pneg %p522
        $region98: #{mini_resnet.1} parent=11 // pred_check_branch
          %670 = sbr.rel (%p668) target = $region100
        $region99: #{mini_resnet.1} parent=11 // pred_region
          _
        $region100: #{mini_resnet.1} parent=11 // pred_fallthru
          _
        // Predicated region
        $region101: #{mini_resnet.1} parent=11 // pred_check
          %p671 = pneg %p543
        $region102: #{mini_resnet.1} parent=11 // pred_check_branch
          %673 = sbr.rel (%p671) target = $region104
        $region103: #{mini_resnet.1} parent=11 // pred_region
          _
        $region104: #{mini_resnet.1} parent=11 // pred_fallthru
          _
        // Predicated region
        $region105: #{mini_resnet.1} parent=11 // pred_check
          %p674 = pneg %p564
        $region106: #{mini_resnet.1} parent=11 // pred_check_branch
          %676 = sbr.rel (%p674) target = $region108
        $region107: #{mini_resnet.1} parent=11 // pred_region
          _
        $region108: #{mini_resnet.1} parent=11 // pred_fallthru
          _
      $region12: #{mini_resnet.1} parent=5 // pred_fallthru
        _
      %p677 = scmp.lt.s32.totalorder %s34, 2
      // Predicated region
      $region109: #{mini_resnet.1} parent=5 // pred_check
        %p678 = pneg %p677
      $region110: #{mini_resnet.1} parent=5 // pred_check_branch
        %680 = sbr.rel (%p678) target = $region112
      $region111: #{mini_resnet.1} parent=5 // pred_region
        // Predicated region
        $region113: #{mini_resnet.1} parent=111 // pred_check
          %p681 = pneg %p54
        $region114: #{mini_resnet.1} parent=111 // pred_check_branch
          %683 = sbr.rel (%p681) target = $region116
        $region115: #{mini_resnet.1} parent=111 // pred_region
          %p684 = scmp.lt.s32.totalorder %s34, 1
          %s685 = scalar_select %p684, %s34, 1
          %s686 = smul.addr %s685, 32
          %s687 = smul.addr %s686, 4
          %s688 = scalar_lea.vmem %s0, %s687
        $region116: #{mini_resnet.1} parent=111 // pred_fallthru
          _
      $region112: #{mini_resnet.1} parent=5 // pred_fallthru
        _
      %p689 = scmp.le.s32.totalorder 1, %s34
      %p690 = scmp.lt.s32.totalorder %s34, 3
      %p691 = pnand %p689, %p690
      %p692 = pneg %p691
      // Predicated region
      $region117: #{mini_resnet.1} parent=5 // pred_check
        _
      $region118: #{mini_resnet.1} parent=5 // pred_check_branch
        %694 = sbr.rel (%p691) target = $region120
      $region119: #{mini_resnet.1} parent=5 // pred_region
        %s695 = ssub.s32 %s34, 1
        %p696 = scmp.lt.s32.totalorder %s39, 1
        %s697 = scalar_select %p696, %s39, 1
        %s698 = smul.addr %s697, 32
        %s699 = smul.addr %s698, 4
        %s700 = scalar_lea.vmem %s0, %s699
        %p701 = pneg %p60
        %p702 = pneg %p57
        %p703 = pneg %p81
        %p704 = pneg %p78
        %p705 = pneg %p102
        %p706 = pneg %p99
        %p707 = pneg %p123
        %p708 = pneg %p120
        %p709 = pneg %p144
        %p710 = pneg %p141
        %p711 = pneg %p165
        %p712 = pneg %p162
        %p713 = pneg %p186
        %p714 = pneg %p183
        %p715 = pneg %p207
        %p716 = pneg %p204
        %p717 = pneg %p228
        %p718 = pneg %p225
        %p719 = pneg %p249
        %p720 = pneg %p246
        %p721 = pneg %p270
        %p722 = pneg %p267
        %p723 = pneg %p291
        %p724 = pneg %p288
        %p725 = pneg %p312
        %p726 = pneg %p309
        %p727 = pneg %p333
        %p728 = pneg %p330
        %p729 = pneg %p354
        %p730 = pneg %p351
        %p731 = pneg %p375
        %p732 = pneg %p372
        %p733 = pneg %p396
        %p734 = pneg %p393
        %p735 = pneg %p417
        %p736 = pneg %p414
        %p737 = pneg %p438
        %p738 = pneg %p435
        %p739 = pneg %p459
        %p740 = pneg %p456
        %p741 = pneg %p480
        %p742 = pneg %p477
        %p743 = pneg %p501
        %p744 = pneg %p498
        %p745 = pneg %p522
        %p746 = pneg %p519
        %p747 = pneg %p543
        %p748 = pneg %p540
        %p749 = pneg %p564
        %p750 = pneg %p561
        %p751 = pneg %p590
        %p752 = pneg %p587
        %s753 = sand.u32 %s577, 1
        %s754 = scalar_lea.sflag [#allocation10], %s753
        %s755 = sand.u32 %s577, 1
        %s756 = scalar_lea.vmem [#allocation9], %s755
        %p757 = scmp.lt.s32.totalorder %s39, 1
        %s758 = scalar_select %p757, %s39, 1
        %s759 = smul.addr %s758, 32
        %s760 = smul.addr %s759, 4
        %s761 = scalar_lea.vmem %s0, %s760
        %v763 = vld [vmem:[%s761] sm:$0xf]
        %v764 = vld [vmem:[%s761 + $0x4] sm:$0xf]
        %v765 = vld [vmem:[%s761 + $0x8] sm:$0xf]
        %v766 = vld [vmem:[%s761 + $0xc] sm:$0xf]
        %v767 = vld [vmem:[%s761 + $0x10] sm:$0xf]
        %v768 = vld [vmem:[%s761 + $0x14] sm:$0xf]
        %v769 = vld [vmem:[%s761 + $0x18] sm:$0xf]
        %v770 = vld [vmem:[%s761 + $0x1c] sm:$0xf]
        %v771 = vld [vmem:[%s761 + $0x20] sm:$0xf]
        %v772 = vld [vmem:[%s761 + $0x24] sm:$0xf]
        %v773 = vld [vmem:[%s761 + $0x28] sm:$0xf]
        %v774 = vld [vmem:[%s761 + $0x2c] sm:$0xf]
        %v775 = vld [vmem:[%s761 + $0x30] sm:$0xf]
        %v776 = vld [vmem:[%s761 + $0x34] sm:$0xf]
        %v777 = vld [vmem:[%s761 + $0x38] sm:$0xf]
        %v778 = vld [vmem:[%s761 + $0x3c] sm:$0xf]
        %v779 = vld [vmem:[%s761 + $0x40] sm:$0xf]
        %v780 = vld [vmem:[%s761 + $0x44] sm:$0xf]
        %v781 = vld [vmem:[%s761 + $0x48] sm:$0xf]
        %v782 = vld [vmem:[%s761 + $0x4c] sm:$0xf]
        %v783 = vld [vmem:[%s761 + $0x50] sm:$0xf]
        %v784 = vld [vmem:[%s761 + $0x54] sm:$0xf]
        %v785 = vld [vmem:[%s761 + $0x58] sm:$0xf]
        %v786 = vld [vmem:[%s761 + $0x5c] sm:$0xf]
        %v787 = vld [vmem:[%s761 + $0x60] sm:$0xf]
        %v788 = vld [vmem:[%s761 + $0x64] sm:$0xf]
        %v789 = vld [vmem:[%s761 + $0x68] sm:$0xf]
        %v790 = vld [vmem:[%s761 + $0x6c] sm:$0xf]
        %v791 = vld [vmem:[%s761 + $0x70] sm:$0xf]
        %v792 = vld [vmem:[%s761 + $0x74] sm:$0xf]
        %v793 = vld [vmem:[%s761 + $0x78] sm:$0xf]
        %v794 = vld [vmem:[%s761 + $0x7c] sm:$0xf]
        %v795 = vld [vmem:[%s1] sm:$0xf]
        %v796 = vld [vmem:[%s1 + $0x4] sm:$0xf]
        %v797 = vld [vmem:[%s1 + $0x8] sm:$0xf]
        %v798 = vld [vmem:[%s1 + $0xc] sm:$0x3]
        %v799 = vld [vmem:[%s2] sm:$0x1]
        %v801 = vperm.slane %v799, 0
        %v835 = vunpack.c.l.b16 %v763
        %v836 = vunpack.c.l.b16 %v764
        %v837 = vunpack.c.l.b16 %v765
        %v838 = vunpack.c.l.b16 %v766
        %v839 = vunpack.c.l.b16 %v767
        %v840 = vunpack.c.l.b16 %v768
        %v841 = vunpack.c.l.b16 %v769
        %v842 = vunpack.c.l.b16 %v770
        %v843 = vunpack.c.l.b16 %v771
        %v844 = vunpack.c.l.b16 %v772
        %v845 = vunpack.c.l.b16 %v773
        %v846 = vunpack.c.l.b16 %v774
        %v847 = vunpack.c.l.b16 %v775
        %v848 = vunpack.c.l.b16 %v776
        %v849 = vunpack.c.l.b16 %v777
        %v850 = vunpack.c.l.b16 %v778
        %v851 = vunpack.c.l.b16 %v779
        %v852 = vunpack.c.l.b16 %v780
        %v853 = vunpack.c.l.b16 %v781
        %v854 = vunpack.c.l.b16 %v782
        %v855 = vunpack.c.l.b16 %v783
        %v856 = vunpack.c.l.b16 %v784
        %v857 = vunpack.c.l.b16 %v785
        %v858 = vunpack.c.l.b16 %v786
        %v859 = vunpack.c.l.b16 %v787
        %v860 = vunpack.c.l.b16 %v788
        %v861 = vunpack.c.l.b16 %v789
        %v862 = vunpack.c.l.b16 %v790
        %v863 = vunpack.c.l.b16 %v791
        %v864 = vunpack.c.l.b16 %v792
        %v865 = vunpack.c.l.b16 %v793
        %v866 = vunpack.c.l.b16 %v794
        %v867 = vpack.c.b16 %v836, %v835
        %v868 = vpack.c.b16 %v838, %v837
        %v869 = vpack.c.b16 %v840, %v839
        %v870 = vpack.c.b16 %v842, %v841
        %v871 = vpack.c.b16 %v844, %v843
        %v872 = vpack.c.b16 %v846, %v845
        %v873 = vpack.c.b16 %v848, %v847
        %v874 = vpack.c.b16 %v850, %v849
        %v875 = vpack.c.b16 %v852, %v851
        %v876 = vpack.c.b16 %v854, %v853
        %v877 = vpack.c.b16 %v856, %v855
        %v878 = vpack.c.b16 %v858, %v857
        %v879 = vpack.c.b16 %v860, %v859
        %v880 = vpack.c.b16 %v862, %v861
        %v881 = vpack.c.b16 %v864, %v863
        %v882 = vpack.c.b16 %v866, %v865
        %v887 = vunpack.c.l.b16 %v795
        %v888 = vunpack.c.l.b16 %v796
        %v889 = vunpack.c.l.b16 %v797
        %v890 = vunpack.c.l.b16 %v798
        %v891 = vpack.c.b16 %v888, %v887
        %v892 = vpack.c.b16 %v890, %v889
        %vm894 = vcmask 220160
        %v896 = vsel %vm894, %v867, 0
        %v899 = vsel %vm894, %v868, 0
        %v902 = vsel %vm894, %v869, 0
        %v905 = vsel %vm894, %v870, 0
        %v908 = vsel %vm894, %v871, 0
        %v911 = vsel %vm894, %v872, 0
        %v914 = vsel %vm894, %v873, 0
        %v917 = vsel %vm894, %v874, 0
        %v920 = vsel %vm894, %v875, 0
        %v923 = vsel %vm894, %v876, 0
        %v926 = vsel %vm894, %v877, 0
        %v929 = vsel %vm894, %v878, 0
        %v932 = vsel %vm894, %v879, 0
        %v935 = vsel %vm894, %v880, 0
        %v938 = vsel %vm894, %v881, 0
        %v941 = vsel %vm894, %v882, 0
        %vm943 = vcmask 1044480
        %vm944 = vcmask 1045504
        %v945 = vsel %vm943, 4294967295, 65535
        %v946 = vsel %vm944, %v945, 0
        %v948 = vand.u32 %v892, %v946
        %950 = vmatpush.bf16.msra.mxu0 0
        %951 = vmatpush.bf16.msra.mxu0 0
        %952 = vmatpush.bf16.msra.mxu0 0
        %953 = vmatpush.bf16.msra.mxu0 0
        %954 = vmatpush.bf16.msra.mxu0 0
        %955 = vmatpush.bf16.msra.mxu0 0
        %956 = vmatpush.bf16.msra.mxu0 %v948
        %957 = vmatpush.bf16.msra.mxu0 %v891
        %958 = vmatmul.bf16.gmra.mxu0 %v896
        %v959 = vpop.f32.mrf.mxu0
        %v960 = vadd.f32 %v801, %v959
        %v961 = vpop.f32.mrf.mxu0
        %v962 = vadd.f32 %v801, %v961
        %963 = vmatmul.bf16.gmra.mxu0 %v899
        %v964 = vpop.f32.mrf.mxu0
        %v965 = vadd.f32 %v801, %v964
        %v966 = vpop.f32.mrf.mxu0
        %v967 = vadd.f32 %v801, %v966
        %968 = vmatmul.bf16.gmra.mxu0 %v902
        %v969 = vpop.f32.mrf.mxu0
        %v970 = vadd.f32 %v801, %v969
        %v971 = vpop.f32.mrf.mxu0
        %v972 = vadd.f32 %v801, %v971
        %973 = vmatmul.bf16.gmra.mxu0 %v905
        %v974 = vpop.f32.mrf.mxu0
        %v975 = vadd.f32 %v801, %v974
        %v976 = vpop.f32.mrf.mxu0
        %v977 = vadd.f32 %v801, %v976
        %978 = vmatmul.bf16.gmra.mxu0 %v908
        %v979 = vpop.f32.mrf.mxu0
        %v980 = vadd.f32 %v801, %v979
        %v981 = vpop.f32.mrf.mxu0
        %v982 = vadd.f32 %v801, %v981
        %983 = vmatmul.bf16.gmra.mxu0 %v911
        %v984 = vpop.f32.mrf.mxu0
        %v985 = vadd.f32 %v801, %v984
        %v986 = vpop.f32.mrf.mxu0
        %v987 = vadd.f32 %v801, %v986
        %988 = vmatmul.bf16.gmra.mxu0 %v914
        %v989 = vpop.f32.mrf.mxu0
        %v990 = vadd.f32 %v801, %v989
        %v991 = vpop.f32.mrf.mxu0
        %v992 = vadd.f32 %v801, %v991
        %993 = vmatmul.bf16.gmra.mxu0 %v917
        %v994 = vpop.f32.mrf.mxu0
        %v995 = vadd.f32 %v801, %v994
        %v996 = vpop.f32.mrf.mxu0
        %v997 = vadd.f32 %v801, %v996
        %998 = vmatmul.bf16.gmra.mxu0 %v920
        %v999 = vpop.f32.mrf.mxu0
        %v1000 = vadd.f32 %v801, %v999
        %v1001 = vpop.f32.mrf.mxu0
        %v1002 = vadd.f32 %v801, %v1001
        %1003 = vmatmul.bf16.gmra.mxu0 %v923
        %v1004 = vpop.f32.mrf.mxu0
        %v1005 = vadd.f32 %v801, %v1004
        %v1006 = vpop.f32.mrf.mxu0
        %v1007 = vadd.f32 %v801, %v1006
        %1008 = vmatmul.bf16.gmra.mxu0 %v926
        %v1009 = vpop.f32.mrf.mxu0
        %v1010 = vadd.f32 %v801, %v1009
        %v1011 = vpop.f32.mrf.mxu0
        %v1012 = vadd.f32 %v801, %v1011
        %1013 = vmatmul.bf16.gmra.mxu0 %v929
        %v1014 = vpop.f32.mrf.mxu0
        %v1015 = vadd.f32 %v801, %v1014
        %v1016 = vpop.f32.mrf.mxu0
        %v1017 = vadd.f32 %v801, %v1016
        %1018 = vmatmul.bf16.gmra.mxu0 %v932
        %v1019 = vpop.f32.mrf.mxu0
        %v1020 = vadd.f32 %v801, %v1019
        %v1021 = vpop.f32.mrf.mxu0
        %v1022 = vadd.f32 %v801, %v1021
        %1023 = vmatmul.bf16.gmra.mxu0 %v935
        %v1024 = vpop.f32.mrf.mxu0
        %v1025 = vadd.f32 %v801, %v1024
        %v1026 = vpop.f32.mrf.mxu0
        %v1027 = vadd.f32 %v801, %v1026
        %1028 = vmatmul.bf16.gmra.mxu0 %v938
        %v1029 = vpop.f32.mrf.mxu0
        %v1030 = vadd.f32 %v801, %v1029
        %v1031 = vpop.f32.mrf.mxu0
        %v1032 = vadd.f32 %v801, %v1031
        %1033 = vmatmul.bf16.gmra.mxu0 %v941
        %v1034 = vpop.f32.mrf.mxu0
        %v1035 = vadd.f32 %v801, %v1034
        %v1036 = vpop.f32.mrf.mxu0
        %v1037 = vadd.f32 %v801, %v1036
        %1038 = vdwg.mxu0
        %v1039 = vmax.f32 %v960, 0.0
        %v1040 = vmax.f32 %v962, 0.0
        %v1041 = vmax.f32 %v965, 0.0
        %v1042 = vmax.f32 %v967, 0.0
        %v1043 = vmax.f32 %v970, 0.0
        %v1044 = vmax.f32 %v972, 0.0
        %v1045 = vmax.f32 %v975, 0.0
        %v1046 = vmax.f32 %v977, 0.0
        %v1047 = vmax.f32 %v980, 0.0
        %v1048 = vmax.f32 %v982, 0.0
        %v1049 = vmax.f32 %v985, 0.0
        %v1050 = vmax.f32 %v987, 0.0
        %v1051 = vmax.f32 %v990, 0.0
        %v1052 = vmax.f32 %v992, 0.0
        %v1053 = vmax.f32 %v995, 0.0
        %v1054 = vmax.f32 %v997, 0.0
        %v1055 = vmax.f32 %v1000, 0.0
        %v1056 = vmax.f32 %v1002, 0.0
        %v1057 = vmax.f32 %v1005, 0.0
        %v1058 = vmax.f32 %v1007, 0.0
        %v1059 = vmax.f32 %v1010, 0.0
        %v1060 = vmax.f32 %v1012, 0.0
        %v1061 = vmax.f32 %v1015, 0.0
        %v1062 = vmax.f32 %v1017, 0.0
        %v1063 = vmax.f32 %v1020, 0.0
        %v1064 = vmax.f32 %v1022, 0.0
        %v1065 = vmax.f32 %v1025, 0.0
        %v1066 = vmax.f32 %v1027, 0.0
        %v1067 = vmax.f32 %v1030, 0.0
        %v1068 = vmax.f32 %v1032, 0.0
        %v1069 = vmax.f32 %v1035, 0.0
        %v1070 = vmax.f32 %v1037, 0.0
        %vm1071 = vcmask 261120
        %1072 = vst.msk [vmem:[#allocation2] sm:$0xff] %vm1071, 0.0
        %1073 = vst.msk [vmem:[#allocation2 + $0x8] sm:$0xff] %vm1071, 0.0
        %vm1074 = vcmask 254976
        %1075 = vst.msk [vmem:[#allocation2 + $0x10] sm:$0x3] %vm1074, 0.0
        %1076 = vst.msk [vmem:[#allocation2 + $0x18] sm:$0xff] %vm1071, 0.0
        %1077 = vst.msk [vmem:[#allocation2 + $0x20] sm:$0xff] %vm1071, 0.0
        %1078 = vst.msk [vmem:[#allocation2 + $0x28] sm:$0x3] %vm1074, 0.0
        %1079 = vst.msk [vmem:[#allocation2 + $0x30] sm:$0xff] %vm1071, 0.0
        %1080 = vst.msk [vmem:[#allocation2 + $0x38] sm:$0xff] %vm1071, 0.0
        %1081 = vst.msk [vmem:[#allocation2 + $0x40] sm:$0x3] %vm1074, 0.0
        %1082 = vst.msk [vmem:[#allocation2 + $0x48] sm:$0xff] %vm1071, 0.0
        %1083 = vst.msk [vmem:[#allocation2 + $0x50] sm:$0xff] %vm1071, 0.0
        %1084 = vst.msk [vmem:[#allocation2 + $0x58] sm:$0x3] %vm1074, 0.0
        %1085 = vst.msk [vmem:[#allocation2 + $0x60] sm:$0xff] %vm1071, 0.0
        %1086 = vst.msk [vmem:[#allocation2 + $0x68] sm:$0xff] %vm1071, 0.0
        %1087 = vst.msk [vmem:[#allocation2 + $0x70] sm:$0x3] %vm1074, 0.0
        %1088 = vst.msk [vmem:[#allocation2 + $0x78] sm:$0xff] %vm1071, 0.0
        %1089 = vst.msk [vmem:[#allocation2 + $0x80] sm:$0xff] %vm1071, 0.0
        %1090 = vst.msk [vmem:[#allocation2 + $0x88] sm:$0x3] %vm1074, 0.0
        %1091 = vst.msk [vmem:[#allocation2 + $0x90] sm:$0xff] %vm1071, 0.0
        %1092 = vst.msk [vmem:[#allocation2 + $0x98] sm:$0xff] %vm1071, 0.0
        %1093 = vst.msk [vmem:[#allocation2 + $0xa0] sm:$0x3] %vm1074, 0.0
        %1094 = vst.msk [vmem:[#allocation2 + $0xa8] sm:$0xff] %vm1071, 0.0
        %1095 = vst.msk [vmem:[#allocation2 + $0xb0] sm:$0xff] %vm1071, 0.0
        %1096 = vst.msk [vmem:[#allocation2 + $0xb8] sm:$0x3] %vm1074, 0.0
        %1097 = vst.msk [vmem:[#allocation2 + $0xc0] sm:$0xff] %vm1071, 0.0
        %1098 = vst.msk [vmem:[#allocation2 + $0xc8] sm:$0xff] %vm1071, 0.0
        %1099 = vst.msk [vmem:[#allocation2 + $0xd0] sm:$0x3] %vm1074, 0.0
        %1100 = vst.msk [vmem:[#allocation2 + $0xd8] sm:$0xff] %vm1071, 0.0
        %1101 = vst.msk [vmem:[#allocation2 + $0xe0] sm:$0xff] %vm1071, 0.0
        %1102 = vst.msk [vmem:[#allocation2 + $0xe8] sm:$0x3] %vm1074, 0.0
        %1103 = vst.msk [vmem:[#allocation2 + $0xf0] sm:$0xff] %vm1071, 0.0
        %1104 = vst.msk [vmem:[#allocation2 + $0xf8] sm:$0xff] %vm1071, 0.0
        %1105 = vst.msk [vmem:[#allocation2 + $0x100] sm:$0x3] %vm1074, 0.0
        %1106 = vst.msk [vmem:[#allocation2 + $0x108] sm:$0xff] %vm1071, 0.0
        %1107 = vst.msk [vmem:[#allocation2 + $0x110] sm:$0xff] %vm1071, 0.0
        %1108 = vst.msk [vmem:[#allocation2 + $0x118] sm:$0x3] %vm1074, 0.0
        %1109 = vst.msk [vmem:[#allocation2 + $0x120] sm:$0xff] %vm1071, 0.0
        %1110 = vst.msk [vmem:[#allocation2 + $0x128] sm:$0xff] %vm1071, 0.0
        %1111 = vst.msk [vmem:[#allocation2 + $0x130] sm:$0x3] %vm1074, 0.0
        %1112 = vst.msk [vmem:[#allocation2 + $0x138] sm:$0xff] %vm1071, 0.0
        %1113 = vst.msk [vmem:[#allocation2 + $0x140] sm:$0xff] %vm1071, 0.0
        %1114 = vst.msk [vmem:[#allocation2 + $0x148] sm:$0x3] %vm1074, 0.0
        %1115 = vst.msk [vmem:[#allocation2 + $0x150] sm:$0xff] %vm1071, 0.0
        %1116 = vst.msk [vmem:[#allocation2 + $0x158] sm:$0xff] %vm1071, 0.0
        %1117 = vst.msk [vmem:[#allocation2 + $0x160] sm:$0x3] %vm1074, 0.0
        %1118 = vst.msk [vmem:[#allocation2 + $0x168] sm:$0xff] %vm1071, 0.0
        %1119 = vst.msk [vmem:[#allocation2 + $0x170] sm:$0xff] %vm1071, 0.0
        %1120 = vst.msk [vmem:[#allocation2 + $0x178] sm:$0x3] %vm1074, 0.0
        %1121 = vst.msk [vmem:[#allocation2 + $0x180] sm:$0xff] %vm1071, 0.0
        %1122 = vst.msk [vmem:[#allocation2 + $0x188] sm:$0xff] %vm1071, 0.0
        %1123 = vst.msk [vmem:[#allocation2 + $0x190] sm:$0x3] %vm1074, 0.0
        %1124 = vst.msk [vmem:[#allocation2 + $0x198] sm:$0xff] %vm1071, 0.0
        %1125 = vst.msk [vmem:[#allocation2 + $0x1a0] sm:$0xff] %vm1071, 0.0
        %1126 = vst.msk [vmem:[#allocation2 + $0x1a8] sm:$0x3] %vm1074, 0.0
        %s1127 = scalar_lea.vmem [#allocation2], 24
        %1128 = vst.msk [vmem:[%s1127 + $0x1] sm:$0xff] %vm1071, %v1039
        %1129 = vst.msk [vmem:[%s1127 + $0x9] sm:$0xff] %vm1071, %v1040
        %1130 = vst.msk [vmem:[%s1127 + $0x19] sm:$0xff] %vm1071, %v1041
        %1131 = vst.msk [vmem:[%s1127 + $0x21] sm:$0xff] %vm1071, %v1042
        %1132 = vst.msk [vmem:[%s1127 + $0x31] sm:$0xff] %vm1071, %v1043
        %1133 = vst.msk [vmem:[%s1127 + $0x39] sm:$0xff] %vm1071, %v1044
        %1134 = vst.msk [vmem:[%s1127 + $0x49] sm:$0xff] %vm1071, %v1045
        %1135 = vst.msk [vmem:[%s1127 + $0x51] sm:$0xff] %vm1071, %v1046
        %1136 = vst.msk [vmem:[%s1127 + $0x61] sm:$0xff] %vm1071, %v1047
        %1137 = vst.msk [vmem:[%s1127 + $0x69] sm:$0xff] %vm1071, %v1048
        %1138 = vst.msk [vmem:[%s1127 + $0x79] sm:$0xff] %vm1071, %v1049
        %1139 = vst.msk [vmem:[%s1127 + $0x81] sm:$0xff] %vm1071, %v1050
        %1140 = vst.msk [vmem:[%s1127 + $0x91] sm:$0xff] %vm1071, %v1051
        %1141 = vst.msk [vmem:[%s1127 + $0x99] sm:$0xff] %vm1071, %v1052
        %1142 = vst.msk [vmem:[%s1127 + $0xa9] sm:$0xff] %vm1071, %v1053
        %1143 = vst.msk [vmem:[%s1127 + $0xb1] sm:$0xff] %vm1071, %v1054
        %1144 = vst.msk [vmem:[%s1127 + $0xc1] sm:$0xff] %vm1071, %v1055
        %1145 = vst.msk [vmem:[%s1127 + $0xc9] sm:$0xff] %vm1071, %v1056
        %1146 = vst.msk [vmem:[%s1127 + $0xd9] sm:$0xff] %vm1071, %v1057
        %1147 = vst.msk [vmem:[%s1127 + $0xe1] sm:$0xff] %vm1071, %v1058
        %1148 = vst.msk [vmem:[%s1127 + $0xf1] sm:$0xff] %vm1071, %v1059
        %1149 = vst.msk [vmem:[%s1127 + $0xf9] sm:$0xff] %vm1071, %v1060
        %1150 = vst.msk [vmem:[%s1127 + $0x109] sm:$0xff] %vm1071, %v1061
        %1151 = vst.msk [vmem:[%s1127 + $0x111] sm:$0xff] %vm1071, %v1062
        %1152 = vst.msk [vmem:[%s1127 + $0x121] sm:$0xff] %vm1071, %v1063
        %1153 = vst.msk [vmem:[%s1127 + $0x129] sm:$0xff] %vm1071, %v1064
        %1154 = vst.msk [vmem:[%s1127 + $0x139] sm:$0xff] %vm1071, %v1065
        %1155 = vst.msk [vmem:[%s1127 + $0x141] sm:$0xff] %vm1071, %v1066
        %1156 = vst.msk [vmem:[%s1127 + $0x151] sm:$0xff] %vm1071, %v1067
        %1157 = vst.msk [vmem:[%s1127 + $0x159] sm:$0xff] %vm1071, %v1068
        %1158 = vst.msk [vmem:[%s1127 + $0x169] sm:$0xff] %vm1071, %v1069
        %1159 = vst.msk [vmem:[%s1127 + $0x171] sm:$0xff] %vm1071, %v1070
        %v1160 = vld [vmem:[#allocation2] sm:$0xff]
        %v1161 = vld [vmem:[#allocation2 + $0x8] sm:$0xff]
        %v1162 = vld [vmem:[#allocation2 + $0x18] sm:$0xff]
        %v1163 = vld [vmem:[#allocation2 + $0x20] sm:$0xff]
        %v1164 = vld [vmem:[#allocation2 + $0x30] sm:$0xff]
        %v1165 = vld [vmem:[#allocation2 + $0x38] sm:$0xff]
        %v1166 = vld [vmem:[#allocation2 + $0x48] sm:$0xff]
        %v1167 = vld [vmem:[#allocation2 + $0x50] sm:$0xff]
        %v1168 = vld [vmem:[#allocation2 + $0x60] sm:$0xff]
        %v1169 = vld [vmem:[#allocation2 + $0x68] sm:$0xff]
        %v1170 = vld [vmem:[#allocation2 + $0x78] sm:$0xff]
        %v1171 = vld [vmem:[#allocation2 + $0x80] sm:$0xff]
        %v1172 = vld [vmem:[#allocation2 + $0x90] sm:$0xff]
        %v1173 = vld [vmem:[#allocation2 + $0x98] sm:$0xff]
        %v1174 = vld [vmem:[#allocation2 + $0xa8] sm:$0xff]
        %v1175 = vld [vmem:[#allocation2 + $0xb0] sm:$0xff]
        %v1176 = vld [vmem:[#allocation2 + $0xc0] sm:$0xff]
        %v1177 = vld [vmem:[#allocation2 + $0xc8] sm:$0xff]
        %v1178 = vld [vmem:[#allocation2 + $0xd8] sm:$0xff]
        %v1179 = vld [vmem:[#allocation2 + $0xe0] sm:$0xff]
        %v1180 = vld [vmem:[#allocation2 + $0xf0] sm:$0xff]
        %v1181 = vld [vmem:[#allocation2 + $0xf8] sm:$0xff]
        %v1182 = vld [vmem:[#allocation2 + $0x108] sm:$0xff]
        %v1183 = vld [vmem:[#allocation2 + $0x110] sm:$0xff]
        %v1184 = vld [vmem:[#allocation2 + $0x120] sm:$0xff]
        %v1185 = vld [vmem:[#allocation2 + $0x128] sm:$0xff]
        %v1186 = vld [vmem:[#allocation2 + $0x138] sm:$0xff]
        %v1187 = vld [vmem:[#allocation2 + $0x140] sm:$0xff]
        %v1188 = vld [vmem:[#allocation2 + $0x150] sm:$0xff]
        %v1189 = vld [vmem:[#allocation2 + $0x158] sm:$0xff]
        %v1190 = vld [vmem:[#allocation2 + $0x168] sm:$0xff]
        %v1191 = vld [vmem:[#allocation2 + $0x170] sm:$0xff]
        %v1192 = vld [vmem:[#allocation2 + $0x1] sm:$0xff]
        %v1193 = vld [vmem:[#allocation2 + $0x9] sm:$0xff]
        %v1194 = vld [vmem:[#allocation2 + $0x19] sm:$0xff]
        %v1195 = vld [vmem:[#allocation2 + $0x21] sm:$0xff]
        %v1196 = vld [vmem:[#allocation2 + $0x31] sm:$0xff]
        %v1197 = vld [vmem:[#allocation2 + $0x39] sm:$0xff]
        %v1198 = vld [vmem:[#allocation2 + $0x49] sm:$0xff]
        %v1199 = vld [vmem:[#allocation2 + $0x51] sm:$0xff]
        %v1200 = vld [vmem:[#allocation2 + $0x61] sm:$0xff]
        %v1201 = vld [vmem:[#allocation2 + $0x69] sm:$0xff]
        %v1202 = vld [vmem:[#allocation2 + $0x79] sm:$0xff]
        %v1203 = vld [vmem:[#allocation2 + $0x81] sm:$0xff]
        %v1204 = vld [vmem:[#allocation2 + $0x91] sm:$0xff]
        %v1205 = vld [vmem:[#allocation2 + $0x99] sm:$0xff]
        %v1206 = vld [vmem:[#allocation2 + $0xa9] sm:$0xff]
        %v1207 = vld [vmem:[#allocation2 + $0xb1] sm:$0xff]
        %v1208 = vld [vmem:[#allocation2 + $0xc1] sm:$0xff]
        %v1209 = vld [vmem:[#allocation2 + $0xc9] sm:$0xff]
        %v1210 = vld [vmem:[#allocation2 + $0xd9] sm:$0xff]
        %v1211 = vld [vmem:[#allocation2 + $0xe1] sm:$0xff]
        %v1212 = vld [vmem:[#allocation2 + $0xf1] sm:$0xff]
        %v1213 = vld [vmem:[#allocation2 + $0xf9] sm:$0xff]
        %v1214 = vld [vmem:[#allocation2 + $0x109] sm:$0xff]
        %v1215 = vld [vmem:[#allocation2 + $0x111] sm:$0xff]
        %v1216 = vld [vmem:[#allocation2 + $0x121] sm:$0xff]
        %v1217 = vld [vmem:[#allocation2 + $0x129] sm:$0xff]
        %v1218 = vld [vmem:[#allocation2 + $0x139] sm:$0xff]
        %v1219 = vld [vmem:[#allocation2 + $0x141] sm:$0xff]
        %v1220 = vld [vmem:[#allocation2 + $0x151] sm:$0xff]
        %v1221 = vld [vmem:[#allocation2 + $0x159] sm:$0xff]
        %v1222 = vld [vmem:[#allocation2 + $0x169] sm:$0xff]
        %v1223 = vld [vmem:[#allocation2 + $0x171] sm:$0xff]
        %v1224 = vld [vmem:[#allocation2 + $0x2] sm:$0xff]
        %v1225 = vld [vmem:[#allocation2 + $0xa] sm:$0xff]
        %v1226 = vld [vmem:[#allocation2 + $0x1a] sm:$0xff]
        %v1227 = vld [vmem:[#allocation2 + $0x22] sm:$0xff]
        %v1228 = vld [vmem:[#allocation2 + $0x32] sm:$0xff]
        %v1229 = vld [vmem:[#allocation2 + $0x3a] sm:$0xff]
        %v1230 = vld [vmem:[#allocation2 + $0x4a] sm:$0xff]
        %v1231 = vld [vmem:[#allocation2 + $0x52] sm:$0xff]
        %v1232 = vld [vmem:[#allocation2 + $0x62] sm:$0xff]
        %v1233 = vld [vmem:[#allocation2 + $0x6a] sm:$0xff]
        %v1234 = vld [vmem:[#allocation2 + $0x7a] sm:$0xff]
        %v1235 = vld [vmem:[#allocation2 + $0x82] sm:$0xff]
        %v1236 = vld [vmem:[#allocation2 + $0x92] sm:$0xff]
        %v1237 = vld [vmem:[#allocation2 + $0x9a] sm:$0xff]
        %v1238 = vld [vmem:[#allocation2 + $0xaa] sm:$0xff]
        %v1239 = vld [vmem:[#allocation2 + $0xb2] sm:$0xff]
        %v1240 = vld [vmem:[#allocation2 + $0xc2] sm:$0xff]
        %v1241 = vld [vmem:[#allocation2 + $0xca] sm:$0xff]
        %v1242 = vld [vmem:[#allocation2 + $0xda] sm:$0xff]
        %v1243 = vld [vmem:[#allocation2 + $0xe2] sm:$0xff]
        %v1244 = vld [vmem:[#allocation2 + $0xf2] sm:$0xff]
        %v1245 = vld [vmem:[#allocation2 + $0xfa] sm:$0xff]
        %v1246 = vld [vmem:[#allocation2 + $0x10a] sm:$0xff]
        %v1247 = vld [vmem:[#allocation2 + $0x112] sm:$0xff]
        %v1248 = vld [vmem:[#allocation2 + $0x122] sm:$0xff]
        %v1249 = vld [vmem:[#allocation2 + $0x12a] sm:$0xff]
        %v1250 = vld [vmem:[#allocation2 + $0x13a] sm:$0xff]
        %v1251 = vld [vmem:[#allocation2 + $0x142] sm:$0xff]
        %v1252 = vld [vmem:[#allocation2 + $0x152] sm:$0xff]
        %v1253 = vld [vmem:[#allocation2 + $0x15a] sm:$0xff]
        %v1254 = vld [vmem:[#allocation2 + $0x16a] sm:$0xff]
        %v1255 = vld [vmem:[#allocation2 + $0x172] sm:$0xff]
        %v1256 = vld [vmem:[%s1127] sm:$0xff]
        %v1257 = vld [vmem:[%s1127 + $0x8] sm:$0xff]
        %v1258 = vld [vmem:[%s1127 + $0x18] sm:$0xff]
        %v1259 = vld [vmem:[%s1127 + $0x20] sm:$0xff]
        %v1260 = vld [vmem:[%s1127 + $0x30] sm:$0xff]
        %v1261 = vld [vmem:[%s1127 + $0x38] sm:$0xff]
        %v1262 = vld [vmem:[%s1127 + $0x48] sm:$0xff]
        %v1263 = vld [vmem:[%s1127 + $0x50] sm:$0xff]
        %v1264 = vld [vmem:[%s1127 + $0x60] sm:$0xff]
        %v1265 = vld [vmem:[%s1127 + $0x68] sm:$0xff]
        %v1266 = vld [vmem:[%s1127 + $0x78] sm:$0xff]
        %v1267 = vld [vmem:[%s1127 + $0x80] sm:$0xff]
        %v1268 = vld [vmem:[%s1127 + $0x90] sm:$0xff]
        %v1269 = vld [vmem:[%s1127 + $0x98] sm:$0xff]
        %v1270 = vld [vmem:[%s1127 + $0xa8] sm:$0xff]
        %v1271 = vld [vmem:[%s1127 + $0xb0] sm:$0xff]
        %v1272 = vld [vmem:[%s1127 + $0xc0] sm:$0xff]
        %v1273 = vld [vmem:[%s1127 + $0xc8] sm:$0xff]
        %v1274 = vld [vmem:[%s1127 + $0xd8] sm:$0xff]
        %v1275 = vld [vmem:[%s1127 + $0xe0] sm:$0xff]
        %v1276 = vld [vmem:[%s1127 + $0xf0] sm:$0xff]
        %v1277 = vld [vmem:[%s1127 + $0xf8] sm:$0xff]
        %v1278 = vld [vmem:[%s1127 + $0x108] sm:$0xff]
        %v1279 = vld [vmem:[%s1127 + $0x110] sm:$0xff]
        %v1280 = vld [vmem:[%s1127 + $0x120] sm:$0xff]
        %v1281 = vld [vmem:[%s1127 + $0x128] sm:$0xff]
        %v1282 = vld [vmem:[%s1127 + $0x138] sm:$0xff]
        %v1283 = vld [vmem:[%s1127 + $0x140] sm:$0xff]
        %v1284 = vld [vmem:[%s1127 + $0x150] sm:$0xff]
        %v1285 = vld [vmem:[%s1127 + $0x158] sm:$0xff]
        %v1286 = vld [vmem:[%s1127 + $0x168] sm:$0xff]
        %v1287 = vld [vmem:[%s1127 + $0x170] sm:$0xff]
        %v1288 = vld [vmem:[%s1127 + $0x1] sm:$0xff]
        %v1289 = vld [vmem:[%s1127 + $0x9] sm:$0xff]
        %v1290 = vld [vmem:[%s1127 + $0x19] sm:$0xff]
        %v1291 = vld [vmem:[%s1127 + $0x21] sm:$0xff]
        %v1292 = vld [vmem:[%s1127 + $0x31] sm:$0xff]
        %v1293 = vld [vmem:[%s1127 + $0x39] sm:$0xff]
        %v1294 = vld [vmem:[%s1127 + $0x49] sm:$0xff]
        %v1295 = vld [vmem:[%s1127 + $0x51] sm:$0xff]
        %v1296 = vld [vmem:[%s1127 + $0x61] sm:$0xff]
        %v1297 = vld [vmem:[%s1127 + $0x69] sm:$0xff]
        %v1298 = vld [vmem:[%s1127 + $0x79] sm:$0xff]
        %v1299 = vld [vmem:[%s1127 + $0x81] sm:$0xff]
        %v1300 = vld [vmem:[%s1127 + $0x91] sm:$0xff]
        %v1301 = vld [vmem:[%s1127 + $0x99] sm:$0xff]
        %v1302 = vld [vmem:[%s1127 + $0xa9] sm:$0xff]
        %v1303 = vld [vmem:[%s1127 + $0xb1] sm:$0xff]
        %v1304 = vld [vmem:[%s1127 + $0xc1] sm:$0xff]
        %v1305 = vld [vmem:[%s1127 + $0xc9] sm:$0xff]
        %v1306 = vld [vmem:[%s1127 + $0xd9] sm:$0xff]
        %v1307 = vld [vmem:[%s1127 + $0xe1] sm:$0xff]
        %v1308 = vld [vmem:[%s1127 + $0xf1] sm:$0xff]
        %v1309 = vld [vmem:[%s1127 + $0xf9] sm:$0xff]
        %v1310 = vld [vmem:[%s1127 + $0x109] sm:$0xff]
        %v1311 = vld [vmem:[%s1127 + $0x111] sm:$0xff]
        %v1312 = vld [vmem:[%s1127 + $0x121] sm:$0xff]
        %v1313 = vld [vmem:[%s1127 + $0x129] sm:$0xff]
        %v1314 = vld [vmem:[%s1127 + $0x139] sm:$0xff]
        %v1315 = vld [vmem:[%s1127 + $0x141] sm:$0xff]
        %v1316 = vld [vmem:[%s1127 + $0x151] sm:$0xff]
        %v1317 = vld [vmem:[%s1127 + $0x159] sm:$0xff]
        %v1318 = vld [vmem:[%s1127 + $0x169] sm:$0xff]
        %v1319 = vld [vmem:[%s1127 + $0x171] sm:$0xff]
        %v1320 = vld [vmem:[%s1127 + $0x2] sm:$0xff]
        %v1321 = vld [vmem:[%s1127 + $0xa] sm:$0xff]
        %v1322 = vld [vmem:[%s1127 + $0x1a] sm:$0xff]
        %v1323 = vld [vmem:[%s1127 + $0x22] sm:$0xff]
        %v1324 = vld [vmem:[%s1127 + $0x32] sm:$0xff]
        %v1325 = vld [vmem:[%s1127 + $0x3a] sm:$0xff]
        %v1326 = vld [vmem:[%s1127 + $0x4a] sm:$0xff]
        %v1327 = vld [vmem:[%s1127 + $0x52] sm:$0xff]
        %v1328 = vld [vmem:[%s1127 + $0x62] sm:$0xff]
        %v1329 = vld [vmem:[%s1127 + $0x6a] sm:$0xff]
        %v1330 = vld [vmem:[%s1127 + $0x7a] sm:$0xff]
        %v1331 = vld [vmem:[%s1127 + $0x82] sm:$0xff]
        %v1332 = vld [vmem:[%s1127 + $0x92] sm:$0xff]
        %v1333 = vld [vmem:[%s1127 + $0x9a] sm:$0xff]
        %v1334 = vld [vmem:[%s1127 + $0xaa] sm:$0xff]
        %v1335 = vld [vmem:[%s1127 + $0xb2] sm:$0xff]
        %v1336 = vld [vmem:[%s1127 + $0xc2] sm:$0xff]
        %v1337 = vld [vmem:[%s1127 + $0xca] sm:$0xff]
        %v1338 = vld [vmem:[%s1127 + $0xda] sm:$0xff]
        %v1339 = vld [vmem:[%s1127 + $0xe2] sm:$0xff]
        %v1340 = vld [vmem:[%s1127 + $0xf2] sm:$0xff]
        %v1341 = vld [vmem:[%s1127 + $0xfa] sm:$0xff]
        %v1342 = vld [vmem:[%s1127 + $0x10a] sm:$0xff]
        %v1343 = vld [vmem:[%s1127 + $0x112] sm:$0xff]
        %v1344 = vld [vmem:[%s1127 + $0x122] sm:$0xff]
        %v1345 = vld [vmem:[%s1127 + $0x12a] sm:$0xff]
        %v1346 = vld [vmem:[%s1127 + $0x13a] sm:$0xff]
        %v1347 = vld [vmem:[%s1127 + $0x142] sm:$0xff]
        %v1348 = vld [vmem:[%s1127 + $0x152] sm:$0xff]
        %v1349 = vld [vmem:[%s1127 + $0x15a] sm:$0xff]
        %v1350 = vld [vmem:[%s1127 + $0x16a] sm:$0xff]
        %v1351 = vld [vmem:[%s1127 + $0x172] sm:$0xff]
        %s1352 = scalar_lea.vmem [#allocation2], 48
        %v1353 = vld [vmem:[%s1352] sm:$0xff]
        %v1354 = vld [vmem:[%s1352 + $0x8] sm:$0xff]
        %v1355 = vld [vmem:[%s1352 + $0x18] sm:$0xff]
        %v1356 = vld [vmem:[%s1352 + $0x20] sm:$0xff]
        %v1357 = vld [vmem:[%s1352 + $0x30] sm:$0xff]
        %v1358 = vld [vmem:[%s1352 + $0x38] sm:$0xff]
        %v1359 = vld [vmem:[%s1352 + $0x48] sm:$0xff]
        %v1360 = vld [vmem:[%s1352 + $0x50] sm:$0xff]
        %v1361 = vld [vmem:[%s1352 + $0x60] sm:$0xff]
        %v1362 = vld [vmem:[%s1352 + $0x68] sm:$0xff]
        %v1363 = vld [vmem:[%s1352 + $0x78] sm:$0xff]
        %v1364 = vld [vmem:[%s1352 + $0x80] sm:$0xff]
        %v1365 = vld [vmem:[%s1352 + $0x90] sm:$0xff]
        %v1366 = vld [vmem:[%s1352 + $0x98] sm:$0xff]
        %v1367 = vld [vmem:[%s1352 + $0xa8] sm:$0xff]
        %v1368 = vld [vmem:[%s1352 + $0xb0] sm:$0xff]
        %v1369 = vld [vmem:[%s1352 + $0xc0] sm:$0xff]
        %v1370 = vld [vmem:[%s1352 + $0xc8] sm:$0xff]
        %v1371 = vld [vmem:[%s1352 + $0xd8] sm:$0xff]
        %v1372 = vld [vmem:[%s1352 + $0xe0] sm:$0xff]
        %v1373 = vld [vmem:[%s1352 + $0xf0] sm:$0xff]
        %v1374 = vld [vmem:[%s1352 + $0xf8] sm:$0xff]
        %v1375 = vld [vmem:[%s1352 + $0x108] sm:$0xff]
        %v1376 = vld [vmem:[%s1352 + $0x110] sm:$0xff]
        %v1377 = vld [vmem:[%s1352 + $0x120] sm:$0xff]
        %v1378 = vld [vmem:[%s1352 + $0x128] sm:$0xff]
        %v1379 = vld [vmem:[%s1352 + $0x138] sm:$0xff]
        %v1380 = vld [vmem:[%s1352 + $0x140] sm:$0xff]
        %v1381 = vld [vmem:[%s1352 + $0x150] sm:$0xff]
        %v1382 = vld [vmem:[%s1352 + $0x158] sm:$0xff]
        %v1383 = vld [vmem:[%s1352 + $0x168] sm:$0xff]
        %v1384 = vld [vmem:[%s1352 + $0x170] sm:$0xff]
        %v1385 = vld [vmem:[%s1352 + $0x1] sm:$0xff]
        %v1386 = vld [vmem:[%s1352 + $0x9] sm:$0xff]
        %v1387 = vld [vmem:[%s1352 + $0x19] sm:$0xff]
        %v1388 = vld [vmem:[%s1352 + $0x21] sm:$0xff]
        %v1389 = vld [vmem:[%s1352 + $0x31] sm:$0xff]
        %v1390 = vld [vmem:[%s1352 + $0x39] sm:$0xff]
        %v1391 = vld [vmem:[%s1352 + $0x49] sm:$0xff]
        %v1392 = vld [vmem:[%s1352 + $0x51] sm:$0xff]
        %v1393 = vld [vmem:[%s1352 + $0x61] sm:$0xff]
        %v1394 = vld [vmem:[%s1352 + $0x69] sm:$0xff]
        %v1395 = vld [vmem:[%s1352 + $0x79] sm:$0xff]
        %v1396 = vld [vmem:[%s1352 + $0x81] sm:$0xff]
        %v1397 = vld [vmem:[%s1352 + $0x91] sm:$0xff]
        %v1398 = vld [vmem:[%s1352 + $0x99] sm:$0xff]
        %v1399 = vld [vmem:[%s1352 + $0xa9] sm:$0xff]
        %v1400 = vld [vmem:[%s1352 + $0xb1] sm:$0xff]
        %v1401 = vld [vmem:[%s1352 + $0xc1] sm:$0xff]
        %v1402 = vld [vmem:[%s1352 + $0xc9] sm:$0xff]
        %v1403 = vld [vmem:[%s1352 + $0xd9] sm:$0xff]
        %v1404 = vld [vmem:[%s1352 + $0xe1] sm:$0xff]
        %v1405 = vld [vmem:[%s1352 + $0xf1] sm:$0xff]
        %v1406 = vld [vmem:[%s1352 + $0xf9] sm:$0xff]
        %v1407 = vld [vmem:[%s1352 + $0x109] sm:$0xff]
        %v1408 = vld [vmem:[%s1352 + $0x111] sm:$0xff]
        %v1409 = vld [vmem:[%s1352 + $0x121] sm:$0xff]
        %v1410 = vld [vmem:[%s1352 + $0x129] sm:$0xff]
        %v1411 = vld [vmem:[%s1352 + $0x139] sm:$0xff]
        %v1412 = vld [vmem:[%s1352 + $0x141] sm:$0xff]
        %v1413 = vld [vmem:[%s1352 + $0x151] sm:$0xff]
        %v1414 = vld [vmem:[%s1352 + $0x159] sm:$0xff]
        %v1415 = vld [vmem:[%s1352 + $0x169] sm:$0xff]
        %v1416 = vld [vmem:[%s1352 + $0x171] sm:$0xff]
        %v1417 = vld [vmem:[%s1352 + $0x2] sm:$0xff]
        %v1418 = vld [vmem:[%s1352 + $0xa] sm:$0xff]
        %v1419 = vld [vmem:[%s1352 + $0x1a] sm:$0xff]
        %v1420 = vld [vmem:[%s1352 + $0x22] sm:$0xff]
        %v1421 = vld [vmem:[%s1352 + $0x32] sm:$0xff]
        %v1422 = vld [vmem:[%s1352 + $0x3a] sm:$0xff]
        %v1423 = vld [vmem:[%s1352 + $0x4a] sm:$0xff]
        %v1424 = vld [vmem:[%s1352 + $0x52] sm:$0xff]
        %v1425 = vld [vmem:[%s1352 + $0x62] sm:$0xff]
        %v1426 = vld [vmem:[%s1352 + $0x6a] sm:$0xff]
        %v1427 = vld [vmem:[%s1352 + $0x7a] sm:$0xff]
        %v1428 = vld [vmem:[%s1352 + $0x82] sm:$0xff]
        %v1429 = vld [vmem:[%s1352 + $0x92] sm:$0xff]
        %v1430 = vld [vmem:[%s1352 + $0x9a] sm:$0xff]
        %v1431 = vld [vmem:[%s1352 + $0xaa] sm:$0xff]
        %v1432 = vld [vmem:[%s1352 + $0xb2] sm:$0xff]
        %v1433 = vld [vmem:[%s1352 + $0xc2] sm:$0xff]
        %v1434 = vld [vmem:[%s1352 + $0xca] sm:$0xff]
        %v1435 = vld [vmem:[%s1352 + $0xda] sm:$0xff]
        %v1436 = vld [vmem:[%s1352 + $0xe2] sm:$0xff]
        %v1437 = vld [vmem:[%s1352 + $0xf2] sm:$0xff]
        %v1438 = vld [vmem:[%s1352 + $0xfa] sm:$0xff]
        %v1439 = vld [vmem:[%s1352 + $0x10a] sm:$0xff]
        %v1440 = vld [vmem:[%s1352 + $0x112] sm:$0xff]
        %v1441 = vld [vmem:[%s1352 + $0x122] sm:$0xff]
        %v1442 = vld [vmem:[%s1352 + $0x12a] sm:$0xff]
        %v1443 = vld [vmem:[%s1352 + $0x13a] sm:$0xff]
        %v1444 = vld [vmem:[%s1352 + $0x142] sm:$0xff]
        %v1445 = vld [vmem:[%s1352 + $0x152] sm:$0xff]
        %v1446 = vld [vmem:[%s1352 + $0x15a] sm:$0xff]
        %v1447 = vld [vmem:[%s1352 + $0x16a] sm:$0xff]
        %v1448 = vld [vmem:[%s1352 + $0x172] sm:$0xff]
        %1481 = vrot.lane.b32.xlu0 %v1192, 32
        %v1482 = vpop.permute.xlu0 %1481
        %1483 = vrot.lane.b32.xlu0 %v1193, 32
        %v1484 = vpop.permute.xlu0 %1483
        %1485 = vrot.lane.b32.xlu0 %v1194, 32
        %v1486 = vpop.permute.xlu0 %1485
        %1487 = vrot.lane.b32.xlu0 %v1195, 32
        %v1488 = vpop.permute.xlu0 %1487
        %1489 = vrot.lane.b32.xlu0 %v1196, 32
        %v1490 = vpop.permute.xlu0 %1489
        %1491 = vrot.lane.b32.xlu0 %v1197, 32
        %v1492 = vpop.permute.xlu0 %1491
        %1493 = vrot.lane.b32.xlu0 %v1198, 32
        %v1494 = vpop.permute.xlu0 %1493
        %1495 = vrot.lane.b32.xlu0 %v1199, 32
        %v1496 = vpop.permute.xlu0 %1495
        %1497 = vrot.lane.b32.xlu0 %v1200, 32
        %v1498 = vpop.permute.xlu0 %1497
        %1499 = vrot.lane.b32.xlu0 %v1201, 32
        %v1500 = vpop.permute.xlu0 %1499
        %1501 = vrot.lane.b32.xlu0 %v1202, 32
        %v1502 = vpop.permute.xlu0 %1501
        %1503 = vrot.lane.b32.xlu0 %v1203, 32
        %v1504 = vpop.permute.xlu0 %1503
        %1505 = vrot.lane.b32.xlu0 %v1204, 32
        %v1506 = vpop.permute.xlu0 %1505
        %1507 = vrot.lane.b32.xlu0 %v1205, 32
        %v1508 = vpop.permute.xlu0 %1507
        %1509 = vrot.lane.b32.xlu0 %v1206, 32
        %v1510 = vpop.permute.xlu0 %1509
        %1511 = vrot.lane.b32.xlu0 %v1207, 32
        %v1512 = vpop.permute.xlu0 %1511
        %1513 = vrot.lane.b32.xlu0 %v1208, 32
        %v1514 = vpop.permute.xlu0 %1513
        %1515 = vrot.lane.b32.xlu0 %v1209, 32
        %v1516 = vpop.permute.xlu0 %1515
        %1517 = vrot.lane.b32.xlu0 %v1210, 32
        %v1518 = vpop.permute.xlu0 %1517
        %1519 = vrot.lane.b32.xlu0 %v1211, 32
        %v1520 = vpop.permute.xlu0 %1519
        %1521 = vrot.lane.b32.xlu0 %v1212, 32
        %v1522 = vpop.permute.xlu0 %1521
        %1523 = vrot.lane.b32.xlu0 %v1213, 32
        %v1524 = vpop.permute.xlu0 %1523
        %1525 = vrot.lane.b32.xlu0 %v1214, 32
        %v1526 = vpop.permute.xlu0 %1525
        %1527 = vrot.lane.b32.xlu0 %v1215, 32
        %v1528 = vpop.permute.xlu0 %1527
        %1529 = vrot.lane.b32.xlu0 %v1216, 32
        %v1530 = vpop.permute.xlu0 %1529
        %1531 = vrot.lane.b32.xlu0 %v1217, 32
        %v1532 = vpop.permute.xlu0 %1531
        %1533 = vrot.lane.b32.xlu0 %v1218, 32
        %v1534 = vpop.permute.xlu0 %1533
        %1535 = vrot.lane.b32.xlu0 %v1219, 32
        %v1536 = vpop.permute.xlu0 %1535
        %1537 = vrot.lane.b32.xlu0 %v1220, 32
        %v1538 = vpop.permute.xlu0 %1537
        %1539 = vrot.lane.b32.xlu0 %v1221, 32
        %v1540 = vpop.permute.xlu0 %1539
        %1541 = vrot.lane.b32.xlu0 %v1222, 32
        %v1542 = vpop.permute.xlu0 %1541
        %1543 = vrot.lane.b32.xlu0 %v1223, 32
        %v1544 = vpop.permute.xlu0 %1543
        %1609 = vrot.lane.b32.xlu0 %v1224, 64
        %v1610 = vpop.permute.xlu0 %1609
        %1611 = vrot.lane.b32.xlu0 %v1225, 64
        %v1612 = vpop.permute.xlu0 %1611
        %1613 = vrot.lane.b32.xlu0 %v1226, 64
        %v1614 = vpop.permute.xlu0 %1613
        %1615 = vrot.lane.b32.xlu0 %v1227, 64
        %v1616 = vpop.permute.xlu0 %1615
        %1617 = vrot.lane.b32.xlu0 %v1228, 64
        %v1618 = vpop.permute.xlu0 %1617
        %1619 = vrot.lane.b32.xlu0 %v1229, 64
        %v1620 = vpop.permute.xlu0 %1619
        %1621 = vrot.lane.b32.xlu0 %v1230, 64
        %v1622 = vpop.permute.xlu0 %1621
        %1623 = vrot.lane.b32.xlu0 %v1231, 64
        %v1624 = vpop.permute.xlu0 %1623
        %1625 = vrot.lane.b32.xlu0 %v1232, 64
        %v1626 = vpop.permute.xlu0 %1625
        %1627 = vrot.lane.b32.xlu0 %v1233, 64
        %v1628 = vpop.permute.xlu0 %1627
        %1629 = vrot.lane.b32.xlu0 %v1234, 64
        %v1630 = vpop.permute.xlu0 %1629
        %1631 = vrot.lane.b32.xlu0 %v1235, 64
        %v1632 = vpop.permute.xlu0 %1631
        %1633 = vrot.lane.b32.xlu0 %v1236, 64
        %v1634 = vpop.permute.xlu0 %1633
        %1635 = vrot.lane.b32.xlu0 %v1237, 64
        %v1636 = vpop.permute.xlu0 %1635
        %1637 = vrot.lane.b32.xlu0 %v1238, 64
        %v1638 = vpop.permute.xlu0 %1637
        %1639 = vrot.lane.b32.xlu0 %v1239, 64
        %v1640 = vpop.permute.xlu0 %1639
        %1641 = vrot.lane.b32.xlu0 %v1240, 64
        %v1642 = vpop.permute.xlu0 %1641
        %1643 = vrot.lane.b32.xlu0 %v1241, 64
        %v1644 = vpop.permute.xlu0 %1643
        %1645 = vrot.lane.b32.xlu0 %v1242, 64
        %v1646 = vpop.permute.xlu0 %1645
        %1647 = vrot.lane.b32.xlu0 %v1243, 64
        %v1648 = vpop.permute.xlu0 %1647
        %1649 = vrot.lane.b32.xlu0 %v1244, 64
        %v1650 = vpop.permute.xlu0 %1649
        %1651 = vrot.lane.b32.xlu0 %v1245, 64
        %v1652 = vpop.permute.xlu0 %1651
        %1653 = vrot.lane.b32.xlu0 %v1246, 64
        %v1654 = vpop.permute.xlu0 %1653
        %1655 = vrot.lane.b32.xlu0 %v1247, 64
        %v1656 = vpop.permute.xlu0 %1655
        %1657 = vrot.lane.b32.xlu0 %v1248, 64
        %v1658 = vpop.permute.xlu0 %1657
        %1659 = vrot.lane.b32.xlu0 %v1249, 64
        %v1660 = vpop.permute.xlu0 %1659
        %1661 = vrot.lane.b32.xlu0 %v1250, 64
        %v1662 = vpop.permute.xlu0 %1661
        %1663 = vrot.lane.b32.xlu0 %v1251, 64
        %v1664 = vpop.permute.xlu0 %1663
        %1665 = vrot.lane.b32.xlu0 %v1252, 64
        %v1666 = vpop.permute.xlu0 %1665
        %1667 = vrot.lane.b32.xlu0 %v1253, 64
        %v1668 = vpop.permute.xlu0 %1667
        %1669 = vrot.lane.b32.xlu0 %v1254, 64
        %v1670 = vpop.permute.xlu0 %1669
        %1671 = vrot.lane.b32.xlu0 %v1255, 64
        %v1672 = vpop.permute.xlu0 %1671
        %1737 = vrot.lane.b32.xlu0 %v1256, 96
        %v1738 = vpop.permute.xlu0 %1737
        %1739 = vrot.lane.b32.xlu0 %v1257, 96
        %v1740 = vpop.permute.xlu0 %1739
        %1741 = vrot.lane.b32.xlu0 %v1258, 96
        %v1742 = vpop.permute.xlu0 %1741
        %1743 = vrot.lane.b32.xlu0 %v1259, 96
        %v1744 = vpop.permute.xlu0 %1743
        %1745 = vrot.lane.b32.xlu0 %v1260, 96
        %v1746 = vpop.permute.xlu0 %1745
        %1747 = vrot.lane.b32.xlu0 %v1261, 96
        %v1748 = vpop.permute.xlu0 %1747
        %1749 = vrot.lane.b32.xlu0 %v1262, 96
        %v1750 = vpop.permute.xlu0 %1749
        %1751 = vrot.lane.b32.xlu0 %v1263, 96
        %v1752 = vpop.permute.xlu0 %1751
        %1753 = vrot.lane.b32.xlu0 %v1264, 96
        %v1754 = vpop.permute.xlu0 %1753
        %1755 = vrot.lane.b32.xlu0 %v1265, 96
        %v1756 = vpop.permute.xlu0 %1755
        %1757 = vrot.lane.b32.xlu0 %v1266, 96
        %v1758 = vpop.permute.xlu0 %1757
        %1759 = vrot.lane.b32.xlu0 %v1267, 96
        %v1760 = vpop.permute.xlu0 %1759
        %1761 = vrot.lane.b32.xlu0 %v1268, 96
        %v1762 = vpop.permute.xlu0 %1761
        %1763 = vrot.lane.b32.xlu0 %v1269, 96
        %v1764 = vpop.permute.xlu0 %1763
        %1765 = vrot.lane.b32.xlu0 %v1270, 96
        %v1766 = vpop.permute.xlu0 %1765
        %1767 = vrot.lane.b32.xlu0 %v1271, 96
        %v1768 = vpop.permute.xlu0 %1767
        %1769 = vrot.lane.b32.xlu0 %v1272, 96
        %v1770 = vpop.permute.xlu0 %1769
        %1771 = vrot.lane.b32.xlu0 %v1273, 96
        %v1772 = vpop.permute.xlu0 %1771
        %1773 = vrot.lane.b32.xlu0 %v1274, 96
        %v1774 = vpop.permute.xlu0 %1773
        %1775 = vrot.lane.b32.xlu0 %v1275, 96
        %v1776 = vpop.permute.xlu0 %1775
        %1777 = vrot.lane.b32.xlu0 %v1276, 96
        %v1778 = vpop.permute.xlu0 %1777
        %1779 = vrot.lane.b32.xlu0 %v1277, 96
        %v1780 = vpop.permute.xlu0 %1779
        %1781 = vrot.lane.b32.xlu0 %v1278, 96
        %v1782 = vpop.permute.xlu0 %1781
        %1783 = vrot.lane.b32.xlu0 %v1279, 96
        %v1784 = vpop.permute.xlu0 %1783
        %1785 = vrot.lane.b32.xlu0 %v1280, 96
        %v1786 = vpop.permute.xlu0 %1785
        %1787 = vrot.lane.b32.xlu0 %v1281, 96
        %v1788 = vpop.permute.xlu0 %1787
        %1789 = vrot.lane.b32.xlu0 %v1282, 96
        %v1790 = vpop.permute.xlu0 %1789
        %1791 = vrot.lane.b32.xlu0 %v1283, 96
        %v1792 = vpop.permute.xlu0 %1791
        %1793 = vrot.lane.b32.xlu0 %v1284, 96
        %v1794 = vpop.permute.xlu0 %1793
        %1795 = vrot.lane.b32.xlu0 %v1285, 96
        %v1796 = vpop.permute.xlu0 %1795
        %1797 = vrot.lane.b32.xlu0 %v1286, 96
        %v1798 = vpop.permute.xlu0 %1797
        %1799 = vrot.lane.b32.xlu0 %v1287, 96
        %v1800 = vpop.permute.xlu0 %1799
        %1865 = vrot.lane.b32.xlu0 %v1320, 32
        %v1866 = vpop.permute.xlu0 %1865
        %1867 = vrot.lane.b32.xlu0 %v1321, 32
        %v1868 = vpop.permute.xlu0 %1867
        %1869 = vrot.lane.b32.xlu0 %v1322, 32
        %v1870 = vpop.permute.xlu0 %1869
        %1871 = vrot.lane.b32.xlu0 %v1323, 32
        %v1872 = vpop.permute.xlu0 %1871
        %1873 = vrot.lane.b32.xlu0 %v1324, 32
        %v1874 = vpop.permute.xlu0 %1873
        %1875 = vrot.lane.b32.xlu0 %v1325, 32
        %v1876 = vpop.permute.xlu0 %1875
        %1877 = vrot.lane.b32.xlu0 %v1326, 32
        %v1878 = vpop.permute.xlu0 %1877
        %1879 = vrot.lane.b32.xlu0 %v1327, 32
        %v1880 = vpop.permute.xlu0 %1879
        %1881 = vrot.lane.b32.xlu0 %v1328, 32
        %v1882 = vpop.permute.xlu0 %1881
        %1883 = vrot.lane.b32.xlu0 %v1329, 32
        %v1884 = vpop.permute.xlu0 %1883
        %1885 = vrot.lane.b32.xlu0 %v1330, 32
        %v1886 = vpop.permute.xlu0 %1885
        %1887 = vrot.lane.b32.xlu0 %v1331, 32
        %v1888 = vpop.permute.xlu0 %1887
        %1889 = vrot.lane.b32.xlu0 %v1332, 32
        %v1890 = vpop.permute.xlu0 %1889
        %1891 = vrot.lane.b32.xlu0 %v1333, 32
        %v1892 = vpop.permute.xlu0 %1891
        %1893 = vrot.lane.b32.xlu0 %v1334, 32
        %v1894 = vpop.permute.xlu0 %1893
        %1895 = vrot.lane.b32.xlu0 %v1335, 32
        %v1896 = vpop.permute.xlu0 %1895
        %1897 = vrot.lane.b32.xlu0 %v1336, 32
        %v1898 = vpop.permute.xlu0 %1897
        %1899 = vrot.lane.b32.xlu0 %v1337, 32
        %v1900 = vpop.permute.xlu0 %1899
        %1901 = vrot.lane.b32.xlu0 %v1338, 32
        %v1902 = vpop.permute.xlu0 %1901
        %1903 = vrot.lane.b32.xlu0 %v1339, 32
        %v1904 = vpop.permute.xlu0 %1903
        %1905 = vrot.lane.b32.xlu0 %v1340, 32
        %v1906 = vpop.permute.xlu0 %1905
        %1907 = vrot.lane.b32.xlu0 %v1341, 32
        %v1908 = vpop.permute.xlu0 %1907
        %1909 = vrot.lane.b32.xlu0 %v1342, 32
        %v1910 = vpop.permute.xlu0 %1909
        %1911 = vrot.lane.b32.xlu0 %v1343, 32
        %v1912 = vpop.permute.xlu0 %1911
        %1913 = vrot.lane.b32.xlu0 %v1344, 32
        %v1914 = vpop.permute.xlu0 %1913
        %1915 = vrot.lane.b32.xlu0 %v1345, 32
        %v1916 = vpop.permute.xlu0 %1915
        %1917 = vrot.lane.b32.xlu0 %v1346, 32
        %v1918 = vpop.permute.xlu0 %1917
        %1919 = vrot.lane.b32.xlu0 %v1347, 32
        %v1920 = vpop.permute.xlu0 %1919
        %1921 = vrot.lane.b32.xlu0 %v1348, 32
        %v1922 = vpop.permute.xlu0 %1921
        %1923 = vrot.lane.b32.xlu0 %v1349, 32
        %v1924 = vpop.permute.xlu0 %1923
        %1925 = vrot.lane.b32.xlu0 %v1350, 32
        %v1926 = vpop.permute.xlu0 %1925
        %1927 = vrot.lane.b32.xlu0 %v1351, 32
        %v1928 = vpop.permute.xlu0 %1927
        %1993 = vrot.lane.b32.xlu0 %v1353, 64
        %v1994 = vpop.permute.xlu0 %1993
        %1995 = vrot.lane.b32.xlu0 %v1354, 64
        %v1996 = vpop.permute.xlu0 %1995
        %1997 = vrot.lane.b32.xlu0 %v1355, 64
        %v1998 = vpop.permute.xlu0 %1997
        %1999 = vrot.lane.b32.xlu0 %v1356, 64
        %v2000 = vpop.permute.xlu0 %1999
        %2001 = vrot.lane.b32.xlu0 %v1357, 64
        %v2002 = vpop.permute.xlu0 %2001
        %2003 = vrot.lane.b32.xlu0 %v1358, 64
        %v2004 = vpop.permute.xlu0 %2003
        %2005 = vrot.lane.b32.xlu0 %v1359, 64
        %v2006 = vpop.permute.xlu0 %2005
        %2007 = vrot.lane.b32.xlu0 %v1360, 64
        %v2008 = vpop.permute.xlu0 %2007
        %2009 = vrot.lane.b32.xlu0 %v1361, 64
        %v2010 = vpop.permute.xlu0 %2009
        %2011 = vrot.lane.b32.xlu0 %v1362, 64
        %v2012 = vpop.permute.xlu0 %2011
        %2013 = vrot.lane.b32.xlu0 %v1363, 64
        %v2014 = vpop.permute.xlu0 %2013
        %2015 = vrot.lane.b32.xlu0 %v1364, 64
        %v2016 = vpop.permute.xlu0 %2015
        %2017 = vrot.lane.b32.xlu0 %v1365, 64
        %v2018 = vpop.permute.xlu0 %2017
        %2019 = vrot.lane.b32.xlu0 %v1366, 64
        %v2020 = vpop.permute.xlu0 %2019
        %2021 = vrot.lane.b32.xlu0 %v1367, 64
        %v2022 = vpop.permute.xlu0 %2021
        %2023 = vrot.lane.b32.xlu0 %v1368, 64
        %v2024 = vpop.permute.xlu0 %2023
        %2025 = vrot.lane.b32.xlu0 %v1369, 64
        %v2026 = vpop.permute.xlu0 %2025
        %2027 = vrot.lane.b32.xlu0 %v1370, 64
        %v2028 = vpop.permute.xlu0 %2027
        %2029 = vrot.lane.b32.xlu0 %v1371, 64
        %v2030 = vpop.permute.xlu0 %2029
        %2031 = vrot.lane.b32.xlu0 %v1372, 64
        %v2032 = vpop.permute.xlu0 %2031
        %2033 = vrot.lane.b32.xlu0 %v1373, 64
        %v2034 = vpop.permute.xlu0 %2033
        %2035 = vrot.lane.b32.xlu0 %v1374, 64
        %v2036 = vpop.permute.xlu0 %2035
        %2037 = vrot.lane.b32.xlu0 %v1375, 64
        %v2038 = vpop.permute.xlu0 %2037
        %2039 = vrot.lane.b32.xlu0 %v1376, 64
        %v2040 = vpop.permute.xlu0 %2039
        %2041 = vrot.lane.b32.xlu0 %v1377, 64
        %v2042 = vpop.permute.xlu0 %2041
        %2043 = vrot.lane.b32.xlu0 %v1378, 64
        %v2044 = vpop.permute.xlu0 %2043
        %2045 = vrot.lane.b32.xlu0 %v1379, 64
        %v2046 = vpop.permute.xlu0 %2045
        %2047 = vrot.lane.b32.xlu0 %v1380, 64
        %v2048 = vpop.permute.xlu0 %2047
        %2049 = vrot.lane.b32.xlu0 %v1381, 64
        %v2050 = vpop.permute.xlu0 %2049
        %2051 = vrot.lane.b32.xlu0 %v1382, 64
        %v2052 = vpop.permute.xlu0 %2051
        %2053 = vrot.lane.b32.xlu0 %v1383, 64
        %v2054 = vpop.permute.xlu0 %2053
        %2055 = vrot.lane.b32.xlu0 %v1384, 64
        %v2056 = vpop.permute.xlu0 %2055
        %2121 = vrot.lane.b32.xlu0 %v1385, 96
        %v2122 = vpop.permute.xlu0 %2121
        %2123 = vrot.lane.b32.xlu0 %v1386, 96
        %v2124 = vpop.permute.xlu0 %2123
        %2125 = vrot.lane.b32.xlu0 %v1387, 96
        %v2126 = vpop.permute.xlu0 %2125
        %2127 = vrot.lane.b32.xlu0 %v1388, 96
        %v2128 = vpop.permute.xlu0 %2127
        %2129 = vrot.lane.b32.xlu0 %v1389, 96
        %v2130 = vpop.permute.xlu0 %2129
        %2131 = vrot.lane.b32.xlu0 %v1390, 96
        %v2132 = vpop.permute.xlu0 %2131
        %2133 = vrot.lane.b32.xlu0 %v1391, 96
        %v2134 = vpop.permute.xlu0 %2133
        %2135 = vrot.lane.b32.xlu0 %v1392, 96
        %v2136 = vpop.permute.xlu0 %2135
        %2137 = vrot.lane.b32.xlu0 %v1393, 96
        %v2138 = vpop.permute.xlu0 %2137
        %2139 = vrot.lane.b32.xlu0 %v1394, 96
        %v2140 = vpop.permute.xlu0 %2139
        %2141 = vrot.lane.b32.xlu0 %v1395, 96
        %v2142 = vpop.permute.xlu0 %2141
        %2143 = vrot.lane.b32.xlu0 %v1396, 96
        %v2144 = vpop.permute.xlu0 %2143
        %2145 = vrot.lane.b32.xlu0 %v1397, 96
        %v2146 = vpop.permute.xlu0 %2145
        %2147 = vrot.lane.b32.xlu0 %v1398, 96
        %v2148 = vpop.permute.xlu0 %2147
        %2149 = vrot.lane.b32.xlu0 %v1399, 96
        %v2150 = vpop.permute.xlu0 %2149
        %2151 = vrot.lane.b32.xlu0 %v1400, 96
        %v2152 = vpop.permute.xlu0 %2151
        %2153 = vrot.lane.b32.xlu0 %v1401, 96
        %v2154 = vpop.permute.xlu0 %2153
        %2155 = vrot.lane.b32.xlu0 %v1402, 96
        %v2156 = vpop.permute.xlu0 %2155
        %2157 = vrot.lane.b32.xlu0 %v1403, 96
        %v2158 = vpop.permute.xlu0 %2157
        %2159 = vrot.lane.b32.xlu0 %v1404, 96
        %v2160 = vpop.permute.xlu0 %2159
        %2161 = vrot.lane.b32.xlu0 %v1405, 96
        %v2162 = vpop.permute.xlu0 %2161
        %2163 = vrot.lane.b32.xlu0 %v1406, 96
        %v2164 = vpop.permute.xlu0 %2163
        %2165 = vrot.lane.b32.xlu0 %v1407, 96
        %v2166 = vpop.permute.xlu0 %2165
        %2167 = vrot.lane.b32.xlu0 %v1408, 96
        %v2168 = vpop.permute.xlu0 %2167
        %2169 = vrot.lane.b32.xlu0 %v1409, 96
        %v2170 = vpop.permute.xlu0 %2169
        %2171 = vrot.lane.b32.xlu0 %v1410, 96
        %v2172 = vpop.permute.xlu0 %2171
        %2173 = vrot.lane.b32.xlu0 %v1411, 96
        %v2174 = vpop.permute.xlu0 %2173
        %2175 = vrot.lane.b32.xlu0 %v1412, 96
        %v2176 = vpop.permute.xlu0 %2175
        %2177 = vrot.lane.b32.xlu0 %v1413, 96
        %v2178 = vpop.permute.xlu0 %2177
        %2179 = vrot.lane.b32.xlu0 %v1414, 96
        %v2180 = vpop.permute.xlu0 %2179
        %2181 = vrot.lane.b32.xlu0 %v1415, 96
        %v2182 = vpop.permute.xlu0 %2181
        %2183 = vrot.lane.b32.xlu0 %v1416, 96
        %v2184 = vpop.permute.xlu0 %2183
        %v2217 = vsel %vm1071, %v1160, %v1482
        %v2218 = vsel %vm1071, %v1161, %v1484
        %v2219 = vsel %vm1071, %v1162, %v1486
        %v2220 = vsel %vm1071, %v1163, %v1488
        %v2221 = vsel %vm1071, %v1164, %v1490
        %v2222 = vsel %vm1071, %v1165, %v1492
        %v2223 = vsel %vm1071, %v1166, %v1494
        %v2224 = vsel %vm1071, %v1167, %v1496
        %v2225 = vsel %vm1071, %v1168, %v1498
        %v2226 = vsel %vm1071, %v1169, %v1500
        %v2227 = vsel %vm1071, %v1170, %v1502
        %v2228 = vsel %vm1071, %v1171, %v1504
        %v2229 = vsel %vm1071, %v1172, %v1506
        %v2230 = vsel %vm1071, %v1173, %v1508
        %v2231 = vsel %vm1071, %v1174, %v1510
        %v2232 = vsel %vm1071, %v1175, %v1512
        %v2233 = vsel %vm1071, %v1176, %v1514
        %v2234 = vsel %vm1071, %v1177, %v1516
        %v2235 = vsel %vm1071, %v1178, %v1518
        %v2236 = vsel %vm1071, %v1179, %v1520
        %v2237 = vsel %vm1071, %v1180, %v1522
        %v2238 = vsel %vm1071, %v1181, %v1524
        %v2239 = vsel %vm1071, %v1182, %v1526
        %v2240 = vsel %vm1071, %v1183, %v1528
        %v2241 = vsel %vm1071, %v1184, %v1530
        %v2242 = vsel %vm1071, %v1185, %v1532
        %v2243 = vsel %vm1071, %v1186, %v1534
        %v2244 = vsel %vm1071, %v1187, %v1536
        %v2245 = vsel %vm1071, %v1188, %v1538
        %v2246 = vsel %vm1071, %v1189, %v1540
        %v2247 = vsel %vm1071, %v1190, %v1542
        %v2248 = vsel %vm1071, %v1191, %v1544
        %vm2249 = vcmask 523264
        %v2250 = vsel %vm2249, %v2217, %v1610
        %v2251 = vsel %vm2249, %v2218, %v1612
        %v2252 = vsel %vm2249, %v2219, %v1614
        %v2253 = vsel %vm2249, %v2220, %v1616
        %v2254 = vsel %vm2249, %v2221, %v1618
        %v2255 = vsel %vm2249, %v2222, %v1620
        %v2256 = vsel %vm2249, %v2223, %v1622
        %v2257 = vsel %vm2249, %v2224, %v1624
        %v2258 = vsel %vm2249, %v2225, %v1626
        %v2259 = vsel %vm2249, %v2226, %v1628
        %v2260 = vsel %vm2249, %v2227, %v1630
        %v2261 = vsel %vm2249, %v2228, %v1632
        %v2262 = vsel %vm2249, %v2229, %v1634
        %v2263 = vsel %vm2249, %v2230, %v1636
        %v2264 = vsel %vm2249, %v2231, %v1638
        %v2265 = vsel %vm2249, %v2232, %v1640
        %v2266 = vsel %vm2249, %v2233, %v1642
        %v2267 = vsel %vm2249, %v2234, %v1644
        %v2268 = vsel %vm2249, %v2235, %v1646
        %v2269 = vsel %vm2249, %v2236, %v1648
        %v2270 = vsel %vm2249, %v2237, %v1650
        %v2271 = vsel %vm2249, %v2238, %v1652
        %v2272 = vsel %vm2249, %v2239, %v1654
        %v2273 = vsel %vm2249, %v2240, %v1656
        %v2274 = vsel %vm2249, %v2241, %v1658
        %v2275 = vsel %vm2249, %v2242, %v1660
        %v2276 = vsel %vm2249, %v2243, %v1662
        %v2277 = vsel %vm2249, %v2244, %v1664
        %v2278 = vsel %vm2249, %v2245, %v1666
        %v2279 = vsel %vm2249, %v2246, %v1668
        %v2280 = vsel %vm2249, %v2247, %v1670
        %v2281 = vsel %vm2249, %v2248, %v1672
        %vm2282 = vcmask 785408
        %v2283 = vsel %vm2282, %v2250, %v1738
        %v2284 = vsel %vm2282, %v2251, %v1740
        %v2285 = vsel %vm2282, %v2252, %v1742
        %v2286 = vsel %vm2282, %v2253, %v1744
        %v2287 = vsel %vm2282, %v2254, %v1746
        %v2288 = vsel %vm2282, %v2255, %v1748
        %v2289 = vsel %vm2282, %v2256, %v1750
        %v2290 = vsel %vm2282, %v2257, %v1752
        %v2291 = vsel %vm2282, %v2258, %v1754
        %v2292 = vsel %vm2282, %v2259, %v1756
        %v2293 = vsel %vm2282, %v2260, %v1758
        %v2294 = vsel %vm2282, %v2261, %v1760
        %v2295 = vsel %vm2282, %v2262, %v1762
        %v2296 = vsel %vm2282, %v2263, %v1764
        %v2297 = vsel %vm2282, %v2264, %v1766
        %v2298 = vsel %vm2282, %v2265, %v1768
        %v2299 = vsel %vm2282, %v2266, %v1770
        %v2300 = vsel %vm2282, %v2267, %v1772
        %v2301 = vsel %vm2282, %v2268, %v1774
        %v2302 = vsel %vm2282, %v2269, %v1776
        %v2303 = vsel %vm2282, %v2270, %v1778
        %v2304 = vsel %vm2282, %v2271, %v1780
        %v2305 = vsel %vm2282, %v2272, %v1782
        %v2306 = vsel %vm2282, %v2273, %v1784
        %v2307 = vsel %vm2282, %v2274, %v1786
        %v2308 = vsel %vm2282, %v2275, %v1788
        %v2309 = vsel %vm2282, %v2276, %v1790
        %v2310 = vsel %vm2282, %v2277, %v1792
        %v2311 = vsel %vm2282, %v2278, %v1794
        %v2312 = vsel %vm2282, %v2279, %v1796
        %v2313 = vsel %vm2282, %v2280, %v1798
        %v2314 = vsel %vm2282, %v2281, %v1800
        %v2315 = vsel %vm1071, %v1288, %v1866
        %v2316 = vsel %vm1071, %v1289, %v1868
        %v2317 = vsel %vm1071, %v1290, %v1870
        %v2318 = vsel %vm1071, %v1291, %v1872
        %v2319 = vsel %vm1071, %v1292, %v1874
        %v2320 = vsel %vm1071, %v1293, %v1876
        %v2321 = vsel %vm1071, %v1294, %v1878
        %v2322 = vsel %vm1071, %v1295, %v1880
        %v2323 = vsel %vm1071, %v1296, %v1882
        %v2324 = vsel %vm1071, %v1297, %v1884
        %v2325 = vsel %vm1071, %v1298, %v1886
        %v2326 = vsel %vm1071, %v1299, %v1888
        %v2327 = vsel %vm1071, %v1300, %v1890
        %v2328 = vsel %vm1071, %v1301, %v1892
        %v2329 = vsel %vm1071, %v1302, %v1894
        %v2330 = vsel %vm1071, %v1303, %v1896
        %v2331 = vsel %vm1071, %v1304, %v1898
        %v2332 = vsel %vm1071, %v1305, %v1900
        %v2333 = vsel %vm1071, %v1306, %v1902
        %v2334 = vsel %vm1071, %v1307, %v1904
        %v2335 = vsel %vm1071, %v1308, %v1906
        %v2336 = vsel %vm1071, %v1309, %v1908
        %v2337 = vsel %vm1071, %v1310, %v1910
        %v2338 = vsel %vm1071, %v1311, %v1912
        %v2339 = vsel %vm1071, %v1312, %v1914
        %v2340 = vsel %vm1071, %v1313, %v1916
        %v2341 = vsel %vm1071, %v1314, %v1918
        %v2342 = vsel %vm1071, %v1315, %v1920
        %v2343 = vsel %vm1071, %v1316, %v1922
        %v2344 = vsel %vm1071, %v1317, %v1924
        %v2345 = vsel %vm1071, %v1318, %v1926
        %v2346 = vsel %vm1071, %v1319, %v1928
        %v2347 = vsel %vm2249, %v2315, %v1994
        %v2348 = vsel %vm2249, %v2316, %v1996
        %v2349 = vsel %vm2249, %v2317, %v1998
        %v2350 = vsel %vm2249, %v2318, %v2000
        %v2351 = vsel %vm2249, %v2319, %v2002
        %v2352 = vsel %vm2249, %v2320, %v2004
        %v2353 = vsel %vm2249, %v2321, %v2006
        %v2354 = vsel %vm2249, %v2322, %v2008
        %v2355 = vsel %vm2249, %v2323, %v2010
        %v2356 = vsel %vm2249, %v2324, %v2012
        %v2357 = vsel %vm2249, %v2325, %v2014
        %v2358 = vsel %vm2249, %v2326, %v2016
        %v2359 = vsel %vm2249, %v2327, %v2018
        %v2360 = vsel %vm2249, %v2328, %v2020
        %v2361 = vsel %vm2249, %v2329, %v2022
        %v2362 = vsel %vm2249, %v2330, %v2024
        %v2363 = vsel %vm2249, %v2331, %v2026
        %v2364 = vsel %vm2249, %v2332, %v2028
        %v2365 = vsel %vm2249, %v2333, %v2030
        %v2366 = vsel %vm2249, %v2334, %v2032
        %v2367 = vsel %vm2249, %v2335, %v2034
        %v2368 = vsel %vm2249, %v2336, %v2036
        %v2369 = vsel %vm2249, %v2337, %v2038
        %v2370 = vsel %vm2249, %v2338, %v2040
        %v2371 = vsel %vm2249, %v2339, %v2042
        %v2372 = vsel %vm2249, %v2340, %v2044
        %v2373 = vsel %vm2249, %v2341, %v2046
        %v2374 = vsel %vm2249, %v2342, %v2048
        %v2375 = vsel %vm2249, %v2343, %v2050
        %v2376 = vsel %vm2249, %v2344, %v2052
        %v2377 = vsel %vm2249, %v2345, %v2054
        %v2378 = vsel %vm2249, %v2346, %v2056
        %v2379 = vsel %vm2282, %v2347, %v2122
        %v2380 = vsel %vm2282, %v2348, %v2124
        %v2381 = vsel %vm2282, %v2349, %v2126
        %v2382 = vsel %vm2282, %v2350, %v2128
        %v2383 = vsel %vm2282, %v2351, %v2130
        %v2384 = vsel %vm2282, %v2352, %v2132
        %v2385 = vsel %vm2282, %v2353, %v2134
        %v2386 = vsel %vm2282, %v2354, %v2136
        %v2387 = vsel %vm2282, %v2355, %v2138
        %v2388 = vsel %vm2282, %v2356, %v2140
        %v2389 = vsel %vm2282, %v2357, %v2142
        %v2390 = vsel %vm2282, %v2358, %v2144
        %v2391 = vsel %vm2282, %v2359, %v2146
        %v2392 = vsel %vm2282, %v2360, %v2148
        %v2393 = vsel %vm2282, %v2361, %v2150
        %v2394 = vsel %vm2282, %v2362, %v2152
        %v2395 = vsel %vm2282, %v2363, %v2154
        %v2396 = vsel %vm2282, %v2364, %v2156
        %v2397 = vsel %vm2282, %v2365, %v2158
        %v2398 = vsel %vm2282, %v2366, %v2160
        %v2399 = vsel %vm2282, %v2367, %v2162
        %v2400 = vsel %vm2282, %v2368, %v2164
        %v2401 = vsel %vm2282, %v2369, %v2166
        %v2402 = vsel %vm2282, %v2370, %v2168
        %v2403 = vsel %vm2282, %v2371, %v2170
        %v2404 = vsel %vm2282, %v2372, %v2172
        %v2405 = vsel %vm2282, %v2373, %v2174
        %v2406 = vsel %vm2282, %v2374, %v2176
        %v2407 = vsel %vm2282, %v2375, %v2178
        %v2408 = vsel %vm2282, %v2376, %v2180
        %v2409 = vsel %vm2282, %v2377, %v2182
        %v2410 = vsel %vm2282, %v2378, %v2184
        %v2411 = vpack.c.bf16 %v2379, %v2283
        %v2412 = vpack.c.bf16 %v1417, %v1417
        %v2413 = vpack.c.bf16 %v2380, %v2284
        %v2414 = vpack.c.bf16 %v1418, %v1418
        %v2415 = vpack.c.bf16 %v2381, %v2285
        %v2416 = vpack.c.bf16 %v1419, %v1419
        %v2417 = vpack.c.bf16 %v2382, %v2286
        %v2418 = vpack.c.bf16 %v1420, %v1420
        %v2419 = vpack.c.bf16 %v2383, %v2287
        %v2420 = vpack.c.bf16 %v1421, %v1421
        %v2421 = vpack.c.bf16 %v2384, %v2288
        %v2422 = vpack.c.bf16 %v1422, %v1422
        %v2423 = vpack.c.bf16 %v2385, %v2289
        %v2424 = vpack.c.bf16 %v1423, %v1423
        %v2425 = vpack.c.bf16 %v2386, %v2290
        %v2426 = vpack.c.bf16 %v1424, %v1424
        %v2427 = vpack.c.bf16 %v2387, %v2291
        %v2428 = vpack.c.bf16 %v1425, %v1425
        %v2429 = vpack.c.bf16 %v2388, %v2292
        %v2430 = vpack.c.bf16 %v1426, %v1426
        %v2431 = vpack.c.bf16 %v2389, %v2293
        %v2432 = vpack.c.bf16 %v1427, %v1427
        %v2433 = vpack.c.bf16 %v2390, %v2294
        %v2434 = vpack.c.bf16 %v1428, %v1428
        %v2435 = vpack.c.bf16 %v2391, %v2295
        %v2436 = vpack.c.bf16 %v1429, %v1429
        %v2437 = vpack.c.bf16 %v2392, %v2296
        %v2438 = vpack.c.bf16 %v1430, %v1430
        %v2439 = vpack.c.bf16 %v2393, %v2297
        %v2440 = vpack.c.bf16 %v1431, %v1431
        %v2441 = vpack.c.bf16 %v2394, %v2298
        %v2442 = vpack.c.bf16 %v1432, %v1432
        %v2443 = vpack.c.bf16 %v2395, %v2299
        %v2444 = vpack.c.bf16 %v1433, %v1433
        %v2445 = vpack.c.bf16 %v2396, %v2300
        %v2446 = vpack.c.bf16 %v1434, %v1434
        %v2447 = vpack.c.bf16 %v2397, %v2301
        %v2448 = vpack.c.bf16 %v1435, %v1435
        %v2449 = vpack.c.bf16 %v2398, %v2302
        %v2450 = vpack.c.bf16 %v1436, %v1436
        %v2451 = vpack.c.bf16 %v2399, %v2303
        %v2452 = vpack.c.bf16 %v1437, %v1437
        %v2453 = vpack.c.bf16 %v2400, %v2304
        %v2454 = vpack.c.bf16 %v1438, %v1438
        %v2455 = vpack.c.bf16 %v2401, %v2305
        %v2456 = vpack.c.bf16 %v1439, %v1439
        %v2457 = vpack.c.bf16 %v2402, %v2306
        %v2458 = vpack.c.bf16 %v1440, %v1440
        %v2459 = vpack.c.bf16 %v2403, %v2307
        %v2460 = vpack.c.bf16 %v1441, %v1441
        %v2461 = vpack.c.bf16 %v2404, %v2308
        %v2462 = vpack.c.bf16 %v1442, %v1442
        %v2463 = vpack.c.bf16 %v2405, %v2309
        %v2464 = vpack.c.bf16 %v1443, %v1443
        %v2465 = vpack.c.bf16 %v2406, %v2310
        %v2466 = vpack.c.bf16 %v1444, %v1444
        %v2467 = vpack.c.bf16 %v2407, %v2311
        %v2468 = vpack.c.bf16 %v1445, %v1445
        %v2469 = vpack.c.bf16 %v2408, %v2312
        %v2470 = vpack.c.bf16 %v1446, %v1446
        %v2471 = vpack.c.bf16 %v2409, %v2313
        %v2472 = vpack.c.bf16 %v1447, %v1447
        %v2473 = vpack.c.bf16 %v2410, %v2314
        %v2474 = vpack.c.bf16 %v1448, %v1448
        %v2539 = vunpack.c.l.b16 %v2411
        %v2540 = vunpack.c.h.b16 %v2411
        %v2541 = vunpack.c.l.b16 %v2412
        %v2542 = vunpack.c.l.b16 %v2413
        %v2543 = vunpack.c.h.b16 %v2413
        %v2544 = vunpack.c.l.b16 %v2414
        %v2545 = vunpack.c.l.b16 %v2415
        %v2546 = vunpack.c.h.b16 %v2415
        %v2547 = vunpack.c.l.b16 %v2416
        %v2548 = vunpack.c.l.b16 %v2417
        %v2549 = vunpack.c.h.b16 %v2417
        %v2550 = vunpack.c.l.b16 %v2418
        %v2551 = vunpack.c.l.b16 %v2419
        %v2552 = vunpack.c.h.b16 %v2419
        %v2553 = vunpack.c.l.b16 %v2420
        %v2554 = vunpack.c.l.b16 %v2421
        %v2555 = vunpack.c.h.b16 %v2421
        %v2556 = vunpack.c.l.b16 %v2422
        %v2557 = vunpack.c.l.b16 %v2423
        %v2558 = vunpack.c.h.b16 %v2423
        %v2559 = vunpack.c.l.b16 %v2424
        %v2560 = vunpack.c.l.b16 %v2425
        %v2561 = vunpack.c.h.b16 %v2425
        %v2562 = vunpack.c.l.b16 %v2426
        %v2563 = vunpack.c.l.b16 %v2427
        %v2564 = vunpack.c.h.b16 %v2427
        %v2565 = vunpack.c.l.b16 %v2428
        %v2566 = vunpack.c.l.b16 %v2429
        %v2567 = vunpack.c.h.b16 %v2429
        %v2568 = vunpack.c.l.b16 %v2430
        %v2569 = vunpack.c.l.b16 %v2431
        %v2570 = vunpack.c.h.b16 %v2431
        %v2571 = vunpack.c.l.b16 %v2432
        %v2572 = vunpack.c.l.b16 %v2433
        %v2573 = vunpack.c.h.b16 %v2433
        %v2574 = vunpack.c.l.b16 %v2434
        %v2575 = vunpack.c.l.b16 %v2435
        %v2576 = vunpack.c.h.b16 %v2435
        %v2577 = vunpack.c.l.b16 %v2436
        %v2578 = vunpack.c.l.b16 %v2437
        %v2579 = vunpack.c.h.b16 %v2437
        %v2580 = vunpack.c.l.b16 %v2438
        %v2581 = vunpack.c.l.b16 %v2439
        %v2582 = vunpack.c.h.b16 %v2439
        %v2583 = vunpack.c.l.b16 %v2440
        %v2584 = vunpack.c.l.b16 %v2441
        %v2585 = vunpack.c.h.b16 %v2441
        %v2586 = vunpack.c.l.b16 %v2442
        %v2587 = vunpack.c.l.b16 %v2443
        %v2588 = vunpack.c.h.b16 %v2443
        %v2589 = vunpack.c.l.b16 %v2444
        %v2590 = vunpack.c.l.b16 %v2445
        %v2591 = vunpack.c.h.b16 %v2445
        %v2592 = vunpack.c.l.b16 %v2446
        %v2593 = vunpack.c.l.b16 %v2447
        %v2594 = vunpack.c.h.b16 %v2447
        %v2595 = vunpack.c.l.b16 %v2448
        %v2596 = vunpack.c.l.b16 %v2449
        %v2597 = vunpack.c.h.b16 %v2449
        %v2598 = vunpack.c.l.b16 %v2450
        %v2599 = vunpack.c.l.b16 %v2451
        %v2600 = vunpack.c.h.b16 %v2451
        %v2601 = vunpack.c.l.b16 %v2452
        %v2602 = vunpack.c.l.b16 %v2453
        %v2603 = vunpack.c.h.b16 %v2453
        %v2604 = vunpack.c.l.b16 %v2454
        %v2605 = vunpack.c.l.b16 %v2455
        %v2606 = vunpack.c.h.b16 %v2455
        %v2607 = vunpack.c.l.b16 %v2456
        %v2608 = vunpack.c.l.b16 %v2457
        %v2609 = vunpack.c.h.b16 %v2457
        %v2610 = vunpack.c.l.b16 %v2458
        %v2611 = vunpack.c.l.b16 %v2459
        %v2612 = vunpack.c.h.b16 %v2459
        %v2613 = vunpack.c.l.b16 %v2460
        %v2614 = vunpack.c.l.b16 %v2461
        %v2615 = vunpack.c.h.b16 %v2461
        %v2616 = vunpack.c.l.b16 %v2462
        %v2617 = vunpack.c.l.b16 %v2463
        %v2618 = vunpack.c.h.b16 %v2463
        %v2619 = vunpack.c.l.b16 %v2464
        %v2620 = vunpack.c.l.b16 %v2465
        %v2621 = vunpack.c.h.b16 %v2465
        %v2622 = vunpack.c.l.b16 %v2466
        %v2623 = vunpack.c.l.b16 %v2467
        %v2624 = vunpack.c.h.b16 %v2467
        %v2625 = vunpack.c.l.b16 %v2468
        %v2626 = vunpack.c.l.b16 %v2469
        %v2627 = vunpack.c.h.b16 %v2469
        %v2628 = vunpack.c.l.b16 %v2470
        %v2629 = vunpack.c.l.b16 %v2471
        %v2630 = vunpack.c.h.b16 %v2471
        %v2631 = vunpack.c.l.b16 %v2472
        %v2632 = vunpack.c.l.b16 %v2473
        %v2633 = vunpack.c.h.b16 %v2473
        %v2634 = vunpack.c.l.b16 %v2474
        %v2635 = vpack.c.b16 %v2542, %v2539
        %v2636 = vpack.c.b16 %v2543, %v2540
        %v2637 = vpack.c.b16 %v2544, %v2541
        %v2638 = vpack.c.b16 %v2548, %v2545
        %v2639 = vpack.c.b16 %v2549, %v2546
        %v2640 = vpack.c.b16 %v2550, %v2547
        %v2641 = vpack.c.b16 %v2554, %v2551
        %v2642 = vpack.c.b16 %v2555, %v2552
        %v2643 = vpack.c.b16 %v2556, %v2553
        %v2644 = vpack.c.b16 %v2560, %v2557
        %v2645 = vpack.c.b16 %v2561, %v2558
        %v2646 = vpack.c.b16 %v2562, %v2559
        %v2647 = vpack.c.b16 %v2566, %v2563
        %v2648 = vpack.c.b16 %v2567, %v2564
        %v2649 = vpack.c.b16 %v2568, %v2565
        %v2650 = vpack.c.b16 %v2572, %v2569
        %v2651 = vpack.c.b16 %v2573, %v2570
        %v2652 = vpack.c.b16 %v2574, %v2571
        %v2653 = vpack.c.b16 %v2578, %v2575
        %v2654 = vpack.c.b16 %v2579, %v2576
        %v2655 = vpack.c.b16 %v2580, %v2577
        %v2656 = vpack.c.b16 %v2584, %v2581
        %v2657 = vpack.c.b16 %v2585, %v2582
        %v2658 = vpack.c.b16 %v2586, %v2583
        %v2659 = vpack.c.b16 %v2590, %v2587
        %v2660 = vpack.c.b16 %v2591, %v2588
        %v2661 = vpack.c.b16 %v2592, %v2589
        %v2662 = vpack.c.b16 %v2596, %v2593
        %v2663 = vpack.c.b16 %v2597, %v2594
        %v2664 = vpack.c.b16 %v2598, %v2595
        %v2665 = vpack.c.b16 %v2602, %v2599
        %v2666 = vpack.c.b16 %v2603, %v2600
        %v2667 = vpack.c.b16 %v2604, %v2601
        %v2668 = vpack.c.b16 %v2608, %v2605
        %v2669 = vpack.c.b16 %v2609, %v2606
        %v2670 = vpack.c.b16 %v2610, %v2607
        %v2671 = vpack.c.b16 %v2614, %v2611
        %v2672 = vpack.c.b16 %v2615, %v2612
        %v2673 = vpack.c.b16 %v2616, %v2613
        %v2674 = vpack.c.b16 %v2620, %v2617
        %v2675 = vpack.c.b16 %v2621, %v2618
        %v2676 = vpack.c.b16 %v2622, %v2619
        %v2677 = vpack.c.b16 %v2626, %v2623
        %v2678 = vpack.c.b16 %v2627, %v2624
        %v2679 = vpack.c.b16 %v2628, %v2625
        %v2680 = vpack.c.b16 %v2632, %v2629
        %v2681 = vpack.c.b16 %v2633, %v2630
        %v2682 = vpack.c.b16 %v2634, %v2631
        %2715 = vrot.lane.b32.xlu0 %v867, 20
        %v2716 = vpop.permute.xlu0 %2715
        %2717 = vrot.lane.b32.xlu0 %v868, 20
        %v2718 = vpop.permute.xlu0 %2717
        %2719 = vrot.lane.b32.xlu0 %v869, 20
        %v2720 = vpop.permute.xlu0 %2719
        %2721 = vrot.lane.b32.xlu0 %v870, 20
        %v2722 = vpop.permute.xlu0 %2721
        %2723 = vrot.lane.b32.xlu0 %v871, 20
        %v2724 = vpop.permute.xlu0 %2723
        %2725 = vrot.lane.b32.xlu0 %v872, 20
        %v2726 = vpop.permute.xlu0 %2725
        %2727 = vrot.lane.b32.xlu0 %v873, 20
        %v2728 = vpop.permute.xlu0 %2727
        %2729 = vrot.lane.b32.xlu0 %v874, 20
        %v2730 = vpop.permute.xlu0 %2729
        %2731 = vrot.lane.b32.xlu0 %v875, 20
        %v2732 = vpop.permute.xlu0 %2731
        %2733 = vrot.lane.b32.xlu0 %v876, 20
        %v2734 = vpop.permute.xlu0 %2733
        %2735 = vrot.lane.b32.xlu0 %v877, 20
        %v2736 = vpop.permute.xlu0 %2735
        %2737 = vrot.lane.b32.xlu0 %v878, 20
        %v2738 = vpop.permute.xlu0 %2737
        %2739 = vrot.lane.b32.xlu0 %v879, 20
        %v2740 = vpop.permute.xlu0 %2739
        %2741 = vrot.lane.b32.xlu0 %v880, 20
        %v2742 = vpop.permute.xlu0 %2741
        %2743 = vrot.lane.b32.xlu0 %v881, 20
        %v2744 = vpop.permute.xlu0 %2743
        %2745 = vrot.lane.b32.xlu0 %v882, 20
        %v2746 = vpop.permute.xlu0 %2745
        %v2749 = vsel %vm1071, %v2637, %v2716
        %v2752 = vsel %vm1071, %v2640, %v2718
        %v2755 = vsel %vm1071, %v2643, %v2720
        %v2758 = vsel %vm1071, %v2646, %v2722
        %v2761 = vsel %vm1071, %v2649, %v2724
        %v2764 = vsel %vm1071, %v2652, %v2726
        %v2767 = vsel %vm1071, %v2655, %v2728
        %v2770 = vsel %vm1071, %v2658, %v2730
        %v2773 = vsel %vm1071, %v2661, %v2732
        %v2776 = vsel %vm1071, %v2664, %v2734
        %v2779 = vsel %vm1071, %v2667, %v2736
        %v2782 = vsel %vm1071, %v2670, %v2738
        %v2785 = vsel %vm1071, %v2673, %v2740
        %v2788 = vsel %vm1071, %v2676, %v2742
        %v2791 = vsel %vm1071, %v2679, %v2744
        %v2794 = vsel %vm1071, %v2682, %v2746
        %v2795 = vld [vmem:[%s3] sm:$0xf]
        %v2796 = vld [vmem:[%s3 + $0x4] sm:$0xf]
        %v2797 = vld [vmem:[%s3 + $0x8] sm:$0xf]
        %v2798 = vld [vmem:[%s3 + $0xc] sm:$0xf]
        %v2799 = vld [vmem:[%s3 + $0x10] sm:$0xf]
        %v2800 = vld [vmem:[%s3 + $0x14] sm:$0xf]
        %v2801 = vld [vmem:[%s3 + $0x18] sm:$0xf]
        %v2802 = vld [vmem:[%s3 + $0x1c] sm:$0xf]
        %v2803 = vld [vmem:[%s3 + $0x20] sm:$0xf]
        %v2804 = vld [vmem:[%s3 + $0x24] sm:$0xf]
        %v2805 = vld [vmem:[%s3 + $0x28] sm:$0xf]
        %v2806 = vld [vmem:[%s3 + $0x2c] sm:$0xf]
        %v2807 = vld [vmem:[%s3 + $0x30] sm:$0xf]
        %v2808 = vld [vmem:[%s3 + $0x34] sm:$0xf]
        %v2809 = vld [vmem:[%s3 + $0x38] sm:$0xf]
        %v2810 = vld [vmem:[%s3 + $0x3c] sm:$0xf]
        %v2811 = vld [vmem:[%s3 + $0x40] sm:$0xf]
        %v2812 = vld [vmem:[%s3 + $0x44] sm:$0xf]
        %v2813 = vld [vmem:[%s3 + $0x48] sm:$0xf]
        %v2814 = vld [vmem:[%s3 + $0x4c] sm:$0xf]
        %v2815 = vld [vmem:[%s3 + $0x50] sm:$0xf]
        %v2816 = vld [vmem:[%s3 + $0x54] sm:$0xf]
        %v2817 = vld [vmem:[%s3 + $0x58] sm:$0xf]
        %v2818 = vld [vmem:[%s3 + $0x5c] sm:$0xf]
        %v2819 = vld [vmem:[%s3 + $0x60] sm:$0xf]
        %v2820 = vld [vmem:[%s3 + $0x64] sm:$0xf]
        %v2821 = vld [vmem:[%s3 + $0x68] sm:$0xf]
        %v2822 = vld [vmem:[%s3 + $0x6c] sm:$0xf]
        %v2823 = vld [vmem:[%s3 + $0x70] sm:$0xf]
        %v2824 = vld [vmem:[%s3 + $0x74] sm:$0xf]
        %v2825 = vld [vmem:[%s3 + $0x78] sm:$0xf]
        %v2826 = vld [vmem:[%s3 + $0x7c] sm:$0xf]
        %v2827 = vld [vmem:[%s3 + $0x80] sm:$0xf]
        %v2828 = vld [vmem:[%s3 + $0x84] sm:$0xf]
        %v2829 = vld [vmem:[%s3 + $0x88] sm:$0xf]
        %v2830 = vld [vmem:[%s3 + $0x8c] sm:$0xf]
        %v2831 = vld [vmem:[%s3 + $0x90] sm:$0x3]
        %v2832 = vld [vmem:[%s4] sm:$0x1]
        %v2834 = vperm.slane %v2832, 0
        %v2873 = vunpack.c.l.b16 %v2795
        %v2874 = vunpack.c.l.b16 %v2796
        %v2875 = vunpack.c.l.b16 %v2797
        %v2876 = vunpack.c.l.b16 %v2798
        %v2877 = vunpack.c.l.b16 %v2799
        %v2878 = vunpack.c.l.b16 %v2800
        %v2879 = vunpack.c.l.b16 %v2801
        %v2880 = vunpack.c.l.b16 %v2802
        %v2881 = vunpack.c.l.b16 %v2803
        %v2882 = vunpack.c.l.b16 %v2804
        %v2883 = vunpack.c.l.b16 %v2805
        %v2884 = vunpack.c.l.b16 %v2806
        %v2885 = vunpack.c.l.b16 %v2807
        %v2886 = vunpack.c.l.b16 %v2808
        %v2887 = vunpack.c.l.b16 %v2809
        %v2888 = vunpack.c.l.b16 %v2810
        %v2889 = vunpack.c.l.b16 %v2811
        %v2890 = vunpack.c.l.b16 %v2812
        %v2891 = vunpack.c.l.b16 %v2813
        %v2892 = vunpack.c.l.b16 %v2814
        %v2893 = vunpack.c.l.b16 %v2815
        %v2894 = vunpack.c.l.b16 %v2816
        %v2895 = vunpack.c.l.b16 %v2817
        %v2896 = vunpack.c.l.b16 %v2818
        %v2897 = vunpack.c.l.b16 %v2819
        %v2898 = vunpack.c.l.b16 %v2820
        %v2899 = vunpack.c.l.b16 %v2821
        %v2900 = vunpack.c.l.b16 %v2822
        %v2901 = vunpack.c.l.b16 %v2823
        %v2902 = vunpack.c.l.b16 %v2824
        %v2903 = vunpack.c.l.b16 %v2825
        %v2904 = vunpack.c.l.b16 %v2826
        %v2905 = vunpack.c.l.b16 %v2827
        %v2906 = vunpack.c.l.b16 %v2828
        %v2907 = vunpack.c.l.b16 %v2829
        %v2908 = vunpack.c.l.b16 %v2830
        %v2909 = vunpack.c.l.b16 %v2831
        %v2910 = vpack.c.b16 %v2874, %v2873
        %v2911 = vpack.c.b16 %v2876, %v2875
        %v2912 = vpack.c.b16 %v2878, %v2877
        %v2913 = vpack.c.b16 %v2880, %v2879
        %v2914 = vpack.c.b16 %v2882, %v2881
        %v2915 = vpack.c.b16 %v2884, %v2883
        %v2916 = vpack.c.b16 %v2886, %v2885
        %v2917 = vpack.c.b16 %v2888, %v2887
        %v2918 = vpack.c.b16 %v2890, %v2889
        %v2919 = vpack.c.b16 %v2892, %v2891
        %v2920 = vpack.c.b16 %v2894, %v2893
        %v2921 = vpack.c.b16 %v2896, %v2895
        %v2922 = vpack.c.b16 %v2898, %v2897
        %v2923 = vpack.c.b16 %v2900, %v2899
        %v2924 = vpack.c.b16 %v2902, %v2901
        %v2925 = vpack.c.b16 %v2904, %v2903
        %v2926 = vpack.c.b16 %v2906, %v2905
        %v2927 = vpack.c.b16 %v2908, %v2907
        %v2928 = vpack.c.b16 %v2909, %v2909
        %vm2947 = vcmask 285696
        %v2948 = vsel %vm2947, %v2749, 0
        %v2950 = vsel %vm2947, %v2752, 0
        %v2952 = vsel %vm2947, %v2755, 0
        %v2954 = vsel %vm2947, %v2758, 0
        %v2956 = vsel %vm2947, %v2761, 0
        %v2958 = vsel %vm2947, %v2764, 0
        %v2960 = vsel %vm2947, %v2767, 0
        %v2962 = vsel %vm2947, %v2770, 0
        %v2964 = vsel %vm2947, %v2773, 0
        %v2966 = vsel %vm2947, %v2776, 0
        %v2968 = vsel %vm2947, %v2779, 0
        %v2970 = vsel %vm2947, %v2782, 0
        %v2972 = vsel %vm2947, %v2785, 0
        %v2974 = vsel %vm2947, %v2788, 0
        %v2976 = vsel %vm2947, %v2791, 0
        %v2978 = vsel %vm2947, %v2794, 0
        %vm2980 = vcmask 1040384
        %vm2981 = vcmask 1041408
        %v2982 = vsel %vm2980, 4294967295, 65535
        %v2983 = vsel %vm2981, %v2982, 0
        %v2985 = vand.u32 %v2928, %v2983
        %2987 = vmatpush.bf16.msra.mxu0 %v2917
        %2988 = vmatpush.bf16.msra.mxu0 %v2916
        %2989 = vmatpush.bf16.msra.mxu0 %v2915
        %2990 = vmatpush.bf16.msra.mxu0 %v2914
        %2991 = vmatpush.bf16.msra.mxu0 %v2913
        %2992 = vmatpush.bf16.msra.mxu0 %v2912
        %2993 = vmatpush.bf16.msra.mxu0 %v2911
        %2994 = vmatpush.bf16.msra.mxu0 %v2910
        %2995 = vmatmul.bf16.gmra.mxu0 %v2635
        %v2996 = vpop.f32.mrf.mxu0
        %v2997 = vadd.f32 %v2834, %v2996
        %v2998 = vpop.f32.mrf.mxu0
        %v2999 = vadd.f32 %v2834, %v2998
        %3000 = vmatmul.bf16.gmra.mxu0 %v2638
        %v3001 = vpop.f32.mrf.mxu0
        %v3002 = vadd.f32 %v2834, %v3001
        %v3003 = vpop.f32.mrf.mxu0
        %v3004 = vadd.f32 %v2834, %v3003
        %3005 = vmatmul.bf16.gmra.mxu0 %v2641
        %v3006 = vpop.f32.mrf.mxu0
        %v3007 = vadd.f32 %v2834, %v3006
        %v3008 = vpop.f32.mrf.mxu0
        %v3009 = vadd.f32 %v2834, %v3008
        %3010 = vmatmul.bf16.gmra.mxu0 %v2644
        %v3011 = vpop.f32.mrf.mxu0
        %v3012 = vadd.f32 %v2834, %v3011
        %v3013 = vpop.f32.mrf.mxu0
        %v3014 = vadd.f32 %v2834, %v3013
        %3015 = vmatmul.bf16.gmra.mxu0 %v2647
        %v3016 = vpop.f32.mrf.mxu0
        %v3017 = vadd.f32 %v2834, %v3016
        %v3018 = vpop.f32.mrf.mxu0
        %v3019 = vadd.f32 %v2834, %v3018
        %3020 = vmatmul.bf16.gmra.mxu0 %v2650
        %v3021 = vpop.f32.mrf.mxu0
        %v3022 = vadd.f32 %v2834, %v3021
        %v3023 = vpop.f32.mrf.mxu0
        %v3024 = vadd.f32 %v2834, %v3023
        %3025 = vmatmul.bf16.gmra.mxu0 %v2653
        %v3026 = vpop.f32.mrf.mxu0
        %v3027 = vadd.f32 %v2834, %v3026
        %v3028 = vpop.f32.mrf.mxu0
        %v3029 = vadd.f32 %v2834, %v3028
        %3030 = vmatmul.bf16.gmra.mxu0 %v2656
        %v3031 = vpop.f32.mrf.mxu0
        %v3032 = vadd.f32 %v2834, %v3031
        %v3033 = vpop.f32.mrf.mxu0
        %v3034 = vadd.f32 %v2834, %v3033
        %3035 = vmatmul.bf16.gmra.mxu0 %v2659
        %v3036 = vpop.f32.mrf.mxu0
        %v3037 = vadd.f32 %v2834, %v3036
        %v3038 = vpop.f32.mrf.mxu0
        %v3039 = vadd.f32 %v2834, %v3038
        %3040 = vmatmul.bf16.gmra.mxu0 %v2662
        %v3041 = vpop.f32.mrf.mxu0
        %v3042 = vadd.f32 %v2834, %v3041
        %v3043 = vpop.f32.mrf.mxu0
        %v3044 = vadd.f32 %v2834, %v3043
        %3045 = vmatmul.bf16.gmra.mxu0 %v2665
        %v3046 = vpop.f32.mrf.mxu0
        %v3047 = vadd.f32 %v2834, %v3046
        %v3048 = vpop.f32.mrf.mxu0
        %v3049 = vadd.f32 %v2834, %v3048
        %3050 = vmatmul.bf16.gmra.mxu0 %v2668
        %v3051 = vpop.f32.mrf.mxu0
        %v3052 = vadd.f32 %v2834, %v3051
        %v3053 = vpop.f32.mrf.mxu0
        %v3054 = vadd.f32 %v2834, %v3053
        %3055 = vmatmul.bf16.gmra.mxu0 %v2671
        %v3056 = vpop.f32.mrf.mxu0
        %v3057 = vadd.f32 %v2834, %v3056
        %v3058 = vpop.f32.mrf.mxu0
        %v3059 = vadd.f32 %v2834, %v3058
        %3060 = vmatmul.bf16.gmra.mxu0 %v2674
        %v3061 = vpop.f32.mrf.mxu0
        %v3062 = vadd.f32 %v2834, %v3061
        %v3063 = vpop.f32.mrf.mxu0
        %v3064 = vadd.f32 %v2834, %v3063
        %3065 = vmatmul.bf16.gmra.mxu0 %v2677
        %v3066 = vpop.f32.mrf.mxu0
        %v3067 = vadd.f32 %v2834, %v3066
        %v3068 = vpop.f32.mrf.mxu0
        %v3069 = vadd.f32 %v2834, %v3068
        %3070 = vmatmul.bf16.gmra.mxu0 %v2680
        %v3071 = vpop.f32.mrf.mxu0
        %v3072 = vadd.f32 %v2834, %v3071
        %v3073 = vpop.f32.mrf.mxu0
        %v3074 = vadd.f32 %v2834, %v3073
        %3075 = vdwg.mxu0
        %3076 = vmatpush.bf16.msra.mxu0 %v2925
        %3077 = vmatpush.bf16.msra.mxu0 %v2924
        %3078 = vmatpush.bf16.msra.mxu0 %v2923
        %3079 = vmatpush.bf16.msra.mxu0 %v2922
        %3080 = vmatpush.bf16.msra.mxu0 %v2921
        %3081 = vmatpush.bf16.msra.mxu0 %v2920
        %3082 = vmatpush.bf16.msra.mxu0 %v2919
        %3083 = vmatpush.bf16.msra.mxu0 %v2918
        %3084 = vmatmul.bf16.gmra.mxu0 %v2636
        %v3085 = vpop.f32.mrf.mxu0
        %v3086 = vadd.f32 %v2997, %v3085
        %v3087 = vpop.f32.mrf.mxu0
        %v3088 = vadd.f32 %v2999, %v3087
        %3089 = vmatmul.bf16.gmra.mxu0 %v2639
        %v3090 = vpop.f32.mrf.mxu0
        %v3091 = vadd.f32 %v3002, %v3090
        %v3092 = vpop.f32.mrf.mxu0
        %v3093 = vadd.f32 %v3004, %v3092
        %3094 = vmatmul.bf16.gmra.mxu0 %v2642
        %v3095 = vpop.f32.mrf.mxu0
        %v3096 = vadd.f32 %v3007, %v3095
        %v3097 = vpop.f32.mrf.mxu0
        %v3098 = vadd.f32 %v3009, %v3097
        %3099 = vmatmul.bf16.gmra.mxu0 %v2645
        %v3100 = vpop.f32.mrf.mxu0
        %v3101 = vadd.f32 %v3012, %v3100
        %v3102 = vpop.f32.mrf.mxu0
        %v3103 = vadd.f32 %v3014, %v3102
        %3104 = vmatmul.bf16.gmra.mxu0 %v2648
        %v3105 = vpop.f32.mrf.mxu0
        %v3106 = vadd.f32 %v3017, %v3105
        %v3107 = vpop.f32.mrf.mxu0
        %v3108 = vadd.f32 %v3019, %v3107
        %3109 = vmatmul.bf16.gmra.mxu0 %v2651
        %v3110 = vpop.f32.mrf.mxu0
        %v3111 = vadd.f32 %v3022, %v3110
        %v3112 = vpop.f32.mrf.mxu0
        %v3113 = vadd.f32 %v3024, %v3112
        %3114 = vmatmul.bf16.gmra.mxu0 %v2654
        %v3115 = vpop.f32.mrf.mxu0
        %v3116 = vadd.f32 %v3027, %v3115
        %v3117 = vpop.f32.mrf.mxu0
        %v3118 = vadd.f32 %v3029, %v3117
        %3119 = vmatmul.bf16.gmra.mxu0 %v2657
        %v3120 = vpop.f32.mrf.mxu0
        %v3121 = vadd.f32 %v3032, %v3120
        %v3122 = vpop.f32.mrf.mxu0
        %v3123 = vadd.f32 %v3034, %v3122
        %3124 = vmatmul.bf16.gmra.mxu0 %v2660
        %v3125 = vpop.f32.mrf.mxu0
        %v3126 = vadd.f32 %v3037, %v3125
        %v3127 = vpop.f32.mrf.mxu0
        %v3128 = vadd.f32 %v3039, %v3127
        %3129 = vmatmul.bf16.gmra.mxu0 %v2663
        %v3130 = vpop.f32.mrf.mxu0
        %v3131 = vadd.f32 %v3042, %v3130
        %v3132 = vpop.f32.mrf.mxu0
        %v3133 = vadd.f32 %v3044, %v3132
        %3134 = vmatmul.bf16.gmra.mxu0 %v2666
        %v3135 = vpop.f32.mrf.mxu0
        %v3136 = vadd.f32 %v3047, %v3135
        %v3137 = vpop.f32.mrf.mxu0
        %v3138 = vadd.f32 %v3049, %v3137
        %3139 = vmatmul.bf16.gmra.mxu0 %v2669
        %v3140 = vpop.f32.mrf.mxu0
        %v3141 = vadd.f32 %v3052, %v3140
        %v3142 = vpop.f32.mrf.mxu0
        %v3143 = vadd.f32 %v3054, %v3142
        %3144 = vmatmul.bf16.gmra.mxu0 %v2672
        %v3145 = vpop.f32.mrf.mxu0
        %v3146 = vadd.f32 %v3057, %v3145
        %v3147 = vpop.f32.mrf.mxu0
        %v3148 = vadd.f32 %v3059, %v3147
        %3149 = vmatmul.bf16.gmra.mxu0 %v2675
        %v3150 = vpop.f32.mrf.mxu0
        %v3151 = vadd.f32 %v3062, %v3150
        %v3152 = vpop.f32.mrf.mxu0
        %v3153 = vadd.f32 %v3064, %v3152
        %3154 = vmatmul.bf16.gmra.mxu0 %v2678
        %v3155 = vpop.f32.mrf.mxu0
        %v3156 = vadd.f32 %v3067, %v3155
        %v3157 = vpop.f32.mrf.mxu0
        %v3158 = vadd.f32 %v3069, %v3157
        %3159 = vmatmul.bf16.gmra.mxu0 %v2681
        %v3160 = vpop.f32.mrf.mxu0
        %v3161 = vadd.f32 %v3072, %v3160
        %v3162 = vpop.f32.mrf.mxu0
        %v3163 = vadd.f32 %v3074, %v3162
        %3164 = vdwg.mxu0
        %3165 = vmatpush.bf16.msra.mxu0 0
        %3166 = vmatpush.bf16.msra.mxu0 0
        %3167 = vmatpush.bf16.msra.mxu0 0
        %3168 = vmatpush.bf16.msra.mxu0 0
        %3169 = vmatpush.bf16.msra.mxu0 0
        %3170 = vmatpush.bf16.msra.mxu0 %v2985
        %3171 = vmatpush.bf16.msra.mxu0 %v2927
        %3172 = vmatpush.bf16.msra.mxu0 %v2926
        %3173 = vmatmul.bf16.gmra.mxu0 %v2948
        %v3174 = vpop.f32.mrf.mxu0
        %v3175 = vadd.f32 %v3086, %v3174
        %v3176 = vpop.f32.mrf.mxu0
        %v3177 = vadd.f32 %v3088, %v3176
        %3178 = vmatmul.bf16.gmra.mxu0 %v2950
        %v3179 = vpop.f32.mrf.mxu0
        %v3180 = vadd.f32 %v3091, %v3179
        %v3181 = vpop.f32.mrf.mxu0
        %v3182 = vadd.f32 %v3093, %v3181
        %3183 = vmatmul.bf16.gmra.mxu0 %v2952
        %v3184 = vpop.f32.mrf.mxu0
        %v3185 = vadd.f32 %v3096, %v3184
        %v3186 = vpop.f32.mrf.mxu0
        %v3187 = vadd.f32 %v3098, %v3186
        %3188 = vmatmul.bf16.gmra.mxu0 %v2954
        %v3189 = vpop.f32.mrf.mxu0
        %v3190 = vadd.f32 %v3101, %v3189
        %v3191 = vpop.f32.mrf.mxu0
        %v3192 = vadd.f32 %v3103, %v3191
        %3193 = vmatmul.bf16.gmra.mxu0 %v2956
        %v3194 = vpop.f32.mrf.mxu0
        %v3195 = vadd.f32 %v3106, %v3194
        %v3196 = vpop.f32.mrf.mxu0
        %v3197 = vadd.f32 %v3108, %v3196
        %3198 = vmatmul.bf16.gmra.mxu0 %v2958
        %v3199 = vpop.f32.mrf.mxu0
        %v3200 = vadd.f32 %v3111, %v3199
        %v3201 = vpop.f32.mrf.mxu0
        %v3202 = vadd.f32 %v3113, %v3201
        %3203 = vmatmul.bf16.gmra.mxu0 %v2960
        %v3204 = vpop.f32.mrf.mxu0
        %v3205 = vadd.f32 %v3116, %v3204
        %v3206 = vpop.f32.mrf.mxu0
        %v3207 = vadd.f32 %v3118, %v3206
        %3208 = vmatmul.bf16.gmra.mxu0 %v2962
        %v3209 = vpop.f32.mrf.mxu0
        %v3210 = vadd.f32 %v3121, %v3209
        %v3211 = vpop.f32.mrf.mxu0
        %v3212 = vadd.f32 %v3123, %v3211
        %3213 = vmatmul.bf16.gmra.mxu0 %v2964
        %v3214 = vpop.f32.mrf.mxu0
        %v3215 = vadd.f32 %v3126, %v3214
        %v3216 = vpop.f32.mrf.mxu0
        %v3217 = vadd.f32 %v3128, %v3216
        %3218 = vmatmul.bf16.gmra.mxu0 %v2966
        %v3219 = vpop.f32.mrf.mxu0
        %v3220 = vadd.f32 %v3131, %v3219
        %v3221 = vpop.f32.mrf.mxu0
        %v3222 = vadd.f32 %v3133, %v3221
        %3223 = vmatmul.bf16.gmra.mxu0 %v2968
        %v3224 = vpop.f32.mrf.mxu0
        %v3225 = vadd.f32 %v3136, %v3224
        %v3226 = vpop.f32.mrf.mxu0
        %v3227 = vadd.f32 %v3138, %v3226
        %3228 = vmatmul.bf16.gmra.mxu0 %v2970
        %v3229 = vpop.f32.mrf.mxu0
        %v3230 = vadd.f32 %v3141, %v3229
        %v3231 = vpop.f32.mrf.mxu0
        %v3232 = vadd.f32 %v3143, %v3231
        %3233 = vmatmul.bf16.gmra.mxu0 %v2972
        %v3234 = vpop.f32.mrf.mxu0
        %v3235 = vadd.f32 %v3146, %v3234
        %v3236 = vpop.f32.mrf.mxu0
        %v3237 = vadd.f32 %v3148, %v3236
        %3238 = vmatmul.bf16.gmra.mxu0 %v2974
        %v3239 = vpop.f32.mrf.mxu0
        %v3240 = vadd.f32 %v3151, %v3239
        %v3241 = vpop.f32.mrf.mxu0
        %v3242 = vadd.f32 %v3153, %v3241
        %3243 = vmatmul.bf16.gmra.mxu0 %v2976
        %v3244 = vpop.f32.mrf.mxu0
        %v3245 = vadd.f32 %v3156, %v3244
        %v3246 = vpop.f32.mrf.mxu0
        %v3247 = vadd.f32 %v3158, %v3246
        %3248 = vmatmul.bf16.gmra.mxu0 %v2978
        %v3249 = vpop.f32.mrf.mxu0
        %v3250 = vadd.f32 %v3161, %v3249
        %v3251 = vpop.f32.mrf.mxu0
        %v3252 = vadd.f32 %v3163, %v3251
        %3253 = vdwg.mxu0
        %v3254 = vmax.f32 %v3175, 0.0
        %v3255 = vmax.f32 %v3177, 0.0
        %v3256 = vmax.f32 %v3180, 0.0
        %v3257 = vmax.f32 %v3182, 0.0
        %v3258 = vmax.f32 %v3185, 0.0
        %v3259 = vmax.f32 %v3187, 0.0
        %v3260 = vmax.f32 %v3190, 0.0
        %v3261 = vmax.f32 %v3192, 0.0
        %v3262 = vmax.f32 %v3195, 0.0
        %v3263 = vmax.f32 %v3197, 0.0
        %v3264 = vmax.f32 %v3200, 0.0
        %v3265 = vmax.f32 %v3202, 0.0
        %v3266 = vmax.f32 %v3205, 0.0
        %v3267 = vmax.f32 %v3207, 0.0
        %v3268 = vmax.f32 %v3210, 0.0
        %v3269 = vmax.f32 %v3212, 0.0
        %v3270 = vmax.f32 %v3215, 0.0
        %v3271 = vmax.f32 %v3217, 0.0
        %v3272 = vmax.f32 %v3220, 0.0
        %v3273 = vmax.f32 %v3222, 0.0
        %v3274 = vmax.f32 %v3225, 0.0
        %v3275 = vmax.f32 %v3227, 0.0
        %v3276 = vmax.f32 %v3230, 0.0
        %v3277 = vmax.f32 %v3232, 0.0
        %v3278 = vmax.f32 %v3235, 0.0
        %v3279 = vmax.f32 %v3237, 0.0
        %v3280 = vmax.f32 %v3240, 0.0
        %v3281 = vmax.f32 %v3242, 0.0
        %v3282 = vmax.f32 %v3245, 0.0
        %v3283 = vmax.f32 %v3247, 0.0
        %v3284 = vmax.f32 %v3250, 0.0
        %v3285 = vmax.f32 %v3252, 0.0
        %v3318 = vrot.slane %v3254, 2
        %v3319 = vrot.slane %v3254, 4
        %v3320 = vrot.slane %v3254, 6
        %v3321 = vrot.slane %v3255, 2
        %v3322 = vrot.slane %v3255, 4
        %v3323 = vrot.slane %v3255, 6
        %v3324 = vrot.slane %v3256, 2
        %v3325 = vrot.slane %v3256, 4
        %v3326 = vrot.slane %v3256, 6
        %v3327 = vrot.slane %v3257, 2
        %v3328 = vrot.slane %v3257, 4
        %v3329 = vrot.slane %v3257, 6
        %v3330 = vrot.slane %v3258, 2
        %v3331 = vrot.slane %v3258, 4
        %v3332 = vrot.slane %v3258, 6
        %v3333 = vrot.slane %v3259, 2
        %v3334 = vrot.slane %v3259, 4
        %v3335 = vrot.slane %v3259, 6
        %v3336 = vrot.slane %v3260, 2
        %v3337 = vrot.slane %v3260, 4
        %v3338 = vrot.slane %v3260, 6
        %v3339 = vrot.slane %v3261, 2
        %v3340 = vrot.slane %v3261, 4
        %v3341 = vrot.slane %v3261, 6
        %v3342 = vrot.slane %v3262, 2
        %v3343 = vrot.slane %v3262, 4
        %v3344 = vrot.slane %v3262, 6
        %v3345 = vrot.slane %v3263, 2
        %v3346 = vrot.slane %v3263, 4
        %v3347 = vrot.slane %v3263, 6
        %v3348 = vrot.slane %v3264, 2
        %v3349 = vrot.slane %v3264, 4
        %v3350 = vrot.slane %v3264, 6
        %v3351 = vrot.slane %v3265, 2
        %v3352 = vrot.slane %v3265, 4
        %v3353 = vrot.slane %v3265, 6
        %v3354 = vrot.slane %v3266, 2
        %v3355 = vrot.slane %v3266, 4
        %v3356 = vrot.slane %v3266, 6
        %v3357 = vrot.slane %v3267, 2
        %v3358 = vrot.slane %v3267, 4
        %v3359 = vrot.slane %v3267, 6
        %v3360 = vrot.slane %v3268, 2
        %v3361 = vrot.slane %v3268, 4
        %v3362 = vrot.slane %v3268, 6
        %v3363 = vrot.slane %v3269, 2
        %v3364 = vrot.slane %v3269, 4
        %v3365 = vrot.slane %v3269, 6
        %v3366 = vrot.slane %v3270, 2
        %v3367 = vrot.slane %v3270, 4
        %v3368 = vrot.slane %v3270, 6
        %v3369 = vrot.slane %v3271, 2
        %v3370 = vrot.slane %v3271, 4
        %v3371 = vrot.slane %v3271, 6
        %v3372 = vrot.slane %v3272, 2
        %v3373 = vrot.slane %v3272, 4
        %v3374 = vrot.slane %v3272, 6
        %v3375 = vrot.slane %v3273, 2
        %v3376 = vrot.slane %v3273, 4
        %v3377 = vrot.slane %v3273, 6
        %v3378 = vrot.slane %v3274, 2
        %v3379 = vrot.slane %v3274, 4
        %v3380 = vrot.slane %v3274, 6
        %v3381 = vrot.slane %v3275, 2
        %v3382 = vrot.slane %v3275, 4
        %v3383 = vrot.slane %v3275, 6
        %v3384 = vrot.slane %v3276, 2
        %v3385 = vrot.slane %v3276, 4
        %v3386 = vrot.slane %v3276, 6
        %v3387 = vrot.slane %v3277, 2
        %v3388 = vrot.slane %v3277, 4
        %v3389 = vrot.slane %v3277, 6
        %v3390 = vrot.slane %v3278, 2
        %v3391 = vrot.slane %v3278, 4
        %v3392 = vrot.slane %v3278, 6
        %v3393 = vrot.slane %v3279, 2
        %v3394 = vrot.slane %v3279, 4
        %v3395 = vrot.slane %v3279, 6
        %v3396 = vrot.slane %v3280, 2
        %v3397 = vrot.slane %v3280, 4
        %v3398 = vrot.slane %v3280, 6
        %v3399 = vrot.slane %v3281, 2
        %v3400 = vrot.slane %v3281, 4
        %v3401 = vrot.slane %v3281, 6
        %v3402 = vrot.slane %v3282, 2
        %v3403 = vrot.slane %v3282, 4
        %v3404 = vrot.slane %v3282, 6
        %v3405 = vrot.slane %v3283, 2
        %v3406 = vrot.slane %v3283, 4
        %v3407 = vrot.slane %v3283, 6
        %v3408 = vrot.slane %v3284, 2
        %v3409 = vrot.slane %v3284, 4
        %v3410 = vrot.slane %v3284, 6
        %v3411 = vrot.slane %v3285, 2
        %v3412 = vrot.slane %v3285, 4
        %v3413 = vrot.slane %v3285, 6
        %v3510 = vsel %vm1074, %v3254, -inf
        %v3511 = vrot.slane %v3510, 4
        %v3512 = vmax.f32 %v3510, %v3511
        %v3513 = vrot.slane %v3512, 2
        %v3514 = vmax.f32 %v3512, %v3513
        %v3515 = vrot.slane %v3514, 1
        %v3516 = vmax.f32 %v3514, %v3515
        %v3517 = vsel %vm1074, %v3318, -inf
        %v3518 = vrot.slane %v3517, 4
        %v3519 = vmax.f32 %v3517, %v3518
        %v3520 = vrot.slane %v3519, 2
        %v3521 = vmax.f32 %v3519, %v3520
        %v3522 = vrot.slane %v3521, 1
        %v3523 = vmax.f32 %v3521, %v3522
        %v3524 = vsel %vm1074, %v3319, -inf
        %v3525 = vrot.slane %v3524, 4
        %v3526 = vmax.f32 %v3524, %v3525
        %v3527 = vrot.slane %v3526, 2
        %v3528 = vmax.f32 %v3526, %v3527
        %v3529 = vrot.slane %v3528, 1
        %v3530 = vmax.f32 %v3528, %v3529
        %v3531 = vsel %vm1074, %v3320, -inf
        %v3532 = vrot.slane %v3531, 4
        %v3533 = vmax.f32 %v3531, %v3532
        %v3534 = vrot.slane %v3533, 2
        %v3535 = vmax.f32 %v3533, %v3534
        %v3536 = vrot.slane %v3535, 1
        %v3537 = vmax.f32 %v3535, %v3536
        %v3538 = vsel %vm1074, %v3255, -inf
        %v3539 = vrot.slane %v3538, 4
        %v3540 = vmax.f32 %v3538, %v3539
        %v3541 = vrot.slane %v3540, 2
        %v3542 = vmax.f32 %v3540, %v3541
        %v3543 = vrot.slane %v3542, 1
        %v3544 = vmax.f32 %v3542, %v3543
        %v3545 = vsel %vm1074, %v3321, -inf
        %v3546 = vrot.slane %v3545, 4
        %v3547 = vmax.f32 %v3545, %v3546
        %v3548 = vrot.slane %v3547, 2
        %v3549 = vmax.f32 %v3547, %v3548
        %v3550 = vrot.slane %v3549, 1
        %v3551 = vmax.f32 %v3549, %v3550
        %v3552 = vsel %vm1074, %v3322, -inf
        %v3553 = vrot.slane %v3552, 4
        %v3554 = vmax.f32 %v3552, %v3553
        %v3555 = vrot.slane %v3554, 2
        %v3556 = vmax.f32 %v3554, %v3555
        %v3557 = vrot.slane %v3556, 1
        %v3558 = vmax.f32 %v3556, %v3557
        %v3559 = vsel %vm1074, %v3323, -inf
        %v3560 = vrot.slane %v3559, 4
        %v3561 = vmax.f32 %v3559, %v3560
        %v3562 = vrot.slane %v3561, 2
        %v3563 = vmax.f32 %v3561, %v3562
        %v3564 = vrot.slane %v3563, 1
        %v3565 = vmax.f32 %v3563, %v3564
        %v3566 = vsel %vm1074, %v3256, -inf
        %v3567 = vrot.slane %v3566, 4
        %v3568 = vmax.f32 %v3566, %v3567
        %v3569 = vrot.slane %v3568, 2
        %v3570 = vmax.f32 %v3568, %v3569
        %v3571 = vrot.slane %v3570, 1
        %v3572 = vmax.f32 %v3570, %v3571
        %v3573 = vsel %vm1074, %v3324, -inf
        %v3574 = vrot.slane %v3573, 4
        %v3575 = vmax.f32 %v3573, %v3574
        %v3576 = vrot.slane %v3575, 2
        %v3577 = vmax.f32 %v3575, %v3576
        %v3578 = vrot.slane %v3577, 1
        %v3579 = vmax.f32 %v3577, %v3578
        %v3580 = vsel %vm1074, %v3325, -inf
        %v3581 = vrot.slane %v3580, 4
        %v3582 = vmax.f32 %v3580, %v3581
        %v3583 = vrot.slane %v3582, 2
        %v3584 = vmax.f32 %v3582, %v3583
        %v3585 = vrot.slane %v3584, 1
        %v3586 = vmax.f32 %v3584, %v3585
        %v3587 = vsel %vm1074, %v3326, -inf
        %v3588 = vrot.slane %v3587, 4
        %v3589 = vmax.f32 %v3587, %v3588
        %v3590 = vrot.slane %v3589, 2
        %v3591 = vmax.f32 %v3589, %v3590
        %v3592 = vrot.slane %v3591, 1
        %v3593 = vmax.f32 %v3591, %v3592
        %v3594 = vsel %vm1074, %v3257, -inf
        %v3595 = vrot.slane %v3594, 4
        %v3596 = vmax.f32 %v3594, %v3595
        %v3597 = vrot.slane %v3596, 2
        %v3598 = vmax.f32 %v3596, %v3597
        %v3599 = vrot.slane %v3598, 1
        %v3600 = vmax.f32 %v3598, %v3599
        %v3601 = vsel %vm1074, %v3327, -inf
        %v3602 = vrot.slane %v3601, 4
        %v3603 = vmax.f32 %v3601, %v3602
        %v3604 = vrot.slane %v3603, 2
        %v3605 = vmax.f32 %v3603, %v3604
        %v3606 = vrot.slane %v3605, 1
        %v3607 = vmax.f32 %v3605, %v3606
        %v3608 = vsel %vm1074, %v3328, -inf
        %v3609 = vrot.slane %v3608, 4
        %v3610 = vmax.f32 %v3608, %v3609
        %v3611 = vrot.slane %v3610, 2
        %v3612 = vmax.f32 %v3610, %v3611
        %v3613 = vrot.slane %v3612, 1
        %v3614 = vmax.f32 %v3612, %v3613
        %v3615 = vsel %vm1074, %v3329, -inf
        %v3616 = vrot.slane %v3615, 4
        %v3617 = vmax.f32 %v3615, %v3616
        %v3618 = vrot.slane %v3617, 2
        %v3619 = vmax.f32 %v3617, %v3618
        %v3620 = vrot.slane %v3619, 1
        %v3621 = vmax.f32 %v3619, %v3620
        %v3622 = vsel %vm1074, %v3258, -inf
        %v3623 = vrot.slane %v3622, 4
        %v3624 = vmax.f32 %v3622, %v3623
        %v3625 = vrot.slane %v3624, 2
        %v3626 = vmax.f32 %v3624, %v3625
        %v3627 = vrot.slane %v3626, 1
        %v3628 = vmax.f32 %v3626, %v3627
        %v3629 = vsel %vm1074, %v3330, -inf
        %v3630 = vrot.slane %v3629, 4
        %v3631 = vmax.f32 %v3629, %v3630
        %v3632 = vrot.slane %v3631, 2
        %v3633 = vmax.f32 %v3631, %v3632
        %v3634 = vrot.slane %v3633, 1
        %v3635 = vmax.f32 %v3633, %v3634
        %v3636 = vsel %vm1074, %v3331, -inf
        %v3637 = vrot.slane %v3636, 4
        %v3638 = vmax.f32 %v3636, %v3637
        %v3639 = vrot.slane %v3638, 2
        %v3640 = vmax.f32 %v3638, %v3639
        %v3641 = vrot.slane %v3640, 1
        %v3642 = vmax.f32 %v3640, %v3641
        %v3643 = vsel %vm1074, %v3332, -inf
        %v3644 = vrot.slane %v3643, 4
        %v3645 = vmax.f32 %v3643, %v3644
        %v3646 = vrot.slane %v3645, 2
        %v3647 = vmax.f32 %v3645, %v3646
        %v3648 = vrot.slane %v3647, 1
        %v3649 = vmax.f32 %v3647, %v3648
        %v3650 = vsel %vm1074, %v3259, -inf
        %v3651 = vrot.slane %v3650, 4
        %v3652 = vmax.f32 %v3650, %v3651
        %v3653 = vrot.slane %v3652, 2
        %v3654 = vmax.f32 %v3652, %v3653
        %v3655 = vrot.slane %v3654, 1
        %v3656 = vmax.f32 %v3654, %v3655
        %v3657 = vsel %vm1074, %v3333, -inf
        %v3658 = vrot.slane %v3657, 4
        %v3659 = vmax.f32 %v3657, %v3658
        %v3660 = vrot.slane %v3659, 2
        %v3661 = vmax.f32 %v3659, %v3660
        %v3662 = vrot.slane %v3661, 1
        %v3663 = vmax.f32 %v3661, %v3662
        %v3664 = vsel %vm1074, %v3334, -inf
        %v3665 = vrot.slane %v3664, 4
        %v3666 = vmax.f32 %v3664, %v3665
        %v3667 = vrot.slane %v3666, 2
        %v3668 = vmax.f32 %v3666, %v3667
        %v3669 = vrot.slane %v3668, 1
        %v3670 = vmax.f32 %v3668, %v3669
        %v3671 = vsel %vm1074, %v3335, -inf
        %v3672 = vrot.slane %v3671, 4
        %v3673 = vmax.f32 %v3671, %v3672
        %v3674 = vrot.slane %v3673, 2
        %v3675 = vmax.f32 %v3673, %v3674
        %v3676 = vrot.slane %v3675, 1
        %v3677 = vmax.f32 %v3675, %v3676
        %v3678 = vsel %vm1074, %v3260, -inf
        %v3679 = vrot.slane %v3678, 4
        %v3680 = vmax.f32 %v3678, %v3679
        %v3681 = vrot.slane %v3680, 2
        %v3682 = vmax.f32 %v3680, %v3681
        %v3683 = vrot.slane %v3682, 1
        %v3684 = vmax.f32 %v3682, %v3683
        %v3685 = vsel %vm1074, %v3336, -inf
        %v3686 = vrot.slane %v3685, 4
        %v3687 = vmax.f32 %v3685, %v3686
        %v3688 = vrot.slane %v3687, 2
        %v3689 = vmax.f32 %v3687, %v3688
        %v3690 = vrot.slane %v3689, 1
        %v3691 = vmax.f32 %v3689, %v3690
        %v3692 = vsel %vm1074, %v3337, -inf
        %v3693 = vrot.slane %v3692, 4
        %v3694 = vmax.f32 %v3692, %v3693
        %v3695 = vrot.slane %v3694, 2
        %v3696 = vmax.f32 %v3694, %v3695
        %v3697 = vrot.slane %v3696, 1
        %v3698 = vmax.f32 %v3696, %v3697
        %v3699 = vsel %vm1074, %v3338, -inf
        %v3700 = vrot.slane %v3699, 4
        %v3701 = vmax.f32 %v3699, %v3700
        %v3702 = vrot.slane %v3701, 2
        %v3703 = vmax.f32 %v3701, %v3702
        %v3704 = vrot.slane %v3703, 1
        %v3705 = vmax.f32 %v3703, %v3704
        %v3706 = vsel %vm1074, %v3261, -inf
        %v3707 = vrot.slane %v3706, 4
        %v3708 = vmax.f32 %v3706, %v3707
        %v3709 = vrot.slane %v3708, 2
        %v3710 = vmax.f32 %v3708, %v3709
        %v3711 = vrot.slane %v3710, 1
        %v3712 = vmax.f32 %v3710, %v3711
        %v3713 = vsel %vm1074, %v3339, -inf
        %v3714 = vrot.slane %v3713, 4
        %v3715 = vmax.f32 %v3713, %v3714
        %v3716 = vrot.slane %v3715, 2
        %v3717 = vmax.f32 %v3715, %v3716
        %v3718 = vrot.slane %v3717, 1
        %v3719 = vmax.f32 %v3717, %v3718
        %v3720 = vsel %vm1074, %v3340, -inf
        %v3721 = vrot.slane %v3720, 4
        %v3722 = vmax.f32 %v3720, %v3721
        %v3723 = vrot.slane %v3722, 2
        %v3724 = vmax.f32 %v3722, %v3723
        %v3725 = vrot.slane %v3724, 1
        %v3726 = vmax.f32 %v3724, %v3725
        %v3727 = vsel %vm1074, %v3341, -inf
        %v3728 = vrot.slane %v3727, 4
        %v3729 = vmax.f32 %v3727, %v3728
        %v3730 = vrot.slane %v3729, 2
        %v3731 = vmax.f32 %v3729, %v3730
        %v3732 = vrot.slane %v3731, 1
        %v3733 = vmax.f32 %v3731, %v3732
        %v3734 = vsel %vm1074, %v3262, -inf
        %v3735 = vrot.slane %v3734, 4
        %v3736 = vmax.f32 %v3734, %v3735
        %v3737 = vrot.slane %v3736, 2
        %v3738 = vmax.f32 %v3736, %v3737
        %v3739 = vrot.slane %v3738, 1
        %v3740 = vmax.f32 %v3738, %v3739
        %v3741 = vsel %vm1074, %v3342, -inf
        %v3742 = vrot.slane %v3741, 4
        %v3743 = vmax.f32 %v3741, %v3742
        %v3744 = vrot.slane %v3743, 2
        %v3745 = vmax.f32 %v3743, %v3744
        %v3746 = vrot.slane %v3745, 1
        %v3747 = vmax.f32 %v3745, %v3746
        %v3748 = vsel %vm1074, %v3343, -inf
        %v3749 = vrot.slane %v3748, 4
        %v3750 = vmax.f32 %v3748, %v3749
        %v3751 = vrot.slane %v3750, 2
        %v3752 = vmax.f32 %v3750, %v3751
        %v3753 = vrot.slane %v3752, 1
        %v3754 = vmax.f32 %v3752, %v3753
        %v3755 = vsel %vm1074, %v3344, -inf
        %v3756 = vrot.slane %v3755, 4
        %v3757 = vmax.f32 %v3755, %v3756
        %v3758 = vrot.slane %v3757, 2
        %v3759 = vmax.f32 %v3757, %v3758
        %v3760 = vrot.slane %v3759, 1
        %v3761 = vmax.f32 %v3759, %v3760
        %v3762 = vsel %vm1074, %v3263, -inf
        %v3763 = vrot.slane %v3762, 4
        %v3764 = vmax.f32 %v3762, %v3763
        %v3765 = vrot.slane %v3764, 2
        %v3766 = vmax.f32 %v3764, %v3765
        %v3767 = vrot.slane %v3766, 1
        %v3768 = vmax.f32 %v3766, %v3767
        %v3769 = vsel %vm1074, %v3345, -inf
        %v3770 = vrot.slane %v3769, 4
        %v3771 = vmax.f32 %v3769, %v3770
        %v3772 = vrot.slane %v3771, 2
        %v3773 = vmax.f32 %v3771, %v3772
        %v3774 = vrot.slane %v3773, 1
        %v3775 = vmax.f32 %v3773, %v3774
        %v3776 = vsel %vm1074, %v3346, -inf
        %v3777 = vrot.slane %v3776, 4
        %v3778 = vmax.f32 %v3776, %v3777
        %v3779 = vrot.slane %v3778, 2
        %v3780 = vmax.f32 %v3778, %v3779
        %v3781 = vrot.slane %v3780, 1
        %v3782 = vmax.f32 %v3780, %v3781
        %v3783 = vsel %vm1074, %v3347, -inf
        %v3784 = vrot.slane %v3783, 4
        %v3785 = vmax.f32 %v3783, %v3784
        %v3786 = vrot.slane %v3785, 2
        %v3787 = vmax.f32 %v3785, %v3786
        %v3788 = vrot.slane %v3787, 1
        %v3789 = vmax.f32 %v3787, %v3788
        %v3790 = vsel %vm1074, %v3264, -inf
        %v3791 = vrot.slane %v3790, 4
        %v3792 = vmax.f32 %v3790, %v3791
        %v3793 = vrot.slane %v3792, 2
        %v3794 = vmax.f32 %v3792, %v3793
        %v3795 = vrot.slane %v3794, 1
        %v3796 = vmax.f32 %v3794, %v3795
        %v3797 = vsel %vm1074, %v3348, -inf
        %v3798 = vrot.slane %v3797, 4
        %v3799 = vmax.f32 %v3797, %v3798
        %v3800 = vrot.slane %v3799, 2
        %v3801 = vmax.f32 %v3799, %v3800
        %v3802 = vrot.slane %v3801, 1
        %v3803 = vmax.f32 %v3801, %v3802
        %v3804 = vsel %vm1074, %v3349, -inf
        %v3805 = vrot.slane %v3804, 4
        %v3806 = vmax.f32 %v3804, %v3805
        %v3807 = vrot.slane %v3806, 2
        %v3808 = vmax.f32 %v3806, %v3807
        %v3809 = vrot.slane %v3808, 1
        %v3810 = vmax.f32 %v3808, %v3809
        %v3811 = vsel %vm1074, %v3350, -inf
        %v3812 = vrot.slane %v3811, 4
        %v3813 = vmax.f32 %v3811, %v3812
        %v3814 = vrot.slane %v3813, 2
        %v3815 = vmax.f32 %v3813, %v3814
        %v3816 = vrot.slane %v3815, 1
        %v3817 = vmax.f32 %v3815, %v3816
        %v3818 = vsel %vm1074, %v3265, -inf
        %v3819 = vrot.slane %v3818, 4
        %v3820 = vmax.f32 %v3818, %v3819
        %v3821 = vrot.slane %v3820, 2
        %v3822 = vmax.f32 %v3820, %v3821
        %v3823 = vrot.slane %v3822, 1
        %v3824 = vmax.f32 %v3822, %v3823
        %v3825 = vsel %vm1074, %v3351, -inf
        %v3826 = vrot.slane %v3825, 4
        %v3827 = vmax.f32 %v3825, %v3826
        %v3828 = vrot.slane %v3827, 2
        %v3829 = vmax.f32 %v3827, %v3828
        %v3830 = vrot.slane %v3829, 1
        %v3831 = vmax.f32 %v3829, %v3830
        %v3832 = vsel %vm1074, %v3352, -inf
        %v3833 = vrot.slane %v3832, 4
        %v3834 = vmax.f32 %v3832, %v3833
        %v3835 = vrot.slane %v3834, 2
        %v3836 = vmax.f32 %v3834, %v3835
        %v3837 = vrot.slane %v3836, 1
        %v3838 = vmax.f32 %v3836, %v3837
        %v3839 = vsel %vm1074, %v3353, -inf
        %v3840 = vrot.slane %v3839, 4
        %v3841 = vmax.f32 %v3839, %v3840
        %v3842 = vrot.slane %v3841, 2
        %v3843 = vmax.f32 %v3841, %v3842
        %v3844 = vrot.slane %v3843, 1
        %v3845 = vmax.f32 %v3843, %v3844
        %v3846 = vsel %vm1074, %v3266, -inf
        %v3847 = vrot.slane %v3846, 4
        %v3848 = vmax.f32 %v3846, %v3847
        %v3849 = vrot.slane %v3848, 2
        %v3850 = vmax.f32 %v3848, %v3849
        %v3851 = vrot.slane %v3850, 1
        %v3852 = vmax.f32 %v3850, %v3851
        %v3853 = vsel %vm1074, %v3354, -inf
        %v3854 = vrot.slane %v3853, 4
        %v3855 = vmax.f32 %v3853, %v3854
        %v3856 = vrot.slane %v3855, 2
        %v3857 = vmax.f32 %v3855, %v3856
        %v3858 = vrot.slane %v3857, 1
        %v3859 = vmax.f32 %v3857, %v3858
        %v3860 = vsel %vm1074, %v3355, -inf
        %v3861 = vrot.slane %v3860, 4
        %v3862 = vmax.f32 %v3860, %v3861
        %v3863 = vrot.slane %v3862, 2
        %v3864 = vmax.f32 %v3862, %v3863
        %v3865 = vrot.slane %v3864, 1
        %v3866 = vmax.f32 %v3864, %v3865
        %v3867 = vsel %vm1074, %v3356, -inf
        %v3868 = vrot.slane %v3867, 4
        %v3869 = vmax.f32 %v3867, %v3868
        %v3870 = vrot.slane %v3869, 2
        %v3871 = vmax.f32 %v3869, %v3870
        %v3872 = vrot.slane %v3871, 1
        %v3873 = vmax.f32 %v3871, %v3872
        %v3874 = vsel %vm1074, %v3267, -inf
        %v3875 = vrot.slane %v3874, 4
        %v3876 = vmax.f32 %v3874, %v3875
        %v3877 = vrot.slane %v3876, 2
        %v3878 = vmax.f32 %v3876, %v3877
        %v3879 = vrot.slane %v3878, 1
        %v3880 = vmax.f32 %v3878, %v3879
        %v3881 = vsel %vm1074, %v3357, -inf
        %v3882 = vrot.slane %v3881, 4
        %v3883 = vmax.f32 %v3881, %v3882
        %v3884 = vrot.slane %v3883, 2
        %v3885 = vmax.f32 %v3883, %v3884
        %v3886 = vrot.slane %v3885, 1
        %v3887 = vmax.f32 %v3885, %v3886
        %v3888 = vsel %vm1074, %v3358, -inf
        %v3889 = vrot.slane %v3888, 4
        %v3890 = vmax.f32 %v3888, %v3889
        %v3891 = vrot.slane %v3890, 2
        %v3892 = vmax.f32 %v3890, %v3891
        %v3893 = vrot.slane %v3892, 1
        %v3894 = vmax.f32 %v3892, %v3893
        %v3895 = vsel %vm1074, %v3359, -inf
        %v3896 = vrot.slane %v3895, 4
        %v3897 = vmax.f32 %v3895, %v3896
        %v3898 = vrot.slane %v3897, 2
        %v3899 = vmax.f32 %v3897, %v3898
        %v3900 = vrot.slane %v3899, 1
        %v3901 = vmax.f32 %v3899, %v3900
        %v3902 = vsel %vm1074, %v3268, -inf
        %v3903 = vrot.slane %v3902, 4
        %v3904 = vmax.f32 %v3902, %v3903
        %v3905 = vrot.slane %v3904, 2
        %v3906 = vmax.f32 %v3904, %v3905
        %v3907 = vrot.slane %v3906, 1
        %v3908 = vmax.f32 %v3906, %v3907
        %v3909 = vsel %vm1074, %v3360, -inf
        %v3910 = vrot.slane %v3909, 4
        %v3911 = vmax.f32 %v3909, %v3910
        %v3912 = vrot.slane %v3911, 2
        %v3913 = vmax.f32 %v3911, %v3912
        %v3914 = vrot.slane %v3913, 1
        %v3915 = vmax.f32 %v3913, %v3914
        %v3916 = vsel %vm1074, %v3361, -inf
        %v3917 = vrot.slane %v3916, 4
        %v3918 = vmax.f32 %v3916, %v3917
        %v3919 = vrot.slane %v3918, 2
        %v3920 = vmax.f32 %v3918, %v3919
        %v3921 = vrot.slane %v3920, 1
        %v3922 = vmax.f32 %v3920, %v3921
        %v3923 = vsel %vm1074, %v3362, -inf
        %v3924 = vrot.slane %v3923, 4
        %v3925 = vmax.f32 %v3923, %v3924
        %v3926 = vrot.slane %v3925, 2
        %v3927 = vmax.f32 %v3925, %v3926
        %v3928 = vrot.slane %v3927, 1
        %v3929 = vmax.f32 %v3927, %v3928
        %v3930 = vsel %vm1074, %v3269, -inf
        %v3931 = vrot.slane %v3930, 4
        %v3932 = vmax.f32 %v3930, %v3931
        %v3933 = vrot.slane %v3932, 2
        %v3934 = vmax.f32 %v3932, %v3933
        %v3935 = vrot.slane %v3934, 1
        %v3936 = vmax.f32 %v3934, %v3935
        %v3937 = vsel %vm1074, %v3363, -inf
        %v3938 = vrot.slane %v3937, 4
        %v3939 = vmax.f32 %v3937, %v3938
        %v3940 = vrot.slane %v3939, 2
        %v3941 = vmax.f32 %v3939, %v3940
        %v3942 = vrot.slane %v3941, 1
        %v3943 = vmax.f32 %v3941, %v3942
        %v3944 = vsel %vm1074, %v3364, -inf
        %v3945 = vrot.slane %v3944, 4
        %v3946 = vmax.f32 %v3944, %v3945
        %v3947 = vrot.slane %v3946, 2
        %v3948 = vmax.f32 %v3946, %v3947
        %v3949 = vrot.slane %v3948, 1
        %v3950 = vmax.f32 %v3948, %v3949
        %v3951 = vsel %vm1074, %v3365, -inf
        %v3952 = vrot.slane %v3951, 4
        %v3953 = vmax.f32 %v3951, %v3952
        %v3954 = vrot.slane %v3953, 2
        %v3955 = vmax.f32 %v3953, %v3954
        %v3956 = vrot.slane %v3955, 1
        %v3957 = vmax.f32 %v3955, %v3956
        %v3958 = vsel %vm1074, %v3270, -inf
        %v3959 = vrot.slane %v3958, 4
        %v3960 = vmax.f32 %v3958, %v3959
        %v3961 = vrot.slane %v3960, 2
        %v3962 = vmax.f32 %v3960, %v3961
        %v3963 = vrot.slane %v3962, 1
        %v3964 = vmax.f32 %v3962, %v3963
        %v3965 = vsel %vm1074, %v3366, -inf
        %v3966 = vrot.slane %v3965, 4
        %v3967 = vmax.f32 %v3965, %v3966
        %v3968 = vrot.slane %v3967, 2
        %v3969 = vmax.f32 %v3967, %v3968
        %v3970 = vrot.slane %v3969, 1
        %v3971 = vmax.f32 %v3969, %v3970
        %v3972 = vsel %vm1074, %v3367, -inf
        %v3973 = vrot.slane %v3972, 4
        %v3974 = vmax.f32 %v3972, %v3973
        %v3975 = vrot.slane %v3974, 2
        %v3976 = vmax.f32 %v3974, %v3975
        %v3977 = vrot.slane %v3976, 1
        %v3978 = vmax.f32 %v3976, %v3977
        %v3979 = vsel %vm1074, %v3368, -inf
        %v3980 = vrot.slane %v3979, 4
        %v3981 = vmax.f32 %v3979, %v3980
        %v3982 = vrot.slane %v3981, 2
        %v3983 = vmax.f32 %v3981, %v3982
        %v3984 = vrot.slane %v3983, 1
        %v3985 = vmax.f32 %v3983, %v3984
        %v3986 = vsel %vm1074, %v3271, -inf
        %v3987 = vrot.slane %v3986, 4
        %v3988 = vmax.f32 %v3986, %v3987
        %v3989 = vrot.slane %v3988, 2
        %v3990 = vmax.f32 %v3988, %v3989
        %v3991 = vrot.slane %v3990, 1
        %v3992 = vmax.f32 %v3990, %v3991
        %v3993 = vsel %vm1074, %v3369, -inf
        %v3994 = vrot.slane %v3993, 4
        %v3995 = vmax.f32 %v3993, %v3994
        %v3996 = vrot.slane %v3995, 2
        %v3997 = vmax.f32 %v3995, %v3996
        %v3998 = vrot.slane %v3997, 1
        %v3999 = vmax.f32 %v3997, %v3998
        %v4000 = vsel %vm1074, %v3370, -inf
        %v4001 = vrot.slane %v4000, 4
        %v4002 = vmax.f32 %v4000, %v4001
        %v4003 = vrot.slane %v4002, 2
        %v4004 = vmax.f32 %v4002, %v4003
        %v4005 = vrot.slane %v4004, 1
        %v4006 = vmax.f32 %v4004, %v4005
        %v4007 = vsel %vm1074, %v3371, -inf
        %v4008 = vrot.slane %v4007, 4
        %v4009 = vmax.f32 %v4007, %v4008
        %v4010 = vrot.slane %v4009, 2
        %v4011 = vmax.f32 %v4009, %v4010
        %v4012 = vrot.slane %v4011, 1
        %v4013 = vmax.f32 %v4011, %v4012
        %v4014 = vsel %vm1074, %v3272, -inf
        %v4015 = vrot.slane %v4014, 4
        %v4016 = vmax.f32 %v4014, %v4015
        %v4017 = vrot.slane %v4016, 2
        %v4018 = vmax.f32 %v4016, %v4017
        %v4019 = vrot.slane %v4018, 1
        %v4020 = vmax.f32 %v4018, %v4019
        %v4021 = vsel %vm1074, %v3372, -inf
        %v4022 = vrot.slane %v4021, 4
        %v4023 = vmax.f32 %v4021, %v4022
        %v4024 = vrot.slane %v4023, 2
        %v4025 = vmax.f32 %v4023, %v4024
        %v4026 = vrot.slane %v4025, 1
        %v4027 = vmax.f32 %v4025, %v4026
        %v4028 = vsel %vm1074, %v3373, -inf
        %v4029 = vrot.slane %v4028, 4
        %v4030 = vmax.f32 %v4028, %v4029
        %v4031 = vrot.slane %v4030, 2
        %v4032 = vmax.f32 %v4030, %v4031
        %v4033 = vrot.slane %v4032, 1
        %v4034 = vmax.f32 %v4032, %v4033
        %v4035 = vsel %vm1074, %v3374, -inf
        %v4036 = vrot.slane %v4035, 4
        %v4037 = vmax.f32 %v4035, %v4036
        %v4038 = vrot.slane %v4037, 2
        %v4039 = vmax.f32 %v4037, %v4038
        %v4040 = vrot.slane %v4039, 1
        %v4041 = vmax.f32 %v4039, %v4040
        %v4042 = vsel %vm1074, %v3273, -inf
        %v4043 = vrot.slane %v4042, 4
        %v4044 = vmax.f32 %v4042, %v4043
        %v4045 = vrot.slane %v4044, 2
        %v4046 = vmax.f32 %v4044, %v4045
        %v4047 = vrot.slane %v4046, 1
        %v4048 = vmax.f32 %v4046, %v4047
        %v4049 = vsel %vm1074, %v3375, -inf
        %v4050 = vrot.slane %v4049, 4
        %v4051 = vmax.f32 %v4049, %v4050
        %v4052 = vrot.slane %v4051, 2
        %v4053 = vmax.f32 %v4051, %v4052
        %v4054 = vrot.slane %v4053, 1
        %v4055 = vmax.f32 %v4053, %v4054
        %v4056 = vsel %vm1074, %v3376, -inf
        %v4057 = vrot.slane %v4056, 4
        %v4058 = vmax.f32 %v4056, %v4057
        %v4059 = vrot.slane %v4058, 2
        %v4060 = vmax.f32 %v4058, %v4059
        %v4061 = vrot.slane %v4060, 1
        %v4062 = vmax.f32 %v4060, %v4061
        %v4063 = vsel %vm1074, %v3377, -inf
        %v4064 = vrot.slane %v4063, 4
        %v4065 = vmax.f32 %v4063, %v4064
        %v4066 = vrot.slane %v4065, 2
        %v4067 = vmax.f32 %v4065, %v4066
        %v4068 = vrot.slane %v4067, 1
        %v4069 = vmax.f32 %v4067, %v4068
        %v4070 = vsel %vm1074, %v3274, -inf
        %v4071 = vrot.slane %v4070, 4
        %v4072 = vmax.f32 %v4070, %v4071
        %v4073 = vrot.slane %v4072, 2
        %v4074 = vmax.f32 %v4072, %v4073
        %v4075 = vrot.slane %v4074, 1
        %v4076 = vmax.f32 %v4074, %v4075
        %v4077 = vsel %vm1074, %v3378, -inf
        %v4078 = vrot.slane %v4077, 4
        %v4079 = vmax.f32 %v4077, %v4078
        %v4080 = vrot.slane %v4079, 2
        %v4081 = vmax.f32 %v4079, %v4080
        %v4082 = vrot.slane %v4081, 1
        %v4083 = vmax.f32 %v4081, %v4082
        %v4084 = vsel %vm1074, %v3379, -inf
        %v4085 = vrot.slane %v4084, 4
        %v4086 = vmax.f32 %v4084, %v4085
        %v4087 = vrot.slane %v4086, 2
        %v4088 = vmax.f32 %v4086, %v4087
        %v4089 = vrot.slane %v4088, 1
        %v4090 = vmax.f32 %v4088, %v4089
        %v4091 = vsel %vm1074, %v3380, -inf
        %v4092 = vrot.slane %v4091, 4
        %v4093 = vmax.f32 %v4091, %v4092
        %v4094 = vrot.slane %v4093, 2
        %v4095 = vmax.f32 %v4093, %v4094
        %v4096 = vrot.slane %v4095, 1
        %v4097 = vmax.f32 %v4095, %v4096
        %v4098 = vsel %vm1074, %v3275, -inf
        %v4099 = vrot.slane %v4098, 4
        %v4100 = vmax.f32 %v4098, %v4099
        %v4101 = vrot.slane %v4100, 2
        %v4102 = vmax.f32 %v4100, %v4101
        %v4103 = vrot.slane %v4102, 1
        %v4104 = vmax.f32 %v4102, %v4103
        %v4105 = vsel %vm1074, %v3381, -inf
        %v4106 = vrot.slane %v4105, 4
        %v4107 = vmax.f32 %v4105, %v4106
        %v4108 = vrot.slane %v4107, 2
        %v4109 = vmax.f32 %v4107, %v4108
        %v4110 = vrot.slane %v4109, 1
        %v4111 = vmax.f32 %v4109, %v4110
        %v4112 = vsel %vm1074, %v3382, -inf
        %v4113 = vrot.slane %v4112, 4
        %v4114 = vmax.f32 %v4112, %v4113
        %v4115 = vrot.slane %v4114, 2
        %v4116 = vmax.f32 %v4114, %v4115
        %v4117 = vrot.slane %v4116, 1
        %v4118 = vmax.f32 %v4116, %v4117
        %v4119 = vsel %vm1074, %v3383, -inf
        %v4120 = vrot.slane %v4119, 4
        %v4121 = vmax.f32 %v4119, %v4120
        %v4122 = vrot.slane %v4121, 2
        %v4123 = vmax.f32 %v4121, %v4122
        %v4124 = vrot.slane %v4123, 1
        %v4125 = vmax.f32 %v4123, %v4124
        %v4126 = vsel %vm1074, %v3276, -inf
        %v4127 = vrot.slane %v4126, 4
        %v4128 = vmax.f32 %v4126, %v4127
        %v4129 = vrot.slane %v4128, 2
        %v4130 = vmax.f32 %v4128, %v4129
        %v4131 = vrot.slane %v4130, 1
        %v4132 = vmax.f32 %v4130, %v4131
        %v4133 = vsel %vm1074, %v3384, -inf
        %v4134 = vrot.slane %v4133, 4
        %v4135 = vmax.f32 %v4133, %v4134
        %v4136 = vrot.slane %v4135, 2
        %v4137 = vmax.f32 %v4135, %v4136
        %v4138 = vrot.slane %v4137, 1
        %v4139 = vmax.f32 %v4137, %v4138
        %v4140 = vsel %vm1074, %v3385, -inf
        %v4141 = vrot.slane %v4140, 4
        %v4142 = vmax.f32 %v4140, %v4141
        %v4143 = vrot.slane %v4142, 2
        %v4144 = vmax.f32 %v4142, %v4143
        %v4145 = vrot.slane %v4144, 1
        %v4146 = vmax.f32 %v4144, %v4145
        %v4147 = vsel %vm1074, %v3386, -inf
        %v4148 = vrot.slane %v4147, 4
        %v4149 = vmax.f32 %v4147, %v4148
        %v4150 = vrot.slane %v4149, 2
        %v4151 = vmax.f32 %v4149, %v4150
        %v4152 = vrot.slane %v4151, 1
        %v4153 = vmax.f32 %v4151, %v4152
        %v4154 = vsel %vm1074, %v3277, -inf
        %v4155 = vrot.slane %v4154, 4
        %v4156 = vmax.f32 %v4154, %v4155
        %v4157 = vrot.slane %v4156, 2
        %v4158 = vmax.f32 %v4156, %v4157
        %v4159 = vrot.slane %v4158, 1
        %v4160 = vmax.f32 %v4158, %v4159
        %v4161 = vsel %vm1074, %v3387, -inf
        %v4162 = vrot.slane %v4161, 4
        %v4163 = vmax.f32 %v4161, %v4162
        %v4164 = vrot.slane %v4163, 2
        %v4165 = vmax.f32 %v4163, %v4164
        %v4166 = vrot.slane %v4165, 1
        %v4167 = vmax.f32 %v4165, %v4166
        %v4168 = vsel %vm1074, %v3388, -inf
        %v4169 = vrot.slane %v4168, 4
        %v4170 = vmax.f32 %v4168, %v4169
        %v4171 = vrot.slane %v4170, 2
        %v4172 = vmax.f32 %v4170, %v4171
        %v4173 = vrot.slane %v4172, 1
        %v4174 = vmax.f32 %v4172, %v4173
        %v4175 = vsel %vm1074, %v3389, -inf
        %v4176 = vrot.slane %v4175, 4
        %v4177 = vmax.f32 %v4175, %v4176
        %v4178 = vrot.slane %v4177, 2
        %v4179 = vmax.f32 %v4177, %v4178
        %v4180 = vrot.slane %v4179, 1
        %v4181 = vmax.f32 %v4179, %v4180
        %v4182 = vsel %vm1074, %v3278, -inf
        %v4183 = vrot.slane %v4182, 4
        %v4184 = vmax.f32 %v4182, %v4183
        %v4185 = vrot.slane %v4184, 2
        %v4186 = vmax.f32 %v4184, %v4185
        %v4187 = vrot.slane %v4186, 1
        %v4188 = vmax.f32 %v4186, %v4187
        %v4189 = vsel %vm1074, %v3390, -inf
        %v4190 = vrot.slane %v4189, 4
        %v4191 = vmax.f32 %v4189, %v4190
        %v4192 = vrot.slane %v4191, 2
        %v4193 = vmax.f32 %v4191, %v4192
        %v4194 = vrot.slane %v4193, 1
        %v4195 = vmax.f32 %v4193, %v4194
        %v4196 = vsel %vm1074, %v3391, -inf
        %v4197 = vrot.slane %v4196, 4
        %v4198 = vmax.f32 %v4196, %v4197
        %v4199 = vrot.slane %v4198, 2
        %v4200 = vmax.f32 %v4198, %v4199
        %v4201 = vrot.slane %v4200, 1
        %v4202 = vmax.f32 %v4200, %v4201
        %v4203 = vsel %vm1074, %v3392, -inf
        %v4204 = vrot.slane %v4203, 4
        %v4205 = vmax.f32 %v4203, %v4204
        %v4206 = vrot.slane %v4205, 2
        %v4207 = vmax.f32 %v4205, %v4206
        %v4208 = vrot.slane %v4207, 1
        %v4209 = vmax.f32 %v4207, %v4208
        %v4210 = vsel %vm1074, %v3279, -inf
        %v4211 = vrot.slane %v4210, 4
        %v4212 = vmax.f32 %v4210, %v4211
        %v4213 = vrot.slane %v4212, 2
        %v4214 = vmax.f32 %v4212, %v4213
        %v4215 = vrot.slane %v4214, 1
        %v4216 = vmax.f32 %v4214, %v4215
        %v4217 = vsel %vm1074, %v3393, -inf
        %v4218 = vrot.slane %v4217, 4
        %v4219 = vmax.f32 %v4217, %v4218
        %v4220 = vrot.slane %v4219, 2
        %v4221 = vmax.f32 %v4219, %v4220
        %v4222 = vrot.slane %v4221, 1
        %v4223 = vmax.f32 %v4221, %v4222
        %v4224 = vsel %vm1074, %v3394, -inf
        %v4225 = vrot.slane %v4224, 4
        %v4226 = vmax.f32 %v4224, %v4225
        %v4227 = vrot.slane %v4226, 2
        %v4228 = vmax.f32 %v4226, %v4227
        %v4229 = vrot.slane %v4228, 1
        %v4230 = vmax.f32 %v4228, %v4229
        %v4231 = vsel %vm1074, %v3395, -inf
        %v4232 = vrot.slane %v4231, 4
        %v4233 = vmax.f32 %v4231, %v4232
        %v4234 = vrot.slane %v4233, 2
        %v4235 = vmax.f32 %v4233, %v4234
        %v4236 = vrot.slane %v4235, 1
        %v4237 = vmax.f32 %v4235, %v4236
        %v4238 = vsel %vm1074, %v3280, -inf
        %v4239 = vrot.slane %v4238, 4
        %v4240 = vmax.f32 %v4238, %v4239
        %v4241 = vrot.slane %v4240, 2
        %v4242 = vmax.f32 %v4240, %v4241
        %v4243 = vrot.slane %v4242, 1
        %v4244 = vmax.f32 %v4242, %v4243
        %v4245 = vsel %vm1074, %v3396, -inf
        %v4246 = vrot.slane %v4245, 4
        %v4247 = vmax.f32 %v4245, %v4246
        %v4248 = vrot.slane %v4247, 2
        %v4249 = vmax.f32 %v4247, %v4248
        %v4250 = vrot.slane %v4249, 1
        %v4251 = vmax.f32 %v4249, %v4250
        %v4252 = vsel %vm1074, %v3397, -inf
        %v4253 = vrot.slane %v4252, 4
        %v4254 = vmax.f32 %v4252, %v4253
        %v4255 = vrot.slane %v4254, 2
        %v4256 = vmax.f32 %v4254, %v4255
        %v4257 = vrot.slane %v4256, 1
        %v4258 = vmax.f32 %v4256, %v4257
        %v4259 = vsel %vm1074, %v3398, -inf
        %v4260 = vrot.slane %v4259, 4
        %v4261 = vmax.f32 %v4259, %v4260
        %v4262 = vrot.slane %v4261, 2
        %v4263 = vmax.f32 %v4261, %v4262
        %v4264 = vrot.slane %v4263, 1
        %v4265 = vmax.f32 %v4263, %v4264
        %v4266 = vsel %vm1074, %v3281, -inf
        %v4267 = vrot.slane %v4266, 4
        %v4268 = vmax.f32 %v4266, %v4267
        %v4269 = vrot.slane %v4268, 2
        %v4270 = vmax.f32 %v4268, %v4269
        %v4271 = vrot.slane %v4270, 1
        %v4272 = vmax.f32 %v4270, %v4271
        %v4273 = vsel %vm1074, %v3399, -inf
        %v4274 = vrot.slane %v4273, 4
        %v4275 = vmax.f32 %v4273, %v4274
        %v4276 = vrot.slane %v4275, 2
        %v4277 = vmax.f32 %v4275, %v4276
        %v4278 = vrot.slane %v4277, 1
        %v4279 = vmax.f32 %v4277, %v4278
        %v4280 = vsel %vm1074, %v3400, -inf
        %v4281 = vrot.slane %v4280, 4
        %v4282 = vmax.f32 %v4280, %v4281
        %v4283 = vrot.slane %v4282, 2
        %v4284 = vmax.f32 %v4282, %v4283
        %v4285 = vrot.slane %v4284, 1
        %v4286 = vmax.f32 %v4284, %v4285
        %v4287 = vsel %vm1074, %v3401, -inf
        %v4288 = vrot.slane %v4287, 4
        %v4289 = vmax.f32 %v4287, %v4288
        %v4290 = vrot.slane %v4289, 2
        %v4291 = vmax.f32 %v4289, %v4290
        %v4292 = vrot.slane %v4291, 1
        %v4293 = vmax.f32 %v4291, %v4292
        %v4294 = vsel %vm1074, %v3282, -inf
        %v4295 = vrot.slane %v4294, 4
        %v4296 = vmax.f32 %v4294, %v4295
        %v4297 = vrot.slane %v4296, 2
        %v4298 = vmax.f32 %v4296, %v4297
        %v4299 = vrot.slane %v4298, 1
        %v4300 = vmax.f32 %v4298, %v4299
        %v4301 = vsel %vm1074, %v3402, -inf
        %v4302 = vrot.slane %v4301, 4
        %v4303 = vmax.f32 %v4301, %v4302
        %v4304 = vrot.slane %v4303, 2
        %v4305 = vmax.f32 %v4303, %v4304
        %v4306 = vrot.slane %v4305, 1
        %v4307 = vmax.f32 %v4305, %v4306
        %v4308 = vsel %vm1074, %v3403, -inf
        %v4309 = vrot.slane %v4308, 4
        %v4310 = vmax.f32 %v4308, %v4309
        %v4311 = vrot.slane %v4310, 2
        %v4312 = vmax.f32 %v4310, %v4311
        %v4313 = vrot.slane %v4312, 1
        %v4314 = vmax.f32 %v4312, %v4313
        %v4315 = vsel %vm1074, %v3404, -inf
        %v4316 = vrot.slane %v4315, 4
        %v4317 = vmax.f32 %v4315, %v4316
        %v4318 = vrot.slane %v4317, 2
        %v4319 = vmax.f32 %v4317, %v4318
        %v4320 = vrot.slane %v4319, 1
        %v4321 = vmax.f32 %v4319, %v4320
        %v4322 = vsel %vm1074, %v3283, -inf
        %v4323 = vrot.slane %v4322, 4
        %v4324 = vmax.f32 %v4322, %v4323
        %v4325 = vrot.slane %v4324, 2
        %v4326 = vmax.f32 %v4324, %v4325
        %v4327 = vrot.slane %v4326, 1
        %v4328 = vmax.f32 %v4326, %v4327
        %v4329 = vsel %vm1074, %v3405, -inf
        %v4330 = vrot.slane %v4329, 4
        %v4331 = vmax.f32 %v4329, %v4330
        %v4332 = vrot.slane %v4331, 2
        %v4333 = vmax.f32 %v4331, %v4332
        %v4334 = vrot.slane %v4333, 1
        %v4335 = vmax.f32 %v4333, %v4334
        %v4336 = vsel %vm1074, %v3406, -inf
        %v4337 = vrot.slane %v4336, 4
        %v4338 = vmax.f32 %v4336, %v4337
        %v4339 = vrot.slane %v4338, 2
        %v4340 = vmax.f32 %v4338, %v4339
        %v4341 = vrot.slane %v4340, 1
        %v4342 = vmax.f32 %v4340, %v4341
        %v4343 = vsel %vm1074, %v3407, -inf
        %v4344 = vrot.slane %v4343, 4
        %v4345 = vmax.f32 %v4343, %v4344
        %v4346 = vrot.slane %v4345, 2
        %v4347 = vmax.f32 %v4345, %v4346
        %v4348 = vrot.slane %v4347, 1
        %v4349 = vmax.f32 %v4347, %v4348
        %v4350 = vsel %vm1074, %v3284, -inf
        %v4351 = vrot.slane %v4350, 4
        %v4352 = vmax.f32 %v4350, %v4351
        %v4353 = vrot.slane %v4352, 2
        %v4354 = vmax.f32 %v4352, %v4353
        %v4355 = vrot.slane %v4354, 1
        %v4356 = vmax.f32 %v4354, %v4355
        %v4357 = vsel %vm1074, %v3408, -inf
        %v4358 = vrot.slane %v4357, 4
        %v4359 = vmax.f32 %v4357, %v4358
        %v4360 = vrot.slane %v4359, 2
        %v4361 = vmax.f32 %v4359, %v4360
        %v4362 = vrot.slane %v4361, 1
        %v4363 = vmax.f32 %v4361, %v4362
        %v4364 = vsel %vm1074, %v3409, -inf
        %v4365 = vrot.slane %v4364, 4
        %v4366 = vmax.f32 %v4364, %v4365
        %v4367 = vrot.slane %v4366, 2
        %v4368 = vmax.f32 %v4366, %v4367
        %v4369 = vrot.slane %v4368, 1
        %v4370 = vmax.f32 %v4368, %v4369
        %v4371 = vsel %vm1074, %v3410, -inf
        %v4372 = vrot.slane %v4371, 4
        %v4373 = vmax.f32 %v4371, %v4372
        %v4374 = vrot.slane %v4373, 2
        %v4375 = vmax.f32 %v4373, %v4374
        %v4376 = vrot.slane %v4375, 1
        %v4377 = vmax.f32 %v4375, %v4376
        %v4378 = vsel %vm1074, %v3285, -inf
        %v4379 = vrot.slane %v4378, 4
        %v4380 = vmax.f32 %v4378, %v4379
        %v4381 = vrot.slane %v4380, 2
        %v4382 = vmax.f32 %v4380, %v4381
        %v4383 = vrot.slane %v4382, 1
        %v4384 = vmax.f32 %v4382, %v4383
        %v4385 = vsel %vm1074, %v3411, -inf
        %v4386 = vrot.slane %v4385, 4
        %v4387 = vmax.f32 %v4385, %v4386
        %v4388 = vrot.slane %v4387, 2
        %v4389 = vmax.f32 %v4387, %v4388
        %v4390 = vrot.slane %v4389, 1
        %v4391 = vmax.f32 %v4389, %v4390
        %v4392 = vsel %vm1074, %v3412, -inf
        %v4393 = vrot.slane %v4392, 4
        %v4394 = vmax.f32 %v4392, %v4393
        %v4395 = vrot.slane %v4394, 2
        %v4396 = vmax.f32 %v4394, %v4395
        %v4397 = vrot.slane %v4396, 1
        %v4398 = vmax.f32 %v4396, %v4397
        %v4399 = vsel %vm1074, %v3413, -inf
        %v4400 = vrot.slane %v4399, 4
        %v4401 = vmax.f32 %v4399, %v4400
        %v4402 = vrot.slane %v4401, 2
        %v4403 = vmax.f32 %v4401, %v4402
        %v4404 = vrot.slane %v4403, 1
        %v4405 = vmax.f32 %v4403, %v4404
        %v4406 = vsel %vm1071, %v3516, -inf
        %v4407 = vsel %vm1071, %v3572, -inf
        %v4408 = vmax.f32 %v4406, %v4407
        %v4409 = vsel %vm1071, %v3523, -inf
        %v4410 = vsel %vm1071, %v3579, -inf
        %v4411 = vmax.f32 %v4409, %v4410
        %v4412 = vsel %vm1071, %v3530, -inf
        %v4413 = vsel %vm1071, %v3586, -inf
        %v4414 = vmax.f32 %v4412, %v4413
        %v4415 = vsel %vm1071, %v3537, -inf
        %v4416 = vsel %vm1071, %v3593, -inf
        %v4417 = vmax.f32 %v4415, %v4416
        %v4418 = vsel %vm1071, %v3544, -inf
        %v4419 = vsel %vm1071, %v3600, -inf
        %v4420 = vmax.f32 %v4418, %v4419
        %v4421 = vsel %vm1071, %v3551, -inf
        %v4422 = vsel %vm1071, %v3607, -inf
        %v4423 = vmax.f32 %v4421, %v4422
        %v4424 = vsel %vm1071, %v3558, -inf
        %v4425 = vsel %vm1071, %v3614, -inf
        %v4426 = vmax.f32 %v4424, %v4425
        %v4427 = vsel %vm1071, %v3565, -inf
        %v4428 = vsel %vm1071, %v3621, -inf
        %v4429 = vmax.f32 %v4427, %v4428
        %v4430 = vsel %vm1071, %v3628, -inf
        %v4431 = vsel %vm1071, %v3684, -inf
        %v4432 = vmax.f32 %v4430, %v4431
        %v4433 = vsel %vm1071, %v3635, -inf
        %v4434 = vsel %vm1071, %v3691, -inf
        %v4435 = vmax.f32 %v4433, %v4434
        %v4436 = vsel %vm1071, %v3642, -inf
        %v4437 = vsel %vm1071, %v3698, -inf
        %v4438 = vmax.f32 %v4436, %v4437
        %v4439 = vsel %vm1071, %v3649, -inf
        %v4440 = vsel %vm1071, %v3705, -inf
        %v4441 = vmax.f32 %v4439, %v4440
        %v4442 = vsel %vm1071, %v3656, -inf
        %v4443 = vsel %vm1071, %v3712, -inf
        %v4444 = vmax.f32 %v4442, %v4443
        %v4445 = vsel %vm1071, %v3663, -inf
        %v4446 = vsel %vm1071, %v3719, -inf
        %v4447 = vmax.f32 %v4445, %v4446
        %v4448 = vsel %vm1071, %v3670, -inf
        %v4449 = vsel %vm1071, %v3726, -inf
        %v4450 = vmax.f32 %v4448, %v4449
        %v4451 = vsel %vm1071, %v3677, -inf
        %v4452 = vsel %vm1071, %v3733, -inf
        %v4453 = vmax.f32 %v4451, %v4452
        %v4454 = vsel %vm1071, %v3740, -inf
        %v4455 = vsel %vm1071, %v3796, -inf
        %v4456 = vmax.f32 %v4454, %v4455
        %v4457 = vsel %vm1071, %v3747, -inf
        %v4458 = vsel %vm1071, %v3803, -inf
        %v4459 = vmax.f32 %v4457, %v4458
        %v4460 = vsel %vm1071, %v3754, -inf
        %v4461 = vsel %vm1071, %v3810, -inf
        %v4462 = vmax.f32 %v4460, %v4461
        %v4463 = vsel %vm1071, %v3761, -inf
        %v4464 = vsel %vm1071, %v3817, -inf
        %v4465 = vmax.f32 %v4463, %v4464
        %v4466 = vsel %vm1071, %v3768, -inf
        %v4467 = vsel %vm1071, %v3824, -inf
        %v4468 = vmax.f32 %v4466, %v4467
        %v4469 = vsel %vm1071, %v3775, -inf
        %v4470 = vsel %vm1071, %v3831, -inf
        %v4471 = vmax.f32 %v4469, %v4470
        %v4472 = vsel %vm1071, %v3782, -inf
        %v4473 = vsel %vm1071, %v3838, -inf
        %v4474 = vmax.f32 %v4472, %v4473
        %v4475 = vsel %vm1071, %v3789, -inf
        %v4476 = vsel %vm1071, %v3845, -inf
        %v4477 = vmax.f32 %v4475, %v4476
        %v4478 = vsel %vm1071, %v3852, -inf
        %v4479 = vsel %vm1071, %v3908, -inf
        %v4480 = vmax.f32 %v4478, %v4479
        %v4481 = vsel %vm1071, %v3859, -inf
        %v4482 = vsel %vm1071, %v3915, -inf
        %v4483 = vmax.f32 %v4481, %v4482
        %v4484 = vsel %vm1071, %v3866, -inf
        %v4485 = vsel %vm1071, %v3922, -inf
        %v4486 = vmax.f32 %v4484, %v4485
        %v4487 = vsel %vm1071, %v3873, -inf
        %v4488 = vsel %vm1071, %v3929, -inf
        %v4489 = vmax.f32 %v4487, %v4488
        %v4490 = vsel %vm1071, %v3880, -inf
        %v4491 = vsel %vm1071, %v3936, -inf
        %v4492 = vmax.f32 %v4490, %v4491
        %v4493 = vsel %vm1071, %v3887, -inf
        %v4494 = vsel %vm1071, %v3943, -inf
        %v4495 = vmax.f32 %v4493, %v4494
        %v4496 = vsel %vm1071, %v3894, -inf
        %v4497 = vsel %vm1071, %v3950, -inf
        %v4498 = vmax.f32 %v4496, %v4497
        %v4499 = vsel %vm1071, %v3901, -inf
        %v4500 = vsel %vm1071, %v3957, -inf
        %v4501 = vmax.f32 %v4499, %v4500
        %v4502 = vsel %vm1071, %v3964, -inf
        %v4503 = vsel %vm1071, %v4020, -inf
        %v4504 = vmax.f32 %v4502, %v4503
        %v4505 = vsel %vm1071, %v3971, -inf
        %v4506 = vsel %vm1071, %v4027, -inf
        %v4507 = vmax.f32 %v4505, %v4506
        %v4508 = vsel %vm1071, %v3978, -inf
        %v4509 = vsel %vm1071, %v4034, -inf
        %v4510 = vmax.f32 %v4508, %v4509
        %v4511 = vsel %vm1071, %v3985, -inf
        %v4512 = vsel %vm1071, %v4041, -inf
        %v4513 = vmax.f32 %v4511, %v4512
        %v4514 = vsel %vm1071, %v3992, -inf
        %v4515 = vsel %vm1071, %v4048, -inf
        %v4516 = vmax.f32 %v4514, %v4515
        %v4517 = vsel %vm1071, %v3999, -inf
        %v4518 = vsel %vm1071, %v4055, -inf
        %v4519 = vmax.f32 %v4517, %v4518
        %v4520 = vsel %vm1071, %v4006, -inf
        %v4521 = vsel %vm1071, %v4062, -inf
        %v4522 = vmax.f32 %v4520, %v4521
        %v4523 = vsel %vm1071, %v4013, -inf
        %v4524 = vsel %vm1071, %v4069, -inf
        %v4525 = vmax.f32 %v4523, %v4524
        %v4526 = vsel %vm1071, %v4076, -inf
        %v4527 = vsel %vm1071, %v4132, -inf
        %v4528 = vmax.f32 %v4526, %v4527
        %v4529 = vsel %vm1071, %v4083, -inf
        %v4530 = vsel %vm1071, %v4139, -inf
        %v4531 = vmax.f32 %v4529, %v4530
        %v4532 = vsel %vm1071, %v4090, -inf
        %v4533 = vsel %vm1071, %v4146, -inf
        %v4534 = vmax.f32 %v4532, %v4533
        %v4535 = vsel %vm1071, %v4097, -inf
        %v4536 = vsel %vm1071, %v4153, -inf
        %v4537 = vmax.f32 %v4535, %v4536
        %v4538 = vsel %vm1071, %v4104, -inf
        %v4539 = vsel %vm1071, %v4160, -inf
        %v4540 = vmax.f32 %v4538, %v4539
        %v4541 = vsel %vm1071, %v4111, -inf
        %v4542 = vsel %vm1071, %v4167, -inf
        %v4543 = vmax.f32 %v4541, %v4542
        %v4544 = vsel %vm1071, %v4118, -inf
        %v4545 = vsel %vm1071, %v4174, -inf
        %v4546 = vmax.f32 %v4544, %v4545
        %v4547 = vsel %vm1071, %v4125, -inf
        %v4548 = vsel %vm1071, %v4181, -inf
        %v4549 = vmax.f32 %v4547, %v4548
        %v4550 = vsel %vm1071, %v4188, -inf
        %v4551 = vsel %vm1071, %v4244, -inf
        %v4552 = vmax.f32 %v4550, %v4551
        %v4553 = vsel %vm1071, %v4195, -inf
        %v4554 = vsel %vm1071, %v4251, -inf
        %v4555 = vmax.f32 %v4553, %v4554
        %v4556 = vsel %vm1071, %v4202, -inf
        %v4557 = vsel %vm1071, %v4258, -inf
        %v4558 = vmax.f32 %v4556, %v4557
        %v4559 = vsel %vm1071, %v4209, -inf
        %v4560 = vsel %vm1071, %v4265, -inf
        %v4561 = vmax.f32 %v4559, %v4560
        %v4562 = vsel %vm1071, %v4216, -inf
        %v4563 = vsel %vm1071, %v4272, -inf
        %v4564 = vmax.f32 %v4562, %v4563
        %v4565 = vsel %vm1071, %v4223, -inf
        %v4566 = vsel %vm1071, %v4279, -inf
        %v4567 = vmax.f32 %v4565, %v4566
        %v4568 = vsel %vm1071, %v4230, -inf
        %v4569 = vsel %vm1071, %v4286, -inf
        %v4570 = vmax.f32 %v4568, %v4569
        %v4571 = vsel %vm1071, %v4237, -inf
        %v4572 = vsel %vm1071, %v4293, -inf
        %v4573 = vmax.f32 %v4571, %v4572
        %v4574 = vsel %vm1071, %v4300, -inf
        %v4575 = vsel %vm1071, %v4356, -inf
        %v4576 = vmax.f32 %v4574, %v4575
        %v4577 = vsel %vm1071, %v4307, -inf
        %v4578 = vsel %vm1071, %v4363, -inf
        %v4579 = vmax.f32 %v4577, %v4578
        %v4580 = vsel %vm1071, %v4314, -inf
        %v4581 = vsel %vm1071, %v4370, -inf
        %v4582 = vmax.f32 %v4580, %v4581
        %v4583 = vsel %vm1071, %v4321, -inf
        %v4584 = vsel %vm1071, %v4377, -inf
        %v4585 = vmax.f32 %v4583, %v4584
        %v4586 = vsel %vm1071, %v4328, -inf
        %v4587 = vsel %vm1071, %v4384, -inf
        %v4588 = vmax.f32 %v4586, %v4587
        %v4589 = vsel %vm1071, %v4335, -inf
        %v4590 = vsel %vm1071, %v4391, -inf
        %v4591 = vmax.f32 %v4589, %v4590
        %v4592 = vsel %vm1071, %v4342, -inf
        %v4593 = vsel %vm1071, %v4398, -inf
        %v4594 = vmax.f32 %v4592, %v4593
        %v4595 = vsel %vm1071, %v4349, -inf
        %v4596 = vsel %vm1071, %v4405, -inf
        %v4597 = vmax.f32 %v4595, %v4596
        %4598 = vst.msk [vmem:[#allocation3] sm:$0xff] %vm1071, 0.0
        %4599 = vst.msk [vmem:[#allocation3 + $0x8] sm:$0x3] %vm1074, 0.0
        %4600 = vst.msk [vmem:[#allocation3 + $0x10] sm:$0xff] %vm1071, 0.0
        %4601 = vst.msk [vmem:[#allocation3 + $0x18] sm:$0x3] %vm1074, 0.0
        %4602 = vst.msk [vmem:[#allocation3 + $0x20] sm:$0xff] %vm1071, 0.0
        %4603 = vst.msk [vmem:[#allocation3 + $0x28] sm:$0x3] %vm1074, 0.0
        %4604 = vst.msk [vmem:[#allocation3 + $0x30] sm:$0xff] %vm1071, 0.0
        %4605 = vst.msk [vmem:[#allocation3 + $0x38] sm:$0x3] %vm1074, 0.0
        %4606 = vst.msk [vmem:[#allocation3 + $0x40] sm:$0xff] %vm1071, 0.0
        %4607 = vst.msk [vmem:[#allocation3 + $0x48] sm:$0x3] %vm1074, 0.0
        %4608 = vst.msk [vmem:[#allocation3 + $0x50] sm:$0xff] %vm1071, 0.0
        %4609 = vst.msk [vmem:[#allocation3 + $0x58] sm:$0x3] %vm1074, 0.0
        %4610 = vst.msk [vmem:[#allocation3 + $0x60] sm:$0xff] %vm1071, 0.0
        %4611 = vst.msk [vmem:[#allocation3 + $0x68] sm:$0x3] %vm1074, 0.0
        %4612 = vst.msk [vmem:[#allocation3 + $0x70] sm:$0xff] %vm1071, 0.0
        %4613 = vst.msk [vmem:[#allocation3 + $0x78] sm:$0x3] %vm1074, 0.0
        %4614 = vst.msk [vmem:[#allocation3 + $0x80] sm:$0xff] %vm1071, 0.0
        %4615 = vst.msk [vmem:[#allocation3 + $0x88] sm:$0x3] %vm1074, 0.0
        %4616 = vst.msk [vmem:[#allocation3 + $0x90] sm:$0xff] %vm1071, 0.0
        %4617 = vst.msk [vmem:[#allocation3 + $0x98] sm:$0x3] %vm1074, 0.0
        %vm4682 = vcmask 1041409
        %v4683 = vsel %vm4682, %v4411, %v4408
        %vm4684 = vcmask 1042434
        %v4685 = vsel %vm4684, %v4414, %v4683
        %vm4686 = vcmask 1043459
        %v4687 = vsel %vm4686, %v4417, %v4685
        %vm4688 = vcmask 1044484
        %v4689 = vsel %vm4688, %v4420, %v4687
        %vm4690 = vcmask 1045509
        %v4691 = vsel %vm4690, %v4423, %v4689
        %vm4692 = vcmask 1046534
        %v4693 = vsel %vm4692, %v4426, %v4691
        %vm4694 = vcmask 1047559
        %v4695 = vsel %vm4694, %v4429, %v4693
        %v4696 = vsel %vm4682, %v4435, %v4432
        %v4697 = vsel %vm4684, %v4438, %v4696
        %v4698 = vsel %vm4686, %v4441, %v4697
        %v4699 = vsel %vm4688, %v4444, %v4698
        %v4700 = vsel %vm4690, %v4447, %v4699
        %v4701 = vsel %vm4692, %v4450, %v4700
        %v4702 = vsel %vm4694, %v4453, %v4701
        %v4703 = vsel %vm4682, %v4459, %v4456
        %v4704 = vsel %vm4684, %v4462, %v4703
        %v4705 = vsel %vm4686, %v4465, %v4704
        %v4706 = vsel %vm4688, %v4468, %v4705
        %v4707 = vsel %vm4690, %v4471, %v4706
        %v4708 = vsel %vm4692, %v4474, %v4707
        %v4709 = vsel %vm4694, %v4477, %v4708
        %v4710 = vsel %vm4682, %v4483, %v4480
        %v4711 = vsel %vm4684, %v4486, %v4710
        %v4712 = vsel %vm4686, %v4489, %v4711
        %v4713 = vsel %vm4688, %v4492, %v4712
        %v4714 = vsel %vm4690, %v4495, %v4713
        %v4715 = vsel %vm4692, %v4498, %v4714
        %v4716 = vsel %vm4694, %v4501, %v4715
        %v4717 = vsel %vm4682, %v4507, %v4504
        %v4718 = vsel %vm4684, %v4510, %v4717
        %v4719 = vsel %vm4686, %v4513, %v4718
        %v4720 = vsel %vm4688, %v4516, %v4719
        %v4721 = vsel %vm4690, %v4519, %v4720
        %v4722 = vsel %vm4692, %v4522, %v4721
        %v4723 = vsel %vm4694, %v4525, %v4722
        %v4724 = vsel %vm4682, %v4531, %v4528
        %v4725 = vsel %vm4684, %v4534, %v4724
        %v4726 = vsel %vm4686, %v4537, %v4725
        %v4727 = vsel %vm4688, %v4540, %v4726
        %v4728 = vsel %vm4690, %v4543, %v4727
        %v4729 = vsel %vm4692, %v4546, %v4728
        %v4730 = vsel %vm4694, %v4549, %v4729
        %v4731 = vsel %vm4682, %v4555, %v4552
        %v4732 = vsel %vm4684, %v4558, %v4731
        %v4733 = vsel %vm4686, %v4561, %v4732
        %v4734 = vsel %vm4688, %v4564, %v4733
        %v4735 = vsel %vm4690, %v4567, %v4734
        %v4736 = vsel %vm4692, %v4570, %v4735
        %v4737 = vsel %vm4694, %v4573, %v4736
        %v4738 = vsel %vm4682, %v4579, %v4576
        %v4739 = vsel %vm4684, %v4582, %v4738
        %v4740 = vsel %vm4686, %v4585, %v4739
        %v4741 = vsel %vm4688, %v4588, %v4740
        %v4742 = vsel %vm4690, %v4591, %v4741
        %v4743 = vsel %vm4692, %v4594, %v4742
        %v4744 = vsel %vm4694, %v4597, %v4743
        %s4753 = scalar_lea.vmem [#allocation3], 16
        %4754 = vst.msk [vmem:[%s4753 + $0x1] sm:$0xff] %vm1071, %v4695
        %4755 = vst.msk [vmem:[%s4753 + $0x11] sm:$0xff] %vm1071, %v4702
        %4756 = vst.msk [vmem:[%s4753 + $0x21] sm:$0xff] %vm1071, %v4709
        %4757 = vst.msk [vmem:[%s4753 + $0x31] sm:$0xff] %vm1071, %v4716
        %4758 = vst.msk [vmem:[%s4753 + $0x41] sm:$0xff] %vm1071, %v4723
        %4759 = vst.msk [vmem:[%s4753 + $0x51] sm:$0xff] %vm1071, %v4730
        %4760 = vst.msk [vmem:[%s4753 + $0x61] sm:$0xff] %vm1071, %v4737
        %4761 = vst.msk [vmem:[%s4753 + $0x71] sm:$0xff] %vm1071, %v4744
        %v4762 = vld [vmem:[#allocation3] sm:$0xff]
        %v4763 = vld [vmem:[#allocation3 + $0x10] sm:$0xff]
        %v4764 = vld [vmem:[#allocation3 + $0x20] sm:$0xff]
        %v4765 = vld [vmem:[#allocation3 + $0x30] sm:$0xff]
        %v4766 = vld [vmem:[#allocation3 + $0x40] sm:$0xff]
        %v4767 = vld [vmem:[#allocation3 + $0x50] sm:$0xff]
        %v4768 = vld [vmem:[#allocation3 + $0x60] sm:$0xff]
        %v4769 = vld [vmem:[#allocation3 + $0x70] sm:$0xff]
        %v4770 = vld [vmem:[#allocation3 + $0x1] sm:$0xff]
        %v4771 = vld [vmem:[#allocation3 + $0x11] sm:$0xff]
        %v4772 = vld [vmem:[#allocation3 + $0x21] sm:$0xff]
        %v4773 = vld [vmem:[#allocation3 + $0x31] sm:$0xff]
        %v4774 = vld [vmem:[#allocation3 + $0x41] sm:$0xff]
        %v4775 = vld [vmem:[#allocation3 + $0x51] sm:$0xff]
        %v4776 = vld [vmem:[#allocation3 + $0x61] sm:$0xff]
        %v4777 = vld [vmem:[#allocation3 + $0x71] sm:$0xff]
        %v4778 = vld [vmem:[#allocation3 + $0x2] sm:$0xff]
        %v4779 = vld [vmem:[#allocation3 + $0x12] sm:$0xff]
        %v4780 = vld [vmem:[#allocation3 + $0x22] sm:$0xff]
        %v4781 = vld [vmem:[#allocation3 + $0x32] sm:$0xff]
        %v4782 = vld [vmem:[#allocation3 + $0x42] sm:$0xff]
        %v4783 = vld [vmem:[#allocation3 + $0x52] sm:$0xff]
        %v4784 = vld [vmem:[#allocation3 + $0x62] sm:$0xff]
        %v4785 = vld [vmem:[#allocation3 + $0x72] sm:$0xff]
        %v4786 = vld [vmem:[%s4753] sm:$0xff]
        %v4787 = vld [vmem:[%s4753 + $0x10] sm:$0xff]
        %v4788 = vld [vmem:[%s4753 + $0x20] sm:$0xff]
        %v4789 = vld [vmem:[%s4753 + $0x30] sm:$0xff]
        %v4790 = vld [vmem:[%s4753 + $0x40] sm:$0xff]
        %v4791 = vld [vmem:[%s4753 + $0x50] sm:$0xff]
        %v4792 = vld [vmem:[%s4753 + $0x60] sm:$0xff]
        %v4793 = vld [vmem:[%s4753 + $0x70] sm:$0xff]
        %v4794 = vld [vmem:[%s4753 + $0x1] sm:$0xff]
        %v4795 = vld [vmem:[%s4753 + $0x11] sm:$0xff]
        %v4796 = vld [vmem:[%s4753 + $0x21] sm:$0xff]
        %v4797 = vld [vmem:[%s4753 + $0x31] sm:$0xff]
        %v4798 = vld [vmem:[%s4753 + $0x41] sm:$0xff]
        %v4799 = vld [vmem:[%s4753 + $0x51] sm:$0xff]
        %v4800 = vld [vmem:[%s4753 + $0x61] sm:$0xff]
        %v4801 = vld [vmem:[%s4753 + $0x71] sm:$0xff]
        %v4802 = vld [vmem:[%s4753 + $0x2] sm:$0xff]
        %v4803 = vld [vmem:[%s4753 + $0x12] sm:$0xff]
        %v4804 = vld [vmem:[%s4753 + $0x22] sm:$0xff]
        %v4805 = vld [vmem:[%s4753 + $0x32] sm:$0xff]
        %v4806 = vld [vmem:[%s4753 + $0x42] sm:$0xff]
        %v4807 = vld [vmem:[%s4753 + $0x52] sm:$0xff]
        %v4808 = vld [vmem:[%s4753 + $0x62] sm:$0xff]
        %v4809 = vld [vmem:[%s4753 + $0x72] sm:$0xff]
        %s4810 = scalar_lea.vmem [#allocation3], 32
        %v4811 = vld [vmem:[%s4810] sm:$0xff]
        %v4812 = vld [vmem:[%s4810 + $0x10] sm:$0xff]
        %v4813 = vld [vmem:[%s4810 + $0x20] sm:$0xff]
        %v4814 = vld [vmem:[%s4810 + $0x30] sm:$0xff]
        %v4815 = vld [vmem:[%s4810 + $0x40] sm:$0xff]
        %v4816 = vld [vmem:[%s4810 + $0x50] sm:$0xff]
        %v4817 = vld [vmem:[%s4810 + $0x60] sm:$0xff]
        %v4818 = vld [vmem:[%s4810 + $0x70] sm:$0xff]
        %v4819 = vld [vmem:[%s4810 + $0x1] sm:$0xff]
        %v4820 = vld [vmem:[%s4810 + $0x11] sm:$0xff]
        %v4821 = vld [vmem:[%s4810 + $0x21] sm:$0xff]
        %v4822 = vld [vmem:[%s4810 + $0x31] sm:$0xff]
        %v4823 = vld [vmem:[%s4810 + $0x41] sm:$0xff]
        %v4824 = vld [vmem:[%s4810 + $0x51] sm:$0xff]
        %v4825 = vld [vmem:[%s4810 + $0x61] sm:$0xff]
        %v4826 = vld [vmem:[%s4810 + $0x71] sm:$0xff]
        %v4827 = vld [vmem:[%s4810 + $0x2] sm:$0xff]
        %v4828 = vld [vmem:[%s4810 + $0x12] sm:$0xff]
        %v4829 = vld [vmem:[%s4810 + $0x22] sm:$0xff]
        %v4830 = vld [vmem:[%s4810 + $0x32] sm:$0xff]
        %v4831 = vld [vmem:[%s4810 + $0x42] sm:$0xff]
        %v4832 = vld [vmem:[%s4810 + $0x52] sm:$0xff]
        %v4833 = vld [vmem:[%s4810 + $0x62] sm:$0xff]
        %v4834 = vld [vmem:[%s4810 + $0x72] sm:$0xff]
        %4843 = vrot.lane.b32.xlu0 %v4770, 32
        %v4844 = vpop.permute.xlu0 %4843
        %4845 = vrot.lane.b32.xlu0 %v4771, 32
        %v4846 = vpop.permute.xlu0 %4845
        %4847 = vrot.lane.b32.xlu0 %v4772, 32
        %v4848 = vpop.permute.xlu0 %4847
        %4849 = vrot.lane.b32.xlu0 %v4773, 32
        %v4850 = vpop.permute.xlu0 %4849
        %4851 = vrot.lane.b32.xlu0 %v4774, 32
        %v4852 = vpop.permute.xlu0 %4851
        %4853 = vrot.lane.b32.xlu0 %v4775, 32
        %v4854 = vpop.permute.xlu0 %4853
        %4855 = vrot.lane.b32.xlu0 %v4776, 32
        %v4856 = vpop.permute.xlu0 %4855
        %4857 = vrot.lane.b32.xlu0 %v4777, 32
        %v4858 = vpop.permute.xlu0 %4857
        %4875 = vrot.lane.b32.xlu0 %v4778, 64
        %v4876 = vpop.permute.xlu0 %4875
        %4877 = vrot.lane.b32.xlu0 %v4779, 64
        %v4878 = vpop.permute.xlu0 %4877
        %4879 = vrot.lane.b32.xlu0 %v4780, 64
        %v4880 = vpop.permute.xlu0 %4879
        %4881 = vrot.lane.b32.xlu0 %v4781, 64
        %v4882 = vpop.permute.xlu0 %4881
        %4883 = vrot.lane.b32.xlu0 %v4782, 64
        %v4884 = vpop.permute.xlu0 %4883
        %4885 = vrot.lane.b32.xlu0 %v4783, 64
        %v4886 = vpop.permute.xlu0 %4885
        %4887 = vrot.lane.b32.xlu0 %v4784, 64
        %v4888 = vpop.permute.xlu0 %4887
        %4889 = vrot.lane.b32.xlu0 %v4785, 64
        %v4890 = vpop.permute.xlu0 %4889
        %4907 = vrot.lane.b32.xlu0 %v4786, 96
        %v4908 = vpop.permute.xlu0 %4907
        %4909 = vrot.lane.b32.xlu0 %v4787, 96
        %v4910 = vpop.permute.xlu0 %4909
        %4911 = vrot.lane.b32.xlu0 %v4788, 96
        %v4912 = vpop.permute.xlu0 %4911
        %4913 = vrot.lane.b32.xlu0 %v4789, 96
        %v4914 = vpop.permute.xlu0 %4913
        %4915 = vrot.lane.b32.xlu0 %v4790, 96
        %v4916 = vpop.permute.xlu0 %4915
        %4917 = vrot.lane.b32.xlu0 %v4791, 96
        %v4918 = vpop.permute.xlu0 %4917
        %4919 = vrot.lane.b32.xlu0 %v4792, 96
        %v4920 = vpop.permute.xlu0 %4919
        %4921 = vrot.lane.b32.xlu0 %v4793, 96
        %v4922 = vpop.permute.xlu0 %4921
        %4939 = vrot.lane.b32.xlu0 %v4802, 32
        %v4940 = vpop.permute.xlu0 %4939
        %4941 = vrot.lane.b32.xlu0 %v4803, 32
        %v4942 = vpop.permute.xlu0 %4941
        %4943 = vrot.lane.b32.xlu0 %v4804, 32
        %v4944 = vpop.permute.xlu0 %4943
        %4945 = vrot.lane.b32.xlu0 %v4805, 32
        %v4946 = vpop.permute.xlu0 %4945
        %4947 = vrot.lane.b32.xlu0 %v4806, 32
        %v4948 = vpop.permute.xlu0 %4947
        %4949 = vrot.lane.b32.xlu0 %v4807, 32
        %v4950 = vpop.permute.xlu0 %4949
        %4951 = vrot.lane.b32.xlu0 %v4808, 32
        %v4952 = vpop.permute.xlu0 %4951
        %4953 = vrot.lane.b32.xlu0 %v4809, 32
        %v4954 = vpop.permute.xlu0 %4953
        %4971 = vrot.lane.b32.xlu0 %v4811, 64
        %v4972 = vpop.permute.xlu0 %4971
        %4973 = vrot.lane.b32.xlu0 %v4812, 64
        %v4974 = vpop.permute.xlu0 %4973
        %4975 = vrot.lane.b32.xlu0 %v4813, 64
        %v4976 = vpop.permute.xlu0 %4975
        %4977 = vrot.lane.b32.xlu0 %v4814, 64
        %v4978 = vpop.permute.xlu0 %4977
        %4979 = vrot.lane.b32.xlu0 %v4815, 64
        %v4980 = vpop.permute.xlu0 %4979
        %4981 = vrot.lane.b32.xlu0 %v4816, 64
        %v4982 = vpop.permute.xlu0 %4981
        %4983 = vrot.lane.b32.xlu0 %v4817, 64
        %v4984 = vpop.permute.xlu0 %4983
        %4985 = vrot.lane.b32.xlu0 %v4818, 64
        %v4986 = vpop.permute.xlu0 %4985
        %5003 = vrot.lane.b32.xlu0 %v4819, 96
        %v5004 = vpop.permute.xlu0 %5003
        %5005 = vrot.lane.b32.xlu0 %v4820, 96
        %v5006 = vpop.permute.xlu0 %5005
        %5007 = vrot.lane.b32.xlu0 %v4821, 96
        %v5008 = vpop.permute.xlu0 %5007
        %5009 = vrot.lane.b32.xlu0 %v4822, 96
        %v5010 = vpop.permute.xlu0 %5009
        %5011 = vrot.lane.b32.xlu0 %v4823, 96
        %v5012 = vpop.permute.xlu0 %5011
        %5013 = vrot.lane.b32.xlu0 %v4824, 96
        %v5014 = vpop.permute.xlu0 %5013
        %5015 = vrot.lane.b32.xlu0 %v4825, 96
        %v5016 = vpop.permute.xlu0 %5015
        %5017 = vrot.lane.b32.xlu0 %v4826, 96
        %v5018 = vpop.permute.xlu0 %5017
        %v5027 = vsel %vm1071, %v4762, %v4844
        %v5028 = vsel %vm1071, %v4763, %v4846
        %v5029 = vsel %vm1071, %v4764, %v4848
        %v5030 = vsel %vm1071, %v4765, %v4850
        %v5031 = vsel %vm1071, %v4766, %v4852
        %v5032 = vsel %vm1071, %v4767, %v4854
        %v5033 = vsel %vm1071, %v4768, %v4856
        %v5034 = vsel %vm1071, %v4769, %v4858
        %v5035 = vsel %vm2249, %v5027, %v4876
        %v5036 = vsel %vm2249, %v5028, %v4878
        %v5037 = vsel %vm2249, %v5029, %v4880
        %v5038 = vsel %vm2249, %v5030, %v4882
        %v5039 = vsel %vm2249, %v5031, %v4884
        %v5040 = vsel %vm2249, %v5032, %v4886
        %v5041 = vsel %vm2249, %v5033, %v4888
        %v5042 = vsel %vm2249, %v5034, %v4890
        %v5043 = vsel %vm2282, %v5035, %v4908
        %v5044 = vsel %vm2282, %v5036, %v4910
        %v5045 = vsel %vm2282, %v5037, %v4912
        %v5046 = vsel %vm2282, %v5038, %v4914
        %v5047 = vsel %vm2282, %v5039, %v4916
        %v5048 = vsel %vm2282, %v5040, %v4918
        %v5049 = vsel %vm2282, %v5041, %v4920
        %v5050 = vsel %vm2282, %v5042, %v4922
        %v5051 = vsel %vm1071, %v4794, %v4940
        %v5052 = vsel %vm1071, %v4795, %v4942
        %v5053 = vsel %vm1071, %v4796, %v4944
        %v5054 = vsel %vm1071, %v4797, %v4946
        %v5055 = vsel %vm1071, %v4798, %v4948
        %v5056 = vsel %vm1071, %v4799, %v4950
        %v5057 = vsel %vm1071, %v4800, %v4952
        %v5058 = vsel %vm1071, %v4801, %v4954
        %v5059 = vsel %vm2249, %v5051, %v4972
        %v5060 = vsel %vm2249, %v5052, %v4974
        %v5061 = vsel %vm2249, %v5053, %v4976
        %v5062 = vsel %vm2249, %v5054, %v4978
        %v5063 = vsel %vm2249, %v5055, %v4980
        %v5064 = vsel %vm2249, %v5056, %v4982
        %v5065 = vsel %vm2249, %v5057, %v4984
        %v5066 = vsel %vm2249, %v5058, %v4986
        %v5067 = vsel %vm2282, %v5059, %v5004
        %v5068 = vsel %vm2282, %v5060, %v5006
        %v5069 = vsel %vm2282, %v5061, %v5008
        %v5070 = vsel %vm2282, %v5062, %v5010
        %v5071 = vsel %vm2282, %v5063, %v5012
        %v5072 = vsel %vm2282, %v5064, %v5014
        %v5073 = vsel %vm2282, %v5065, %v5016
        %v5074 = vsel %vm2282, %v5066, %v5018
        %v5075 = vpack.c.bf16 %v5044, %v5043
        %v5076 = vpack.c.bf16 %v5068, %v5067
        %v5077 = vpack.c.bf16 %v4828, %v4827
        %v5078 = vpack.c.bf16 %v5046, %v5045
        %v5079 = vpack.c.bf16 %v5070, %v5069
        %v5080 = vpack.c.bf16 %v4830, %v4829
        %v5081 = vpack.c.bf16 %v5048, %v5047
        %v5082 = vpack.c.bf16 %v5072, %v5071
        %v5083 = vpack.c.bf16 %v4832, %v4831
        %v5084 = vpack.c.bf16 %v5050, %v5049
        %v5085 = vpack.c.bf16 %v5074, %v5073
        %v5086 = vpack.c.bf16 %v4834, %v4833
        %v5087 = vld [vmem:[%s5] sm:$0xf]
        %v5088 = vld [vmem:[%s5 + $0x4] sm:$0xf]
        %v5089 = vld [vmem:[%s5 + $0x8] sm:$0xf]
        %v5090 = vld [vmem:[%s5 + $0xc] sm:$0xf]
        %v5091 = vld [vmem:[%s5 + $0x10] sm:$0xf]
        %v5092 = vld [vmem:[%s5 + $0x14] sm:$0xf]
        %v5093 = vld [vmem:[%s5 + $0x18] sm:$0xf]
        %v5094 = vld [vmem:[%s5 + $0x1c] sm:$0xf]
        %v5095 = vld [vmem:[%s5 + $0x20] sm:$0xf]
        %v5096 = vld [vmem:[%s5 + $0x24] sm:$0xf]
        %v5097 = vld [vmem:[%s5 + $0x28] sm:$0xf]
        %v5098 = vld [vmem:[%s5 + $0x2c] sm:$0xf]
        %v5099 = vld [vmem:[%s5 + $0x30] sm:$0xf]
        %v5100 = vld [vmem:[%s5 + $0x34] sm:$0xf]
        %v5101 = vld [vmem:[%s5 + $0x38] sm:$0xf]
        %v5102 = vld [vmem:[%s5 + $0x3c] sm:$0xf]
        %v5103 = vld [vmem:[%s5 + $0x40] sm:$0xf]
        %v5104 = vld [vmem:[%s5 + $0x44] sm:$0xf]
        %v5105 = vld [vmem:[%s5 + $0x48] sm:$0xf]
        %v5106 = vld [vmem:[%s5 + $0x4c] sm:$0xf]
        %v5107 = vld [vmem:[%s5 + $0x50] sm:$0xf]
        %v5108 = vld [vmem:[%s5 + $0x54] sm:$0xf]
        %v5109 = vld [vmem:[%s5 + $0x58] sm:$0xf]
        %v5110 = vld [vmem:[%s5 + $0x5c] sm:$0xf]
        %v5111 = vld [vmem:[%s5 + $0x60] sm:$0xf]
        %v5112 = vld [vmem:[%s5 + $0x64] sm:$0xf]
        %v5113 = vld [vmem:[%s5 + $0x68] sm:$0xf]
        %v5114 = vld [vmem:[%s5 + $0x6c] sm:$0xf]
        %v5115 = vld [vmem:[%s5 + $0x70] sm:$0xf]
        %v5116 = vld [vmem:[%s5 + $0x74] sm:$0xf]
        %v5117 = vld [vmem:[%s5 + $0x78] sm:$0xf]
        %v5118 = vld [vmem:[%s5 + $0x7c] sm:$0xf]
        %v5119 = vld [vmem:[%s5 + $0x80] sm:$0xf]
        %v5120 = vld [vmem:[%s5 + $0x84] sm:$0xf]
        %v5121 = vld [vmem:[%s5 + $0x88] sm:$0xf]
        %v5122 = vld [vmem:[%s5 + $0x8c] sm:$0xf]
        %v5123 = vld [vmem:[%s6] sm:$0x1]
        %v5125 = vperm.slane %v5123, 0
        %v5163 = vunpack.c.l.b16 %v5087
        %v5164 = vunpack.c.l.b16 %v5088
        %v5165 = vunpack.c.l.b16 %v5089
        %v5166 = vunpack.c.l.b16 %v5090
        %v5167 = vunpack.c.l.b16 %v5091
        %v5168 = vunpack.c.l.b16 %v5092
        %v5169 = vunpack.c.l.b16 %v5093
        %v5170 = vunpack.c.l.b16 %v5094
        %v5171 = vunpack.c.l.b16 %v5095
        %v5172 = vunpack.c.l.b16 %v5096
        %v5173 = vunpack.c.l.b16 %v5097
        %v5174 = vunpack.c.l.b16 %v5098
        %v5175 = vunpack.c.l.b16 %v5099
        %v5176 = vunpack.c.l.b16 %v5100
        %v5177 = vunpack.c.l.b16 %v5101
        %v5178 = vunpack.c.l.b16 %v5102
        %v5179 = vunpack.c.l.b16 %v5103
        %v5180 = vunpack.c.l.b16 %v5104
        %v5181 = vunpack.c.l.b16 %v5105
        %v5182 = vunpack.c.l.b16 %v5106
        %v5183 = vunpack.c.l.b16 %v5107
        %v5184 = vunpack.c.l.b16 %v5108
        %v5185 = vunpack.c.l.b16 %v5109
        %v5186 = vunpack.c.l.b16 %v5110
        %v5187 = vunpack.c.l.b16 %v5111
        %v5188 = vunpack.c.l.b16 %v5112
        %v5189 = vunpack.c.l.b16 %v5113
        %v5190 = vunpack.c.l.b16 %v5114
        %v5191 = vunpack.c.l.b16 %v5115
        %v5192 = vunpack.c.l.b16 %v5116
        %v5193 = vunpack.c.l.b16 %v5117
        %v5194 = vunpack.c.l.b16 %v5118
        %v5195 = vunpack.c.l.b16 %v5119
        %v5196 = vunpack.c.l.b16 %v5120
        %v5197 = vunpack.c.l.b16 %v5121
        %v5198 = vunpack.c.l.b16 %v5122
        %v5199 = vpack.c.b16 %v5164, %v5163
        %v5200 = vpack.c.b16 %v5166, %v5165
        %v5201 = vpack.c.b16 %v5168, %v5167
        %v5202 = vpack.c.b16 %v5170, %v5169
        %v5203 = vpack.c.b16 %v5172, %v5171
        %v5204 = vpack.c.b16 %v5174, %v5173
        %v5205 = vpack.c.b16 %v5176, %v5175
        %v5206 = vpack.c.b16 %v5178, %v5177
        %v5207 = vpack.c.b16 %v5180, %v5179
        %v5208 = vpack.c.b16 %v5182, %v5181
        %v5209 = vpack.c.b16 %v5184, %v5183
        %v5210 = vpack.c.b16 %v5186, %v5185
        %v5211 = vpack.c.b16 %v5188, %v5187
        %v5212 = vpack.c.b16 %v5190, %v5189
        %v5213 = vpack.c.b16 %v5192, %v5191
        %v5214 = vpack.c.b16 %v5194, %v5193
        %v5215 = vpack.c.b16 %v5196, %v5195
        %v5216 = vpack.c.b16 %v5198, %v5197
        %v5236 = vsel %vm1071, %v5077, 0
        %v5239 = vsel %vm1071, %v5080, 0
        %v5242 = vsel %vm1071, %v5083, 0
        %v5245 = vsel %vm1071, %v5086, 0
        %5247 = vmatpush.bf16.msra.mxu0 %v5206
        %5248 = vmatpush.bf16.msra.mxu0 %v5205
        %5249 = vmatpush.bf16.msra.mxu0 %v5204
        %5250 = vmatpush.bf16.msra.mxu0 %v5203
        %5251 = vmatpush.bf16.msra.mxu0 %v5202
        %5252 = vmatpush.bf16.msra.mxu0 %v5201
        %5253 = vmatpush.bf16.msra.mxu0 %v5200
        %5254 = vmatpush.bf16.msra.mxu0 %v5199
        %5255 = vmatmul.bf16.gmra.mxu0 %v5075
        %v5256 = vpop.f32.mrf.mxu0
        %v5257 = vadd.f32 %v5125, %v5256
        %v5258 = vpop.f32.mrf.mxu0
        %v5259 = vadd.f32 %v5125, %v5258
        %5260 = vmatmul.bf16.gmra.mxu0 %v5078
        %v5261 = vpop.f32.mrf.mxu0
        %v5262 = vadd.f32 %v5125, %v5261
        %v5263 = vpop.f32.mrf.mxu0
        %v5264 = vadd.f32 %v5125, %v5263
        %5265 = vmatmul.bf16.gmra.mxu0 %v5081
        %v5266 = vpop.f32.mrf.mxu0
        %v5267 = vadd.f32 %v5125, %v5266
        %v5268 = vpop.f32.mrf.mxu0
        %v5269 = vadd.f32 %v5125, %v5268
        %5270 = vmatmul.bf16.gmra.mxu0 %v5084
        %v5271 = vpop.f32.mrf.mxu0
        %v5272 = vadd.f32 %v5125, %v5271
        %v5273 = vpop.f32.mrf.mxu0
        %v5274 = vadd.f32 %v5125, %v5273
        %5275 = vdwg.mxu0
        %5276 = vmatpush.bf16.msra.mxu0 %v5214
        %5277 = vmatpush.bf16.msra.mxu0 %v5213
        %5278 = vmatpush.bf16.msra.mxu0 %v5212
        %5279 = vmatpush.bf16.msra.mxu0 %v5211
        %5280 = vmatpush.bf16.msra.mxu0 %v5210
        %5281 = vmatpush.bf16.msra.mxu0 %v5209
        %5282 = vmatpush.bf16.msra.mxu0 %v5208
        %5283 = vmatpush.bf16.msra.mxu0 %v5207
        %5284 = vmatmul.bf16.gmra.mxu0 %v5076
        %v5285 = vpop.f32.mrf.mxu0
        %v5286 = vadd.f32 %v5257, %v5285
        %v5287 = vpop.f32.mrf.mxu0
        %v5288 = vadd.f32 %v5259, %v5287
        %5289 = vmatmul.bf16.gmra.mxu0 %v5079
        %v5290 = vpop.f32.mrf.mxu0
        %v5291 = vadd.f32 %v5262, %v5290
        %v5292 = vpop.f32.mrf.mxu0
        %v5293 = vadd.f32 %v5264, %v5292
        %5294 = vmatmul.bf16.gmra.mxu0 %v5082
        %v5295 = vpop.f32.mrf.mxu0
        %v5296 = vadd.f32 %v5267, %v5295
        %v5297 = vpop.f32.mrf.mxu0
        %v5298 = vadd.f32 %v5269, %v5297
        %5299 = vmatmul.bf16.gmra.mxu0 %v5085
        %v5300 = vpop.f32.mrf.mxu0
        %v5301 = vadd.f32 %v5272, %v5300
        %v5302 = vpop.f32.mrf.mxu0
        %v5303 = vadd.f32 %v5274, %v5302
        %5304 = vdwg.mxu0
        %5305 = vmatpush.bf16.msra.mxu0 0
        %5306 = vmatpush.bf16.msra.mxu0 0
        %5307 = vmatpush.bf16.msra.mxu0 0
        %5308 = vmatpush.bf16.msra.mxu0 0
        %5309 = vmatpush.bf16.msra.mxu0 0
        %5310 = vmatpush.bf16.msra.mxu0 0
        %5311 = vmatpush.bf16.msra.mxu0 %v5216
        %5312 = vmatpush.bf16.msra.mxu0 %v5215
        %5313 = vmatmul.bf16.gmra.mxu0 %v5236
        %v5314 = vpop.f32.mrf.mxu0
        %v5315 = vadd.f32 %v5286, %v5314
        %v5316 = vpop.f32.mrf.mxu0
        %v5317 = vadd.f32 %v5288, %v5316
        %5318 = vmatmul.bf16.gmra.mxu0 %v5239
        %v5319 = vpop.f32.mrf.mxu0
        %v5320 = vadd.f32 %v5291, %v5319
        %v5321 = vpop.f32.mrf.mxu0
        %v5322 = vadd.f32 %v5293, %v5321
        %5323 = vmatmul.bf16.gmra.mxu0 %v5242
        %v5324 = vpop.f32.mrf.mxu0
        %v5325 = vadd.f32 %v5296, %v5324
        %v5326 = vpop.f32.mrf.mxu0
        %v5327 = vadd.f32 %v5298, %v5326
        %5328 = vmatmul.bf16.gmra.mxu0 %v5245
        %v5329 = vpop.f32.mrf.mxu0
        %v5330 = vadd.f32 %v5301, %v5329
        %v5331 = vpop.f32.mrf.mxu0
        %v5332 = vadd.f32 %v5303, %v5331
        %5333 = vdwg.mxu0
        %v5334 = vmax.f32 %v5315, 0.0
        %v5335 = vmax.f32 %v5317, 0.0
        %v5336 = vmax.f32 %v5320, 0.0
        %v5337 = vmax.f32 %v5322, 0.0
        %v5338 = vmax.f32 %v5325, 0.0
        %v5339 = vmax.f32 %v5327, 0.0
        %v5340 = vmax.f32 %v5330, 0.0
        %v5341 = vmax.f32 %v5332, 0.0
        %5342 = vst.msk [vmem:[#allocation4] sm:$0xff] %vm2249, 0.0
        %vm5343 = vcmask 517120
        %5344 = vst.msk [vmem:[#allocation4 + $0x8] sm:$0x3] %vm5343, 0.0
        %5345 = vst.msk [vmem:[#allocation4 + $0x10] sm:$0xff] %vm2249, 0.0
        %5346 = vst.msk [vmem:[#allocation4 + $0x18] sm:$0x3] %vm5343, 0.0
        %5347 = vst.msk [vmem:[#allocation4 + $0x20] sm:$0xff] %vm2249, 0.0
        %5348 = vst.msk [vmem:[#allocation4 + $0x28] sm:$0x3] %vm5343, 0.0
        %5349 = vst.msk [vmem:[#allocation4 + $0x30] sm:$0xff] %vm2249, 0.0
        %5350 = vst.msk [vmem:[#allocation4 + $0x38] sm:$0x3] %vm5343, 0.0
        %5351 = vst.msk [vmem:[#allocation4 + $0x40] sm:$0xff] %vm2249, 0.0
        %5352 = vst.msk [vmem:[#allocation4 + $0x48] sm:$0x3] %vm5343, 0.0
        %5353 = vst.msk [vmem:[#allocation4 + $0x50] sm:$0xff] %vm2249, 0.0
        %5354 = vst.msk [vmem:[#allocation4 + $0x58] sm:$0x3] %vm5343, 0.0
        %5355 = vst.msk [vmem:[#allocation4 + $0x60] sm:$0xff] %vm2249, 0.0
        %5356 = vst.msk [vmem:[#allocation4 + $0x68] sm:$0x3] %vm5343, 0.0
        %5357 = vst.msk [vmem:[#allocation4 + $0x70] sm:$0xff] %vm2249, 0.0
        %5358 = vst.msk [vmem:[#allocation4 + $0x78] sm:$0x3] %vm5343, 0.0
        %5359 = vst.msk [vmem:[#allocation4 + $0x80] sm:$0xff] %vm2249, 0.0
        %5360 = vst.msk [vmem:[#allocation4 + $0x88] sm:$0x3] %vm5343, 0.0
        %5361 = vst.msk [vmem:[#allocation4 + $0x90] sm:$0xff] %vm2249, 0.0
        %5362 = vst.msk [vmem:[#allocation4 + $0x98] sm:$0x3] %vm5343, 0.0
        %s5363 = scalar_lea.vmem [#allocation4], 16
        %5364 = vst.msk [vmem:[%s5363 + $0x1] sm:$0xff] %vm2249, %v5334
        %5365 = vst.msk [vmem:[%s5363 + $0x11] sm:$0xff] %vm2249, %v5335
        %5366 = vst.msk [vmem:[%s5363 + $0x21] sm:$0xff] %vm2249, %v5336
        %5367 = vst.msk [vmem:[%s5363 + $0x31] sm:$0xff] %vm2249, %v5337
        %5368 = vst.msk [vmem:[%s5363 + $0x41] sm:$0xff] %vm2249, %v5338
        %5369 = vst.msk [vmem:[%s5363 + $0x51] sm:$0xff] %vm2249, %v5339
        %5370 = vst.msk [vmem:[%s5363 + $0x61] sm:$0xff] %vm2249, %v5340
        %5371 = vst.msk [vmem:[%s5363 + $0x71] sm:$0xff] %vm2249, %v5341
        %v5372 = vld [vmem:[%s4753 + $0x1] sm:$0xff]
        %v5373 = vld [vmem:[%s4753 + $0x11] sm:$0xff]
        %v5374 = vld [vmem:[%s4753 + $0x21] sm:$0xff]
        %v5375 = vld [vmem:[%s4753 + $0x31] sm:$0xff]
        %v5376 = vld [vmem:[%s4753 + $0x41] sm:$0xff]
        %v5377 = vld [vmem:[%s4753 + $0x51] sm:$0xff]
        %v5378 = vld [vmem:[%s4753 + $0x61] sm:$0xff]
        %v5379 = vld [vmem:[%s4753 + $0x71] sm:$0xff]
        %v5380 = vpack.c.bf16 %v5372, %v5372
        %v5381 = vpack.c.bf16 %v5373, %v5373
        %v5382 = vpack.c.bf16 %v5374, %v5374
        %v5383 = vpack.c.bf16 %v5375, %v5375
        %v5384 = vpack.c.bf16 %v5376, %v5376
        %v5385 = vpack.c.bf16 %v5377, %v5377
        %v5386 = vpack.c.bf16 %v5378, %v5378
        %v5387 = vpack.c.bf16 %v5379, %v5379
        %v5388 = vld [vmem:[#allocation4] sm:$0xff]
        %v5389 = vld [vmem:[#allocation4 + $0x10] sm:$0xff]
        %v5390 = vld [vmem:[#allocation4 + $0x20] sm:$0xff]
        %v5391 = vld [vmem:[#allocation4 + $0x30] sm:$0xff]
        %v5392 = vld [vmem:[#allocation4 + $0x40] sm:$0xff]
        %v5393 = vld [vmem:[#allocation4 + $0x50] sm:$0xff]
        %v5394 = vld [vmem:[#allocation4 + $0x60] sm:$0xff]
        %v5395 = vld [vmem:[#allocation4 + $0x70] sm:$0xff]
        %v5396 = vld [vmem:[#allocation4 + $0x1] sm:$0xff]
        %v5397 = vld [vmem:[#allocation4 + $0x11] sm:$0xff]
        %v5398 = vld [vmem:[#allocation4 + $0x21] sm:$0xff]
        %v5399 = vld [vmem:[#allocation4 + $0x31] sm:$0xff]
        %v5400 = vld [vmem:[#allocation4 + $0x41] sm:$0xff]
        %v5401 = vld [vmem:[#allocation4 + $0x51] sm:$0xff]
        %v5402 = vld [vmem:[#allocation4 + $0x61] sm:$0xff]
        %v5403 = vld [vmem:[#allocation4 + $0x71] sm:$0xff]
        %v5404 = vld [vmem:[#allocation4 + $0x2] sm:$0xff]
        %v5405 = vld [vmem:[#allocation4 + $0x12] sm:$0xff]
        %v5406 = vld [vmem:[#allocation4 + $0x22] sm:$0xff]
        %v5407 = vld [vmem:[#allocation4 + $0x32] sm:$0xff]
        %v5408 = vld [vmem:[#allocation4 + $0x42] sm:$0xff]
        %v5409 = vld [vmem:[#allocation4 + $0x52] sm:$0xff]
        %v5410 = vld [vmem:[#allocation4 + $0x62] sm:$0xff]
        %v5411 = vld [vmem:[#allocation4 + $0x72] sm:$0xff]
        %v5412 = vld [vmem:[%s5363] sm:$0xff]
        %v5413 = vld [vmem:[%s5363 + $0x10] sm:$0xff]
        %v5414 = vld [vmem:[%s5363 + $0x20] sm:$0xff]
        %v5415 = vld [vmem:[%s5363 + $0x30] sm:$0xff]
        %v5416 = vld [vmem:[%s5363 + $0x40] sm:$0xff]
        %v5417 = vld [vmem:[%s5363 + $0x50] sm:$0xff]
        %v5418 = vld [vmem:[%s5363 + $0x60] sm:$0xff]
        %v5419 = vld [vmem:[%s5363 + $0x70] sm:$0xff]
        %v5420 = vld [vmem:[%s5363 + $0x1] sm:$0xff]
        %v5421 = vld [vmem:[%s5363 + $0x11] sm:$0xff]
        %v5422 = vld [vmem:[%s5363 + $0x21] sm:$0xff]
        %v5423 = vld [vmem:[%s5363 + $0x31] sm:$0xff]
        %v5424 = vld [vmem:[%s5363 + $0x41] sm:$0xff]
        %v5425 = vld [vmem:[%s5363 + $0x51] sm:$0xff]
        %v5426 = vld [vmem:[%s5363 + $0x61] sm:$0xff]
        %v5427 = vld [vmem:[%s5363 + $0x71] sm:$0xff]
        %v5428 = vld [vmem:[%s5363 + $0x2] sm:$0xff]
        %v5429 = vld [vmem:[%s5363 + $0x12] sm:$0xff]
        %v5430 = vld [vmem:[%s5363 + $0x22] sm:$0xff]
        %v5431 = vld [vmem:[%s5363 + $0x32] sm:$0xff]
        %v5432 = vld [vmem:[%s5363 + $0x42] sm:$0xff]
        %v5433 = vld [vmem:[%s5363 + $0x52] sm:$0xff]
        %v5434 = vld [vmem:[%s5363 + $0x62] sm:$0xff]
        %v5435 = vld [vmem:[%s5363 + $0x72] sm:$0xff]
        %s5436 = scalar_lea.vmem [#allocation4], 32
        %v5437 = vld [vmem:[%s5436] sm:$0xff]
        %v5438 = vld [vmem:[%s5436 + $0x10] sm:$0xff]
        %v5439 = vld [vmem:[%s5436 + $0x20] sm:$0xff]
        %v5440 = vld [vmem:[%s5436 + $0x30] sm:$0xff]
        %v5441 = vld [vmem:[%s5436 + $0x40] sm:$0xff]
        %v5442 = vld [vmem:[%s5436 + $0x50] sm:$0xff]
        %v5443 = vld [vmem:[%s5436 + $0x60] sm:$0xff]
        %v5444 = vld [vmem:[%s5436 + $0x70] sm:$0xff]
        %v5445 = vld [vmem:[%s5436 + $0x1] sm:$0xff]
        %v5446 = vld [vmem:[%s5436 + $0x11] sm:$0xff]
        %v5447 = vld [vmem:[%s5436 + $0x21] sm:$0xff]
        %v5448 = vld [vmem:[%s5436 + $0x31] sm:$0xff]
        %v5449 = vld [vmem:[%s5436 + $0x41] sm:$0xff]
        %v5450 = vld [vmem:[%s5436 + $0x51] sm:$0xff]
        %v5451 = vld [vmem:[%s5436 + $0x61] sm:$0xff]
        %v5452 = vld [vmem:[%s5436 + $0x71] sm:$0xff]
        %v5453 = vld [vmem:[%s5436 + $0x2] sm:$0xff]
        %v5454 = vld [vmem:[%s5436 + $0x12] sm:$0xff]
        %v5455 = vld [vmem:[%s5436 + $0x22] sm:$0xff]
        %v5456 = vld [vmem:[%s5436 + $0x32] sm:$0xff]
        %v5457 = vld [vmem:[%s5436 + $0x42] sm:$0xff]
        %v5458 = vld [vmem:[%s5436 + $0x52] sm:$0xff]
        %v5459 = vld [vmem:[%s5436 + $0x62] sm:$0xff]
        %v5460 = vld [vmem:[%s5436 + $0x72] sm:$0xff]
        %5469 = vrot.lane.b32.xlu0 %v5396, 64
        %v5470 = vpop.permute.xlu0 %5469
        %5471 = vrot.lane.b32.xlu0 %v5397, 64
        %v5472 = vpop.permute.xlu0 %5471
        %5473 = vrot.lane.b32.xlu0 %v5398, 64
        %v5474 = vpop.permute.xlu0 %5473
        %5475 = vrot.lane.b32.xlu0 %v5399, 64
        %v5476 = vpop.permute.xlu0 %5475
        %5477 = vrot.lane.b32.xlu0 %v5400, 64
        %v5478 = vpop.permute.xlu0 %5477
        %5479 = vrot.lane.b32.xlu0 %v5401, 64
        %v5480 = vpop.permute.xlu0 %5479
        %5481 = vrot.lane.b32.xlu0 %v5402, 64
        %v5482 = vpop.permute.xlu0 %5481
        %5483 = vrot.lane.b32.xlu0 %v5403, 64
        %v5484 = vpop.permute.xlu0 %5483
        %5501 = vrot.lane.b32.xlu0 %v5412, 64
        %v5502 = vpop.permute.xlu0 %5501
        %5503 = vrot.lane.b32.xlu0 %v5413, 64
        %v5504 = vpop.permute.xlu0 %5503
        %5505 = vrot.lane.b32.xlu0 %v5414, 64
        %v5506 = vpop.permute.xlu0 %5505
        %5507 = vrot.lane.b32.xlu0 %v5415, 64
        %v5508 = vpop.permute.xlu0 %5507
        %5509 = vrot.lane.b32.xlu0 %v5416, 64
        %v5510 = vpop.permute.xlu0 %5509
        %5511 = vrot.lane.b32.xlu0 %v5417, 64
        %v5512 = vpop.permute.xlu0 %5511
        %5513 = vrot.lane.b32.xlu0 %v5418, 64
        %v5514 = vpop.permute.xlu0 %5513
        %5515 = vrot.lane.b32.xlu0 %v5419, 64
        %v5516 = vpop.permute.xlu0 %5515
        %5533 = vrot.lane.b32.xlu0 %v5428, 64
        %v5534 = vpop.permute.xlu0 %5533
        %5535 = vrot.lane.b32.xlu0 %v5429, 64
        %v5536 = vpop.permute.xlu0 %5535
        %5537 = vrot.lane.b32.xlu0 %v5430, 64
        %v5538 = vpop.permute.xlu0 %5537
        %5539 = vrot.lane.b32.xlu0 %v5431, 64
        %v5540 = vpop.permute.xlu0 %5539
        %5541 = vrot.lane.b32.xlu0 %v5432, 64
        %v5542 = vpop.permute.xlu0 %5541
        %5543 = vrot.lane.b32.xlu0 %v5433, 64
        %v5544 = vpop.permute.xlu0 %5543
        %5545 = vrot.lane.b32.xlu0 %v5434, 64
        %v5546 = vpop.permute.xlu0 %5545
        %5547 = vrot.lane.b32.xlu0 %v5435, 64
        %v5548 = vpop.permute.xlu0 %5547
        %5565 = vrot.lane.b32.xlu0 %v5445, 64
        %v5566 = vpop.permute.xlu0 %5565
        %5567 = vrot.lane.b32.xlu0 %v5446, 64
        %v5568 = vpop.permute.xlu0 %5567
        %5569 = vrot.lane.b32.xlu0 %v5447, 64
        %v5570 = vpop.permute.xlu0 %5569
        %5571 = vrot.lane.b32.xlu0 %v5448, 64
        %v5572 = vpop.permute.xlu0 %5571
        %5573 = vrot.lane.b32.xlu0 %v5449, 64
        %v5574 = vpop.permute.xlu0 %5573
        %5575 = vrot.lane.b32.xlu0 %v5450, 64
        %v5576 = vpop.permute.xlu0 %5575
        %5577 = vrot.lane.b32.xlu0 %v5451, 64
        %v5578 = vpop.permute.xlu0 %5577
        %5579 = vrot.lane.b32.xlu0 %v5452, 64
        %v5580 = vpop.permute.xlu0 %5579
        %v5589 = vsel %vm2249, %v5388, %v5470
        %v5590 = vsel %vm2249, %v5389, %v5472
        %v5591 = vsel %vm2249, %v5390, %v5474
        %v5592 = vsel %vm2249, %v5391, %v5476
        %v5593 = vsel %vm2249, %v5392, %v5478
        %v5594 = vsel %vm2249, %v5393, %v5480
        %v5595 = vsel %vm2249, %v5394, %v5482
        %v5596 = vsel %vm2249, %v5395, %v5484
        %v5597 = vsel %vm2249, %v5404, %v5502
        %v5598 = vsel %vm2249, %v5405, %v5504
        %v5599 = vsel %vm2249, %v5406, %v5506
        %v5600 = vsel %vm2249, %v5407, %v5508
        %v5601 = vsel %vm2249, %v5408, %v5510
        %v5602 = vsel %vm2249, %v5409, %v5512
        %v5603 = vsel %vm2249, %v5410, %v5514
        %v5604 = vsel %vm2249, %v5411, %v5516
        %v5605 = vsel %vm2249, %v5420, %v5534
        %v5606 = vsel %vm2249, %v5421, %v5536
        %v5607 = vsel %vm2249, %v5422, %v5538
        %v5608 = vsel %vm2249, %v5423, %v5540
        %v5609 = vsel %vm2249, %v5424, %v5542
        %v5610 = vsel %vm2249, %v5425, %v5544
        %v5611 = vsel %vm2249, %v5426, %v5546
        %v5612 = vsel %vm2249, %v5427, %v5548
        %v5613 = vsel %vm2249, %v5437, %v5566
        %v5614 = vsel %vm2249, %v5438, %v5568
        %v5615 = vsel %vm2249, %v5439, %v5570
        %v5616 = vsel %vm2249, %v5440, %v5572
        %v5617 = vsel %vm2249, %v5441, %v5574
        %v5618 = vsel %vm2249, %v5442, %v5576
        %v5619 = vsel %vm2249, %v5443, %v5578
        %v5620 = vsel %vm2249, %v5444, %v5580
        %v5621 = vpack.c.bf16 %v5597, %v5589
        %v5622 = vpack.c.bf16 %v5613, %v5605
        %v5623 = vpack.c.bf16 %v5453, %v5453
        %v5624 = vpack.c.bf16 %v5598, %v5590
        %v5625 = vpack.c.bf16 %v5614, %v5606
        %v5626 = vpack.c.bf16 %v5454, %v5454
        %v5627 = vpack.c.bf16 %v5599, %v5591
        %v5628 = vpack.c.bf16 %v5615, %v5607
        %v5629 = vpack.c.bf16 %v5455, %v5455
        %v5630 = vpack.c.bf16 %v5600, %v5592
        %v5631 = vpack.c.bf16 %v5616, %v5608
        %v5632 = vpack.c.bf16 %v5456, %v5456
        %v5633 = vpack.c.bf16 %v5601, %v5593
        %v5634 = vpack.c.bf16 %v5617, %v5609
        %v5635 = vpack.c.bf16 %v5457, %v5457
        %v5636 = vpack.c.bf16 %v5602, %v5594
        %v5637 = vpack.c.bf16 %v5618, %v5610
        %v5638 = vpack.c.bf16 %v5458, %v5458
        %v5639 = vpack.c.bf16 %v5603, %v5595
        %v5640 = vpack.c.bf16 %v5619, %v5611
        %v5641 = vpack.c.bf16 %v5459, %v5459
        %v5642 = vpack.c.bf16 %v5604, %v5596
        %v5643 = vpack.c.bf16 %v5620, %v5612
        %v5644 = vpack.c.bf16 %v5460, %v5460
        %v5669 = vunpack.c.l.b16 %v5621
        %v5670 = vunpack.c.h.b16 %v5621
        %v5671 = vunpack.c.l.b16 %v5622
        %v5672 = vunpack.c.h.b16 %v5622
        %v5673 = vunpack.c.l.b16 %v5623
        %v5674 = vunpack.c.l.b16 %v5624
        %v5675 = vunpack.c.h.b16 %v5624
        %v5676 = vunpack.c.l.b16 %v5625
        %v5677 = vunpack.c.h.b16 %v5625
        %v5678 = vunpack.c.l.b16 %v5626
        %v5679 = vunpack.c.l.b16 %v5627
        %v5680 = vunpack.c.h.b16 %v5627
        %v5681 = vunpack.c.l.b16 %v5628
        %v5682 = vunpack.c.h.b16 %v5628
        %v5683 = vunpack.c.l.b16 %v5629
        %v5684 = vunpack.c.l.b16 %v5630
        %v5685 = vunpack.c.h.b16 %v5630
        %v5686 = vunpack.c.l.b16 %v5631
        %v5687 = vunpack.c.h.b16 %v5631
        %v5688 = vunpack.c.l.b16 %v5632
        %v5689 = vunpack.c.l.b16 %v5633
        %v5690 = vunpack.c.h.b16 %v5633
        %v5691 = vunpack.c.l.b16 %v5634
        %v5692 = vunpack.c.h.b16 %v5634
        %v5693 = vunpack.c.l.b16 %v5635
        %v5694 = vunpack.c.l.b16 %v5636
        %v5695 = vunpack.c.h.b16 %v5636
        %v5696 = vunpack.c.l.b16 %v5637
        %v5697 = vunpack.c.h.b16 %v5637
        %v5698 = vunpack.c.l.b16 %v5638
        %v5699 = vunpack.c.l.b16 %v5639
        %v5700 = vunpack.c.h.b16 %v5639
        %v5701 = vunpack.c.l.b16 %v5640
        %v5702 = vunpack.c.h.b16 %v5640
        %v5703 = vunpack.c.l.b16 %v5641
        %v5704 = vunpack.c.l.b16 %v5642
        %v5705 = vunpack.c.h.b16 %v5642
        %v5706 = vunpack.c.l.b16 %v5643
        %v5707 = vunpack.c.h.b16 %v5643
        %v5708 = vunpack.c.l.b16 %v5644
        %v5709 = vpack.c.b16 %v5674, %v5669
        %v5710 = vpack.c.b16 %v5675, %v5670
        %v5711 = vpack.c.b16 %v5676, %v5671
        %v5712 = vpack.c.b16 %v5677, %v5672
        %v5713 = vpack.c.b16 %v5678, %v5673
        %v5714 = vpack.c.b16 %v5684, %v5679
        %v5715 = vpack.c.b16 %v5685, %v5680
        %v5716 = vpack.c.b16 %v5686, %v5681
        %v5717 = vpack.c.b16 %v5687, %v5682
        %v5718 = vpack.c.b16 %v5688, %v5683
        %v5719 = vpack.c.b16 %v5694, %v5689
        %v5720 = vpack.c.b16 %v5695, %v5690
        %v5721 = vpack.c.b16 %v5696, %v5691
        %v5722 = vpack.c.b16 %v5697, %v5692
        %v5723 = vpack.c.b16 %v5698, %v5693
        %v5724 = vpack.c.b16 %v5704, %v5699
        %v5725 = vpack.c.b16 %v5705, %v5700
        %v5726 = vpack.c.b16 %v5706, %v5701
        %v5727 = vpack.c.b16 %v5707, %v5702
        %v5728 = vpack.c.b16 %v5708, %v5703
        %v5753 = vunpack.c.l.b16 %v5380
        %v5754 = vunpack.c.l.b16 %v5381
        %v5755 = vunpack.c.l.b16 %v5382
        %v5756 = vunpack.c.l.b16 %v5383
        %v5757 = vunpack.c.l.b16 %v5384
        %v5758 = vunpack.c.l.b16 %v5385
        %v5759 = vunpack.c.l.b16 %v5386
        %v5760 = vunpack.c.l.b16 %v5387
        %v5761 = vpack.c.b16 %v5754, %v5753
        %v5762 = vpack.c.b16 %v5756, %v5755
        %v5763 = vpack.c.b16 %v5758, %v5757
        %v5764 = vpack.c.b16 %v5760, %v5759
        %5765 = vrot.lane.b32.xlu0 %v5761, 64
        %v5766 = vpop.permute.xlu0 %5765
        %5767 = vrot.lane.b32.xlu0 %v5762, 64
        %v5768 = vpop.permute.xlu0 %5767
        %5769 = vrot.lane.b32.xlu0 %v5763, 64
        %v5770 = vpop.permute.xlu0 %5769
        %5771 = vrot.lane.b32.xlu0 %v5764, 64
        %v5772 = vpop.permute.xlu0 %5771
        %v5775 = vsel %vm2249, %v5713, %v5766
        %v5778 = vsel %vm2249, %v5718, %v5768
        %v5781 = vsel %vm2249, %v5723, %v5770
        %v5784 = vsel %vm2249, %v5728, %v5772
        %v5785 = vld [vmem:[%s7] sm:$0xf]
        %v5786 = vld [vmem:[%s7 + $0x4] sm:$0xf]
        %v5787 = vld [vmem:[%s7 + $0x8] sm:$0xf]
        %v5788 = vld [vmem:[%s7 + $0xc] sm:$0xf]
        %v5789 = vld [vmem:[%s7 + $0x10] sm:$0xf]
        %v5790 = vld [vmem:[%s7 + $0x14] sm:$0xf]
        %v5791 = vld [vmem:[%s7 + $0x18] sm:$0xf]
        %v5792 = vld [vmem:[%s7 + $0x1c] sm:$0xf]
        %v5793 = vld [vmem:[%s7 + $0x20] sm:$0xf]
        %v5794 = vld [vmem:[%s7 + $0x24] sm:$0xf]
        %v5795 = vld [vmem:[%s7 + $0x28] sm:$0xf]
        %v5796 = vld [vmem:[%s7 + $0x2c] sm:$0xf]
        %v5797 = vld [vmem:[%s7 + $0x30] sm:$0xf]
        %v5798 = vld [vmem:[%s7 + $0x34] sm:$0xf]
        %v5799 = vld [vmem:[%s7 + $0x38] sm:$0xf]
        %v5800 = vld [vmem:[%s7 + $0x3c] sm:$0xf]
        %v5801 = vld [vmem:[%s7 + $0x40] sm:$0xf]
        %v5802 = vld [vmem:[%s7 + $0x44] sm:$0xf]
        %v5803 = vld [vmem:[%s7 + $0x48] sm:$0xf]
        %v5804 = vld [vmem:[%s7 + $0x4c] sm:$0xf]
        %v5805 = vld [vmem:[%s7 + $0x50] sm:$0xf]
        %v5806 = vld [vmem:[%s7 + $0x54] sm:$0xf]
        %v5807 = vld [vmem:[%s7 + $0x58] sm:$0xf]
        %v5808 = vld [vmem:[%s7 + $0x5c] sm:$0xf]
        %v5809 = vld [vmem:[%s7 + $0x60] sm:$0xf]
        %v5810 = vld [vmem:[%s7 + $0x64] sm:$0xf]
        %v5811 = vld [vmem:[%s7 + $0x68] sm:$0xf]
        %v5812 = vld [vmem:[%s7 + $0x6c] sm:$0xf]
        %v5813 = vld [vmem:[%s7 + $0x70] sm:$0xf]
        %v5814 = vld [vmem:[%s7 + $0x74] sm:$0xf]
        %v5815 = vld [vmem:[%s7 + $0x78] sm:$0xf]
        %v5816 = vld [vmem:[%s7 + $0x7c] sm:$0xf]
        %v5817 = vld [vmem:[%s7 + $0x80] sm:$0xf]
        %v5818 = vld [vmem:[%s7 + $0x84] sm:$0xf]
        %v5819 = vld [vmem:[%s7 + $0x88] sm:$0xf]
        %v5820 = vld [vmem:[%s7 + $0x8c] sm:$0xf]
        %v5821 = vld [vmem:[%s7 + $0x90] sm:$0xf]
        %v5822 = vld [vmem:[%s7 + $0x94] sm:$0xf]
        %v5823 = vld [vmem:[%s7 + $0x98] sm:$0xf]
        %v5824 = vld [vmem:[%s7 + $0x9c] sm:$0xf]
        %v5825 = vld [vmem:[%s7 + $0xa0] sm:$0xf]
        %v5826 = vld [vmem:[%s7 + $0xa4] sm:$0xf]
        %v5827 = vld [vmem:[%s7 + $0xa8] sm:$0xf]
        %v5828 = vld [vmem:[%s7 + $0xac] sm:$0xf]
        %v5829 = vld [vmem:[%s7 + $0xb0] sm:$0xf]
        %v5830 = vld [vmem:[%s7 + $0xb4] sm:$0xf]
        %v5831 = vld [vmem:[%s7 + $0xb8] sm:$0xf]
        %v5832 = vld [vmem:[%s7 + $0xbc] sm:$0xf]
        %v5833 = vld [vmem:[%s7 + $0xc0] sm:$0xf]
        %v5834 = vld [vmem:[%s7 + $0xc4] sm:$0xf]
        %v5835 = vld [vmem:[%s7 + $0xc8] sm:$0xf]
        %v5836 = vld [vmem:[%s7 + $0xcc] sm:$0xf]
        %v5837 = vld [vmem:[%s7 + $0xd0] sm:$0xf]
        %v5838 = vld [vmem:[%s7 + $0xd4] sm:$0xf]
        %v5839 = vld [vmem:[%s7 + $0xd8] sm:$0xf]
        %v5840 = vld [vmem:[%s7 + $0xdc] sm:$0xf]
        %v5841 = vld [vmem:[%s7 + $0xe0] sm:$0xf]
        %v5842 = vld [vmem:[%s7 + $0xe4] sm:$0xf]
        %v5843 = vld [vmem:[%s7 + $0xe8] sm:$0xf]
        %v5844 = vld [vmem:[%s7 + $0xec] sm:$0xf]
        %v5845 = vld [vmem:[%s7 + $0xf0] sm:$0xf]
        %v5846 = vld [vmem:[%s7 + $0xf4] sm:$0xf]
        %v5847 = vld [vmem:[%s7 + $0xf8] sm:$0xf]
        %v5848 = vld [vmem:[%s7 + $0xfc] sm:$0xf]
        %v5849 = vld [vmem:[%s7 + $0x100] sm:$0xf]
        %v5850 = vld [vmem:[%s7 + $0x104] sm:$0xf]
        %v5851 = vld [vmem:[%s7 + $0x108] sm:$0xf]
        %v5852 = vld [vmem:[%s7 + $0x10c] sm:$0xf]
        %v5853 = vld [vmem:[%s7 + $0x110] sm:$0xf]
        %v5854 = vld [vmem:[%s7 + $0x114] sm:$0xf]
        %v5855 = vld [vmem:[%s7 + $0x118] sm:$0xf]
        %v5856 = vld [vmem:[%s7 + $0x11c] sm:$0xf]
        %v5857 = vld [vmem:[%s7 + $0x120] sm:$0xf]
        %v5858 = vld [vmem:[%s7 + $0x124] sm:$0xf]
        %v5859 = vld [vmem:[%s7 + $0x128] sm:$0xf]
        %v5860 = vld [vmem:[%s7 + $0x12c] sm:$0xf]
        %v5861 = vld [vmem:[%s8] sm:$0x1]
        %v5863 = vperm.slane %v5861, 0
        %v5941 = vunpack.c.l.b16 %v5785
        %v5942 = vunpack.c.l.b16 %v5786
        %v5943 = vunpack.c.l.b16 %v5787
        %v5944 = vunpack.c.l.b16 %v5788
        %v5945 = vunpack.c.l.b16 %v5789
        %v5946 = vunpack.c.l.b16 %v5790
        %v5947 = vunpack.c.l.b16 %v5791
        %v5948 = vunpack.c.l.b16 %v5792
        %v5949 = vunpack.c.l.b16 %v5793
        %v5950 = vunpack.c.l.b16 %v5794
        %v5951 = vunpack.c.l.b16 %v5795
        %v5952 = vunpack.c.l.b16 %v5796
        %v5953 = vunpack.c.l.b16 %v5797
        %v5954 = vunpack.c.l.b16 %v5798
        %v5955 = vunpack.c.l.b16 %v5799
        %v5956 = vunpack.c.l.b16 %v5800
        %v5957 = vunpack.c.l.b16 %v5801
        %v5958 = vunpack.c.l.b16 %v5802
        %v5959 = vunpack.c.l.b16 %v5803
        %v5960 = vunpack.c.l.b16 %v5804
        %v5961 = vunpack.c.l.b16 %v5805
        %v5962 = vunpack.c.l.b16 %v5806
        %v5963 = vunpack.c.l.b16 %v5807
        %v5964 = vunpack.c.l.b16 %v5808
        %v5965 = vunpack.c.l.b16 %v5809
        %v5966 = vunpack.c.l.b16 %v5810
        %v5967 = vunpack.c.l.b16 %v5811
        %v5968 = vunpack.c.l.b16 %v5812
        %v5969 = vunpack.c.l.b16 %v5813
        %v5970 = vunpack.c.l.b16 %v5814
        %v5971 = vunpack.c.l.b16 %v5815
        %v5972 = vunpack.c.l.b16 %v5816
        %v5973 = vunpack.c.l.b16 %v5817
        %v5974 = vunpack.c.l.b16 %v5818
        %v5975 = vunpack.c.l.b16 %v5819
        %v5976 = vunpack.c.l.b16 %v5820
        %v5977 = vunpack.c.l.b16 %v5821
        %v5978 = vunpack.c.l.b16 %v5822
        %v5979 = vunpack.c.l.b16 %v5823
        %v5980 = vunpack.c.l.b16 %v5824
        %v5981 = vunpack.c.l.b16 %v5825
        %v5982 = vunpack.c.l.b16 %v5826
        %v5983 = vunpack.c.l.b16 %v5827
        %v5984 = vunpack.c.l.b16 %v5828
        %v5985 = vunpack.c.l.b16 %v5829
        %v5986 = vunpack.c.l.b16 %v5830
        %v5987 = vunpack.c.l.b16 %v5831
        %v5988 = vunpack.c.l.b16 %v5832
        %v5989 = vunpack.c.l.b16 %v5833
        %v5990 = vunpack.c.l.b16 %v5834
        %v5991 = vunpack.c.l.b16 %v5835
        %v5992 = vunpack.c.l.b16 %v5836
        %v5993 = vunpack.c.l.b16 %v5837
        %v5994 = vunpack.c.l.b16 %v5838
        %v5995 = vunpack.c.l.b16 %v5839
        %v5996 = vunpack.c.l.b16 %v5840
        %v5997 = vunpack.c.l.b16 %v5841
        %v5998 = vunpack.c.l.b16 %v5842
        %v5999 = vunpack.c.l.b16 %v5843
        %v6000 = vunpack.c.l.b16 %v5844
        %v6001 = vunpack.c.l.b16 %v5845
        %v6002 = vunpack.c.l.b16 %v5846
        %v6003 = vunpack.c.l.b16 %v5847
        %v6004 = vunpack.c.l.b16 %v5848
        %v6005 = vunpack.c.l.b16 %v5849
        %v6006 = vunpack.c.l.b16 %v5850
        %v6007 = vunpack.c.l.b16 %v5851
        %v6008 = vunpack.c.l.b16 %v5852
        %v6009 = vunpack.c.l.b16 %v5853
        %v6010 = vunpack.c.l.b16 %v5854
        %v6011 = vunpack.c.l.b16 %v5855
        %v6012 = vunpack.c.l.b16 %v5856
        %v6013 = vunpack.c.l.b16 %v5857
        %v6014 = vunpack.c.l.b16 %v5858
        %v6015 = vunpack.c.l.b16 %v5859
        %v6016 = vunpack.c.l.b16 %v5860
        %v6017 = vpack.c.b16 %v5942, %v5941
        %v6018 = vpack.c.b16 %v5944, %v5943
        %v6019 = vpack.c.b16 %v5946, %v5945
        %v6020 = vpack.c.b16 %v5948, %v5947
        %v6021 = vpack.c.b16 %v5950, %v5949
        %v6022 = vpack.c.b16 %v5952, %v5951
        %v6023 = vpack.c.b16 %v5954, %v5953
        %v6024 = vpack.c.b16 %v5956, %v5955
        %v6025 = vpack.c.b16 %v5958, %v5957
        %v6026 = vpack.c.b16 %v5960, %v5959
        %v6027 = vpack.c.b16 %v5962, %v5961
        %v6028 = vpack.c.b16 %v5964, %v5963
        %v6029 = vpack.c.b16 %v5966, %v5965
        %v6030 = vpack.c.b16 %v5968, %v5967
        %v6031 = vpack.c.b16 %v5970, %v5969
        %v6032 = vpack.c.b16 %v5972, %v5971
        %v6033 = vpack.c.b16 %v5974, %v5973
        %v6034 = vpack.c.b16 %v5976, %v5975
        %v6035 = vpack.c.b16 %v5978, %v5977
        %v6036 = vpack.c.b16 %v5980, %v5979
        %v6037 = vpack.c.b16 %v5982, %v5981
        %v6038 = vpack.c.b16 %v5984, %v5983
        %v6039 = vpack.c.b16 %v5986, %v5985
        %v6040 = vpack.c.b16 %v5988, %v5987
        %v6041 = vpack.c.b16 %v5990, %v5989
        %v6042 = vpack.c.b16 %v5992, %v5991
        %v6043 = vpack.c.b16 %v5994, %v5993
        %v6044 = vpack.c.b16 %v5996, %v5995
        %v6045 = vpack.c.b16 %v5998, %v5997
        %v6046 = vpack.c.b16 %v6000, %v5999
        %v6047 = vpack.c.b16 %v6002, %v6001
        %v6048 = vpack.c.b16 %v6004, %v6003
        %v6049 = vpack.c.b16 %v6006, %v6005
        %v6050 = vpack.c.b16 %v6008, %v6007
        %v6051 = vpack.c.b16 %v6010, %v6009
        %v6052 = vpack.c.b16 %v6012, %v6011
        %v6053 = vpack.c.b16 %v6014, %v6013
        %v6054 = vpack.c.b16 %v6016, %v6015
        %v6093 = vsel %vm2282, %v5775, 0
        %v6095 = vsel %vm2282, %v5778, 0
        %v6097 = vsel %vm2282, %v5781, 0
        %v6099 = vsel %vm2282, %v5784, 0
        %6101 = vmatpush.bf16.msra.mxu0 %v6024
        %6102 = vmatpush.bf16.msra.mxu0 %v6023
        %6103 = vmatpush.bf16.msra.mxu0 %v6022
        %6104 = vmatpush.bf16.msra.mxu0 %v6021
        %6105 = vmatpush.bf16.msra.mxu0 %v6020
        %6106 = vmatpush.bf16.msra.mxu0 %v6019
        %6107 = vmatpush.bf16.msra.mxu0 %v6018
        %6108 = vmatpush.bf16.msra.mxu0 %v6017
        %6109 = vmatmul.bf16.gmra.mxu0 %v5709
        %v6110 = vpop.f32.mrf.mxu0
        %v6111 = vadd.f32 %v5863, %v6110
        %v6112 = vpop.f32.mrf.mxu0
        %v6113 = vadd.f32 %v5863, %v6112
        %6114 = vmatmul.bf16.gmra.mxu0 %v5714
        %v6115 = vpop.f32.mrf.mxu0
        %v6116 = vadd.f32 %v5863, %v6115
        %v6117 = vpop.f32.mrf.mxu0
        %v6118 = vadd.f32 %v5863, %v6117
        %6119 = vmatmul.bf16.gmra.mxu0 %v5719
        %v6120 = vpop.f32.mrf.mxu0
        %v6121 = vadd.f32 %v5863, %v6120
        %v6122 = vpop.f32.mrf.mxu0
        %v6123 = vadd.f32 %v5863, %v6122
        %6124 = vmatmul.bf16.gmra.mxu0 %v5724
        %v6125 = vpop.f32.mrf.mxu0
        %v6126 = vadd.f32 %v5863, %v6125
        %v6127 = vpop.f32.mrf.mxu0
        %v6128 = vadd.f32 %v5863, %v6127
        %6129 = vdwg.mxu0
        %6130 = vmatpush.bf16.msra.mxu0 %v6032
        %6131 = vmatpush.bf16.msra.mxu0 %v6031
        %6132 = vmatpush.bf16.msra.mxu0 %v6030
        %6133 = vmatpush.bf16.msra.mxu0 %v6029
        %6134 = vmatpush.bf16.msra.mxu0 %v6028
        %6135 = vmatpush.bf16.msra.mxu0 %v6027
        %6136 = vmatpush.bf16.msra.mxu0 %v6026
        %6137 = vmatpush.bf16.msra.mxu0 %v6025
        %6138 = vmatmul.bf16.gmra.mxu0 %v5710
        %v6139 = vpop.f32.mrf.mxu0
        %v6140 = vadd.f32 %v6111, %v6139
        %v6141 = vpop.f32.mrf.mxu0
        %v6142 = vadd.f32 %v6113, %v6141
        %6143 = vmatmul.bf16.gmra.mxu0 %v5715
        %v6144 = vpop.f32.mrf.mxu0
        %v6145 = vadd.f32 %v6116, %v6144
        %v6146 = vpop.f32.mrf.mxu0
        %v6147 = vadd.f32 %v6118, %v6146
        %6148 = vmatmul.bf16.gmra.mxu0 %v5720
        %v6149 = vpop.f32.mrf.mxu0
        %v6150 = vadd.f32 %v6121, %v6149
        %v6151 = vpop.f32.mrf.mxu0
        %v6152 = vadd.f32 %v6123, %v6151
        %6153 = vmatmul.bf16.gmra.mxu0 %v5725
        %v6154 = vpop.f32.mrf.mxu0
        %v6155 = vadd.f32 %v6126, %v6154
        %v6156 = vpop.f32.mrf.mxu0
        %v6157 = vadd.f32 %v6128, %v6156
        %6158 = vdwg.mxu0
        %6159 = vmatpush.bf16.msra.mxu0 %v6040
        %6160 = vmatpush.bf16.msra.mxu0 %v6039
        %6161 = vmatpush.bf16.msra.mxu0 %v6038
        %6162 = vmatpush.bf16.msra.mxu0 %v6037
        %6163 = vmatpush.bf16.msra.mxu0 %v6036
        %6164 = vmatpush.bf16.msra.mxu0 %v6035
        %6165 = vmatpush.bf16.msra.mxu0 %v6034
        %6166 = vmatpush.bf16.msra.mxu0 %v6033
        %6167 = vmatmul.bf16.gmra.mxu0 %v5711
        %v6168 = vpop.f32.mrf.mxu0
        %v6169 = vadd.f32 %v6140, %v6168
        %v6170 = vpop.f32.mrf.mxu0
        %v6171 = vadd.f32 %v6142, %v6170
        %6172 = vmatmul.bf16.gmra.mxu0 %v5716
        %v6173 = vpop.f32.mrf.mxu0
        %v6174 = vadd.f32 %v6145, %v6173
        %v6175 = vpop.f32.mrf.mxu0
        %v6176 = vadd.f32 %v6147, %v6175
        %6177 = vmatmul.bf16.gmra.mxu0 %v5721
        %v6178 = vpop.f32.mrf.mxu0
        %v6179 = vadd.f32 %v6150, %v6178
        %v6180 = vpop.f32.mrf.mxu0
        %v6181 = vadd.f32 %v6152, %v6180
        %6182 = vmatmul.bf16.gmra.mxu0 %v5726
        %v6183 = vpop.f32.mrf.mxu0
        %v6184 = vadd.f32 %v6155, %v6183
        %v6185 = vpop.f32.mrf.mxu0
        %v6186 = vadd.f32 %v6157, %v6185
        %6187 = vdwg.mxu0
        %6188 = vmatpush.bf16.msra.mxu0 %v6048
        %6189 = vmatpush.bf16.msra.mxu0 %v6047
        %6190 = vmatpush.bf16.msra.mxu0 %v6046
        %6191 = vmatpush.bf16.msra.mxu0 %v6045
        %6192 = vmatpush.bf16.msra.mxu0 %v6044
        %6193 = vmatpush.bf16.msra.mxu0 %v6043
        %6194 = vmatpush.bf16.msra.mxu0 %v6042
        %6195 = vmatpush.bf16.msra.mxu0 %v6041
        %6196 = vmatmul.bf16.gmra.mxu0 %v5712
        %v6197 = vpop.f32.mrf.mxu0
        %v6198 = vadd.f32 %v6169, %v6197
        %v6199 = vpop.f32.mrf.mxu0
        %v6200 = vadd.f32 %v6171, %v6199
        %6201 = vmatmul.bf16.gmra.mxu0 %v5717
        %v6202 = vpop.f32.mrf.mxu0
        %v6203 = vadd.f32 %v6174, %v6202
        %v6204 = vpop.f32.mrf.mxu0
        %v6205 = vadd.f32 %v6176, %v6204
        %6206 = vmatmul.bf16.gmra.mxu0 %v5722
        %v6207 = vpop.f32.mrf.mxu0
        %v6208 = vadd.f32 %v6179, %v6207
        %v6209 = vpop.f32.mrf.mxu0
        %v6210 = vadd.f32 %v6181, %v6209
        %6211 = vmatmul.bf16.gmra.mxu0 %v5727
        %v6212 = vpop.f32.mrf.mxu0
        %v6213 = vadd.f32 %v6184, %v6212
        %v6214 = vpop.f32.mrf.mxu0
        %v6215 = vadd.f32 %v6186, %v6214
        %6216 = vdwg.mxu0
        %6217 = vmatpush.bf16.msra.mxu0 0
        %6218 = vmatpush.bf16.msra.mxu0 0
        %6219 = vmatpush.bf16.msra.mxu0 %v6054
        %6220 = vmatpush.bf16.msra.mxu0 %v6053
        %6221 = vmatpush.bf16.msra.mxu0 %v6052
        %6222 = vmatpush.bf16.msra.mxu0 %v6051
        %6223 = vmatpush.bf16.msra.mxu0 %v6050
        %6224 = vmatpush.bf16.msra.mxu0 %v6049
        %6225 = vmatmul.bf16.gmra.mxu0 %v6093
        %v6226 = vpop.f32.mrf.mxu0
        %v6227 = vadd.f32 %v6198, %v6226
        %v6228 = vpop.f32.mrf.mxu0
        %v6229 = vadd.f32 %v6200, %v6228
        %6230 = vmatmul.bf16.gmra.mxu0 %v6095
        %v6231 = vpop.f32.mrf.mxu0
        %v6232 = vadd.f32 %v6203, %v6231
        %v6233 = vpop.f32.mrf.mxu0
        %v6234 = vadd.f32 %v6205, %v6233
        %6235 = vmatmul.bf16.gmra.mxu0 %v6097
        %v6236 = vpop.f32.mrf.mxu0
        %v6237 = vadd.f32 %v6208, %v6236
        %v6238 = vpop.f32.mrf.mxu0
        %v6239 = vadd.f32 %v6210, %v6238
        %6240 = vmatmul.bf16.gmra.mxu0 %v6099
        %v6241 = vpop.f32.mrf.mxu0
        %v6242 = vadd.f32 %v6213, %v6241
        %v6243 = vpop.f32.mrf.mxu0
        %v6244 = vadd.f32 %v6215, %v6243
        %6245 = vdwg.mxu0
        %v6246 = vmax.f32 %v6227, 0.0
        %v6247 = vmax.f32 %v6229, 0.0
        %v6248 = vmax.f32 %v6232, 0.0
        %v6249 = vmax.f32 %v6234, 0.0
        %v6250 = vmax.f32 %v6237, 0.0
        %v6251 = vmax.f32 %v6239, 0.0
        %v6252 = vmax.f32 %v6242, 0.0
        %v6253 = vmax.f32 %v6244, 0.0
        %v6262 = vrot.slane %v6246, 2
        %v6263 = vrot.slane %v6246, 4
        %v6264 = vrot.slane %v6246, 6
        %v6265 = vrot.slane %v6247, 2
        %v6266 = vrot.slane %v6247, 4
        %v6267 = vrot.slane %v6247, 6
        %v6268 = vrot.slane %v6248, 2
        %v6269 = vrot.slane %v6248, 4
        %v6270 = vrot.slane %v6248, 6
        %v6271 = vrot.slane %v6249, 2
        %v6272 = vrot.slane %v6249, 4
        %v6273 = vrot.slane %v6249, 6
        %v6274 = vrot.slane %v6250, 2
        %v6275 = vrot.slane %v6250, 4
        %v6276 = vrot.slane %v6250, 6
        %v6277 = vrot.slane %v6251, 2
        %v6278 = vrot.slane %v6251, 4
        %v6279 = vrot.slane %v6251, 6
        %v6280 = vrot.slane %v6252, 2
        %v6281 = vrot.slane %v6252, 4
        %v6282 = vrot.slane %v6252, 6
        %v6283 = vrot.slane %v6253, 2
        %v6284 = vrot.slane %v6253, 4
        %v6285 = vrot.slane %v6253, 6
        %v6310 = vsel %vm5343, %v6246, -inf
        %v6311 = vrot.slane %v6310, 4
        %v6312 = vmax.f32 %v6310, %v6311
        %v6313 = vrot.slane %v6312, 2
        %v6314 = vmax.f32 %v6312, %v6313
        %v6315 = vrot.slane %v6314, 1
        %v6316 = vmax.f32 %v6314, %v6315
        %v6317 = vsel %vm5343, %v6262, -inf
        %v6318 = vrot.slane %v6317, 4
        %v6319 = vmax.f32 %v6317, %v6318
        %v6320 = vrot.slane %v6319, 2
        %v6321 = vmax.f32 %v6319, %v6320
        %v6322 = vrot.slane %v6321, 1
        %v6323 = vmax.f32 %v6321, %v6322
        %v6324 = vsel %vm5343, %v6263, -inf
        %v6325 = vrot.slane %v6324, 4
        %v6326 = vmax.f32 %v6324, %v6325
        %v6327 = vrot.slane %v6326, 2
        %v6328 = vmax.f32 %v6326, %v6327
        %v6329 = vrot.slane %v6328, 1
        %v6330 = vmax.f32 %v6328, %v6329
        %v6331 = vsel %vm5343, %v6264, -inf
        %v6332 = vrot.slane %v6331, 4
        %v6333 = vmax.f32 %v6331, %v6332
        %v6334 = vrot.slane %v6333, 2
        %v6335 = vmax.f32 %v6333, %v6334
        %v6336 = vrot.slane %v6335, 1
        %v6337 = vmax.f32 %v6335, %v6336
        %v6338 = vsel %vm5343, %v6247, -inf
        %v6339 = vrot.slane %v6338, 4
        %v6340 = vmax.f32 %v6338, %v6339
        %v6341 = vrot.slane %v6340, 2
        %v6342 = vmax.f32 %v6340, %v6341
        %v6343 = vrot.slane %v6342, 1
        %v6344 = vmax.f32 %v6342, %v6343
        %v6345 = vsel %vm5343, %v6265, -inf
        %v6346 = vrot.slane %v6345, 4
        %v6347 = vmax.f32 %v6345, %v6346
        %v6348 = vrot.slane %v6347, 2
        %v6349 = vmax.f32 %v6347, %v6348
        %v6350 = vrot.slane %v6349, 1
        %v6351 = vmax.f32 %v6349, %v6350
        %v6352 = vsel %vm5343, %v6266, -inf
        %v6353 = vrot.slane %v6352, 4
        %v6354 = vmax.f32 %v6352, %v6353
        %v6355 = vrot.slane %v6354, 2
        %v6356 = vmax.f32 %v6354, %v6355
        %v6357 = vrot.slane %v6356, 1
        %v6358 = vmax.f32 %v6356, %v6357
        %v6359 = vsel %vm5343, %v6267, -inf
        %v6360 = vrot.slane %v6359, 4
        %v6361 = vmax.f32 %v6359, %v6360
        %v6362 = vrot.slane %v6361, 2
        %v6363 = vmax.f32 %v6361, %v6362
        %v6364 = vrot.slane %v6363, 1
        %v6365 = vmax.f32 %v6363, %v6364
        %v6366 = vsel %vm5343, %v6248, -inf
        %v6367 = vrot.slane %v6366, 4
        %v6368 = vmax.f32 %v6366, %v6367
        %v6369 = vrot.slane %v6368, 2
        %v6370 = vmax.f32 %v6368, %v6369
        %v6371 = vrot.slane %v6370, 1
        %v6372 = vmax.f32 %v6370, %v6371
        %v6373 = vsel %vm5343, %v6268, -inf
        %v6374 = vrot.slane %v6373, 4
        %v6375 = vmax.f32 %v6373, %v6374
        %v6376 = vrot.slane %v6375, 2
        %v6377 = vmax.f32 %v6375, %v6376
        %v6378 = vrot.slane %v6377, 1
        %v6379 = vmax.f32 %v6377, %v6378
        %v6380 = vsel %vm5343, %v6269, -inf
        %v6381 = vrot.slane %v6380, 4
        %v6382 = vmax.f32 %v6380, %v6381
        %v6383 = vrot.slane %v6382, 2
        %v6384 = vmax.f32 %v6382, %v6383
        %v6385 = vrot.slane %v6384, 1
        %v6386 = vmax.f32 %v6384, %v6385
        %v6387 = vsel %vm5343, %v6270, -inf
        %v6388 = vrot.slane %v6387, 4
        %v6389 = vmax.f32 %v6387, %v6388
        %v6390 = vrot.slane %v6389, 2
        %v6391 = vmax.f32 %v6389, %v6390
        %v6392 = vrot.slane %v6391, 1
        %v6393 = vmax.f32 %v6391, %v6392
        %v6394 = vsel %vm5343, %v6249, -inf
        %v6395 = vrot.slane %v6394, 4
        %v6396 = vmax.f32 %v6394, %v6395
        %v6397 = vrot.slane %v6396, 2
        %v6398 = vmax.f32 %v6396, %v6397
        %v6399 = vrot.slane %v6398, 1
        %v6400 = vmax.f32 %v6398, %v6399
        %v6401 = vsel %vm5343, %v6271, -inf
        %v6402 = vrot.slane %v6401, 4
        %v6403 = vmax.f32 %v6401, %v6402
        %v6404 = vrot.slane %v6403, 2
        %v6405 = vmax.f32 %v6403, %v6404
        %v6406 = vrot.slane %v6405, 1
        %v6407 = vmax.f32 %v6405, %v6406
        %v6408 = vsel %vm5343, %v6272, -inf
        %v6409 = vrot.slane %v6408, 4
        %v6410 = vmax.f32 %v6408, %v6409
        %v6411 = vrot.slane %v6410, 2
        %v6412 = vmax.f32 %v6410, %v6411
        %v6413 = vrot.slane %v6412, 1
        %v6414 = vmax.f32 %v6412, %v6413
        %v6415 = vsel %vm5343, %v6273, -inf
        %v6416 = vrot.slane %v6415, 4
        %v6417 = vmax.f32 %v6415, %v6416
        %v6418 = vrot.slane %v6417, 2
        %v6419 = vmax.f32 %v6417, %v6418
        %v6420 = vrot.slane %v6419, 1
        %v6421 = vmax.f32 %v6419, %v6420
        %v6422 = vsel %vm5343, %v6250, -inf
        %v6423 = vrot.slane %v6422, 4
        %v6424 = vmax.f32 %v6422, %v6423
        %v6425 = vrot.slane %v6424, 2
        %v6426 = vmax.f32 %v6424, %v6425
        %v6427 = vrot.slane %v6426, 1
        %v6428 = vmax.f32 %v6426, %v6427
        %v6429 = vsel %vm5343, %v6274, -inf
        %v6430 = vrot.slane %v6429, 4
        %v6431 = vmax.f32 %v6429, %v6430
        %v6432 = vrot.slane %v6431, 2
        %v6433 = vmax.f32 %v6431, %v6432
        %v6434 = vrot.slane %v6433, 1
        %v6435 = vmax.f32 %v6433, %v6434
        %v6436 = vsel %vm5343, %v6275, -inf
        %v6437 = vrot.slane %v6436, 4
        %v6438 = vmax.f32 %v6436, %v6437
        %v6439 = vrot.slane %v6438, 2
        %v6440 = vmax.f32 %v6438, %v6439
        %v6441 = vrot.slane %v6440, 1
        %v6442 = vmax.f32 %v6440, %v6441
        %v6443 = vsel %vm5343, %v6276, -inf
        %v6444 = vrot.slane %v6443, 4
        %v6445 = vmax.f32 %v6443, %v6444
        %v6446 = vrot.slane %v6445, 2
        %v6447 = vmax.f32 %v6445, %v6446
        %v6448 = vrot.slane %v6447, 1
        %v6449 = vmax.f32 %v6447, %v6448
        %v6450 = vsel %vm5343, %v6251, -inf
        %v6451 = vrot.slane %v6450, 4
        %v6452 = vmax.f32 %v6450, %v6451
        %v6453 = vrot.slane %v6452, 2
        %v6454 = vmax.f32 %v6452, %v6453
        %v6455 = vrot.slane %v6454, 1
        %v6456 = vmax.f32 %v6454, %v6455
        %v6457 = vsel %vm5343, %v6277, -inf
        %v6458 = vrot.slane %v6457, 4
        %v6459 = vmax.f32 %v6457, %v6458
        %v6460 = vrot.slane %v6459, 2
        %v6461 = vmax.f32 %v6459, %v6460
        %v6462 = vrot.slane %v6461, 1
        %v6463 = vmax.f32 %v6461, %v6462
        %v6464 = vsel %vm5343, %v6278, -inf
        %v6465 = vrot.slane %v6464, 4
        %v6466 = vmax.f32 %v6464, %v6465
        %v6467 = vrot.slane %v6466, 2
        %v6468 = vmax.f32 %v6466, %v6467
        %v6469 = vrot.slane %v6468, 1
        %v6470 = vmax.f32 %v6468, %v6469
        %v6471 = vsel %vm5343, %v6279, -inf
        %v6472 = vrot.slane %v6471, 4
        %v6473 = vmax.f32 %v6471, %v6472
        %v6474 = vrot.slane %v6473, 2
        %v6475 = vmax.f32 %v6473, %v6474
        %v6476 = vrot.slane %v6475, 1
        %v6477 = vmax.f32 %v6475, %v6476
        %v6478 = vsel %vm5343, %v6252, -inf
        %v6479 = vrot.slane %v6478, 4
        %v6480 = vmax.f32 %v6478, %v6479
        %v6481 = vrot.slane %v6480, 2
        %v6482 = vmax.f32 %v6480, %v6481
        %v6483 = vrot.slane %v6482, 1
        %v6484 = vmax.f32 %v6482, %v6483
        %v6485 = vsel %vm5343, %v6280, -inf
        %v6486 = vrot.slane %v6485, 4
        %v6487 = vmax.f32 %v6485, %v6486
        %v6488 = vrot.slane %v6487, 2
        %v6489 = vmax.f32 %v6487, %v6488
        %v6490 = vrot.slane %v6489, 1
        %v6491 = vmax.f32 %v6489, %v6490
        %v6492 = vsel %vm5343, %v6281, -inf
        %v6493 = vrot.slane %v6492, 4
        %v6494 = vmax.f32 %v6492, %v6493
        %v6495 = vrot.slane %v6494, 2
        %v6496 = vmax.f32 %v6494, %v6495
        %v6497 = vrot.slane %v6496, 1
        %v6498 = vmax.f32 %v6496, %v6497
        %v6499 = vsel %vm5343, %v6282, -inf
        %v6500 = vrot.slane %v6499, 4
        %v6501 = vmax.f32 %v6499, %v6500
        %v6502 = vrot.slane %v6501, 2
        %v6503 = vmax.f32 %v6501, %v6502
        %v6504 = vrot.slane %v6503, 1
        %v6505 = vmax.f32 %v6503, %v6504
        %v6506 = vsel %vm5343, %v6253, -inf
        %v6507 = vrot.slane %v6506, 4
        %v6508 = vmax.f32 %v6506, %v6507
        %v6509 = vrot.slane %v6508, 2
        %v6510 = vmax.f32 %v6508, %v6509
        %v6511 = vrot.slane %v6510, 1
        %v6512 = vmax.f32 %v6510, %v6511
        %v6513 = vsel %vm5343, %v6283, -inf
        %v6514 = vrot.slane %v6513, 4
        %v6515 = vmax.f32 %v6513, %v6514
        %v6516 = vrot.slane %v6515, 2
        %v6517 = vmax.f32 %v6515, %v6516
        %v6518 = vrot.slane %v6517, 1
        %v6519 = vmax.f32 %v6517, %v6518
        %v6520 = vsel %vm5343, %v6284, -inf
        %v6521 = vrot.slane %v6520, 4
        %v6522 = vmax.f32 %v6520, %v6521
        %v6523 = vrot.slane %v6522, 2
        %v6524 = vmax.f32 %v6522, %v6523
        %v6525 = vrot.slane %v6524, 1
        %v6526 = vmax.f32 %v6524, %v6525
        %v6527 = vsel %vm5343, %v6285, -inf
        %v6528 = vrot.slane %v6527, 4
        %v6529 = vmax.f32 %v6527, %v6528
        %v6530 = vrot.slane %v6529, 2
        %v6531 = vmax.f32 %v6529, %v6530
        %v6532 = vrot.slane %v6531, 1
        %v6533 = vmax.f32 %v6531, %v6532
        %v6534 = vsel %vm2249, %v6316, -inf
        %v6535 = vsel %vm2249, %v6344, -inf
        %v6536 = vmax.f32 %v6534, %v6535
        %v6537 = vsel %vm2249, %v6323, -inf
        %v6538 = vsel %vm2249, %v6351, -inf
        %v6539 = vmax.f32 %v6537, %v6538
        %v6540 = vsel %vm2249, %v6330, -inf
        %v6541 = vsel %vm2249, %v6358, -inf
        %v6542 = vmax.f32 %v6540, %v6541
        %v6543 = vsel %vm2249, %v6337, -inf
        %v6544 = vsel %vm2249, %v6365, -inf
        %v6545 = vmax.f32 %v6543, %v6544
        %v6546 = vsel %vm2249, %v6372, -inf
        %v6547 = vsel %vm2249, %v6400, -inf
        %v6548 = vmax.f32 %v6546, %v6547
        %v6549 = vsel %vm2249, %v6379, -inf
        %v6550 = vsel %vm2249, %v6407, -inf
        %v6551 = vmax.f32 %v6549, %v6550
        %v6552 = vsel %vm2249, %v6386, -inf
        %v6553 = vsel %vm2249, %v6414, -inf
        %v6554 = vmax.f32 %v6552, %v6553
        %v6555 = vsel %vm2249, %v6393, -inf
        %v6556 = vsel %vm2249, %v6421, -inf
        %v6557 = vmax.f32 %v6555, %v6556
        %v6558 = vsel %vm2249, %v6428, -inf
        %v6559 = vsel %vm2249, %v6456, -inf
        %v6560 = vmax.f32 %v6558, %v6559
        %v6561 = vsel %vm2249, %v6435, -inf
        %v6562 = vsel %vm2249, %v6463, -inf
        %v6563 = vmax.f32 %v6561, %v6562
        %v6564 = vsel %vm2249, %v6442, -inf
        %v6565 = vsel %vm2249, %v6470, -inf
        %v6566 = vmax.f32 %v6564, %v6565
        %v6567 = vsel %vm2249, %v6449, -inf
        %v6568 = vsel %vm2249, %v6477, -inf
        %v6569 = vmax.f32 %v6567, %v6568
        %v6570 = vsel %vm2249, %v6484, -inf
        %v6571 = vsel %vm2249, %v6512, -inf
        %v6572 = vmax.f32 %v6570, %v6571
        %v6573 = vsel %vm2249, %v6491, -inf
        %v6574 = vsel %vm2249, %v6519, -inf
        %v6575 = vmax.f32 %v6573, %v6574
        %v6576 = vsel %vm2249, %v6498, -inf
        %v6577 = vsel %vm2249, %v6526, -inf
        %v6578 = vmax.f32 %v6576, %v6577
        %v6579 = vsel %vm2249, %v6505, -inf
        %v6580 = vsel %vm2249, %v6533, -inf
        %v6581 = vmax.f32 %v6579, %v6580
        %vm6582 = vcmask 521216
        %6583 = vst.msk [vmem:[#allocation5] sm:$0x3f] %vm6582, 0.0
        %6584 = vst.msk [vmem:[#allocation5 + $0x8] sm:$0x3f] %vm6582, 0.0
        %6585 = vst.msk [vmem:[#allocation5 + $0x10] sm:$0x3f] %vm6582, 0.0
        %6586 = vst.msk [vmem:[#allocation5 + $0x18] sm:$0x3f] %vm6582, 0.0
        %6587 = vst.msk [vmem:[#allocation5 + $0x20] sm:$0x3f] %vm6582, 0.0
        %6588 = vst.msk [vmem:[#allocation5 + $0x28] sm:$0x3f] %vm6582, 0.0
        %v6605 = vsel %vm4682, %v6539, %v6536
        %v6606 = vsel %vm4684, %v6542, %v6605
        %v6607 = vsel %vm4686, %v6545, %v6606
        %v6608 = vsel %vm4682, %v6551, %v6548
        %v6609 = vsel %vm4684, %v6554, %v6608
        %v6610 = vsel %vm4686, %v6557, %v6609
        %v6611 = vsel %vm4682, %v6563, %v6560
        %v6612 = vsel %vm4684, %v6566, %v6611
        %v6613 = vsel %vm4686, %v6569, %v6612
        %v6614 = vsel %vm4682, %v6575, %v6572
        %v6615 = vsel %vm4684, %v6578, %v6614
        %v6616 = vsel %vm4686, %v6581, %v6615
        %s6621 = scalar_lea.vmem [#allocation5], 8
        %vm6622 = vcmask 519168
        %6623 = vst.msk [vmem:[%s6621 + $0x1] sm:$0xf] %vm6622, %v6607
        %6624 = vst.msk [vmem:[%s6621 + $0x9] sm:$0xf] %vm6622, %v6610
        %6625 = vst.msk [vmem:[%s6621 + $0x11] sm:$0xf] %vm6622, %v6613
        %6626 = vst.msk [vmem:[%s6621 + $0x19] sm:$0xf] %vm6622, %v6616
        %v6627 = vld [vmem:[#allocation5] sm:$0xf]
        %v6628 = vld [vmem:[#allocation5 + $0x8] sm:$0xf]
        %v6629 = vld [vmem:[#allocation5 + $0x10] sm:$0xf]
        %v6630 = vld [vmem:[#allocation5 + $0x18] sm:$0xf]
        %v6631 = vld [vmem:[#allocation5 + $0x1] sm:$0xf]
        %v6632 = vld [vmem:[#allocation5 + $0x9] sm:$0xf]
        %v6633 = vld [vmem:[#allocation5 + $0x11] sm:$0xf]
        %v6634 = vld [vmem:[#allocation5 + $0x19] sm:$0xf]
        %v6635 = vld [vmem:[#allocation5 + $0x2] sm:$0xf]
        %v6636 = vld [vmem:[#allocation5 + $0xa] sm:$0xf]
        %v6637 = vld [vmem:[#allocation5 + $0x12] sm:$0xf]
        %v6638 = vld [vmem:[#allocation5 + $0x1a] sm:$0xf]
        %v6639 = vld [vmem:[%s6621] sm:$0xf]
        %v6640 = vld [vmem:[%s6621 + $0x8] sm:$0xf]
        %v6641 = vld [vmem:[%s6621 + $0x10] sm:$0xf]
        %v6642 = vld [vmem:[%s6621 + $0x18] sm:$0xf]
        %v6643 = vld [vmem:[%s6621 + $0x1] sm:$0xf]
        %v6644 = vld [vmem:[%s6621 + $0x9] sm:$0xf]
        %v6645 = vld [vmem:[%s6621 + $0x11] sm:$0xf]
        %v6646 = vld [vmem:[%s6621 + $0x19] sm:$0xf]
        %v6647 = vld [vmem:[%s6621 + $0x2] sm:$0xf]
        %v6648 = vld [vmem:[%s6621 + $0xa] sm:$0xf]
        %v6649 = vld [vmem:[%s6621 + $0x12] sm:$0xf]
        %v6650 = vld [vmem:[%s6621 + $0x1a] sm:$0xf]
        %s6651 = scalar_lea.vmem [#allocation5], 16
        %v6652 = vld [vmem:[%s6651] sm:$0xf]
        %v6653 = vld [vmem:[%s6651 + $0x8] sm:$0xf]
        %v6654 = vld [vmem:[%s6651 + $0x10] sm:$0xf]
        %v6655 = vld [vmem:[%s6651 + $0x18] sm:$0xf]
        %v6656 = vld [vmem:[%s6651 + $0x1] sm:$0xf]
        %v6657 = vld [vmem:[%s6651 + $0x9] sm:$0xf]
        %v6658 = vld [vmem:[%s6651 + $0x11] sm:$0xf]
        %v6659 = vld [vmem:[%s6651 + $0x19] sm:$0xf]
        %v6660 = vld [vmem:[%s6651 + $0x2] sm:$0xf]
        %v6661 = vld [vmem:[%s6651 + $0xa] sm:$0xf]
        %v6662 = vld [vmem:[%s6651 + $0x12] sm:$0xf]
        %v6663 = vld [vmem:[%s6651 + $0x1a] sm:$0xf]
        %6668 = vst [vmem:[#allocation1] ss:$2 sm:$0xff] %v6627
        %s6669 = scalar_lea.vmem [#allocation1], 1
        %6670 = vst [vmem:[%s6669] ss:$2 sm:$0xff] %v6628
        %s6671 = scalar_lea.vmem [#allocation1], 16
        %6672 = vst [vmem:[%s6671] ss:$2 sm:$0xff] %v6629
        %s6673 = scalar_lea.vmem [#allocation1], 17
        %6674 = vst [vmem:[%s6673] ss:$2 sm:$0xff] %v6630
        %v6675 = vld.sshfl [vmem:[#allocation1] sm:$0xff pattern:$0x75316420]
        %v6676 = vld.sshfl [vmem:[#allocation1 + $0x10] sm:$0xff pattern:$0x75316420]
        %6683 = vst [vmem:[#allocation1] ss:$2 sm:$0xff] %v6631
        %s6684 = scalar_lea.vmem [#allocation1], 1
        %6685 = vst [vmem:[%s6684] ss:$2 sm:$0xff] %v6632
        %s6686 = scalar_lea.vmem [#allocation1], 16
        %6687 = vst [vmem:[%s6686] ss:$2 sm:$0xff] %v6633
        %s6688 = scalar_lea.vmem [#allocation1], 17
        %6689 = vst [vmem:[%s6688] ss:$2 sm:$0xff] %v6634
        %v6690 = vld.sshfl [vmem:[#allocation1] sm:$0xff pattern:$0x75316420]
        %v6691 = vld.sshfl [vmem:[#allocation1 + $0x10] sm:$0xff pattern:$0x75316420]
        %6692 = vrot.lane.b32.xlu0 %v6690, 64
        %v6693 = vpop.permute.xlu0 %6692
        %6694 = vrot.lane.b32.xlu0 %v6691, 64
        %v6695 = vpop.permute.xlu0 %6694
        %6702 = vst [vmem:[#allocation1] ss:$2 sm:$0xff] %v6635
        %s6703 = scalar_lea.vmem [#allocation1], 1
        %6704 = vst [vmem:[%s6703] ss:$2 sm:$0xff] %v6636
        %s6705 = scalar_lea.vmem [#allocation1], 16
        %6706 = vst [vmem:[%s6705] ss:$2 sm:$0xff] %v6637
        %s6707 = scalar_lea.vmem [#allocation1], 17
        %6708 = vst [vmem:[%s6707] ss:$2 sm:$0xff] %v6638
        %v6709 = vld.sshfl [vmem:[#allocation1] sm:$0xff pattern:$0x75316420]
        %v6710 = vld.sshfl [vmem:[#allocation1 + $0x10] sm:$0xff pattern:$0x75316420]
        %6717 = vst [vmem:[#allocation1] ss:$2 sm:$0xff] %v6639
        %s6718 = scalar_lea.vmem [#allocation1], 1
        %6719 = vst [vmem:[%s6718] ss:$2 sm:$0xff] %v6640
        %s6720 = scalar_lea.vmem [#allocation1], 16
        %6721 = vst [vmem:[%s6720] ss:$2 sm:$0xff] %v6641
        %s6722 = scalar_lea.vmem [#allocation1], 17
        %6723 = vst [vmem:[%s6722] ss:$2 sm:$0xff] %v6642
        %v6724 = vld.sshfl [vmem:[#allocation1] sm:$0xff pattern:$0x75316420]
        %v6725 = vld.sshfl [vmem:[#allocation1 + $0x10] sm:$0xff pattern:$0x75316420]
        %6726 = vrot.lane.b32.xlu0 %v6724, 64
        %v6727 = vpop.permute.xlu0 %6726
        %6728 = vrot.lane.b32.xlu0 %v6725, 64
        %v6729 = vpop.permute.xlu0 %6728
        %6736 = vst [vmem:[#allocation1] ss:$2 sm:$0xff] %v6643
        %s6737 = scalar_lea.vmem [#allocation1], 1
        %6738 = vst [vmem:[%s6737] ss:$2 sm:$0xff] %v6644
        %s6739 = scalar_lea.vmem [#allocation1], 16
        %6740 = vst [vmem:[%s6739] ss:$2 sm:$0xff] %v6645
        %s6741 = scalar_lea.vmem [#allocation1], 17
        %6742 = vst [vmem:[%s6741] ss:$2 sm:$0xff] %v6646
        %v6743 = vld.sshfl [vmem:[#allocation1] sm:$0xff pattern:$0x75316420]
        %v6744 = vld.sshfl [vmem:[#allocation1 + $0x10] sm:$0xff pattern:$0x75316420]
        %6751 = vst [vmem:[#allocation1] ss:$2 sm:$0xff] %v6647
        %s6752 = scalar_lea.vmem [#allocation1], 1
        %6753 = vst [vmem:[%s6752] ss:$2 sm:$0xff] %v6648
        %s6754 = scalar_lea.vmem [#allocation1], 16
        %6755 = vst [vmem:[%s6754] ss:$2 sm:$0xff] %v6649
        %s6756 = scalar_lea.vmem [#allocation1], 17
        %6757 = vst [vmem:[%s6756] ss:$2 sm:$0xff] %v6650
        %v6758 = vld.sshfl [vmem:[#allocation1] sm:$0xff pattern:$0x75316420]
        %v6759 = vld.sshfl [vmem:[#allocation1 + $0x10] sm:$0xff pattern:$0x75316420]
        %6760 = vrot.lane.b32.xlu0 %v6758, 64
        %v6761 = vpop.permute.xlu0 %6760
        %6762 = vrot.lane.b32.xlu0 %v6759, 64
        %v6763 = vpop.permute.xlu0 %6762
        %6770 = vst [vmem:[#allocation1] ss:$2 sm:$0xff] %v6652
        %s6771 = scalar_lea.vmem [#allocation1], 1
        %6772 = vst [vmem:[%s6771] ss:$2 sm:$0xff] %v6653
        %s6773 = scalar_lea.vmem [#allocation1], 16
        %6774 = vst [vmem:[%s6773] ss:$2 sm:$0xff] %v6654
        %s6775 = scalar_lea.vmem [#allocation1], 17
        %6776 = vst [vmem:[%s6775] ss:$2 sm:$0xff] %v6655
        %v6777 = vld.sshfl [vmem:[#allocation1] sm:$0xff pattern:$0x75316420]
        %v6778 = vld.sshfl [vmem:[#allocation1 + $0x10] sm:$0xff pattern:$0x75316420]
        %6785 = vst [vmem:[#allocation1] ss:$2 sm:$0xff] %v6656
        %s6786 = scalar_lea.vmem [#allocation1], 1
        %6787 = vst [vmem:[%s6786] ss:$2 sm:$0xff] %v6657
        %s6788 = scalar_lea.vmem [#allocation1], 16
        %6789 = vst [vmem:[%s6788] ss:$2 sm:$0xff] %v6658
        %s6790 = scalar_lea.vmem [#allocation1], 17
        %6791 = vst [vmem:[%s6790] ss:$2 sm:$0xff] %v6659
        %v6792 = vld.sshfl [vmem:[#allocation1] sm:$0xff pattern:$0x75316420]
        %v6793 = vld.sshfl [vmem:[#allocation1 + $0x10] sm:$0xff pattern:$0x75316420]
        %6794 = vrot.lane.b32.xlu0 %v6792, 64
        %v6795 = vpop.permute.xlu0 %6794
        %6796 = vrot.lane.b32.xlu0 %v6793, 64
        %v6797 = vpop.permute.xlu0 %6796
        %6804 = vst [vmem:[#allocation1] ss:$2 sm:$0xff] %v6660
        %s6805 = scalar_lea.vmem [#allocation1], 1
        %6806 = vst [vmem:[%s6805] ss:$2 sm:$0xff] %v6661
        %s6807 = scalar_lea.vmem [#allocation1], 16
        %6808 = vst [vmem:[%s6807] ss:$2 sm:$0xff] %v6662
        %s6809 = scalar_lea.vmem [#allocation1], 17
        %6810 = vst [vmem:[%s6809] ss:$2 sm:$0xff] %v6663
        %v6811 = vld.sshfl [vmem:[#allocation1] sm:$0xff pattern:$0x75316420]
        %v6812 = vld.sshfl [vmem:[#allocation1 + $0x10] sm:$0xff pattern:$0x75316420]
        %v6815 = vsel %vm2249, %v6675, %v6693
        %v6816 = vsel %vm2249, %v6676, %v6695
        %v6817 = vsel %vm2249, %v6709, %v6727
        %v6818 = vsel %vm2249, %v6710, %v6729
        %v6819 = vsel %vm2249, %v6743, %v6761
        %v6820 = vsel %vm2249, %v6744, %v6763
        %v6821 = vsel %vm2249, %v6777, %v6795
        %v6822 = vsel %vm2249, %v6778, %v6797
        %v6823 = vpack.c.bf16 %v6816, %v6815
        %v6824 = vpack.c.bf16 %v6818, %v6817
        %v6825 = vpack.c.bf16 %v6820, %v6819
        %v6826 = vpack.c.bf16 %v6822, %v6821
        %v6827 = vpack.c.bf16 %v6812, %v6811
        %v6828 = vld [vmem:[%s9] sm:$0xf]
        %v6829 = vld [vmem:[%s9 + $0x4] sm:$0xf]
        %v6830 = vld [vmem:[%s9 + $0x8] sm:$0xf]
        %v6831 = vld [vmem:[%s9 + $0xc] sm:$0xf]
        %v6832 = vld [vmem:[%s9 + $0x10] sm:$0xf]
        %v6833 = vld [vmem:[%s9 + $0x14] sm:$0xf]
        %v6834 = vld [vmem:[%s9 + $0x18] sm:$0xf]
        %v6835 = vld [vmem:[%s9 + $0x1c] sm:$0xf]
        %v6836 = vld [vmem:[%s9 + $0x20] sm:$0xf]
        %v6837 = vld [vmem:[%s9 + $0x24] sm:$0xf]
        %v6838 = vld [vmem:[%s9 + $0x28] sm:$0xf]
        %v6839 = vld [vmem:[%s9 + $0x2c] sm:$0xf]
        %v6840 = vld [vmem:[%s9 + $0x30] sm:$0xf]
        %v6841 = vld [vmem:[%s9 + $0x34] sm:$0xf]
        %v6842 = vld [vmem:[%s9 + $0x38] sm:$0xf]
        %v6843 = vld [vmem:[%s9 + $0x3c] sm:$0xf]
        %v6844 = vld [vmem:[%s9 + $0x40] sm:$0xf]
        %v6845 = vld [vmem:[%s9 + $0x44] sm:$0xf]
        %v6846 = vld [vmem:[%s9 + $0x48] sm:$0xf]
        %v6847 = vld [vmem:[%s9 + $0x4c] sm:$0xf]
        %v6848 = vld [vmem:[%s9 + $0x50] sm:$0xf]
        %v6849 = vld [vmem:[%s9 + $0x54] sm:$0xf]
        %v6850 = vld [vmem:[%s9 + $0x58] sm:$0xf]
        %v6851 = vld [vmem:[%s9 + $0x5c] sm:$0xf]
        %v6852 = vld [vmem:[%s9 + $0x60] sm:$0xf]
        %v6853 = vld [vmem:[%s9 + $0x64] sm:$0xf]
        %v6854 = vld [vmem:[%s9 + $0x68] sm:$0xf]
        %v6855 = vld [vmem:[%s9 + $0x6c] sm:$0xf]
        %v6856 = vld [vmem:[%s9 + $0x70] sm:$0xf]
        %v6857 = vld [vmem:[%s9 + $0x74] sm:$0xf]
        %v6858 = vld [vmem:[%s9 + $0x78] sm:$0xf]
        %v6859 = vld [vmem:[%s9 + $0x7c] sm:$0xf]
        %v6860 = vld [vmem:[%s9 + $0x80] sm:$0xf]
        %v6861 = vld [vmem:[%s9 + $0x84] sm:$0xf]
        %v6862 = vld [vmem:[%s9 + $0x88] sm:$0xf]
        %v6863 = vld [vmem:[%s9 + $0x8c] sm:$0xf]
        %v6864 = vld [vmem:[%s9 + $0x90] sm:$0xf]
        %v6865 = vld [vmem:[%s9 + $0x94] sm:$0xf]
        %v6866 = vld [vmem:[%s9 + $0x98] sm:$0xf]
        %v6867 = vld [vmem:[%s9 + $0x9c] sm:$0xf]
        %v6868 = vld [vmem:[%s9 + $0xa0] sm:$0xf]
        %v6869 = vld [vmem:[%s9 + $0xa4] sm:$0xf]
        %v6870 = vld [vmem:[%s9 + $0xa8] sm:$0xf]
        %v6871 = vld [vmem:[%s9 + $0xac] sm:$0xf]
        %v6872 = vld [vmem:[%s9 + $0xb0] sm:$0xf]
        %v6873 = vld [vmem:[%s9 + $0xb4] sm:$0xf]
        %v6874 = vld [vmem:[%s9 + $0xb8] sm:$0xf]
        %v6875 = vld [vmem:[%s9 + $0xbc] sm:$0xf]
        %v6876 = vld [vmem:[%s9 + $0xc0] sm:$0xf]
        %v6877 = vld [vmem:[%s9 + $0xc4] sm:$0xf]
        %v6878 = vld [vmem:[%s9 + $0xc8] sm:$0xf]
        %v6879 = vld [vmem:[%s9 + $0xcc] sm:$0xf]
        %v6880 = vld [vmem:[%s9 + $0xd0] sm:$0xf]
        %v6881 = vld [vmem:[%s9 + $0xd4] sm:$0xf]
        %v6882 = vld [vmem:[%s9 + $0xd8] sm:$0xf]
        %v6883 = vld [vmem:[%s9 + $0xdc] sm:$0xf]
        %v6884 = vld [vmem:[%s9 + $0xe0] sm:$0xf]
        %v6885 = vld [vmem:[%s9 + $0xe4] sm:$0xf]
        %v6886 = vld [vmem:[%s9 + $0xe8] sm:$0xf]
        %v6887 = vld [vmem:[%s9 + $0xec] sm:$0xf]
        %v6888 = vld [vmem:[%s9 + $0xf0] sm:$0xf]
        %v6889 = vld [vmem:[%s9 + $0xf4] sm:$0xf]
        %v6890 = vld [vmem:[%s9 + $0xf8] sm:$0xf]
        %v6891 = vld [vmem:[%s9 + $0xfc] sm:$0xf]
        %v6892 = vld [vmem:[%s9 + $0x100] sm:$0xf]
        %v6893 = vld [vmem:[%s9 + $0x104] sm:$0xf]
        %v6894 = vld [vmem:[%s9 + $0x108] sm:$0xf]
        %v6895 = vld [vmem:[%s9 + $0x10c] sm:$0xf]
        %v6896 = vld [vmem:[%s9 + $0x110] sm:$0xf]
        %v6897 = vld [vmem:[%s9 + $0x114] sm:$0xf]
        %v6898 = vld [vmem:[%s9 + $0x118] sm:$0xf]
        %v6899 = vld [vmem:[%s9 + $0x11c] sm:$0xf]
        %v6900 = vld [vmem:[%s10] sm:$0x1]
        %v6902 = vperm.slane %v6900, 0
        %v6976 = vunpack.c.l.b16 %v6828
        %v6977 = vunpack.c.l.b16 %v6829
        %v6978 = vunpack.c.l.b16 %v6830
        %v6979 = vunpack.c.l.b16 %v6831
        %v6980 = vunpack.c.l.b16 %v6832
        %v6981 = vunpack.c.l.b16 %v6833
        %v6982 = vunpack.c.l.b16 %v6834
        %v6983 = vunpack.c.l.b16 %v6835
        %v6984 = vunpack.c.l.b16 %v6836
        %v6985 = vunpack.c.l.b16 %v6837
        %v6986 = vunpack.c.l.b16 %v6838
        %v6987 = vunpack.c.l.b16 %v6839
        %v6988 = vunpack.c.l.b16 %v6840
        %v6989 = vunpack.c.l.b16 %v6841
        %v6990 = vunpack.c.l.b16 %v6842
        %v6991 = vunpack.c.l.b16 %v6843
        %v6992 = vunpack.c.l.b16 %v6844
        %v6993 = vunpack.c.l.b16 %v6845
        %v6994 = vunpack.c.l.b16 %v6846
        %v6995 = vunpack.c.l.b16 %v6847
        %v6996 = vunpack.c.l.b16 %v6848
        %v6997 = vunpack.c.l.b16 %v6849
        %v6998 = vunpack.c.l.b16 %v6850
        %v6999 = vunpack.c.l.b16 %v6851
        %v7000 = vunpack.c.l.b16 %v6852
        %v7001 = vunpack.c.l.b16 %v6853
        %v7002 = vunpack.c.l.b16 %v6854
        %v7003 = vunpack.c.l.b16 %v6855
        %v7004 = vunpack.c.l.b16 %v6856
        %v7005 = vunpack.c.l.b16 %v6857
        %v7006 = vunpack.c.l.b16 %v6858
        %v7007 = vunpack.c.l.b16 %v6859
        %v7008 = vunpack.c.l.b16 %v6860
        %v7009 = vunpack.c.l.b16 %v6861
        %v7010 = vunpack.c.l.b16 %v6862
        %v7011 = vunpack.c.l.b16 %v6863
        %v7012 = vunpack.c.l.b16 %v6864
        %v7013 = vunpack.c.l.b16 %v6865
        %v7014 = vunpack.c.l.b16 %v6866
        %v7015 = vunpack.c.l.b16 %v6867
        %v7016 = vunpack.c.l.b16 %v6868
        %v7017 = vunpack.c.l.b16 %v6869
        %v7018 = vunpack.c.l.b16 %v6870
        %v7019 = vunpack.c.l.b16 %v6871
        %v7020 = vunpack.c.l.b16 %v6872
        %v7021 = vunpack.c.l.b16 %v6873
        %v7022 = vunpack.c.l.b16 %v6874
        %v7023 = vunpack.c.l.b16 %v6875
        %v7024 = vunpack.c.l.b16 %v6876
        %v7025 = vunpack.c.l.b16 %v6877
        %v7026 = vunpack.c.l.b16 %v6878
        %v7027 = vunpack.c.l.b16 %v6879
        %v7028 = vunpack.c.l.b16 %v6880
        %v7029 = vunpack.c.l.b16 %v6881
        %v7030 = vunpack.c.l.b16 %v6882
        %v7031 = vunpack.c.l.b16 %v6883
        %v7032 = vunpack.c.l.b16 %v6884
        %v7033 = vunpack.c.l.b16 %v6885
        %v7034 = vunpack.c.l.b16 %v6886
        %v7035 = vunpack.c.l.b16 %v6887
        %v7036 = vunpack.c.l.b16 %v6888
        %v7037 = vunpack.c.l.b16 %v6889
        %v7038 = vunpack.c.l.b16 %v6890
        %v7039 = vunpack.c.l.b16 %v6891
        %v7040 = vunpack.c.l.b16 %v6892
        %v7041 = vunpack.c.l.b16 %v6893
        %v7042 = vunpack.c.l.b16 %v6894
        %v7043 = vunpack.c.l.b16 %v6895
        %v7044 = vunpack.c.l.b16 %v6896
        %v7045 = vunpack.c.l.b16 %v6897
        %v7046 = vunpack.c.l.b16 %v6898
        %v7047 = vunpack.c.l.b16 %v6899
        %v7048 = vpack.c.b16 %v6977, %v6976
        %v7049 = vpack.c.b16 %v6979, %v6978
        %v7050 = vpack.c.b16 %v6981, %v6980
        %v7051 = vpack.c.b16 %v6983, %v6982
        %v7052 = vpack.c.b16 %v6985, %v6984
        %v7053 = vpack.c.b16 %v6987, %v6986
        %v7054 = vpack.c.b16 %v6989, %v6988
        %v7055 = vpack.c.b16 %v6991, %v6990
        %v7056 = vpack.c.b16 %v6993, %v6992
        %v7057 = vpack.c.b16 %v6995, %v6994
        %v7058 = vpack.c.b16 %v6997, %v6996
        %v7059 = vpack.c.b16 %v6999, %v6998
        %v7060 = vpack.c.b16 %v7001, %v7000
        %v7061 = vpack.c.b16 %v7003, %v7002
        %v7062 = vpack.c.b16 %v7005, %v7004
        %v7063 = vpack.c.b16 %v7007, %v7006
        %v7064 = vpack.c.b16 %v7009, %v7008
        %v7065 = vpack.c.b16 %v7011, %v7010
        %v7066 = vpack.c.b16 %v7013, %v7012
        %v7067 = vpack.c.b16 %v7015, %v7014
        %v7068 = vpack.c.b16 %v7017, %v7016
        %v7069 = vpack.c.b16 %v7019, %v7018
        %v7070 = vpack.c.b16 %v7021, %v7020
        %v7071 = vpack.c.b16 %v7023, %v7022
        %v7072 = vpack.c.b16 %v7025, %v7024
        %v7073 = vpack.c.b16 %v7027, %v7026
        %v7074 = vpack.c.b16 %v7029, %v7028
        %v7075 = vpack.c.b16 %v7031, %v7030
        %v7076 = vpack.c.b16 %v7033, %v7032
        %v7077 = vpack.c.b16 %v7035, %v7034
        %v7078 = vpack.c.b16 %v7037, %v7036
        %v7079 = vpack.c.b16 %v7039, %v7038
        %v7080 = vpack.c.b16 %v7041, %v7040
        %v7081 = vpack.c.b16 %v7043, %v7042
        %v7082 = vpack.c.b16 %v7045, %v7044
        %v7083 = vpack.c.b16 %v7047, %v7046
        %v7121 = vsel %vm2249, %v6827, 0
        %7123 = vmatpush.bf16.msra.mxu0 %v7055
        %7124 = vmatpush.bf16.msra.mxu0 %v7054
        %7125 = vmatpush.bf16.msra.mxu0 %v7053
        %7126 = vmatpush.bf16.msra.mxu0 %v7052
        %7127 = vmatpush.bf16.msra.mxu0 %v7051
        %7128 = vmatpush.bf16.msra.mxu0 %v7050
        %7129 = vmatpush.bf16.msra.mxu0 %v7049
        %7130 = vmatpush.bf16.msra.mxu0 %v7048
        %7131 = vmatmul.bf16.gmra.mxu0 %v6823
        %v7132 = vpop.f32.mrf.mxu0
        %v7133 = vadd.f32 %v6902, %v7132
        %v7134 = vpop.f32.mrf.mxu0
        %v7135 = vadd.f32 %v6902, %v7134
        %7136 = vdwg.mxu0
        %7137 = vmatpush.bf16.msra.mxu0 %v7063
        %7138 = vmatpush.bf16.msra.mxu0 %v7062
        %7139 = vmatpush.bf16.msra.mxu0 %v7061
        %7140 = vmatpush.bf16.msra.mxu0 %v7060
        %7141 = vmatpush.bf16.msra.mxu0 %v7059
        %7142 = vmatpush.bf16.msra.mxu0 %v7058
        %7143 = vmatpush.bf16.msra.mxu0 %v7057
        %7144 = vmatpush.bf16.msra.mxu0 %v7056
        %7145 = vmatmul.bf16.gmra.mxu0 %v6824
        %v7146 = vpop.f32.mrf.mxu0
        %v7147 = vadd.f32 %v7133, %v7146
        %v7148 = vpop.f32.mrf.mxu0
        %v7149 = vadd.f32 %v7135, %v7148
        %7150 = vdwg.mxu0
        %7151 = vmatpush.bf16.msra.mxu0 %v7071
        %7152 = vmatpush.bf16.msra.mxu0 %v7070
        %7153 = vmatpush.bf16.msra.mxu0 %v7069
        %7154 = vmatpush.bf16.msra.mxu0 %v7068
        %7155 = vmatpush.bf16.msra.mxu0 %v7067
        %7156 = vmatpush.bf16.msra.mxu0 %v7066
        %7157 = vmatpush.bf16.msra.mxu0 %v7065
        %7158 = vmatpush.bf16.msra.mxu0 %v7064
        %7159 = vmatmul.bf16.gmra.mxu0 %v6825
        %v7160 = vpop.f32.mrf.mxu0
        %v7161 = vadd.f32 %v7147, %v7160
        %v7162 = vpop.f32.mrf.mxu0
        %v7163 = vadd.f32 %v7149, %v7162
        %7164 = vdwg.mxu0
        %7165 = vmatpush.bf16.msra.mxu0 %v7079
        %7166 = vmatpush.bf16.msra.mxu0 %v7078
        %7167 = vmatpush.bf16.msra.mxu0 %v7077
        %7168 = vmatpush.bf16.msra.mxu0 %v7076
        %7169 = vmatpush.bf16.msra.mxu0 %v7075
        %7170 = vmatpush.bf16.msra.mxu0 %v7074
        %7171 = vmatpush.bf16.msra.mxu0 %v7073
        %7172 = vmatpush.bf16.msra.mxu0 %v7072
        %7173 = vmatmul.bf16.gmra.mxu0 %v6826
        %v7174 = vpop.f32.mrf.mxu0
        %v7175 = vadd.f32 %v7161, %v7174
        %v7176 = vpop.f32.mrf.mxu0
        %v7177 = vadd.f32 %v7163, %v7176
        %7178 = vdwg.mxu0
        %7179 = vmatpush.bf16.msra.mxu0 0
        %7180 = vmatpush.bf16.msra.mxu0 0
        %7181 = vmatpush.bf16.msra.mxu0 0
        %7182 = vmatpush.bf16.msra.mxu0 0
        %7183 = vmatpush.bf16.msra.mxu0 %v7083
        %7184 = vmatpush.bf16.msra.mxu0 %v7082
        %7185 = vmatpush.bf16.msra.mxu0 %v7081
        %7186 = vmatpush.bf16.msra.mxu0 %v7080
        %7187 = vmatmul.bf16.gmra.mxu0 %v7121
        %v7188 = vpop.f32.mrf.mxu0
        %v7189 = vadd.f32 %v7175, %v7188
        %v7190 = vpop.f32.mrf.mxu0
        %v7191 = vadd.f32 %v7177, %v7190
        %7192 = vdwg.mxu0
        %v7193 = vmax.f32 %v7189, 0.0
        %v7194 = vmax.f32 %v7191, 0.0
        %v7197 = vrot.slane %v7193, 4
        %v7198 = vrot.slane %v7194, 4
        %7201 = vst [vmem:[#allocation6] sm:$0x3f] 0.0
        %7202 = vst [vmem:[#allocation6 + $0x8] sm:$0x3f] 0.0
        %7203 = vst [vmem:[#allocation6 + $0x10] sm:$0x3f] 0.0
        %7204 = vst [vmem:[#allocation6 + $0x18] sm:$0x3f] 0.0
        %7205 = vst [vmem:[#allocation6 + $0x20] sm:$0x3f] 0.0
        %7206 = vst [vmem:[#allocation6 + $0x28] sm:$0x3f] 0.0
        %s7207 = scalar_lea.vmem [#allocation6], 8
        %7208 = vst [vmem:[%s7207 + $0x1] sm:$0xf] %v7193
        %7209 = vst [vmem:[%s7207 + $0x9] sm:$0xf] %v7197
        %7210 = vst [vmem:[%s7207 + $0x11] sm:$0xf] %v7194
        %7211 = vst [vmem:[%s7207 + $0x19] sm:$0xf] %v7198
        %v7212 = vld [vmem:[%s6621 + $0x1] sm:$0xf]
        %v7213 = vld [vmem:[%s6621 + $0x9] sm:$0xf]
        %v7214 = vld [vmem:[%s6621 + $0x11] sm:$0xf]
        %v7215 = vld [vmem:[%s6621 + $0x19] sm:$0xf]
        %7220 = vst [vmem:[#allocation1] ss:$2 sm:$0xff] %v7212
        %s7221 = scalar_lea.vmem [#allocation1], 1
        %7222 = vst [vmem:[%s7221] ss:$2 sm:$0xff] %v7213
        %s7223 = scalar_lea.vmem [#allocation1], 16
        %7224 = vst [vmem:[%s7223] ss:$2 sm:$0xff] %v7214
        %s7225 = scalar_lea.vmem [#allocation1], 17
        %7226 = vst [vmem:[%s7225] ss:$2 sm:$0xff] %v7215
        %v7227 = vld.sshfl [vmem:[#allocation1] sm:$0xff pattern:$0x75316420]
        %v7228 = vld.sshfl [vmem:[#allocation1 + $0x10] sm:$0xff pattern:$0x75316420]
        %v7231 = vpack.c.bf16 %v7227, %v7227
        %v7232 = vpack.c.bf16 %v7228, %v7228
        %v7233 = vld [vmem:[#allocation6] sm:$0xf]
        %v7234 = vld [vmem:[#allocation6 + $0x8] sm:$0xf]
        %v7235 = vld [vmem:[#allocation6 + $0x10] sm:$0xf]
        %v7236 = vld [vmem:[#allocation6 + $0x18] sm:$0xf]
        %v7237 = vld [vmem:[#allocation6 + $0x1] sm:$0xf]
        %v7238 = vld [vmem:[#allocation6 + $0x9] sm:$0xf]
        %v7239 = vld [vmem:[#allocation6 + $0x11] sm:$0xf]
        %v7240 = vld [vmem:[#allocation6 + $0x19] sm:$0xf]
        %v7241 = vld [vmem:[#allocation6 + $0x2] sm:$0xf]
        %v7242 = vld [vmem:[#allocation6 + $0xa] sm:$0xf]
        %v7243 = vld [vmem:[#allocation6 + $0x12] sm:$0xf]
        %v7244 = vld [vmem:[#allocation6 + $0x1a] sm:$0xf]
        %v7245 = vld [vmem:[%s7207] sm:$0xf]
        %v7246 = vld [vmem:[%s7207 + $0x8] sm:$0xf]
        %v7247 = vld [vmem:[%s7207 + $0x10] sm:$0xf]
        %v7248 = vld [vmem:[%s7207 + $0x18] sm:$0xf]
        %v7249 = vld [vmem:[%s7207 + $0x1] sm:$0xf]
        %v7250 = vld [vmem:[%s7207 + $0x9] sm:$0xf]
        %v7251 = vld [vmem:[%s7207 + $0x11] sm:$0xf]
        %v7252 = vld [vmem:[%s7207 + $0x19] sm:$0xf]
        %v7253 = vld [vmem:[%s7207 + $0x2] sm:$0xf]
        %v7254 = vld [vmem:[%s7207 + $0xa] sm:$0xf]
        %v7255 = vld [vmem:[%s7207 + $0x12] sm:$0xf]
        %v7256 = vld [vmem:[%s7207 + $0x1a] sm:$0xf]
        %s7257 = scalar_lea.vmem [#allocation6], 16
        %v7258 = vld [vmem:[%s7257] sm:$0xf]
        %v7259 = vld [vmem:[%s7257 + $0x8] sm:$0xf]
        %v7260 = vld [vmem:[%s7257 + $0x10] sm:$0xf]
        %v7261 = vld [vmem:[%s7257 + $0x18] sm:$0xf]
        %v7262 = vld [vmem:[%s7257 + $0x1] sm:$0xf]
        %v7263 = vld [vmem:[%s7257 + $0x9] sm:$0xf]
        %v7264 = vld [vmem:[%s7257 + $0x11] sm:$0xf]
        %v7265 = vld [vmem:[%s7257 + $0x19] sm:$0xf]
        %v7266 = vld [vmem:[%s7257 + $0x2] sm:$0xf]
        %v7267 = vld [vmem:[%s7257 + $0xa] sm:$0xf]
        %v7268 = vld [vmem:[%s7257 + $0x12] sm:$0xf]
        %v7269 = vld [vmem:[%s7257 + $0x1a] sm:$0xf]
        %7274 = vst [vmem:[#allocation1] ss:$2 sm:$0xff] %v7233
        %s7275 = scalar_lea.vmem [#allocation1], 1
        %7276 = vst [vmem:[%s7275] ss:$2 sm:$0xff] %v7234
        %s7277 = scalar_lea.vmem [#allocation1], 16
        %7278 = vst [vmem:[%s7277] ss:$2 sm:$0xff] %v7235
        %s7279 = scalar_lea.vmem [#allocation1], 17
        %7280 = vst [vmem:[%s7279] ss:$2 sm:$0xff] %v7236
        %v7281 = vld.sshfl [vmem:[#allocation1] sm:$0xff pattern:$0x75316420]
        %v7282 = vld.sshfl [vmem:[#allocation1 + $0x10] sm:$0xff pattern:$0x75316420]
        %7289 = vst [vmem:[#allocation1] ss:$2 sm:$0xff] %v7237
        %s7290 = scalar_lea.vmem [#allocation1], 1
        %7291 = vst [vmem:[%s7290] ss:$2 sm:$0xff] %v7238
        %s7292 = scalar_lea.vmem [#allocation1], 16
        %7293 = vst [vmem:[%s7292] ss:$2 sm:$0xff] %v7239
        %s7294 = scalar_lea.vmem [#allocation1], 17
        %7295 = vst [vmem:[%s7294] ss:$2 sm:$0xff] %v7240
        %v7296 = vld.sshfl [vmem:[#allocation1] sm:$0xff pattern:$0x75316420]
        %v7297 = vld.sshfl [vmem:[#allocation1 + $0x10] sm:$0xff pattern:$0x75316420]
        %7304 = vst [vmem:[#allocation1] ss:$2 sm:$0xff] %v7241
        %s7305 = scalar_lea.vmem [#allocation1], 1
        %7306 = vst [vmem:[%s7305] ss:$2 sm:$0xff] %v7242
        %s7307 = scalar_lea.vmem [#allocation1], 16
        %7308 = vst [vmem:[%s7307] ss:$2 sm:$0xff] %v7243
        %s7309 = scalar_lea.vmem [#allocation1], 17
        %7310 = vst [vmem:[%s7309] ss:$2 sm:$0xff] %v7244
        %v7311 = vld.sshfl [vmem:[#allocation1] sm:$0xff pattern:$0x75316420]
        %v7312 = vld.sshfl [vmem:[#allocation1 + $0x10] sm:$0xff pattern:$0x75316420]
        %7319 = vst [vmem:[#allocation1] ss:$2 sm:$0xff] %v7245
        %s7320 = scalar_lea.vmem [#allocation1], 1
        %7321 = vst [vmem:[%s7320] ss:$2 sm:$0xff] %v7246
        %s7322 = scalar_lea.vmem [#allocation1], 16
        %7323 = vst [vmem:[%s7322] ss:$2 sm:$0xff] %v7247
        %s7324 = scalar_lea.vmem [#allocation1], 17
        %7325 = vst [vmem:[%s7324] ss:$2 sm:$0xff] %v7248
        %v7326 = vld.sshfl [vmem:[#allocation1] sm:$0xff pattern:$0x75316420]
        %v7327 = vld.sshfl [vmem:[#allocation1 + $0x10] sm:$0xff pattern:$0x75316420]
        %7334 = vst [vmem:[#allocation1] ss:$2 sm:$0xff] %v7249
        %s7335 = scalar_lea.vmem [#allocation1], 1
        %7336 = vst [vmem:[%s7335] ss:$2 sm:$0xff] %v7250
        %s7337 = scalar_lea.vmem [#allocation1], 16
        %7338 = vst [vmem:[%s7337] ss:$2 sm:$0xff] %v7251
        %s7339 = scalar_lea.vmem [#allocation1], 17
        %7340 = vst [vmem:[%s7339] ss:$2 sm:$0xff] %v7252
        %v7341 = vld.sshfl [vmem:[#allocation1] sm:$0xff pattern:$0x75316420]
        %v7342 = vld.sshfl [vmem:[#allocation1 + $0x10] sm:$0xff pattern:$0x75316420]
        %7349 = vst [vmem:[#allocation1] ss:$2 sm:$0xff] %v7253
        %s7350 = scalar_lea.vmem [#allocation1], 1
        %7351 = vst [vmem:[%s7350] ss:$2 sm:$0xff] %v7254
        %s7352 = scalar_lea.vmem [#allocation1], 16
        %7353 = vst [vmem:[%s7352] ss:$2 sm:$0xff] %v7255
        %s7354 = scalar_lea.vmem [#allocation1], 17
        %7355 = vst [vmem:[%s7354] ss:$2 sm:$0xff] %v7256
        %v7356 = vld.sshfl [vmem:[#allocation1] sm:$0xff pattern:$0x75316420]
        %v7357 = vld.sshfl [vmem:[#allocation1 + $0x10] sm:$0xff pattern:$0x75316420]
        %7364 = vst [vmem:[#allocation1] ss:$2 sm:$0xff] %v7258
        %s7365 = scalar_lea.vmem [#allocation1], 1
        %7366 = vst [vmem:[%s7365] ss:$2 sm:$0xff] %v7259
        %s7367 = scalar_lea.vmem [#allocation1], 16
        %7368 = vst [vmem:[%s7367] ss:$2 sm:$0xff] %v7260
        %s7369 = scalar_lea.vmem [#allocation1], 17
        %7370 = vst [vmem:[%s7369] ss:$2 sm:$0xff] %v7261
        %v7371 = vld.sshfl [vmem:[#allocation1] sm:$0xff pattern:$0x75316420]
        %v7372 = vld.sshfl [vmem:[#allocation1 + $0x10] sm:$0xff pattern:$0x75316420]
        %7379 = vst [vmem:[#allocation1] ss:$2 sm:$0xff] %v7262
        %s7380 = scalar_lea.vmem [#allocation1], 1
        %7381 = vst [vmem:[%s7380] ss:$2 sm:$0xff] %v7263
        %s7382 = scalar_lea.vmem [#allocation1], 16
        %7383 = vst [vmem:[%s7382] ss:$2 sm:$0xff] %v7264
        %s7384 = scalar_lea.vmem [#allocation1], 17
        %7385 = vst [vmem:[%s7384] ss:$2 sm:$0xff] %v7265
        %v7386 = vld.sshfl [vmem:[#allocation1] sm:$0xff pattern:$0x75316420]
        %v7387 = vld.sshfl [vmem:[#allocation1 + $0x10] sm:$0xff pattern:$0x75316420]
        %7394 = vst [vmem:[#allocation1] ss:$2 sm:$0xff] %v7266
        %s7395 = scalar_lea.vmem [#allocation1], 1
        %7396 = vst [vmem:[%s7395] ss:$2 sm:$0xff] %v7267
        %s7397 = scalar_lea.vmem [#allocation1], 16
        %7398 = vst [vmem:[%s7397] ss:$2 sm:$0xff] %v7268
        %s7399 = scalar_lea.vmem [#allocation1], 17
        %7400 = vst [vmem:[%s7399] ss:$2 sm:$0xff] %v7269
        %v7401 = vld.sshfl [vmem:[#allocation1] sm:$0xff pattern:$0x75316420]
        %v7402 = vld.sshfl [vmem:[#allocation1 + $0x10] sm:$0xff pattern:$0x75316420]
        %v7405 = vpack.c.bf16 %v7296, %v7281
        %v7406 = vpack.c.bf16 %v7326, %v7311
        %v7407 = vpack.c.bf16 %v7356, %v7341
        %v7408 = vpack.c.bf16 %v7386, %v7371
        %v7409 = vpack.c.bf16 %v7401, %v7401
        %v7410 = vpack.c.bf16 %v7297, %v7282
        %v7411 = vpack.c.bf16 %v7327, %v7312
        %v7412 = vpack.c.bf16 %v7357, %v7342
        %v7413 = vpack.c.bf16 %v7387, %v7372
        %v7414 = vpack.c.bf16 %v7402, %v7402
        %v7425 = vunpack.c.l.b16 %v7405
        %v7426 = vunpack.c.h.b16 %v7405
        %v7427 = vunpack.c.l.b16 %v7406
        %v7428 = vunpack.c.h.b16 %v7406
        %v7429 = vunpack.c.l.b16 %v7407
        %v7430 = vunpack.c.h.b16 %v7407
        %v7431 = vunpack.c.l.b16 %v7408
        %v7432 = vunpack.c.h.b16 %v7408
        %v7433 = vunpack.c.l.b16 %v7409
        %v7434 = vunpack.c.l.b16 %v7410
        %v7435 = vunpack.c.h.b16 %v7410
        %v7436 = vunpack.c.l.b16 %v7411
        %v7437 = vunpack.c.h.b16 %v7411
        %v7438 = vunpack.c.l.b16 %v7412
        %v7439 = vunpack.c.h.b16 %v7412
        %v7440 = vunpack.c.l.b16 %v7413
        %v7441 = vunpack.c.h.b16 %v7413
        %v7442 = vunpack.c.l.b16 %v7414
        %v7443 = vpack.c.b16 %v7434, %v7425
        %v7444 = vpack.c.b16 %v7435, %v7426
        %v7445 = vpack.c.b16 %v7436, %v7427
        %v7446 = vpack.c.b16 %v7437, %v7428
        %v7447 = vpack.c.b16 %v7438, %v7429
        %v7448 = vpack.c.b16 %v7439, %v7430
        %v7449 = vpack.c.b16 %v7440, %v7431
        %v7450 = vpack.c.b16 %v7441, %v7432
        %v7451 = vpack.c.b16 %v7442, %v7433
        %v7463 = vunpack.c.l.b16 %v7231
        %v7464 = vunpack.c.l.b16 %v7232
        %v7465 = vpack.c.b16 %v7464, %v7463
        %v7466 = vld [vmem:[%s11] sm:$0xf]
        %v7467 = vld [vmem:[%s11 + $0x4] sm:$0xf]
        %v7468 = vld [vmem:[%s11 + $0x8] sm:$0xf]
        %v7469 = vld [vmem:[%s11 + $0xc] sm:$0xf]
        %v7470 = vld [vmem:[%s11 + $0x10] sm:$0xf]
        %v7471 = vld [vmem:[%s11 + $0x14] sm:$0xf]
        %v7472 = vld [vmem:[%s11 + $0x18] sm:$0xf]
        %v7473 = vld [vmem:[%s11 + $0x1c] sm:$0xf]
        %v7474 = vld [vmem:[%s11 + $0x20] sm:$0xf]
        %v7475 = vld [vmem:[%s11 + $0x24] sm:$0xf]
        %v7476 = vld [vmem:[%s11 + $0x28] sm:$0xf]
        %v7477 = vld [vmem:[%s11 + $0x2c] sm:$0xf]
        %v7478 = vld [vmem:[%s11 + $0x30] sm:$0xf]
        %v7479 = vld [vmem:[%s11 + $0x34] sm:$0xf]
        %v7480 = vld [vmem:[%s11 + $0x38] sm:$0xf]
        %v7481 = vld [vmem:[%s11 + $0x3c] sm:$0xf]
        %v7482 = vld [vmem:[%s11 + $0x40] sm:$0xf]
        %v7483 = vld [vmem:[%s11 + $0x44] sm:$0xf]
        %v7484 = vld [vmem:[%s11 + $0x48] sm:$0xf]
        %v7485 = vld [vmem:[%s11 + $0x4c] sm:$0xf]
        %v7486 = vld [vmem:[%s11 + $0x50] sm:$0xf]
        %v7487 = vld [vmem:[%s11 + $0x54] sm:$0xf]
        %v7488 = vld [vmem:[%s11 + $0x58] sm:$0xf]
        %v7489 = vld [vmem:[%s11 + $0x5c] sm:$0xf]
        %v7490 = vld [vmem:[%s11 + $0x60] sm:$0xf]
        %v7491 = vld [vmem:[%s11 + $0x64] sm:$0xf]
        %v7492 = vld [vmem:[%s11 + $0x68] sm:$0xf]
        %v7493 = vld [vmem:[%s11 + $0x6c] sm:$0xf]
        %v7494 = vld [vmem:[%s11 + $0x70] sm:$0xf]
        %v7495 = vld [vmem:[%s11 + $0x74] sm:$0xf]
        %v7496 = vld [vmem:[%s11 + $0x78] sm:$0xf]
        %v7497 = vld [vmem:[%s11 + $0x7c] sm:$0xf]
        %v7498 = vld [vmem:[%s11 + $0x80] sm:$0xf]
        %v7499 = vld [vmem:[%s11 + $0x84] sm:$0xf]
        %v7500 = vld [vmem:[%s11 + $0x88] sm:$0xf]
        %v7501 = vld [vmem:[%s11 + $0x8c] sm:$0xf]
        %v7502 = vld [vmem:[%s11 + $0x90] sm:$0xf]
        %v7503 = vld [vmem:[%s11 + $0x94] sm:$0xf]
        %v7504 = vld [vmem:[%s11 + $0x98] sm:$0xf]
        %v7505 = vld [vmem:[%s11 + $0x9c] sm:$0xf]
        %v7506 = vld [vmem:[%s11 + $0xa0] sm:$0xf]
        %v7507 = vld [vmem:[%s11 + $0xa4] sm:$0xf]
        %v7508 = vld [vmem:[%s11 + $0xa8] sm:$0xf]
        %v7509 = vld [vmem:[%s11 + $0xac] sm:$0xf]
        %v7510 = vld [vmem:[%s11 + $0xb0] sm:$0xf]
        %v7511 = vld [vmem:[%s11 + $0xb4] sm:$0xf]
        %v7512 = vld [vmem:[%s11 + $0xb8] sm:$0xf]
        %v7513 = vld [vmem:[%s11 + $0xbc] sm:$0xf]
        %v7514 = vld [vmem:[%s11 + $0xc0] sm:$0xf]
        %v7515 = vld [vmem:[%s11 + $0xc4] sm:$0xf]
        %v7516 = vld [vmem:[%s11 + $0xc8] sm:$0xf]
        %v7517 = vld [vmem:[%s11 + $0xcc] sm:$0xf]
        %v7518 = vld [vmem:[%s11 + $0xd0] sm:$0xf]
        %v7519 = vld [vmem:[%s11 + $0xd4] sm:$0xf]
        %v7520 = vld [vmem:[%s11 + $0xd8] sm:$0xf]
        %v7521 = vld [vmem:[%s11 + $0xdc] sm:$0xf]
        %v7522 = vld [vmem:[%s11 + $0xe0] sm:$0xf]
        %v7523 = vld [vmem:[%s11 + $0xe4] sm:$0xf]
        %v7524 = vld [vmem:[%s11 + $0xe8] sm:$0xf]
        %v7525 = vld [vmem:[%s11 + $0xec] sm:$0xf]
        %v7526 = vld [vmem:[%s11 + $0xf0] sm:$0xf]
        %v7527 = vld [vmem:[%s11 + $0xf4] sm:$0xf]
        %v7528 = vld [vmem:[%s11 + $0xf8] sm:$0xf]
        %v7529 = vld [vmem:[%s11 + $0xfc] sm:$0xf]
        %v7530 = vld [vmem:[%s11 + $0x100] sm:$0xf]
        %v7531 = vld [vmem:[%s11 + $0x104] sm:$0xf]
        %v7532 = vld [vmem:[%s11 + $0x108] sm:$0xf]
        %v7533 = vld [vmem:[%s11 + $0x10c] sm:$0xf]
        %v7534 = vld [vmem:[%s11 + $0x110] sm:$0xf]
        %v7535 = vld [vmem:[%s11 + $0x114] sm:$0xf]
        %v7536 = vld [vmem:[%s11 + $0x118] sm:$0xf]
        %v7537 = vld [vmem:[%s11 + $0x11c] sm:$0xf]
        %v7538 = vld [vmem:[%s11 + $0x120] sm:$0xf]
        %v7539 = vld [vmem:[%s11 + $0x124] sm:$0xf]
        %v7540 = vld [vmem:[%s11 + $0x128] sm:$0xf]
        %v7541 = vld [vmem:[%s11 + $0x12c] sm:$0xf]
        %v7542 = vld [vmem:[%s11 + $0x130] sm:$0xf]
        %v7543 = vld [vmem:[%s11 + $0x134] sm:$0xf]
        %v7544 = vld [vmem:[%s11 + $0x138] sm:$0xf]
        %v7545 = vld [vmem:[%s11 + $0x13c] sm:$0xf]
        %v7546 = vld [vmem:[%s11 + $0x140] sm:$0xf]
        %v7547 = vld [vmem:[%s11 + $0x144] sm:$0xf]
        %v7548 = vld [vmem:[%s11 + $0x148] sm:$0xf]
        %v7549 = vld [vmem:[%s11 + $0x14c] sm:$0xf]
        %v7550 = vld [vmem:[%s11 + $0x150] sm:$0xf]
        %v7551 = vld [vmem:[%s11 + $0x154] sm:$0xf]
        %v7552 = vld [vmem:[%s11 + $0x158] sm:$0xf]
        %v7553 = vld [vmem:[%s11 + $0x15c] sm:$0xf]
        %v7554 = vld [vmem:[%s11 + $0x160] sm:$0xf]
        %v7555 = vld [vmem:[%s11 + $0x164] sm:$0xf]
        %v7556 = vld [vmem:[%s11 + $0x168] sm:$0xf]
        %v7557 = vld [vmem:[%s11 + $0x16c] sm:$0xf]
        %v7558 = vld [vmem:[%s11 + $0x170] sm:$0xf]
        %v7559 = vld [vmem:[%s11 + $0x174] sm:$0xf]
        %v7560 = vld [vmem:[%s11 + $0x178] sm:$0xf]
        %v7561 = vld [vmem:[%s11 + $0x17c] sm:$0xf]
        %v7562 = vld [vmem:[%s11 + $0x180] sm:$0xf]
        %v7563 = vld [vmem:[%s11 + $0x184] sm:$0xf]
        %v7564 = vld [vmem:[%s11 + $0x188] sm:$0xf]
        %v7565 = vld [vmem:[%s11 + $0x18c] sm:$0xf]
        %v7566 = vld [vmem:[%s11 + $0x190] sm:$0xf]
        %v7567 = vld [vmem:[%s11 + $0x194] sm:$0xf]
        %v7568 = vld [vmem:[%s11 + $0x198] sm:$0xf]
        %v7569 = vld [vmem:[%s11 + $0x19c] sm:$0xf]
        %v7570 = vld [vmem:[%s11 + $0x1a0] sm:$0xf]
        %v7571 = vld [vmem:[%s11 + $0x1a4] sm:$0xf]
        %v7572 = vld [vmem:[%s11 + $0x1a8] sm:$0xf]
        %v7573 = vld [vmem:[%s11 + $0x1ac] sm:$0xf]
        %v7574 = vld [vmem:[%s11 + $0x1b0] sm:$0xf]
        %v7575 = vld [vmem:[%s11 + $0x1b4] sm:$0xf]
        %v7576 = vld [vmem:[%s11 + $0x1b8] sm:$0xf]
        %v7577 = vld [vmem:[%s11 + $0x1bc] sm:$0xf]
        %v7578 = vld [vmem:[%s11 + $0x1c0] sm:$0xf]
        %v7579 = vld [vmem:[%s11 + $0x1c4] sm:$0xf]
        %v7580 = vld [vmem:[%s11 + $0x1c8] sm:$0xf]
        %v7581 = vld [vmem:[%s11 + $0x1cc] sm:$0xf]
        %v7582 = vld [vmem:[%s11 + $0x1d0] sm:$0xf]
        %v7583 = vld [vmem:[%s11 + $0x1d4] sm:$0xf]
        %v7584 = vld [vmem:[%s11 + $0x1d8] sm:$0xf]
        %v7585 = vld [vmem:[%s11 + $0x1dc] sm:$0xf]
        %v7586 = vld [vmem:[%s11 + $0x1e0] sm:$0xf]
        %v7587 = vld [vmem:[%s11 + $0x1e4] sm:$0xf]
        %v7588 = vld [vmem:[%s11 + $0x1e8] sm:$0xf]
        %v7589 = vld [vmem:[%s11 + $0x1ec] sm:$0xf]
        %v7590 = vld [vmem:[%s11 + $0x1f0] sm:$0xf]
        %v7591 = vld [vmem:[%s11 + $0x1f4] sm:$0xf]
        %v7592 = vld [vmem:[%s11 + $0x1f8] sm:$0xf]
        %v7593 = vld [vmem:[%s11 + $0x1fc] sm:$0xf]
        %v7594 = vld [vmem:[%s11 + $0x200] sm:$0xf]
        %v7595 = vld [vmem:[%s11 + $0x204] sm:$0xf]
        %v7596 = vld [vmem:[%s11 + $0x208] sm:$0xf]
        %v7597 = vld [vmem:[%s11 + $0x20c] sm:$0xf]
        %v7598 = vld [vmem:[%s11 + $0x210] sm:$0xf]
        %v7599 = vld [vmem:[%s11 + $0x214] sm:$0xf]
        %v7600 = vld [vmem:[%s11 + $0x218] sm:$0xf]
        %v7601 = vld [vmem:[%s11 + $0x21c] sm:$0xf]
        %v7602 = vld [vmem:[%s11 + $0x220] sm:$0xf]
        %v7603 = vld [vmem:[%s11 + $0x224] sm:$0xf]
        %v7604 = vld [vmem:[%s11 + $0x228] sm:$0xf]
        %v7605 = vld [vmem:[%s11 + $0x22c] sm:$0xf]
        %v7606 = vld [vmem:[%s11 + $0x230] sm:$0xf]
        %v7607 = vld [vmem:[%s11 + $0x234] sm:$0xf]
        %v7608 = vld [vmem:[%s11 + $0x238] sm:$0xf]
        %v7609 = vld [vmem:[%s11 + $0x23c] sm:$0xf]
        %v7610 = vld [vmem:[%s11 + $0x240] sm:$0xf]
        %v7611 = vld [vmem:[%s11 + $0x244] sm:$0xf]
        %v7612 = vld [vmem:[%s11 + $0x248] sm:$0xf]
        %v7613 = vld [vmem:[%s11 + $0x24c] sm:$0xf]
        %v7614 = vld [vmem:[%s11 + $0x250] sm:$0xf]
        %v7615 = vld [vmem:[%s11 + $0x254] sm:$0xf]
        %v7616 = vld [vmem:[%s11 + $0x258] sm:$0xf]
        %v7617 = vld [vmem:[%s11 + $0x25c] sm:$0xf]
        %v7618 = vld [vmem:[%s12] sm:$0x1]
        %v7620 = vperm.slane %v7618, 0
        %v7774 = vunpack.c.l.b16 %v7466
        %v7775 = vunpack.c.l.b16 %v7467
        %v7776 = vunpack.c.l.b16 %v7468
        %v7777 = vunpack.c.l.b16 %v7469
        %v7778 = vunpack.c.l.b16 %v7470
        %v7779 = vunpack.c.l.b16 %v7471
        %v7780 = vunpack.c.l.b16 %v7472
        %v7781 = vunpack.c.l.b16 %v7473
        %v7782 = vunpack.c.l.b16 %v7474
        %v7783 = vunpack.c.l.b16 %v7475
        %v7784 = vunpack.c.l.b16 %v7476
        %v7785 = vunpack.c.l.b16 %v7477
        %v7786 = vunpack.c.l.b16 %v7478
        %v7787 = vunpack.c.l.b16 %v7479
        %v7788 = vunpack.c.l.b16 %v7480
        %v7789 = vunpack.c.l.b16 %v7481
        %v7790 = vunpack.c.l.b16 %v7482
        %v7791 = vunpack.c.l.b16 %v7483
        %v7792 = vunpack.c.l.b16 %v7484
        %v7793 = vunpack.c.l.b16 %v7485
        %v7794 = vunpack.c.l.b16 %v7486
        %v7795 = vunpack.c.l.b16 %v7487
        %v7796 = vunpack.c.l.b16 %v7488
        %v7797 = vunpack.c.l.b16 %v7489
        %v7798 = vunpack.c.l.b16 %v7490
        %v7799 = vunpack.c.l.b16 %v7491
        %v7800 = vunpack.c.l.b16 %v7492
        %v7801 = vunpack.c.l.b16 %v7493
        %v7802 = vunpack.c.l.b16 %v7494
        %v7803 = vunpack.c.l.b16 %v7495
        %v7804 = vunpack.c.l.b16 %v7496
        %v7805 = vunpack.c.l.b16 %v7497
        %v7806 = vunpack.c.l.b16 %v7498
        %v7807 = vunpack.c.l.b16 %v7499
        %v7808 = vunpack.c.l.b16 %v7500
        %v7809 = vunpack.c.l.b16 %v7501
        %v7810 = vunpack.c.l.b16 %v7502
        %v7811 = vunpack.c.l.b16 %v7503
        %v7812 = vunpack.c.l.b16 %v7504
        %v7813 = vunpack.c.l.b16 %v7505
        %v7814 = vunpack.c.l.b16 %v7506
        %v7815 = vunpack.c.l.b16 %v7507
        %v7816 = vunpack.c.l.b16 %v7508
        %v7817 = vunpack.c.l.b16 %v7509
        %v7818 = vunpack.c.l.b16 %v7510
        %v7819 = vunpack.c.l.b16 %v7511
        %v7820 = vunpack.c.l.b16 %v7512
        %v7821 = vunpack.c.l.b16 %v7513
        %v7822 = vunpack.c.l.b16 %v7514
        %v7823 = vunpack.c.l.b16 %v7515
        %v7824 = vunpack.c.l.b16 %v7516
        %v7825 = vunpack.c.l.b16 %v7517
        %v7826 = vunpack.c.l.b16 %v7518
        %v7827 = vunpack.c.l.b16 %v7519
        %v7828 = vunpack.c.l.b16 %v7520
        %v7829 = vunpack.c.l.b16 %v7521
        %v7830 = vunpack.c.l.b16 %v7522
        %v7831 = vunpack.c.l.b16 %v7523
        %v7832 = vunpack.c.l.b16 %v7524
        %v7833 = vunpack.c.l.b16 %v7525
        %v7834 = vunpack.c.l.b16 %v7526
        %v7835 = vunpack.c.l.b16 %v7527
        %v7836 = vunpack.c.l.b16 %v7528
        %v7837 = vunpack.c.l.b16 %v7529
        %v7838 = vunpack.c.l.b16 %v7530
        %v7839 = vunpack.c.l.b16 %v7531
        %v7840 = vunpack.c.l.b16 %v7532
        %v7841 = vunpack.c.l.b16 %v7533
        %v7842 = vunpack.c.l.b16 %v7534
        %v7843 = vunpack.c.l.b16 %v7535
        %v7844 = vunpack.c.l.b16 %v7536
        %v7845 = vunpack.c.l.b16 %v7537
        %v7846 = vunpack.c.l.b16 %v7538
        %v7847 = vunpack.c.l.b16 %v7539
        %v7848 = vunpack.c.l.b16 %v7540
        %v7849 = vunpack.c.l.b16 %v7541
        %v7850 = vunpack.c.l.b16 %v7542
        %v7851 = vunpack.c.l.b16 %v7543
        %v7852 = vunpack.c.l.b16 %v7544
        %v7853 = vunpack.c.l.b16 %v7545
        %v7854 = vunpack.c.l.b16 %v7546
        %v7855 = vunpack.c.l.b16 %v7547
        %v7856 = vunpack.c.l.b16 %v7548
        %v7857 = vunpack.c.l.b16 %v7549
        %v7858 = vunpack.c.l.b16 %v7550
        %v7859 = vunpack.c.l.b16 %v7551
        %v7860 = vunpack.c.l.b16 %v7552
        %v7861 = vunpack.c.l.b16 %v7553
        %v7862 = vunpack.c.l.b16 %v7554
        %v7863 = vunpack.c.l.b16 %v7555
        %v7864 = vunpack.c.l.b16 %v7556
        %v7865 = vunpack.c.l.b16 %v7557
        %v7866 = vunpack.c.l.b16 %v7558
        %v7867 = vunpack.c.l.b16 %v7559
        %v7868 = vunpack.c.l.b16 %v7560
        %v7869 = vunpack.c.l.b16 %v7561
        %v7870 = vunpack.c.l.b16 %v7562
        %v7871 = vunpack.c.l.b16 %v7563
        %v7872 = vunpack.c.l.b16 %v7564
        %v7873 = vunpack.c.l.b16 %v7565
        %v7874 = vunpack.c.l.b16 %v7566
        %v7875 = vunpack.c.l.b16 %v7567
        %v7876 = vunpack.c.l.b16 %v7568
        %v7877 = vunpack.c.l.b16 %v7569
        %v7878 = vunpack.c.l.b16 %v7570
        %v7879 = vunpack.c.l.b16 %v7571
        %v7880 = vunpack.c.l.b16 %v7572
        %v7881 = vunpack.c.l.b16 %v7573
        %v7882 = vunpack.c.l.b16 %v7574
        %v7883 = vunpack.c.l.b16 %v7575
        %v7884 = vunpack.c.l.b16 %v7576
        %v7885 = vunpack.c.l.b16 %v7577
        %v7886 = vunpack.c.l.b16 %v7578
        %v7887 = vunpack.c.l.b16 %v7579
        %v7888 = vunpack.c.l.b16 %v7580
        %v7889 = vunpack.c.l.b16 %v7581
        %v7890 = vunpack.c.l.b16 %v7582
        %v7891 = vunpack.c.l.b16 %v7583
        %v7892 = vunpack.c.l.b16 %v7584
        %v7893 = vunpack.c.l.b16 %v7585
        %v7894 = vunpack.c.l.b16 %v7586
        %v7895 = vunpack.c.l.b16 %v7587
        %v7896 = vunpack.c.l.b16 %v7588
        %v7897 = vunpack.c.l.b16 %v7589
        %v7898 = vunpack.c.l.b16 %v7590
        %v7899 = vunpack.c.l.b16 %v7591
        %v7900 = vunpack.c.l.b16 %v7592
        %v7901 = vunpack.c.l.b16 %v7593
        %v7902 = vunpack.c.l.b16 %v7594
        %v7903 = vunpack.c.l.b16 %v7595
        %v7904 = vunpack.c.l.b16 %v7596
        %v7905 = vunpack.c.l.b16 %v7597
        %v7906 = vunpack.c.l.b16 %v7598
        %v7907 = vunpack.c.l.b16 %v7599
        %v7908 = vunpack.c.l.b16 %v7600
        %v7909 = vunpack.c.l.b16 %v7601
        %v7910 = vunpack.c.l.b16 %v7602
        %v7911 = vunpack.c.l.b16 %v7603
        %v7912 = vunpack.c.l.b16 %v7604
        %v7913 = vunpack.c.l.b16 %v7605
        %v7914 = vunpack.c.l.b16 %v7606
        %v7915 = vunpack.c.l.b16 %v7607
        %v7916 = vunpack.c.l.b16 %v7608
        %v7917 = vunpack.c.l.b16 %v7609
        %v7918 = vunpack.c.l.b16 %v7610
        %v7919 = vunpack.c.l.b16 %v7611
        %v7920 = vunpack.c.l.b16 %v7612
        %v7921 = vunpack.c.l.b16 %v7613
        %v7922 = vunpack.c.l.b16 %v7614
        %v7923 = vunpack.c.l.b16 %v7615
        %v7924 = vunpack.c.l.b16 %v7616
        %v7925 = vunpack.c.l.b16 %v7617
        %v7926 = vpack.c.b16 %v7775, %v7774
        %v7927 = vpack.c.b16 %v7777, %v7776
        %v7928 = vpack.c.b16 %v7779, %v7778
        %v7929 = vpack.c.b16 %v7781, %v7780
        %v7930 = vpack.c.b16 %v7783, %v7782
        %v7931 = vpack.c.b16 %v7785, %v7784
        %v7932 = vpack.c.b16 %v7787, %v7786
        %v7933 = vpack.c.b16 %v7789, %v7788
        %v7934 = vpack.c.b16 %v7791, %v7790
        %v7935 = vpack.c.b16 %v7793, %v7792
        %v7936 = vpack.c.b16 %v7795, %v7794
        %v7937 = vpack.c.b16 %v7797, %v7796
        %v7938 = vpack.c.b16 %v7799, %v7798
        %v7939 = vpack.c.b16 %v7801, %v7800
        %v7940 = vpack.c.b16 %v7803, %v7802
        %v7941 = vpack.c.b16 %v7805, %v7804
        %v7942 = vpack.c.b16 %v7807, %v7806
        %v7943 = vpack.c.b16 %v7809, %v7808
        %v7944 = vpack.c.b16 %v7811, %v7810
        %v7945 = vpack.c.b16 %v7813, %v7812
        %v7946 = vpack.c.b16 %v7815, %v7814
        %v7947 = vpack.c.b16 %v7817, %v7816
        %v7948 = vpack.c.b16 %v7819, %v7818
        %v7949 = vpack.c.b16 %v7821, %v7820
        %v7950 = vpack.c.b16 %v7823, %v7822
        %v7951 = vpack.c.b16 %v7825, %v7824
        %v7952 = vpack.c.b16 %v7827, %v7826
        %v7953 = vpack.c.b16 %v7829, %v7828
        %v7954 = vpack.c.b16 %v7831, %v7830
        %v7955 = vpack.c.b16 %v7833, %v7832
        %v7956 = vpack.c.b16 %v7835, %v7834
        %v7957 = vpack.c.b16 %v7837, %v7836
        %v7958 = vpack.c.b16 %v7839, %v7838
        %v7959 = vpack.c.b16 %v7841, %v7840
        %v7960 = vpack.c.b16 %v7843, %v7842
        %v7961 = vpack.c.b16 %v7845, %v7844
        %v7962 = vpack.c.b16 %v7847, %v7846
        %v7963 = vpack.c.b16 %v7849, %v7848
        %v7964 = vpack.c.b16 %v7851, %v7850
        %v7965 = vpack.c.b16 %v7853, %v7852
        %v7966 = vpack.c.b16 %v7855, %v7854
        %v7967 = vpack.c.b16 %v7857, %v7856
        %v7968 = vpack.c.b16 %v7859, %v7858
        %v7969 = vpack.c.b16 %v7861, %v7860
        %v7970 = vpack.c.b16 %v7863, %v7862
        %v7971 = vpack.c.b16 %v7865, %v7864
        %v7972 = vpack.c.b16 %v7867, %v7866
        %v7973 = vpack.c.b16 %v7869, %v7868
        %v7974 = vpack.c.b16 %v7871, %v7870
        %v7975 = vpack.c.b16 %v7873, %v7872
        %v7976 = vpack.c.b16 %v7875, %v7874
        %v7977 = vpack.c.b16 %v7877, %v7876
        %v7978 = vpack.c.b16 %v7879, %v7878
        %v7979 = vpack.c.b16 %v7881, %v7880
        %v7980 = vpack.c.b16 %v7883, %v7882
        %v7981 = vpack.c.b16 %v7885, %v7884
        %v7982 = vpack.c.b16 %v7887, %v7886
        %v7983 = vpack.c.b16 %v7889, %v7888
        %v7984 = vpack.c.b16 %v7891, %v7890
        %v7985 = vpack.c.b16 %v7893, %v7892
        %v7986 = vpack.c.b16 %v7895, %v7894
        %v7987 = vpack.c.b16 %v7897, %v7896
        %v7988 = vpack.c.b16 %v7899, %v7898
        %v7989 = vpack.c.b16 %v7901, %v7900
        %v7990 = vpack.c.b16 %v7903, %v7902
        %v7991 = vpack.c.b16 %v7905, %v7904
        %v7992 = vpack.c.b16 %v7907, %v7906
        %v7993 = vpack.c.b16 %v7909, %v7908
        %v7994 = vpack.c.b16 %v7911, %v7910
        %v7995 = vpack.c.b16 %v7913, %v7912
        %v7996 = vpack.c.b16 %v7915, %v7914
        %v7997 = vpack.c.b16 %v7917, %v7916
        %v7998 = vpack.c.b16 %v7919, %v7918
        %v7999 = vpack.c.b16 %v7921, %v7920
        %v8000 = vpack.c.b16 %v7923, %v7922
        %v8001 = vpack.c.b16 %v7925, %v7924
        %v8079 = vsel %vm2249, %v7465, 0
        %8081 = vmatpush.bf16.msra.mxu0 %v7933
        %8082 = vmatpush.bf16.msra.mxu0 %v7932
        %8083 = vmatpush.bf16.msra.mxu0 %v7931
        %8084 = vmatpush.bf16.msra.mxu0 %v7930
        %8085 = vmatpush.bf16.msra.mxu0 %v7929
        %8086 = vmatpush.bf16.msra.mxu0 %v7928
        %8087 = vmatpush.bf16.msra.mxu0 %v7927
        %8088 = vmatpush.bf16.msra.mxu0 %v7926
        %8089 = vmatmul.bf16.gmra.mxu0 %v7443
        %v8090 = vpop.f32.mrf.mxu0
        %v8091 = vadd.f32 %v7620, %v8090
        %v8092 = vpop.f32.mrf.mxu0
        %v8093 = vadd.f32 %v7620, %v8092
        %8094 = vdwg.mxu0
        %8095 = vmatpush.bf16.msra.mxu0 %v7941
        %8096 = vmatpush.bf16.msra.mxu0 %v7940
        %8097 = vmatpush.bf16.msra.mxu0 %v7939
        %8098 = vmatpush.bf16.msra.mxu0 %v7938
        %8099 = vmatpush.bf16.msra.mxu0 %v7937
        %8100 = vmatpush.bf16.msra.mxu0 %v7936
        %8101 = vmatpush.bf16.msra.mxu0 %v7935
        %8102 = vmatpush.bf16.msra.mxu0 %v7934
        %8103 = vmatmul.bf16.gmra.mxu0 %v7444
        %v8104 = vpop.f32.mrf.mxu0
        %v8105 = vadd.f32 %v8091, %v8104
        %v8106 = vpop.f32.mrf.mxu0
        %v8107 = vadd.f32 %v8093, %v8106
        %8108 = vdwg.mxu0
        %8109 = vmatpush.bf16.msra.mxu0 %v7949
        %8110 = vmatpush.bf16.msra.mxu0 %v7948
        %8111 = vmatpush.bf16.msra.mxu0 %v7947
        %8112 = vmatpush.bf16.msra.mxu0 %v7946
        %8113 = vmatpush.bf16.msra.mxu0 %v7945
        %8114 = vmatpush.bf16.msra.mxu0 %v7944
        %8115 = vmatpush.bf16.msra.mxu0 %v7943
        %8116 = vmatpush.bf16.msra.mxu0 %v7942
        %8117 = vmatmul.bf16.gmra.mxu0 %v7445
        %v8118 = vpop.f32.mrf.mxu0
        %v8119 = vadd.f32 %v8105, %v8118
        %v8120 = vpop.f32.mrf.mxu0
        %v8121 = vadd.f32 %v8107, %v8120
        %8122 = vdwg.mxu0
        %8123 = vmatpush.bf16.msra.mxu0 %v7957
        %8124 = vmatpush.bf16.msra.mxu0 %v7956
        %8125 = vmatpush.bf16.msra.mxu0 %v7955
        %8126 = vmatpush.bf16.msra.mxu0 %v7954
        %8127 = vmatpush.bf16.msra.mxu0 %v7953
        %8128 = vmatpush.bf16.msra.mxu0 %v7952
        %8129 = vmatpush.bf16.msra.mxu0 %v7951
        %8130 = vmatpush.bf16.msra.mxu0 %v7950
        %8131 = vmatmul.bf16.gmra.mxu0 %v7446
        %v8132 = vpop.f32.mrf.mxu0
        %v8133 = vadd.f32 %v8119, %v8132
        %v8134 = vpop.f32.mrf.mxu0
        %v8135 = vadd.f32 %v8121, %v8134
        %8136 = vdwg.mxu0
        %8137 = vmatpush.bf16.msra.mxu0 %v7965
        %8138 = vmatpush.bf16.msra.mxu0 %v7964
        %8139 = vmatpush.bf16.msra.mxu0 %v7963
        %8140 = vmatpush.bf16.msra.mxu0 %v7962
        %8141 = vmatpush.bf16.msra.mxu0 %v7961
        %8142 = vmatpush.bf16.msra.mxu0 %v7960
        %8143 = vmatpush.bf16.msra.mxu0 %v7959
        %8144 = vmatpush.bf16.msra.mxu0 %v7958
        %8145 = vmatmul.bf16.gmra.mxu0 %v7447
        %v8146 = vpop.f32.mrf.mxu0
        %v8147 = vadd.f32 %v8133, %v8146
        %v8148 = vpop.f32.mrf.mxu0
        %v8149 = vadd.f32 %v8135, %v8148
        %8150 = vdwg.mxu0
        %8151 = vmatpush.bf16.msra.mxu0 %v7973
        %8152 = vmatpush.bf16.msra.mxu0 %v7972
        %8153 = vmatpush.bf16.msra.mxu0 %v7971
        %8154 = vmatpush.bf16.msra.mxu0 %v7970
        %8155 = vmatpush.bf16.msra.mxu0 %v7969
        %8156 = vmatpush.bf16.msra.mxu0 %v7968
        %8157 = vmatpush.bf16.msra.mxu0 %v7967
        %8158 = vmatpush.bf16.msra.mxu0 %v7966
        %8159 = vmatmul.bf16.gmra.mxu0 %v7448
        %v8160 = vpop.f32.mrf.mxu0
        %v8161 = vadd.f32 %v8147, %v8160
        %v8162 = vpop.f32.mrf.mxu0
        %v8163 = vadd.f32 %v8149, %v8162
        %8164 = vdwg.mxu0
        %8165 = vmatpush.bf16.msra.mxu0 %v7981
        %8166 = vmatpush.bf16.msra.mxu0 %v7980
        %8167 = vmatpush.bf16.msra.mxu0 %v7979
        %8168 = vmatpush.bf16.msra.mxu0 %v7978
        %8169 = vmatpush.bf16.msra.mxu0 %v7977
        %8170 = vmatpush.bf16.msra.mxu0 %v7976
        %8171 = vmatpush.bf16.msra.mxu0 %v7975
        %8172 = vmatpush.bf16.msra.mxu0 %v7974
        %8173 = vmatmul.bf16.gmra.mxu0 %v7449
        %v8174 = vpop.f32.mrf.mxu0
        %v8175 = vadd.f32 %v8161, %v8174
        %v8176 = vpop.f32.mrf.mxu0
        %v8177 = vadd.f32 %v8163, %v8176
        %8178 = vdwg.mxu0
        %8179 = vmatpush.bf16.msra.mxu0 %v7989
        %8180 = vmatpush.bf16.msra.mxu0 %v7988
        %8181 = vmatpush.bf16.msra.mxu0 %v7987
        %8182 = vmatpush.bf16.msra.mxu0 %v7986
        %8183 = vmatpush.bf16.msra.mxu0 %v7985
        %8184 = vmatpush.bf16.msra.mxu0 %v7984
        %8185 = vmatpush.bf16.msra.mxu0 %v7983
        %8186 = vmatpush.bf16.msra.mxu0 %v7982
        %8187 = vmatmul.bf16.gmra.mxu0 %v7450
        %v8188 = vpop.f32.mrf.mxu0
        %v8189 = vadd.f32 %v8175, %v8188
        %v8190 = vpop.f32.mrf.mxu0
        %v8191 = vadd.f32 %v8177, %v8190
        %8192 = vdwg.mxu0
        %8193 = vmatpush.bf16.msra.mxu0 %v7997
        %8194 = vmatpush.bf16.msra.mxu0 %v7996
        %8195 = vmatpush.bf16.msra.mxu0 %v7995
        %8196 = vmatpush.bf16.msra.mxu0 %v7994
        %8197 = vmatpush.bf16.msra.mxu0 %v7993
        %8198 = vmatpush.bf16.msra.mxu0 %v7992
        %8199 = vmatpush.bf16.msra.mxu0 %v7991
        %8200 = vmatpush.bf16.msra.mxu0 %v7990
        %8201 = vmatmul.bf16.gmra.mxu0 %v7451
        %v8202 = vpop.f32.mrf.mxu0
        %v8203 = vadd.f32 %v8189, %v8202
        %v8204 = vpop.f32.mrf.mxu0
        %v8205 = vadd.f32 %v8191, %v8204
        %8206 = vdwg.mxu0
        %8207 = vmatpush.bf16.msra.mxu0 0
        %8208 = vmatpush.bf16.msra.mxu0 0
        %8209 = vmatpush.bf16.msra.mxu0 0
        %8210 = vmatpush.bf16.msra.mxu0 0
        %8211 = vmatpush.bf16.msra.mxu0 %v8001
        %8212 = vmatpush.bf16.msra.mxu0 %v8000
        %8213 = vmatpush.bf16.msra.mxu0 %v7999
        %8214 = vmatpush.bf16.msra.mxu0 %v7998
        %8215 = vmatmul.bf16.gmra.mxu0 %v8079
        %v8216 = vpop.f32.mrf.mxu0
        %v8217 = vadd.f32 %v8203, %v8216
        %v8218 = vpop.f32.mrf.mxu0
        %v8219 = vadd.f32 %v8205, %v8218
        %8220 = vdwg.mxu0
        %v8221 = vmax.f32 %v8217, 0.0
        %v8222 = vmax.f32 %v8219, 0.0
        %v8225 = vrot.slane %v8221, 2
        %v8226 = vrot.slane %v8221, 4
        %v8227 = vrot.slane %v8221, 6
        %v8228 = vrot.slane %v8222, 2
        %v8229 = vrot.slane %v8222, 4
        %v8230 = vrot.slane %v8222, 6
        %v8237 = vsel %vm2981, %v8221, -inf
        %v8238 = vrot.slane %v8237, 4
        %v8239 = vmax.f32 %v8237, %v8238
        %v8240 = vrot.slane %v8239, 2
        %v8241 = vmax.f32 %v8239, %v8240
        %v8242 = vrot.slane %v8241, 1
        %v8243 = vmax.f32 %v8241, %v8242
        %v8244 = vsel %vm2981, %v8225, -inf
        %v8245 = vrot.slane %v8244, 4
        %v8246 = vmax.f32 %v8244, %v8245
        %v8247 = vrot.slane %v8246, 2
        %v8248 = vmax.f32 %v8246, %v8247
        %v8249 = vrot.slane %v8248, 1
        %v8250 = vmax.f32 %v8248, %v8249
        %v8251 = vsel %vm2981, %v8226, -inf
        %v8252 = vrot.slane %v8251, 4
        %v8253 = vmax.f32 %v8251, %v8252
        %v8254 = vrot.slane %v8253, 2
        %v8255 = vmax.f32 %v8253, %v8254
        %v8256 = vrot.slane %v8255, 1
        %v8257 = vmax.f32 %v8255, %v8256
        %v8258 = vsel %vm2981, %v8227, -inf
        %v8259 = vrot.slane %v8258, 4
        %v8260 = vmax.f32 %v8258, %v8259
        %v8261 = vrot.slane %v8260, 2
        %v8262 = vmax.f32 %v8260, %v8261
        %v8263 = vrot.slane %v8262, 1
        %v8264 = vmax.f32 %v8262, %v8263
        %v8265 = vsel %vm2981, %v8222, -inf
        %v8266 = vrot.slane %v8265, 4
        %v8267 = vmax.f32 %v8265, %v8266
        %v8268 = vrot.slane %v8267, 2
        %v8269 = vmax.f32 %v8267, %v8268
        %v8270 = vrot.slane %v8269, 1
        %v8271 = vmax.f32 %v8269, %v8270
        %v8272 = vsel %vm2981, %v8228, -inf
        %v8273 = vrot.slane %v8272, 4
        %v8274 = vmax.f32 %v8272, %v8273
        %v8275 = vrot.slane %v8274, 2
        %v8276 = vmax.f32 %v8274, %v8275
        %v8277 = vrot.slane %v8276, 1
        %v8278 = vmax.f32 %v8276, %v8277
        %v8279 = vsel %vm2981, %v8229, -inf
        %v8280 = vrot.slane %v8279, 4
        %v8281 = vmax.f32 %v8279, %v8280
        %v8282 = vrot.slane %v8281, 2
        %v8283 = vmax.f32 %v8281, %v8282
        %v8284 = vrot.slane %v8283, 1
        %v8285 = vmax.f32 %v8283, %v8284
        %v8286 = vsel %vm2981, %v8230, -inf
        %v8287 = vrot.slane %v8286, 4
        %v8288 = vmax.f32 %v8286, %v8287
        %v8289 = vrot.slane %v8288, 2
        %v8290 = vmax.f32 %v8288, %v8289
        %v8291 = vrot.slane %v8290, 1
        %v8292 = vmax.f32 %v8290, %v8291
        %v8293 = vmax.f32 %v8243, %v8257
        %v8294 = vmax.f32 %v8250, %v8264
        %v8295 = vmax.f32 %v8271, %v8285
        %v8296 = vmax.f32 %v8278, %v8292
        %8297 = vst [vmem:[#allocation7] sm:$0xf] 0.0
        %8298 = vst [vmem:[#allocation7 + $0x4] sm:$0xf] 0.0
        %8299 = vst [vmem:[#allocation7 + $0x8] sm:$0xf] 0.0
        %8300 = vst [vmem:[#allocation7 + $0xc] sm:$0xf] 0.0
        %v8305 = vsel %vm4682, %v8294, %v8293
        %v8306 = vsel %vm4682, %v8296, %v8295
        %s8309 = scalar_lea.vmem [#allocation7], 4
        %8310 = vst [vmem:[%s8309 + $0x1] sm:$0x3] %v8305
        %8311 = vst [vmem:[%s8309 + $0x5] sm:$0x3] %v8306
        %v8312 = vld [vmem:[#allocation7] sm:$0x3]
        %v8313 = vld [vmem:[#allocation7 + $0x4] sm:$0x3]
        %v8314 = vld [vmem:[#allocation7 + $0x1] sm:$0x3]
        %v8315 = vld [vmem:[#allocation7 + $0x5] sm:$0x3]
        %v8316 = vld [vmem:[#allocation7 + $0x2] sm:$0x3]
        %v8317 = vld [vmem:[#allocation7 + $0x6] sm:$0x3]
        %v8318 = vld [vmem:[%s8309] sm:$0x3]
        %v8319 = vld [vmem:[%s8309 + $0x4] sm:$0x3]
        %v8320 = vld [vmem:[%s8309 + $0x1] sm:$0x3]
        %v8321 = vld [vmem:[%s8309 + $0x5] sm:$0x3]
        %v8322 = vld [vmem:[%s8309 + $0x2] sm:$0x3]
        %v8323 = vld [vmem:[%s8309 + $0x6] sm:$0x3]
        %s8324 = scalar_lea.vmem [#allocation7], 8
        %v8325 = vld [vmem:[%s8324] sm:$0x3]
        %v8326 = vld [vmem:[%s8324 + $0x4] sm:$0x3]
        %v8327 = vld [vmem:[%s8324 + $0x1] sm:$0x3]
        %v8328 = vld [vmem:[%s8324 + $0x5] sm:$0x3]
        %v8329 = vld [vmem:[%s8324 + $0x2] sm:$0x3]
        %v8330 = vld [vmem:[%s8324 + $0x6] sm:$0x3]
        %8333 = vst [vmem:[#allocation1] ss:$4 sm:$0xff] %v8312
        %s8334 = scalar_lea.vmem [#allocation1], 1
        %8335 = vst [vmem:[%s8334] ss:$4 sm:$0xff] %v8313
        %v8336 = vld.sshfl [vmem:[#allocation1] sm:$0xff pattern:$0x73625140]
        %8340 = vst [vmem:[#allocation1] ss:$4 sm:$0xff] %v8314
        %s8341 = scalar_lea.vmem [#allocation1], 1
        %8342 = vst [vmem:[%s8341] ss:$4 sm:$0xff] %v8315
        %v8343 = vld.sshfl [vmem:[#allocation1] sm:$0xff pattern:$0x73625140]
        %8347 = vst [vmem:[#allocation1] ss:$4 sm:$0xff] %v8316
        %s8348 = scalar_lea.vmem [#allocation1], 1
        %8349 = vst [vmem:[%s8348] ss:$4 sm:$0xff] %v8317
        %v8350 = vld.sshfl [vmem:[#allocation1] sm:$0xff pattern:$0x73625140]
        %8354 = vst [vmem:[#allocation1] ss:$4 sm:$0xff] %v8318
        %s8355 = scalar_lea.vmem [#allocation1], 1
        %8356 = vst [vmem:[%s8355] ss:$4 sm:$0xff] %v8319
        %v8357 = vld.sshfl [vmem:[#allocation1] sm:$0xff pattern:$0x73625140]
        %8361 = vst [vmem:[#allocation1] ss:$4 sm:$0xff] %v8320
        %s8362 = scalar_lea.vmem [#allocation1], 1
        %8363 = vst [vmem:[%s8362] ss:$4 sm:$0xff] %v8321
        %v8364 = vld.sshfl [vmem:[#allocation1] sm:$0xff pattern:$0x73625140]
        %8368 = vst [vmem:[#allocation1] ss:$4 sm:$0xff] %v8322
        %s8369 = scalar_lea.vmem [#allocation1], 1
        %8370 = vst [vmem:[%s8369] ss:$4 sm:$0xff] %v8323
        %v8371 = vld.sshfl [vmem:[#allocation1] sm:$0xff pattern:$0x73625140]
        %8375 = vst [vmem:[#allocation1] ss:$4 sm:$0xff] %v8325
        %s8376 = scalar_lea.vmem [#allocation1], 1
        %8377 = vst [vmem:[%s8376] ss:$4 sm:$0xff] %v8326
        %v8378 = vld.sshfl [vmem:[#allocation1] sm:$0xff pattern:$0x73625140]
        %8382 = vst [vmem:[#allocation1] ss:$4 sm:$0xff] %v8327
        %s8383 = scalar_lea.vmem [#allocation1], 1
        %8384 = vst [vmem:[%s8383] ss:$4 sm:$0xff] %v8328
        %v8385 = vld.sshfl [vmem:[#allocation1] sm:$0xff pattern:$0x73625140]
        %8389 = vst [vmem:[#allocation1] ss:$4 sm:$0xff] %v8329
        %s8390 = scalar_lea.vmem [#allocation1], 1
        %8391 = vst [vmem:[%s8390] ss:$4 sm:$0xff] %v8330
        %v8392 = vld.sshfl [vmem:[#allocation1] sm:$0xff pattern:$0x73625140]
        %v8394 = vpack.c.bf16 %v8336, %v8336
        %v8395 = vpack.c.bf16 %v8343, %v8343
        %v8396 = vpack.c.bf16 %v8350, %v8350
        %v8397 = vpack.c.bf16 %v8357, %v8357
        %v8398 = vpack.c.bf16 %v8364, %v8364
        %v8399 = vpack.c.bf16 %v8371, %v8371
        %v8400 = vpack.c.bf16 %v8378, %v8378
        %v8401 = vpack.c.bf16 %v8385, %v8385
        %v8402 = vpack.c.bf16 %v8392, %v8392
        %v8403 = vld [vmem:[%s13] sm:$0xf]
        %v8404 = vld [vmem:[%s13 + $0x4] sm:$0xf]
        %v8405 = vld [vmem:[%s13 + $0x8] sm:$0xf]
        %v8406 = vld [vmem:[%s13 + $0xc] sm:$0xf]
        %v8407 = vld [vmem:[%s13 + $0x10] sm:$0xf]
        %v8408 = vld [vmem:[%s13 + $0x14] sm:$0xf]
        %v8409 = vld [vmem:[%s13 + $0x18] sm:$0xf]
        %v8410 = vld [vmem:[%s13 + $0x1c] sm:$0xf]
        %v8411 = vld [vmem:[%s13 + $0x20] sm:$0xf]
        %v8412 = vld [vmem:[%s13 + $0x24] sm:$0xf]
        %v8413 = vld [vmem:[%s13 + $0x28] sm:$0xf]
        %v8414 = vld [vmem:[%s13 + $0x2c] sm:$0xf]
        %v8415 = vld [vmem:[%s13 + $0x30] sm:$0xf]
        %v8416 = vld [vmem:[%s13 + $0x34] sm:$0xf]
        %v8417 = vld [vmem:[%s13 + $0x38] sm:$0xf]
        %v8418 = vld [vmem:[%s13 + $0x3c] sm:$0xf]
        %v8419 = vld [vmem:[%s13 + $0x40] sm:$0xf]
        %v8420 = vld [vmem:[%s13 + $0x44] sm:$0xf]
        %v8421 = vld [vmem:[%s13 + $0x48] sm:$0xf]
        %v8422 = vld [vmem:[%s13 + $0x4c] sm:$0xf]
        %v8423 = vld [vmem:[%s13 + $0x50] sm:$0xf]
        %v8424 = vld [vmem:[%s13 + $0x54] sm:$0xf]
        %v8425 = vld [vmem:[%s13 + $0x58] sm:$0xf]
        %v8426 = vld [vmem:[%s13 + $0x5c] sm:$0xf]
        %v8427 = vld [vmem:[%s13 + $0x60] sm:$0xf]
        %v8428 = vld [vmem:[%s13 + $0x64] sm:$0xf]
        %v8429 = vld [vmem:[%s13 + $0x68] sm:$0xf]
        %v8430 = vld [vmem:[%s13 + $0x6c] sm:$0xf]
        %v8431 = vld [vmem:[%s13 + $0x70] sm:$0xf]
        %v8432 = vld [vmem:[%s13 + $0x74] sm:$0xf]
        %v8433 = vld [vmem:[%s13 + $0x78] sm:$0xf]
        %v8434 = vld [vmem:[%s13 + $0x7c] sm:$0xf]
        %v8435 = vld [vmem:[%s13 + $0x80] sm:$0xf]
        %v8436 = vld [vmem:[%s13 + $0x84] sm:$0xf]
        %v8437 = vld [vmem:[%s13 + $0x88] sm:$0xf]
        %v8438 = vld [vmem:[%s13 + $0x8c] sm:$0xf]
        %v8439 = vld [vmem:[%s13 + $0x90] sm:$0xf]
        %v8440 = vld [vmem:[%s13 + $0x94] sm:$0xf]
        %v8441 = vld [vmem:[%s13 + $0x98] sm:$0xf]
        %v8442 = vld [vmem:[%s13 + $0x9c] sm:$0xf]
        %v8443 = vld [vmem:[%s13 + $0xa0] sm:$0xf]
        %v8444 = vld [vmem:[%s13 + $0xa4] sm:$0xf]
        %v8445 = vld [vmem:[%s13 + $0xa8] sm:$0xf]
        %v8446 = vld [vmem:[%s13 + $0xac] sm:$0xf]
        %v8447 = vld [vmem:[%s13 + $0xb0] sm:$0xf]
        %v8448 = vld [vmem:[%s13 + $0xb4] sm:$0xf]
        %v8449 = vld [vmem:[%s13 + $0xb8] sm:$0xf]
        %v8450 = vld [vmem:[%s13 + $0xbc] sm:$0xf]
        %v8451 = vld [vmem:[%s13 + $0xc0] sm:$0xf]
        %v8452 = vld [vmem:[%s13 + $0xc4] sm:$0xf]
        %v8453 = vld [vmem:[%s13 + $0xc8] sm:$0xf]
        %v8454 = vld [vmem:[%s13 + $0xcc] sm:$0xf]
        %v8455 = vld [vmem:[%s13 + $0xd0] sm:$0xf]
        %v8456 = vld [vmem:[%s13 + $0xd4] sm:$0xf]
        %v8457 = vld [vmem:[%s13 + $0xd8] sm:$0xf]
        %v8458 = vld [vmem:[%s13 + $0xdc] sm:$0xf]
        %v8459 = vld [vmem:[%s13 + $0xe0] sm:$0xf]
        %v8460 = vld [vmem:[%s13 + $0xe4] sm:$0xf]
        %v8461 = vld [vmem:[%s13 + $0xe8] sm:$0xf]
        %v8462 = vld [vmem:[%s13 + $0xec] sm:$0xf]
        %v8463 = vld [vmem:[%s13 + $0xf0] sm:$0xf]
        %v8464 = vld [vmem:[%s13 + $0xf4] sm:$0xf]
        %v8465 = vld [vmem:[%s13 + $0xf8] sm:$0xf]
        %v8466 = vld [vmem:[%s13 + $0xfc] sm:$0xf]
        %v8467 = vld [vmem:[%s13 + $0x100] sm:$0xf]
        %v8468 = vld [vmem:[%s13 + $0x104] sm:$0xf]
        %v8469 = vld [vmem:[%s13 + $0x108] sm:$0xf]
        %v8470 = vld [vmem:[%s13 + $0x10c] sm:$0xf]
        %v8471 = vld [vmem:[%s13 + $0x110] sm:$0xf]
        %v8472 = vld [vmem:[%s13 + $0x114] sm:$0xf]
        %v8473 = vld [vmem:[%s13 + $0x118] sm:$0xf]
        %v8474 = vld [vmem:[%s13 + $0x11c] sm:$0xf]
        %v8475 = vld [vmem:[%s13 + $0x120] sm:$0xf]
        %v8476 = vld [vmem:[%s13 + $0x124] sm:$0xf]
        %v8477 = vld [vmem:[%s13 + $0x128] sm:$0xf]
        %v8478 = vld [vmem:[%s13 + $0x12c] sm:$0xf]
        %v8479 = vld [vmem:[%s13 + $0x130] sm:$0xf]
        %v8480 = vld [vmem:[%s13 + $0x134] sm:$0xf]
        %v8481 = vld [vmem:[%s13 + $0x138] sm:$0xf]
        %v8482 = vld [vmem:[%s13 + $0x13c] sm:$0xf]
        %v8483 = vld [vmem:[%s13 + $0x140] sm:$0xf]
        %v8484 = vld [vmem:[%s13 + $0x144] sm:$0xf]
        %v8485 = vld [vmem:[%s13 + $0x148] sm:$0xf]
        %v8486 = vld [vmem:[%s13 + $0x14c] sm:$0xf]
        %v8487 = vld [vmem:[%s13 + $0x150] sm:$0xf]
        %v8488 = vld [vmem:[%s13 + $0x154] sm:$0xf]
        %v8489 = vld [vmem:[%s13 + $0x158] sm:$0xf]
        %v8490 = vld [vmem:[%s13 + $0x15c] sm:$0xf]
        %v8491 = vld [vmem:[%s13 + $0x160] sm:$0xf]
        %v8492 = vld [vmem:[%s13 + $0x164] sm:$0xf]
        %v8493 = vld [vmem:[%s13 + $0x168] sm:$0xf]
        %v8494 = vld [vmem:[%s13 + $0x16c] sm:$0xf]
        %v8495 = vld [vmem:[%s13 + $0x170] sm:$0xf]
        %v8496 = vld [vmem:[%s13 + $0x174] sm:$0xf]
        %v8497 = vld [vmem:[%s13 + $0x178] sm:$0xf]
        %v8498 = vld [vmem:[%s13 + $0x17c] sm:$0xf]
        %v8499 = vld [vmem:[%s13 + $0x180] sm:$0xf]
        %v8500 = vld [vmem:[%s13 + $0x184] sm:$0xf]
        %v8501 = vld [vmem:[%s13 + $0x188] sm:$0xf]
        %v8502 = vld [vmem:[%s13 + $0x18c] sm:$0xf]
        %v8503 = vld [vmem:[%s13 + $0x190] sm:$0xf]
        %v8504 = vld [vmem:[%s13 + $0x194] sm:$0xf]
        %v8505 = vld [vmem:[%s13 + $0x198] sm:$0xf]
        %v8506 = vld [vmem:[%s13 + $0x19c] sm:$0xf]
        %v8507 = vld [vmem:[%s13 + $0x1a0] sm:$0xf]
        %v8508 = vld [vmem:[%s13 + $0x1a4] sm:$0xf]
        %v8509 = vld [vmem:[%s13 + $0x1a8] sm:$0xf]
        %v8510 = vld [vmem:[%s13 + $0x1ac] sm:$0xf]
        %v8511 = vld [vmem:[%s13 + $0x1b0] sm:$0xf]
        %v8512 = vld [vmem:[%s13 + $0x1b4] sm:$0xf]
        %v8513 = vld [vmem:[%s13 + $0x1b8] sm:$0xf]
        %v8514 = vld [vmem:[%s13 + $0x1bc] sm:$0xf]
        %v8515 = vld [vmem:[%s13 + $0x1c0] sm:$0xf]
        %v8516 = vld [vmem:[%s13 + $0x1c4] sm:$0xf]
        %v8517 = vld [vmem:[%s13 + $0x1c8] sm:$0xf]
        %v8518 = vld [vmem:[%s13 + $0x1cc] sm:$0xf]
        %v8519 = vld [vmem:[%s13 + $0x1d0] sm:$0xf]
        %v8520 = vld [vmem:[%s13 + $0x1d4] sm:$0xf]
        %v8521 = vld [vmem:[%s13 + $0x1d8] sm:$0xf]
        %v8522 = vld [vmem:[%s13 + $0x1dc] sm:$0xf]
        %v8523 = vld [vmem:[%s13 + $0x1e0] sm:$0xf]
        %v8524 = vld [vmem:[%s13 + $0x1e4] sm:$0xf]
        %v8525 = vld [vmem:[%s13 + $0x1e8] sm:$0xf]
        %v8526 = vld [vmem:[%s13 + $0x1ec] sm:$0xf]
        %v8527 = vld [vmem:[%s13 + $0x1f0] sm:$0xf]
        %v8528 = vld [vmem:[%s13 + $0x1f4] sm:$0xf]
        %v8529 = vld [vmem:[%s13 + $0x1f8] sm:$0xf]
        %v8530 = vld [vmem:[%s13 + $0x1fc] sm:$0xf]
        %v8531 = vld [vmem:[%s13 + $0x200] sm:$0xf]
        %v8532 = vld [vmem:[%s13 + $0x204] sm:$0xf]
        %v8533 = vld [vmem:[%s13 + $0x208] sm:$0xf]
        %v8534 = vld [vmem:[%s13 + $0x20c] sm:$0xf]
        %v8535 = vld [vmem:[%s13 + $0x210] sm:$0xf]
        %v8536 = vld [vmem:[%s13 + $0x214] sm:$0xf]
        %v8537 = vld [vmem:[%s13 + $0x218] sm:$0xf]
        %v8538 = vld [vmem:[%s13 + $0x21c] sm:$0xf]
        %v8539 = vld [vmem:[%s13 + $0x220] sm:$0xf]
        %v8540 = vld [vmem:[%s13 + $0x224] sm:$0xf]
        %v8541 = vld [vmem:[%s13 + $0x228] sm:$0xf]
        %v8542 = vld [vmem:[%s13 + $0x22c] sm:$0xf]
        %v8543 = vld [vmem:[%s13 + $0x230] sm:$0xf]
        %v8544 = vld [vmem:[%s13 + $0x234] sm:$0xf]
        %v8545 = vld [vmem:[%s13 + $0x238] sm:$0xf]
        %v8546 = vld [vmem:[%s13 + $0x23c] sm:$0xf]
        %v8547 = vld [vmem:[%s14] sm:$0x1]
        %v8549 = vperm.slane %v8547, 0
        %v8695 = vunpack.c.l.b16 %v8403
        %v8696 = vunpack.c.l.b16 %v8404
        %v8697 = vunpack.c.l.b16 %v8405
        %v8698 = vunpack.c.l.b16 %v8406
        %v8699 = vunpack.c.l.b16 %v8407
        %v8700 = vunpack.c.l.b16 %v8408
        %v8701 = vunpack.c.l.b16 %v8409
        %v8702 = vunpack.c.l.b16 %v8410
        %v8703 = vunpack.c.l.b16 %v8411
        %v8704 = vunpack.c.l.b16 %v8412
        %v8705 = vunpack.c.l.b16 %v8413
        %v8706 = vunpack.c.l.b16 %v8414
        %v8707 = vunpack.c.l.b16 %v8415
        %v8708 = vunpack.c.l.b16 %v8416
        %v8709 = vunpack.c.l.b16 %v8417
        %v8710 = vunpack.c.l.b16 %v8418
        %v8711 = vunpack.c.l.b16 %v8419
        %v8712 = vunpack.c.l.b16 %v8420
        %v8713 = vunpack.c.l.b16 %v8421
        %v8714 = vunpack.c.l.b16 %v8422
        %v8715 = vunpack.c.l.b16 %v8423
        %v8716 = vunpack.c.l.b16 %v8424
        %v8717 = vunpack.c.l.b16 %v8425
        %v8718 = vunpack.c.l.b16 %v8426
        %v8719 = vunpack.c.l.b16 %v8427
        %v8720 = vunpack.c.l.b16 %v8428
        %v8721 = vunpack.c.l.b16 %v8429
        %v8722 = vunpack.c.l.b16 %v8430
        %v8723 = vunpack.c.l.b16 %v8431
        %v8724 = vunpack.c.l.b16 %v8432
        %v8725 = vunpack.c.l.b16 %v8433
        %v8726 = vunpack.c.l.b16 %v8434
        %v8727 = vunpack.c.l.b16 %v8435
        %v8728 = vunpack.c.l.b16 %v8436
        %v8729 = vunpack.c.l.b16 %v8437
        %v8730 = vunpack.c.l.b16 %v8438
        %v8731 = vunpack.c.l.b16 %v8439
        %v8732 = vunpack.c.l.b16 %v8440
        %v8733 = vunpack.c.l.b16 %v8441
        %v8734 = vunpack.c.l.b16 %v8442
        %v8735 = vunpack.c.l.b16 %v8443
        %v8736 = vunpack.c.l.b16 %v8444
        %v8737 = vunpack.c.l.b16 %v8445
        %v8738 = vunpack.c.l.b16 %v8446
        %v8739 = vunpack.c.l.b16 %v8447
        %v8740 = vunpack.c.l.b16 %v8448
        %v8741 = vunpack.c.l.b16 %v8449
        %v8742 = vunpack.c.l.b16 %v8450
        %v8743 = vunpack.c.l.b16 %v8451
        %v8744 = vunpack.c.l.b16 %v8452
        %v8745 = vunpack.c.l.b16 %v8453
        %v8746 = vunpack.c.l.b16 %v8454
        %v8747 = vunpack.c.l.b16 %v8455
        %v8748 = vunpack.c.l.b16 %v8456
        %v8749 = vunpack.c.l.b16 %v8457
        %v8750 = vunpack.c.l.b16 %v8458
        %v8751 = vunpack.c.l.b16 %v8459
        %v8752 = vunpack.c.l.b16 %v8460
        %v8753 = vunpack.c.l.b16 %v8461
        %v8754 = vunpack.c.l.b16 %v8462
        %v8755 = vunpack.c.l.b16 %v8463
        %v8756 = vunpack.c.l.b16 %v8464
        %v8757 = vunpack.c.l.b16 %v8465
        %v8758 = vunpack.c.l.b16 %v8466
        %v8759 = vunpack.c.l.b16 %v8467
        %v8760 = vunpack.c.l.b16 %v8468
        %v8761 = vunpack.c.l.b16 %v8469
        %v8762 = vunpack.c.l.b16 %v8470
        %v8763 = vunpack.c.l.b16 %v8471
        %v8764 = vunpack.c.l.b16 %v8472
        %v8765 = vunpack.c.l.b16 %v8473
        %v8766 = vunpack.c.l.b16 %v8474
        %v8767 = vunpack.c.l.b16 %v8475
        %v8768 = vunpack.c.l.b16 %v8476
        %v8769 = vunpack.c.l.b16 %v8477
        %v8770 = vunpack.c.l.b16 %v8478
        %v8771 = vunpack.c.l.b16 %v8479
        %v8772 = vunpack.c.l.b16 %v8480
        %v8773 = vunpack.c.l.b16 %v8481
        %v8774 = vunpack.c.l.b16 %v8482
        %v8775 = vunpack.c.l.b16 %v8483
        %v8776 = vunpack.c.l.b16 %v8484
        %v8777 = vunpack.c.l.b16 %v8485
        %v8778 = vunpack.c.l.b16 %v8486
        %v8779 = vunpack.c.l.b16 %v8487
        %v8780 = vunpack.c.l.b16 %v8488
        %v8781 = vunpack.c.l.b16 %v8489
        %v8782 = vunpack.c.l.b16 %v8490
        %v8783 = vunpack.c.l.b16 %v8491
        %v8784 = vunpack.c.l.b16 %v8492
        %v8785 = vunpack.c.l.b16 %v8493
        %v8786 = vunpack.c.l.b16 %v8494
        %v8787 = vunpack.c.l.b16 %v8495
        %v8788 = vunpack.c.l.b16 %v8496
        %v8789 = vunpack.c.l.b16 %v8497
        %v8790 = vunpack.c.l.b16 %v8498
        %v8791 = vunpack.c.l.b16 %v8499
        %v8792 = vunpack.c.l.b16 %v8500
        %v8793 = vunpack.c.l.b16 %v8501
        %v8794 = vunpack.c.l.b16 %v8502
        %v8795 = vunpack.c.l.b16 %v8503
        %v8796 = vunpack.c.l.b16 %v8504
        %v8797 = vunpack.c.l.b16 %v8505
        %v8798 = vunpack.c.l.b16 %v8506
        %v8799 = vunpack.c.l.b16 %v8507
        %v8800 = vunpack.c.l.b16 %v8508
        %v8801 = vunpack.c.l.b16 %v8509
        %v8802 = vunpack.c.l.b16 %v8510
        %v8803 = vunpack.c.l.b16 %v8511
        %v8804 = vunpack.c.l.b16 %v8512
        %v8805 = vunpack.c.l.b16 %v8513
        %v8806 = vunpack.c.l.b16 %v8514
        %v8807 = vunpack.c.l.b16 %v8515
        %v8808 = vunpack.c.l.b16 %v8516
        %v8809 = vunpack.c.l.b16 %v8517
        %v8810 = vunpack.c.l.b16 %v8518
        %v8811 = vunpack.c.l.b16 %v8519
        %v8812 = vunpack.c.l.b16 %v8520
        %v8813 = vunpack.c.l.b16 %v8521
        %v8814 = vunpack.c.l.b16 %v8522
        %v8815 = vunpack.c.l.b16 %v8523
        %v8816 = vunpack.c.l.b16 %v8524
        %v8817 = vunpack.c.l.b16 %v8525
        %v8818 = vunpack.c.l.b16 %v8526
        %v8819 = vunpack.c.l.b16 %v8527
        %v8820 = vunpack.c.l.b16 %v8528
        %v8821 = vunpack.c.l.b16 %v8529
        %v8822 = vunpack.c.l.b16 %v8530
        %v8823 = vunpack.c.l.b16 %v8531
        %v8824 = vunpack.c.l.b16 %v8532
        %v8825 = vunpack.c.l.b16 %v8533
        %v8826 = vunpack.c.l.b16 %v8534
        %v8827 = vunpack.c.l.b16 %v8535
        %v8828 = vunpack.c.l.b16 %v8536
        %v8829 = vunpack.c.l.b16 %v8537
        %v8830 = vunpack.c.l.b16 %v8538
        %v8831 = vunpack.c.l.b16 %v8539
        %v8832 = vunpack.c.l.b16 %v8540
        %v8833 = vunpack.c.l.b16 %v8541
        %v8834 = vunpack.c.l.b16 %v8542
        %v8835 = vunpack.c.l.b16 %v8543
        %v8836 = vunpack.c.l.b16 %v8544
        %v8837 = vunpack.c.l.b16 %v8545
        %v8838 = vunpack.c.l.b16 %v8546
        %v8839 = vpack.c.b16 %v8696, %v8695
        %v8840 = vpack.c.b16 %v8698, %v8697
        %v8841 = vpack.c.b16 %v8700, %v8699
        %v8842 = vpack.c.b16 %v8702, %v8701
        %v8843 = vpack.c.b16 %v8704, %v8703
        %v8844 = vpack.c.b16 %v8706, %v8705
        %v8845 = vpack.c.b16 %v8708, %v8707
        %v8846 = vpack.c.b16 %v8710, %v8709
        %v8847 = vpack.c.b16 %v8712, %v8711
        %v8848 = vpack.c.b16 %v8714, %v8713
        %v8849 = vpack.c.b16 %v8716, %v8715
        %v8850 = vpack.c.b16 %v8718, %v8717
        %v8851 = vpack.c.b16 %v8720, %v8719
        %v8852 = vpack.c.b16 %v8722, %v8721
        %v8853 = vpack.c.b16 %v8724, %v8723
        %v8854 = vpack.c.b16 %v8726, %v8725
        %v8855 = vpack.c.b16 %v8728, %v8727
        %v8856 = vpack.c.b16 %v8730, %v8729
        %v8857 = vpack.c.b16 %v8732, %v8731
        %v8858 = vpack.c.b16 %v8734, %v8733
        %v8859 = vpack.c.b16 %v8736, %v8735
        %v8860 = vpack.c.b16 %v8738, %v8737
        %v8861 = vpack.c.b16 %v8740, %v8739
        %v8862 = vpack.c.b16 %v8742, %v8741
        %v8863 = vpack.c.b16 %v8744, %v8743
        %v8864 = vpack.c.b16 %v8746, %v8745
        %v8865 = vpack.c.b16 %v8748, %v8747
        %v8866 = vpack.c.b16 %v8750, %v8749
        %v8867 = vpack.c.b16 %v8752, %v8751
        %v8868 = vpack.c.b16 %v8754, %v8753
        %v8869 = vpack.c.b16 %v8756, %v8755
        %v8870 = vpack.c.b16 %v8758, %v8757
        %v8871 = vpack.c.b16 %v8760, %v8759
        %v8872 = vpack.c.b16 %v8762, %v8761
        %v8873 = vpack.c.b16 %v8764, %v8763
        %v8874 = vpack.c.b16 %v8766, %v8765
        %v8875 = vpack.c.b16 %v8768, %v8767
        %v8876 = vpack.c.b16 %v8770, %v8769
        %v8877 = vpack.c.b16 %v8772, %v8771
        %v8878 = vpack.c.b16 %v8774, %v8773
        %v8879 = vpack.c.b16 %v8776, %v8775
        %v8880 = vpack.c.b16 %v8778, %v8777
        %v8881 = vpack.c.b16 %v8780, %v8779
        %v8882 = vpack.c.b16 %v8782, %v8781
        %v8883 = vpack.c.b16 %v8784, %v8783
        %v8884 = vpack.c.b16 %v8786, %v8785
        %v8885 = vpack.c.b16 %v8788, %v8787
        %v8886 = vpack.c.b16 %v8790, %v8789
        %v8887 = vpack.c.b16 %v8792, %v8791
        %v8888 = vpack.c.b16 %v8794, %v8793
        %v8889 = vpack.c.b16 %v8796, %v8795
        %v8890 = vpack.c.b16 %v8798, %v8797
        %v8891 = vpack.c.b16 %v8800, %v8799
        %v8892 = vpack.c.b16 %v8802, %v8801
        %v8893 = vpack.c.b16 %v8804, %v8803
        %v8894 = vpack.c.b16 %v8806, %v8805
        %v8895 = vpack.c.b16 %v8808, %v8807
        %v8896 = vpack.c.b16 %v8810, %v8809
        %v8897 = vpack.c.b16 %v8812, %v8811
        %v8898 = vpack.c.b16 %v8814, %v8813
        %v8899 = vpack.c.b16 %v8816, %v8815
        %v8900 = vpack.c.b16 %v8818, %v8817
        %v8901 = vpack.c.b16 %v8820, %v8819
        %v8902 = vpack.c.b16 %v8822, %v8821
        %v8903 = vpack.c.b16 %v8824, %v8823
        %v8904 = vpack.c.b16 %v8826, %v8825
        %v8905 = vpack.c.b16 %v8828, %v8827
        %v8906 = vpack.c.b16 %v8830, %v8829
        %v8907 = vpack.c.b16 %v8832, %v8831
        %v8908 = vpack.c.b16 %v8834, %v8833
        %v8909 = vpack.c.b16 %v8836, %v8835
        %v8910 = vpack.c.b16 %v8838, %v8837
        %8983 = vmatpush.bf16.msra.mxu0 %v8846
        %8984 = vmatpush.bf16.msra.mxu0 %v8845
        %8985 = vmatpush.bf16.msra.mxu0 %v8844
        %8986 = vmatpush.bf16.msra.mxu0 %v8843
        %8987 = vmatpush.bf16.msra.mxu0 %v8842
        %8988 = vmatpush.bf16.msra.mxu0 %v8841
        %8989 = vmatpush.bf16.msra.mxu0 %v8840
        %8990 = vmatpush.bf16.msra.mxu0 %v8839
        %8991 = vmatmul.bf16.gmra.mxu0 %v8394
        %v8992 = vpop.f32.mrf.mxu0
        %v8993 = vadd.f32 %v8549, %v8992
        %v8994 = vpop.f32.mrf.mxu0
        %8995 = vdwg.mxu0
        %8996 = vmatpush.bf16.msra.mxu0 %v8854
        %8997 = vmatpush.bf16.msra.mxu0 %v8853
        %8998 = vmatpush.bf16.msra.mxu0 %v8852
        %8999 = vmatpush.bf16.msra.mxu0 %v8851
        %9000 = vmatpush.bf16.msra.mxu0 %v8850
        %9001 = vmatpush.bf16.msra.mxu0 %v8849
        %9002 = vmatpush.bf16.msra.mxu0 %v8848
        %9003 = vmatpush.bf16.msra.mxu0 %v8847
        %9004 = vmatmul.bf16.gmra.mxu0 %v8395
        %v9005 = vpop.f32.mrf.mxu0
        %v9006 = vadd.f32 %v8993, %v9005
        %v9007 = vpop.f32.mrf.mxu0
        %9008 = vdwg.mxu0
        %9009 = vmatpush.bf16.msra.mxu0 %v8862
        %9010 = vmatpush.bf16.msra.mxu0 %v8861
        %9011 = vmatpush.bf16.msra.mxu0 %v8860
        %9012 = vmatpush.bf16.msra.mxu0 %v8859
        %9013 = vmatpush.bf16.msra.mxu0 %v8858
        %9014 = vmatpush.bf16.msra.mxu0 %v8857
        %9015 = vmatpush.bf16.msra.mxu0 %v8856
        %9016 = vmatpush.bf16.msra.mxu0 %v8855
        %9017 = vmatmul.bf16.gmra.mxu0 %v8396
        %v9018 = vpop.f32.mrf.mxu0
        %v9019 = vadd.f32 %v9006, %v9018
        %v9020 = vpop.f32.mrf.mxu0
        %9021 = vdwg.mxu0
        %9022 = vmatpush.bf16.msra.mxu0 %v8870
        %9023 = vmatpush.bf16.msra.mxu0 %v8869
        %9024 = vmatpush.bf16.msra.mxu0 %v8868
        %9025 = vmatpush.bf16.msra.mxu0 %v8867
        %9026 = vmatpush.bf16.msra.mxu0 %v8866
        %9027 = vmatpush.bf16.msra.mxu0 %v8865
        %9028 = vmatpush.bf16.msra.mxu0 %v8864
        %9029 = vmatpush.bf16.msra.mxu0 %v8863
        %9030 = vmatmul.bf16.gmra.mxu0 %v8397
        %v9031 = vpop.f32.mrf.mxu0
        %v9032 = vadd.f32 %v9019, %v9031
        %v9033 = vpop.f32.mrf.mxu0
        %9034 = vdwg.mxu0
        %9035 = vmatpush.bf16.msra.mxu0 %v8878
        %9036 = vmatpush.bf16.msra.mxu0 %v8877
        %9037 = vmatpush.bf16.msra.mxu0 %v8876
        %9038 = vmatpush.bf16.msra.mxu0 %v8875
        %9039 = vmatpush.bf16.msra.mxu0 %v8874
        %9040 = vmatpush.bf16.msra.mxu0 %v8873
        %9041 = vmatpush.bf16.msra.mxu0 %v8872
        %9042 = vmatpush.bf16.msra.mxu0 %v8871
        %9043 = vmatmul.bf16.gmra.mxu0 %v8398
        %v9044 = vpop.f32.mrf.mxu0
        %v9045 = vadd.f32 %v9032, %v9044
        %v9046 = vpop.f32.mrf.mxu0
        %9047 = vdwg.mxu0
        %9048 = vmatpush.bf16.msra.mxu0 %v8886
        %9049 = vmatpush.bf16.msra.mxu0 %v8885
        %9050 = vmatpush.bf16.msra.mxu0 %v8884
        %9051 = vmatpush.bf16.msra.mxu0 %v8883
        %9052 = vmatpush.bf16.msra.mxu0 %v8882
        %9053 = vmatpush.bf16.msra.mxu0 %v8881
        %9054 = vmatpush.bf16.msra.mxu0 %v8880
        %9055 = vmatpush.bf16.msra.mxu0 %v8879
        %9056 = vmatmul.bf16.gmra.mxu0 %v8399
        %v9057 = vpop.f32.mrf.mxu0
        %v9058 = vadd.f32 %v9045, %v9057
        %v9059 = vpop.f32.mrf.mxu0
        %9060 = vdwg.mxu0
        %9061 = vmatpush.bf16.msra.mxu0 %v8894
        %9062 = vmatpush.bf16.msra.mxu0 %v8893
        %9063 = vmatpush.bf16.msra.mxu0 %v8892
        %9064 = vmatpush.bf16.msra.mxu0 %v8891
        %9065 = vmatpush.bf16.msra.mxu0 %v8890
        %9066 = vmatpush.bf16.msra.mxu0 %v8889
        %9067 = vmatpush.bf16.msra.mxu0 %v8888
        %9068 = vmatpush.bf16.msra.mxu0 %v8887
        %9069 = vmatmul.bf16.gmra.mxu0 %v8400
        %v9070 = vpop.f32.mrf.mxu0
        %v9071 = vadd.f32 %v9058, %v9070
        %v9072 = vpop.f32.mrf.mxu0
        %9073 = vdwg.mxu0
        %9074 = vmatpush.bf16.msra.mxu0 %v8902
        %9075 = vmatpush.bf16.msra.mxu0 %v8901
        %9076 = vmatpush.bf16.msra.mxu0 %v8900
        %9077 = vmatpush.bf16.msra.mxu0 %v8899
        %9078 = vmatpush.bf16.msra.mxu0 %v8898
        %9079 = vmatpush.bf16.msra.mxu0 %v8897
        %9080 = vmatpush.bf16.msra.mxu0 %v8896
        %9081 = vmatpush.bf16.msra.mxu0 %v8895
        %9082 = vmatmul.bf16.gmra.mxu0 %v8401
        %v9083 = vpop.f32.mrf.mxu0
        %v9084 = vadd.f32 %v9071, %v9083
        %v9085 = vpop.f32.mrf.mxu0
        %9086 = vdwg.mxu0
        %9087 = vmatpush.bf16.msra.mxu0 %v8910
        %9088 = vmatpush.bf16.msra.mxu0 %v8909
        %9089 = vmatpush.bf16.msra.mxu0 %v8908
        %9090 = vmatpush.bf16.msra.mxu0 %v8907
        %9091 = vmatpush.bf16.msra.mxu0 %v8906
        %9092 = vmatpush.bf16.msra.mxu0 %v8905
        %9093 = vmatpush.bf16.msra.mxu0 %v8904
        %9094 = vmatpush.bf16.msra.mxu0 %v8903
        %9095 = vmatmul.bf16.gmra.mxu0 %v8402
        %v9096 = vpop.f32.mrf.mxu0
        %v9097 = vadd.f32 %v9084, %v9096
        %v9098 = vpop.f32.mrf.mxu0
        %9099 = vdwg.mxu0
        %v9100 = vmax.f32 %v9097, 0.0
        %v9102 = vrot.slane %v9100, 2
        %9104 = vst [vmem:[#allocation8] sm:$0xf] 0.0
        %9105 = vst [vmem:[#allocation8 + $0x4] sm:$0xf] 0.0
        %9106 = vst [vmem:[#allocation8 + $0x8] sm:$0xf] 0.0
        %9107 = vst [vmem:[#allocation8 + $0xc] sm:$0xf] 0.0
        %s9108 = scalar_lea.vmem [#allocation8], 4
        %9109 = vst [vmem:[%s9108 + $0x1] sm:$0x3] %v9100
        %9110 = vst [vmem:[%s9108 + $0x5] sm:$0x3] %v9102
        %v9111 = vld [vmem:[#allocation8] sm:$0x3]
        %v9112 = vld [vmem:[#allocation8 + $0x4] sm:$0x3]
        %v9113 = vld [vmem:[#allocation8 + $0x1] sm:$0x3]
        %v9114 = vld [vmem:[#allocation8 + $0x5] sm:$0x3]
        %v9115 = vld [vmem:[#allocation8 + $0x2] sm:$0x3]
        %v9116 = vld [vmem:[#allocation8 + $0x6] sm:$0x3]
        %v9117 = vld [vmem:[%s9108] sm:$0x3]
        %v9118 = vld [vmem:[%s9108 + $0x4] sm:$0x3]
        %v9119 = vld [vmem:[%s9108 + $0x1] sm:$0x3]
        %v9120 = vld [vmem:[%s9108 + $0x5] sm:$0x3]
        %v9121 = vld [vmem:[%s9108 + $0x2] sm:$0x3]
        %v9122 = vld [vmem:[%s9108 + $0x6] sm:$0x3]
        %s9123 = scalar_lea.vmem [#allocation8], 8
        %v9124 = vld [vmem:[%s9123] sm:$0x3]
        %v9125 = vld [vmem:[%s9123 + $0x4] sm:$0x3]
        %v9126 = vld [vmem:[%s9123 + $0x1] sm:$0x3]
        %v9127 = vld [vmem:[%s9123 + $0x5] sm:$0x3]
        %v9128 = vld [vmem:[%s9123 + $0x2] sm:$0x3]
        %v9129 = vld [vmem:[%s9123 + $0x6] sm:$0x3]
        %9132 = vst [vmem:[#allocation1] ss:$4 sm:$0xff] %v9111
        %s9133 = scalar_lea.vmem [#allocation1], 1
        %9134 = vst [vmem:[%s9133] ss:$4 sm:$0xff] %v9112
        %v9135 = vld.sshfl [vmem:[#allocation1] sm:$0xff pattern:$0x73625140]
        %9139 = vst [vmem:[#allocation1] ss:$4 sm:$0xff] %v9113
        %s9140 = scalar_lea.vmem [#allocation1], 1
        %9141 = vst [vmem:[%s9140] ss:$4 sm:$0xff] %v9114
        %v9142 = vld.sshfl [vmem:[#allocation1] sm:$0xff pattern:$0x73625140]
        %9146 = vst [vmem:[#allocation1] ss:$4 sm:$0xff] %v9115
        %s9147 = scalar_lea.vmem [#allocation1], 1
        %9148 = vst [vmem:[%s9147] ss:$4 sm:$0xff] %v9116
        %v9149 = vld.sshfl [vmem:[#allocation1] sm:$0xff pattern:$0x73625140]
        %9153 = vst [vmem:[#allocation1] ss:$4 sm:$0xff] %v9117
        %s9154 = scalar_lea.vmem [#allocation1], 1
        %9155 = vst [vmem:[%s9154] ss:$4 sm:$0xff] %v9118
        %v9156 = vld.sshfl [vmem:[#allocation1] sm:$0xff pattern:$0x73625140]
        %9160 = vst [vmem:[#allocation1] ss:$4 sm:$0xff] %v9119
        %s9161 = scalar_lea.vmem [#allocation1], 1
        %9162 = vst [vmem:[%s9161] ss:$4 sm:$0xff] %v9120
        %v9163 = vld.sshfl [vmem:[#allocation1] sm:$0xff pattern:$0x73625140]
        %9167 = vst [vmem:[#allocation1] ss:$4 sm:$0xff] %v9121
        %s9168 = scalar_lea.vmem [#allocation1], 1
        %9169 = vst [vmem:[%s9168] ss:$4 sm:$0xff] %v9122
        %v9170 = vld.sshfl [vmem:[#allocation1] sm:$0xff pattern:$0x73625140]
        %9174 = vst [vmem:[#allocation1] ss:$4 sm:$0xff] %v9124
        %s9175 = scalar_lea.vmem [#allocation1], 1
        %9176 = vst [vmem:[%s9175] ss:$4 sm:$0xff] %v9125
        %v9177 = vld.sshfl [vmem:[#allocation1] sm:$0xff pattern:$0x73625140]
        %9181 = vst [vmem:[#allocation1] ss:$4 sm:$0xff] %v9126
        %s9182 = scalar_lea.vmem [#allocation1], 1
        %9183 = vst [vmem:[%s9182] ss:$4 sm:$0xff] %v9127
        %v9184 = vld.sshfl [vmem:[#allocation1] sm:$0xff pattern:$0x73625140]
        %9188 = vst [vmem:[#allocation1] ss:$4 sm:$0xff] %v9128
        %s9189 = scalar_lea.vmem [#allocation1], 1
        %9190 = vst [vmem:[%s9189] ss:$4 sm:$0xff] %v9129
        %v9191 = vld.sshfl [vmem:[#allocation1] sm:$0xff pattern:$0x73625140]
        %v9193 = vpack.c.bf16 %v9135, %v9135
        %v9194 = vpack.c.bf16 %v9142, %v9142
        %v9195 = vpack.c.bf16 %v9149, %v9149
        %v9196 = vpack.c.bf16 %v9156, %v9156
        %v9197 = vpack.c.bf16 %v9163, %v9163
        %v9198 = vpack.c.bf16 %v9170, %v9170
        %v9199 = vpack.c.bf16 %v9177, %v9177
        %v9200 = vpack.c.bf16 %v9184, %v9184
        %v9201 = vpack.c.bf16 %v9191, %v9191
        %v9202 = vld [vmem:[%s15] sm:$0xf]
        %v9203 = vld [vmem:[%s15 + $0x4] sm:$0xf]
        %v9204 = vld [vmem:[%s15 + $0x8] sm:$0xf]
        %v9205 = vld [vmem:[%s15 + $0xc] sm:$0xf]
        %v9206 = vld [vmem:[%s15 + $0x10] sm:$0xf]
        %v9207 = vld [vmem:[%s15 + $0x14] sm:$0xf]
        %v9208 = vld [vmem:[%s15 + $0x18] sm:$0xf]
        %v9209 = vld [vmem:[%s15 + $0x1c] sm:$0xf]
        %v9210 = vld [vmem:[%s15 + $0x20] sm:$0xf]
        %v9211 = vld [vmem:[%s15 + $0x24] sm:$0xf]
        %v9212 = vld [vmem:[%s15 + $0x28] sm:$0xf]
        %v9213 = vld [vmem:[%s15 + $0x2c] sm:$0xf]
        %v9214 = vld [vmem:[%s15 + $0x30] sm:$0xf]
        %v9215 = vld [vmem:[%s15 + $0x34] sm:$0xf]
        %v9216 = vld [vmem:[%s15 + $0x38] sm:$0xf]
        %v9217 = vld [vmem:[%s15 + $0x3c] sm:$0xf]
        %v9218 = vld [vmem:[%s15 + $0x40] sm:$0xf]
        %v9219 = vld [vmem:[%s15 + $0x44] sm:$0xf]
        %v9220 = vld [vmem:[%s15 + $0x48] sm:$0xf]
        %v9221 = vld [vmem:[%s15 + $0x4c] sm:$0xf]
        %v9222 = vld [vmem:[%s15 + $0x50] sm:$0xf]
        %v9223 = vld [vmem:[%s15 + $0x54] sm:$0xf]
        %v9224 = vld [vmem:[%s15 + $0x58] sm:$0xf]
        %v9225 = vld [vmem:[%s15 + $0x5c] sm:$0xf]
        %v9226 = vld [vmem:[%s15 + $0x60] sm:$0xf]
        %v9227 = vld [vmem:[%s15 + $0x64] sm:$0xf]
        %v9228 = vld [vmem:[%s15 + $0x68] sm:$0xf]
        %v9229 = vld [vmem:[%s15 + $0x6c] sm:$0xf]
        %v9230 = vld [vmem:[%s15 + $0x70] sm:$0xf]
        %v9231 = vld [vmem:[%s15 + $0x74] sm:$0xf]
        %v9232 = vld [vmem:[%s15 + $0x78] sm:$0xf]
        %v9233 = vld [vmem:[%s15 + $0x7c] sm:$0xf]
        %v9234 = vld [vmem:[%s15 + $0x80] sm:$0xf]
        %v9235 = vld [vmem:[%s15 + $0x84] sm:$0xf]
        %v9236 = vld [vmem:[%s15 + $0x88] sm:$0xf]
        %v9237 = vld [vmem:[%s15 + $0x8c] sm:$0xf]
        %v9238 = vld [vmem:[%s15 + $0x90] sm:$0xf]
        %v9239 = vld [vmem:[%s15 + $0x94] sm:$0xf]
        %v9240 = vld [vmem:[%s15 + $0x98] sm:$0xf]
        %v9241 = vld [vmem:[%s15 + $0x9c] sm:$0xf]
        %v9242 = vld [vmem:[%s15 + $0xa0] sm:$0xf]
        %v9243 = vld [vmem:[%s15 + $0xa4] sm:$0xf]
        %v9244 = vld [vmem:[%s15 + $0xa8] sm:$0xf]
        %v9245 = vld [vmem:[%s15 + $0xac] sm:$0xf]
        %v9246 = vld [vmem:[%s15 + $0xb0] sm:$0xf]
        %v9247 = vld [vmem:[%s15 + $0xb4] sm:$0xf]
        %v9248 = vld [vmem:[%s15 + $0xb8] sm:$0xf]
        %v9249 = vld [vmem:[%s15 + $0xbc] sm:$0xf]
        %v9250 = vld [vmem:[%s15 + $0xc0] sm:$0xf]
        %v9251 = vld [vmem:[%s15 + $0xc4] sm:$0xf]
        %v9252 = vld [vmem:[%s15 + $0xc8] sm:$0xf]
        %v9253 = vld [vmem:[%s15 + $0xcc] sm:$0xf]
        %v9254 = vld [vmem:[%s15 + $0xd0] sm:$0xf]
        %v9255 = vld [vmem:[%s15 + $0xd4] sm:$0xf]
        %v9256 = vld [vmem:[%s15 + $0xd8] sm:$0xf]
        %v9257 = vld [vmem:[%s15 + $0xdc] sm:$0xf]
        %v9258 = vld [vmem:[%s15 + $0xe0] sm:$0xf]
        %v9259 = vld [vmem:[%s15 + $0xe4] sm:$0xf]
        %v9260 = vld [vmem:[%s15 + $0xe8] sm:$0xf]
        %v9261 = vld [vmem:[%s15 + $0xec] sm:$0xf]
        %v9262 = vld [vmem:[%s15 + $0xf0] sm:$0xf]
        %v9263 = vld [vmem:[%s15 + $0xf4] sm:$0xf]
        %v9264 = vld [vmem:[%s15 + $0xf8] sm:$0xf]
        %v9265 = vld [vmem:[%s15 + $0xfc] sm:$0xf]
        %v9266 = vld [vmem:[%s15 + $0x100] sm:$0xf]
        %v9267 = vld [vmem:[%s15 + $0x104] sm:$0xf]
        %v9268 = vld [vmem:[%s15 + $0x108] sm:$0xf]
        %v9269 = vld [vmem:[%s15 + $0x10c] sm:$0xf]
        %v9270 = vld [vmem:[%s15 + $0x110] sm:$0xf]
        %v9271 = vld [vmem:[%s15 + $0x114] sm:$0xf]
        %v9272 = vld [vmem:[%s15 + $0x118] sm:$0xf]
        %v9273 = vld [vmem:[%s15 + $0x11c] sm:$0xf]
        %v9274 = vld [vmem:[%s15 + $0x120] sm:$0xf]
        %v9275 = vld [vmem:[%s15 + $0x124] sm:$0xf]
        %v9276 = vld [vmem:[%s15 + $0x128] sm:$0xf]
        %v9277 = vld [vmem:[%s15 + $0x12c] sm:$0xf]
        %v9278 = vld [vmem:[%s15 + $0x130] sm:$0xf]
        %v9279 = vld [vmem:[%s15 + $0x134] sm:$0xf]
        %v9280 = vld [vmem:[%s15 + $0x138] sm:$0xf]
        %v9281 = vld [vmem:[%s15 + $0x13c] sm:$0xf]
        %v9282 = vld [vmem:[%s15 + $0x140] sm:$0xf]
        %v9283 = vld [vmem:[%s15 + $0x144] sm:$0xf]
        %v9284 = vld [vmem:[%s15 + $0x148] sm:$0xf]
        %v9285 = vld [vmem:[%s15 + $0x14c] sm:$0xf]
        %v9286 = vld [vmem:[%s15 + $0x150] sm:$0xf]
        %v9287 = vld [vmem:[%s15 + $0x154] sm:$0xf]
        %v9288 = vld [vmem:[%s15 + $0x158] sm:$0xf]
        %v9289 = vld [vmem:[%s15 + $0x15c] sm:$0xf]
        %v9290 = vld [vmem:[%s15 + $0x160] sm:$0xf]
        %v9291 = vld [vmem:[%s15 + $0x164] sm:$0xf]
        %v9292 = vld [vmem:[%s15 + $0x168] sm:$0xf]
        %v9293 = vld [vmem:[%s15 + $0x16c] sm:$0xf]
        %v9294 = vld [vmem:[%s15 + $0x170] sm:$0xf]
        %v9295 = vld [vmem:[%s15 + $0x174] sm:$0xf]
        %v9296 = vld [vmem:[%s15 + $0x178] sm:$0xf]
        %v9297 = vld [vmem:[%s15 + $0x17c] sm:$0xf]
        %v9298 = vld [vmem:[%s15 + $0x180] sm:$0xf]
        %v9299 = vld [vmem:[%s15 + $0x184] sm:$0xf]
        %v9300 = vld [vmem:[%s15 + $0x188] sm:$0xf]
        %v9301 = vld [vmem:[%s15 + $0x18c] sm:$0xf]
        %v9302 = vld [vmem:[%s15 + $0x190] sm:$0xf]
        %v9303 = vld [vmem:[%s15 + $0x194] sm:$0xf]
        %v9304 = vld [vmem:[%s15 + $0x198] sm:$0xf]
        %v9305 = vld [vmem:[%s15 + $0x19c] sm:$0xf]
        %v9306 = vld [vmem:[%s15 + $0x1a0] sm:$0xf]
        %v9307 = vld [vmem:[%s15 + $0x1a4] sm:$0xf]
        %v9308 = vld [vmem:[%s15 + $0x1a8] sm:$0xf]
        %v9309 = vld [vmem:[%s15 + $0x1ac] sm:$0xf]
        %v9310 = vld [vmem:[%s15 + $0x1b0] sm:$0xf]
        %v9311 = vld [vmem:[%s15 + $0x1b4] sm:$0xf]
        %v9312 = vld [vmem:[%s15 + $0x1b8] sm:$0xf]
        %v9313 = vld [vmem:[%s15 + $0x1bc] sm:$0xf]
        %v9314 = vld [vmem:[%s15 + $0x1c0] sm:$0xf]
        %v9315 = vld [vmem:[%s15 + $0x1c4] sm:$0xf]
        %v9316 = vld [vmem:[%s15 + $0x1c8] sm:$0xf]
        %v9317 = vld [vmem:[%s15 + $0x1cc] sm:$0xf]
        %v9318 = vld [vmem:[%s15 + $0x1d0] sm:$0xf]
        %v9319 = vld [vmem:[%s15 + $0x1d4] sm:$0xf]
        %v9320 = vld [vmem:[%s15 + $0x1d8] sm:$0xf]
        %v9321 = vld [vmem:[%s15 + $0x1dc] sm:$0xf]
        %v9322 = vld [vmem:[%s15 + $0x1e0] sm:$0xf]
        %v9323 = vld [vmem:[%s15 + $0x1e4] sm:$0xf]
        %v9324 = vld [vmem:[%s15 + $0x1e8] sm:$0xf]
        %v9325 = vld [vmem:[%s15 + $0x1ec] sm:$0xf]
        %v9326 = vld [vmem:[%s15 + $0x1f0] sm:$0xf]
        %v9327 = vld [vmem:[%s15 + $0x1f4] sm:$0xf]
        %v9328 = vld [vmem:[%s15 + $0x1f8] sm:$0xf]
        %v9329 = vld [vmem:[%s15 + $0x1fc] sm:$0xf]
        %v9330 = vld [vmem:[%s15 + $0x200] sm:$0xf]
        %v9331 = vld [vmem:[%s15 + $0x204] sm:$0xf]
        %v9332 = vld [vmem:[%s15 + $0x208] sm:$0xf]
        %v9333 = vld [vmem:[%s15 + $0x20c] sm:$0xf]
        %v9334 = vld [vmem:[%s15 + $0x210] sm:$0xf]
        %v9335 = vld [vmem:[%s15 + $0x214] sm:$0xf]
        %v9336 = vld [vmem:[%s15 + $0x218] sm:$0xf]
        %v9337 = vld [vmem:[%s15 + $0x21c] sm:$0xf]
        %v9338 = vld [vmem:[%s15 + $0x220] sm:$0xf]
        %v9339 = vld [vmem:[%s15 + $0x224] sm:$0xf]
        %v9340 = vld [vmem:[%s15 + $0x228] sm:$0xf]
        %v9341 = vld [vmem:[%s15 + $0x22c] sm:$0xf]
        %v9342 = vld [vmem:[%s15 + $0x230] sm:$0xf]
        %v9343 = vld [vmem:[%s15 + $0x234] sm:$0xf]
        %v9344 = vld [vmem:[%s15 + $0x238] sm:$0xf]
        %v9345 = vld [vmem:[%s15 + $0x23c] sm:$0xf]
        %v9346 = vld [vmem:[%s16] sm:$0x1]
        %v9348 = vperm.slane %v9346, 0
        %v9494 = vunpack.c.l.b16 %v9202
        %v9495 = vunpack.c.l.b16 %v9203
        %v9496 = vunpack.c.l.b16 %v9204
        %v9497 = vunpack.c.l.b16 %v9205
        %v9498 = vunpack.c.l.b16 %v9206
        %v9499 = vunpack.c.l.b16 %v9207
        %v9500 = vunpack.c.l.b16 %v9208
        %v9501 = vunpack.c.l.b16 %v9209
        %v9502 = vunpack.c.l.b16 %v9210
        %v9503 = vunpack.c.l.b16 %v9211
        %v9504 = vunpack.c.l.b16 %v9212
        %v9505 = vunpack.c.l.b16 %v9213
        %v9506 = vunpack.c.l.b16 %v9214
        %v9507 = vunpack.c.l.b16 %v9215
        %v9508 = vunpack.c.l.b16 %v9216
        %v9509 = vunpack.c.l.b16 %v9217
        %v9510 = vunpack.c.l.b16 %v9218
        %v9511 = vunpack.c.l.b16 %v9219
        %v9512 = vunpack.c.l.b16 %v9220
        %v9513 = vunpack.c.l.b16 %v9221
        %v9514 = vunpack.c.l.b16 %v9222
        %v9515 = vunpack.c.l.b16 %v9223
        %v9516 = vunpack.c.l.b16 %v9224
        %v9517 = vunpack.c.l.b16 %v9225
        %v9518 = vunpack.c.l.b16 %v9226
        %v9519 = vunpack.c.l.b16 %v9227
        %v9520 = vunpack.c.l.b16 %v9228
        %v9521 = vunpack.c.l.b16 %v9229
        %v9522 = vunpack.c.l.b16 %v9230
        %v9523 = vunpack.c.l.b16 %v9231
        %v9524 = vunpack.c.l.b16 %v9232
        %v9525 = vunpack.c.l.b16 %v9233
        %v9526 = vunpack.c.l.b16 %v9234
        %v9527 = vunpack.c.l.b16 %v9235
        %v9528 = vunpack.c.l.b16 %v9236
        %v9529 = vunpack.c.l.b16 %v9237
        %v9530 = vunpack.c.l.b16 %v9238
        %v9531 = vunpack.c.l.b16 %v9239
        %v9532 = vunpack.c.l.b16 %v9240
        %v9533 = vunpack.c.l.b16 %v9241
        %v9534 = vunpack.c.l.b16 %v9242
        %v9535 = vunpack.c.l.b16 %v9243
        %v9536 = vunpack.c.l.b16 %v9244
        %v9537 = vunpack.c.l.b16 %v9245
        %v9538 = vunpack.c.l.b16 %v9246
        %v9539 = vunpack.c.l.b16 %v9247
        %v9540 = vunpack.c.l.b16 %v9248
        %v9541 = vunpack.c.l.b16 %v9249
        %v9542 = vunpack.c.l.b16 %v9250
        %v9543 = vunpack.c.l.b16 %v9251
        %v9544 = vunpack.c.l.b16 %v9252
        %v9545 = vunpack.c.l.b16 %v9253
        %v9546 = vunpack.c.l.b16 %v9254
        %v9547 = vunpack.c.l.b16 %v9255
        %v9548 = vunpack.c.l.b16 %v9256
        %v9549 = vunpack.c.l.b16 %v9257
        %v9550 = vunpack.c.l.b16 %v9258
        %v9551 = vunpack.c.l.b16 %v9259
        %v9552 = vunpack.c.l.b16 %v9260
        %v9553 = vunpack.c.l.b16 %v9261
        %v9554 = vunpack.c.l.b16 %v9262
        %v9555 = vunpack.c.l.b16 %v9263
        %v9556 = vunpack.c.l.b16 %v9264
        %v9557 = vunpack.c.l.b16 %v9265
        %v9558 = vunpack.c.l.b16 %v9266
        %v9559 = vunpack.c.l.b16 %v9267
        %v9560 = vunpack.c.l.b16 %v9268
        %v9561 = vunpack.c.l.b16 %v9269
        %v9562 = vunpack.c.l.b16 %v9270
        %v9563 = vunpack.c.l.b16 %v9271
        %v9564 = vunpack.c.l.b16 %v9272
        %v9565 = vunpack.c.l.b16 %v9273
        %v9566 = vunpack.c.l.b16 %v9274
        %v9567 = vunpack.c.l.b16 %v9275
        %v9568 = vunpack.c.l.b16 %v9276
        %v9569 = vunpack.c.l.b16 %v9277
        %v9570 = vunpack.c.l.b16 %v9278
        %v9571 = vunpack.c.l.b16 %v9279
        %v9572 = vunpack.c.l.b16 %v9280
        %v9573 = vunpack.c.l.b16 %v9281
        %v9574 = vunpack.c.l.b16 %v9282
        %v9575 = vunpack.c.l.b16 %v9283
        %v9576 = vunpack.c.l.b16 %v9284
        %v9577 = vunpack.c.l.b16 %v9285
        %v9578 = vunpack.c.l.b16 %v9286
        %v9579 = vunpack.c.l.b16 %v9287
        %v9580 = vunpack.c.l.b16 %v9288
        %v9581 = vunpack.c.l.b16 %v9289
        %v9582 = vunpack.c.l.b16 %v9290
        %v9583 = vunpack.c.l.b16 %v9291
        %v9584 = vunpack.c.l.b16 %v9292
        %v9585 = vunpack.c.l.b16 %v9293
        %v9586 = vunpack.c.l.b16 %v9294
        %v9587 = vunpack.c.l.b16 %v9295
        %v9588 = vunpack.c.l.b16 %v9296
        %v9589 = vunpack.c.l.b16 %v9297
        %v9590 = vunpack.c.l.b16 %v9298
        %v9591 = vunpack.c.l.b16 %v9299
        %v9592 = vunpack.c.l.b16 %v9300
        %v9593 = vunpack.c.l.b16 %v9301
        %v9594 = vunpack.c.l.b16 %v9302
        %v9595 = vunpack.c.l.b16 %v9303
        %v9596 = vunpack.c.l.b16 %v9304
        %v9597 = vunpack.c.l.b16 %v9305
        %v9598 = vunpack.c.l.b16 %v9306
        %v9599 = vunpack.c.l.b16 %v9307
        %v9600 = vunpack.c.l.b16 %v9308
        %v9601 = vunpack.c.l.b16 %v9309
        %v9602 = vunpack.c.l.b16 %v9310
        %v9603 = vunpack.c.l.b16 %v9311
        %v9604 = vunpack.c.l.b16 %v9312
        %v9605 = vunpack.c.l.b16 %v9313
        %v9606 = vunpack.c.l.b16 %v9314
        %v9607 = vunpack.c.l.b16 %v9315
        %v9608 = vunpack.c.l.b16 %v9316
        %v9609 = vunpack.c.l.b16 %v9317
        %v9610 = vunpack.c.l.b16 %v9318
        %v9611 = vunpack.c.l.b16 %v9319
        %v9612 = vunpack.c.l.b16 %v9320
        %v9613 = vunpack.c.l.b16 %v9321
        %v9614 = vunpack.c.l.b16 %v9322
        %v9615 = vunpack.c.l.b16 %v9323
        %v9616 = vunpack.c.l.b16 %v9324
        %v9617 = vunpack.c.l.b16 %v9325
        %v9618 = vunpack.c.l.b16 %v9326
        %v9619 = vunpack.c.l.b16 %v9327
        %v9620 = vunpack.c.l.b16 %v9328
        %v9621 = vunpack.c.l.b16 %v9329
        %v9622 = vunpack.c.l.b16 %v9330
        %v9623 = vunpack.c.l.b16 %v9331
        %v9624 = vunpack.c.l.b16 %v9332
        %v9625 = vunpack.c.l.b16 %v9333
        %v9626 = vunpack.c.l.b16 %v9334
        %v9627 = vunpack.c.l.b16 %v9335
        %v9628 = vunpack.c.l.b16 %v9336
        %v9629 = vunpack.c.l.b16 %v9337
        %v9630 = vunpack.c.l.b16 %v9338
        %v9631 = vunpack.c.l.b16 %v9339
        %v9632 = vunpack.c.l.b16 %v9340
        %v9633 = vunpack.c.l.b16 %v9341
        %v9634 = vunpack.c.l.b16 %v9342
        %v9635 = vunpack.c.l.b16 %v9343
        %v9636 = vunpack.c.l.b16 %v9344
        %v9637 = vunpack.c.l.b16 %v9345
        %v9638 = vpack.c.b16 %v9495, %v9494
        %v9639 = vpack.c.b16 %v9497, %v9496
        %v9640 = vpack.c.b16 %v9499, %v9498
        %v9641 = vpack.c.b16 %v9501, %v9500
        %v9642 = vpack.c.b16 %v9503, %v9502
        %v9643 = vpack.c.b16 %v9505, %v9504
        %v9644 = vpack.c.b16 %v9507, %v9506
        %v9645 = vpack.c.b16 %v9509, %v9508
        %v9646 = vpack.c.b16 %v9511, %v9510
        %v9647 = vpack.c.b16 %v9513, %v9512
        %v9648 = vpack.c.b16 %v9515, %v9514
        %v9649 = vpack.c.b16 %v9517, %v9516
        %v9650 = vpack.c.b16 %v9519, %v9518
        %v9651 = vpack.c.b16 %v9521, %v9520
        %v9652 = vpack.c.b16 %v9523, %v9522
        %v9653 = vpack.c.b16 %v9525, %v9524
        %v9654 = vpack.c.b16 %v9527, %v9526
        %v9655 = vpack.c.b16 %v9529, %v9528
        %v9656 = vpack.c.b16 %v9531, %v9530
        %v9657 = vpack.c.b16 %v9533, %v9532
        %v9658 = vpack.c.b16 %v9535, %v9534
        %v9659 = vpack.c.b16 %v9537, %v9536
        %v9660 = vpack.c.b16 %v9539, %v9538
        %v9661 = vpack.c.b16 %v9541, %v9540
        %v9662 = vpack.c.b16 %v9543, %v9542
        %v9663 = vpack.c.b16 %v9545, %v9544
        %v9664 = vpack.c.b16 %v9547, %v9546
        %v9665 = vpack.c.b16 %v9549, %v9548
        %v9666 = vpack.c.b16 %v9551, %v9550
        %v9667 = vpack.c.b16 %v9553, %v9552
        %v9668 = vpack.c.b16 %v9555, %v9554
        %v9669 = vpack.c.b16 %v9557, %v9556
        %v9670 = vpack.c.b16 %v9559, %v9558
        %v9671 = vpack.c.b16 %v9561, %v9560
        %v9672 = vpack.c.b16 %v9563, %v9562
        %v9673 = vpack.c.b16 %v9565, %v9564
        %v9674 = vpack.c.b16 %v9567, %v9566
        %v9675 = vpack.c.b16 %v9569, %v9568
        %v9676 = vpack.c.b16 %v9571, %v9570
        %v9677 = vpack.c.b16 %v9573, %v9572
        %v9678 = vpack.c.b16 %v9575, %v9574
        %v9679 = vpack.c.b16 %v9577, %v9576
        %v9680 = vpack.c.b16 %v9579, %v9578
        %v9681 = vpack.c.b16 %v9581, %v9580
        %v9682 = vpack.c.b16 %v9583, %v9582
        %v9683 = vpack.c.b16 %v9585, %v9584
        %v9684 = vpack.c.b16 %v9587, %v9586
        %v9685 = vpack.c.b16 %v9589, %v9588
        %v9686 = vpack.c.b16 %v9591, %v9590
        %v9687 = vpack.c.b16 %v9593, %v9592
        %v9688 = vpack.c.b16 %v9595, %v9594
        %v9689 = vpack.c.b16 %v9597, %v9596
        %v9690 = vpack.c.b16 %v9599, %v9598
        %v9691 = vpack.c.b16 %v9601, %v9600
        %v9692 = vpack.c.b16 %v9603, %v9602
        %v9693 = vpack.c.b16 %v9605, %v9604
        %v9694 = vpack.c.b16 %v9607, %v9606
        %v9695 = vpack.c.b16 %v9609, %v9608
        %v9696 = vpack.c.b16 %v9611, %v9610
        %v9697 = vpack.c.b16 %v9613, %v9612
        %v9698 = vpack.c.b16 %v9615, %v9614
        %v9699 = vpack.c.b16 %v9617, %v9616
        %v9700 = vpack.c.b16 %v9619, %v9618
        %v9701 = vpack.c.b16 %v9621, %v9620
        %v9702 = vpack.c.b16 %v9623, %v9622
        %v9703 = vpack.c.b16 %v9625, %v9624
        %v9704 = vpack.c.b16 %v9627, %v9626
        %v9705 = vpack.c.b16 %v9629, %v9628
        %v9706 = vpack.c.b16 %v9631, %v9630
        %v9707 = vpack.c.b16 %v9633, %v9632
        %v9708 = vpack.c.b16 %v9635, %v9634
        %v9709 = vpack.c.b16 %v9637, %v9636
        %9782 = vmatpush.bf16.msra.mxu0 %v9645
        %9783 = vmatpush.bf16.msra.mxu0 %v9644
        %9784 = vmatpush.bf16.msra.mxu0 %v9643
        %9785 = vmatpush.bf16.msra.mxu0 %v9642
        %9786 = vmatpush.bf16.msra.mxu0 %v9641
        %9787 = vmatpush.bf16.msra.mxu0 %v9640
        %9788 = vmatpush.bf16.msra.mxu0 %v9639
        %9789 = vmatpush.bf16.msra.mxu0 %v9638
        %9790 = vmatmul.bf16.gmra.mxu0 %v9193
        %v9791 = vpop.f32.mrf.mxu0
        %v9792 = vadd.f32 %v9348, %v9791
        %v9793 = vpop.f32.mrf.mxu0
        %9794 = vdwg.mxu0
        %9795 = vmatpush.bf16.msra.mxu0 %v9653
        %9796 = vmatpush.bf16.msra.mxu0 %v9652
        %9797 = vmatpush.bf16.msra.mxu0 %v9651
        %9798 = vmatpush.bf16.msra.mxu0 %v9650
        %9799 = vmatpush.bf16.msra.mxu0 %v9649
        %9800 = vmatpush.bf16.msra.mxu0 %v9648
        %9801 = vmatpush.bf16.msra.mxu0 %v9647
        %9802 = vmatpush.bf16.msra.mxu0 %v9646
        %9803 = vmatmul.bf16.gmra.mxu0 %v9194
        %v9804 = vpop.f32.mrf.mxu0
        %v9805 = vadd.f32 %v9792, %v9804
        %v9806 = vpop.f32.mrf.mxu0
        %9807 = vdwg.mxu0
        %9808 = vmatpush.bf16.msra.mxu0 %v9661
        %9809 = vmatpush.bf16.msra.mxu0 %v9660
        %9810 = vmatpush.bf16.msra.mxu0 %v9659
        %9811 = vmatpush.bf16.msra.mxu0 %v9658
        %9812 = vmatpush.bf16.msra.mxu0 %v9657
        %9813 = vmatpush.bf16.msra.mxu0 %v9656
        %9814 = vmatpush.bf16.msra.mxu0 %v9655
        %9815 = vmatpush.bf16.msra.mxu0 %v9654
        %9816 = vmatmul.bf16.gmra.mxu0 %v9195
        %v9817 = vpop.f32.mrf.mxu0
        %v9818 = vadd.f32 %v9805, %v9817
        %v9819 = vpop.f32.mrf.mxu0
        %9820 = vdwg.mxu0
        %9821 = vmatpush.bf16.msra.mxu0 %v9669
        %9822 = vmatpush.bf16.msra.mxu0 %v9668
        %9823 = vmatpush.bf16.msra.mxu0 %v9667
        %9824 = vmatpush.bf16.msra.mxu0 %v9666
        %9825 = vmatpush.bf16.msra.mxu0 %v9665
        %9826 = vmatpush.bf16.msra.mxu0 %v9664
        %9827 = vmatpush.bf16.msra.mxu0 %v9663
        %9828 = vmatpush.bf16.msra.mxu0 %v9662
        %9829 = vmatmul.bf16.gmra.mxu0 %v9196
        %v9830 = vpop.f32.mrf.mxu0
        %v9831 = vadd.f32 %v9818, %v9830
        %v9832 = vpop.f32.mrf.mxu0
        %9833 = vdwg.mxu0
        %9834 = vmatpush.bf16.msra.mxu0 %v9677
        %9835 = vmatpush.bf16.msra.mxu0 %v9676
        %9836 = vmatpush.bf16.msra.mxu0 %v9675
        %9837 = vmatpush.bf16.msra.mxu0 %v9674
        %9838 = vmatpush.bf16.msra.mxu0 %v9673
        %9839 = vmatpush.bf16.msra.mxu0 %v9672
        %9840 = vmatpush.bf16.msra.mxu0 %v9671
        %9841 = vmatpush.bf16.msra.mxu0 %v9670
        %9842 = vmatmul.bf16.gmra.mxu0 %v9197
        %v9843 = vpop.f32.mrf.mxu0
        %v9844 = vadd.f32 %v9831, %v9843
        %v9845 = vpop.f32.mrf.mxu0
        %9846 = vdwg.mxu0
        %9847 = vmatpush.bf16.msra.mxu0 %v9685
        %9848 = vmatpush.bf16.msra.mxu0 %v9684
        %9849 = vmatpush.bf16.msra.mxu0 %v9683
        %9850 = vmatpush.bf16.msra.mxu0 %v9682
        %9851 = vmatpush.bf16.msra.mxu0 %v9681
        %9852 = vmatpush.bf16.msra.mxu0 %v9680
        %9853 = vmatpush.bf16.msra.mxu0 %v9679
        %9854 = vmatpush.bf16.msra.mxu0 %v9678
        %9855 = vmatmul.bf16.gmra.mxu0 %v9198
        %v9856 = vpop.f32.mrf.mxu0
        %v9857 = vadd.f32 %v9844, %v9856
        %v9858 = vpop.f32.mrf.mxu0
        %9859 = vdwg.mxu0
        %9860 = vmatpush.bf16.msra.mxu0 %v9693
        %9861 = vmatpush.bf16.msra.mxu0 %v9692
        %9862 = vmatpush.bf16.msra.mxu0 %v9691
        %9863 = vmatpush.bf16.msra.mxu0 %v9690
        %9864 = vmatpush.bf16.msra.mxu0 %v9689
        %9865 = vmatpush.bf16.msra.mxu0 %v9688
        %9866 = vmatpush.bf16.msra.mxu0 %v9687
        %9867 = vmatpush.bf16.msra.mxu0 %v9686
        %9868 = vmatmul.bf16.gmra.mxu0 %v9199
        %v9869 = vpop.f32.mrf.mxu0
        %v9870 = vadd.f32 %v9857, %v9869
        %v9871 = vpop.f32.mrf.mxu0
        %9872 = vdwg.mxu0
        %9873 = vmatpush.bf16.msra.mxu0 %v9701
        %9874 = vmatpush.bf16.msra.mxu0 %v9700
        %9875 = vmatpush.bf16.msra.mxu0 %v9699
        %9876 = vmatpush.bf16.msra.mxu0 %v9698
        %9877 = vmatpush.bf16.msra.mxu0 %v9697
        %9878 = vmatpush.bf16.msra.mxu0 %v9696
        %9879 = vmatpush.bf16.msra.mxu0 %v9695
        %9880 = vmatpush.bf16.msra.mxu0 %v9694
        %9881 = vmatmul.bf16.gmra.mxu0 %v9200
        %v9882 = vpop.f32.mrf.mxu0
        %v9883 = vadd.f32 %v9870, %v9882
        %v9884 = vpop.f32.mrf.mxu0
        %9885 = vdwg.mxu0
        %9886 = vmatpush.bf16.msra.mxu0 %v9709
        %9887 = vmatpush.bf16.msra.mxu0 %v9708
        %9888 = vmatpush.bf16.msra.mxu0 %v9707
        %9889 = vmatpush.bf16.msra.mxu0 %v9706
        %9890 = vmatpush.bf16.msra.mxu0 %v9705
        %9891 = vmatpush.bf16.msra.mxu0 %v9704
        %9892 = vmatpush.bf16.msra.mxu0 %v9703
        %9893 = vmatpush.bf16.msra.mxu0 %v9702
        %9894 = vmatmul.bf16.gmra.mxu0 %v9201
        %v9895 = vpop.f32.mrf.mxu0
        %v9896 = vadd.f32 %v9883, %v9895
        %v9897 = vpop.f32.mrf.mxu0
        %9898 = vdwg.mxu0
        %v9899 = vsel %vm4684, %v8295, %v8305
        %v9900 = vsel %vm4686, %v8296, %v9899
        %v9902 = vadd.f32 %v9896, %v9900
        %v9903 = vmax.f32 %v9902, 0.0
        %vm9904 = vcmask 1043456
        %v9905 = vsel %vm9904, %v9903, -inf
        %v9906 = vrot.slane %v9905, 4
        %v9907 = vmax.f32 %v9905, %v9906
        %v9908 = vrot.slane %v9907, 2
        %v9909 = vmax.f32 %v9907, %v9908
        %v9910 = vrot.slane %v9909, 1
        %v9911 = vmax.f32 %v9909, %v9910
        %v9912 = vpack.c.bf16 %v9911, %v9911
        %v9913 = vld [vmem:[%s17] sm:$0xf]
        %v9914 = vld [vmem:[%s17 + $0x4] sm:$0xf]
        %v9915 = vld [vmem:[%s17 + $0x8] sm:$0xf]
        %v9916 = vld [vmem:[%s17 + $0xc] sm:$0xf]
        %v9917 = vld [vmem:[%s17 + $0x10] sm:$0xf]
        %v9918 = vld [vmem:[%s17 + $0x14] sm:$0xf]
        %v9919 = vld [vmem:[%s17 + $0x18] sm:$0xf]
        %v9920 = vld [vmem:[%s17 + $0x1c] sm:$0xf]
        %v9921 = vld [vmem:[%s17 + $0x20] sm:$0xf]
        %v9922 = vld [vmem:[%s17 + $0x24] sm:$0xf]
        %v9923 = vld [vmem:[%s17 + $0x28] sm:$0xf]
        %v9924 = vld [vmem:[%s17 + $0x2c] sm:$0xf]
        %v9925 = vld [vmem:[%s17 + $0x30] sm:$0xf]
        %v9926 = vld [vmem:[%s17 + $0x34] sm:$0xf]
        %v9927 = vld [vmem:[%s17 + $0x38] sm:$0xf]
        %v9928 = vld [vmem:[%s17 + $0x3c] sm:$0xf]
        %v9929 = vld [vmem:[%s18] sm:$0x1]
        %v9946 = vunpack.c.l.b16 %v9913
        %v9947 = vunpack.c.l.b16 %v9914
        %v9948 = vunpack.c.l.b16 %v9915
        %v9949 = vunpack.c.l.b16 %v9916
        %v9950 = vunpack.c.l.b16 %v9917
        %v9951 = vunpack.c.l.b16 %v9918
        %v9952 = vunpack.c.l.b16 %v9919
        %v9953 = vunpack.c.l.b16 %v9920
        %v9954 = vunpack.c.l.b16 %v9921
        %v9955 = vunpack.c.l.b16 %v9922
        %v9956 = vunpack.c.l.b16 %v9923
        %v9957 = vunpack.c.l.b16 %v9924
        %v9958 = vunpack.c.l.b16 %v9925
        %v9959 = vunpack.c.l.b16 %v9926
        %v9960 = vunpack.c.l.b16 %v9927
        %v9961 = vunpack.c.l.b16 %v9928
        %v9962 = vpack.c.b16 %v9947, %v9946
        %v9963 = vpack.c.b16 %v9949, %v9948
        %v9964 = vpack.c.b16 %v9951, %v9950
        %v9965 = vpack.c.b16 %v9953, %v9952
        %v9966 = vpack.c.b16 %v9955, %v9954
        %v9967 = vpack.c.b16 %v9957, %v9956
        %v9968 = vpack.c.b16 %v9959, %v9958
        %v9969 = vpack.c.b16 %v9961, %v9960
        %9978 = vmatpush.bf16.msra.mxu0 %v9969
        %9979 = vmatpush.bf16.msra.mxu0 %v9968
        %9980 = vmatpush.bf16.msra.mxu0 %v9967
        %9981 = vmatpush.bf16.msra.mxu0 %v9966
        %9982 = vmatpush.bf16.msra.mxu0 %v9965
        %9983 = vmatpush.bf16.msra.mxu0 %v9964
        %9984 = vmatpush.bf16.msra.mxu0 %v9963
        %9985 = vmatpush.bf16.msra.mxu0 %v9962
        %9986 = vmatmul.bf16.gmra.mxu0 %v9912
        %v9987 = vpop.f32.mrf.mxu0
        %v9988 = vadd.f32 %v9929, %v9987
        %v9989 = vpop.f32.mrf.mxu0
        %9990 = vdwg.mxu0
        %v9991 = vmax.f32 %v9988, 0.0
        %v9992 = vpack.c.bf16 %v9991, %v9991
        %v9993 = vld [vmem:[%s19] sm:$0xf]
        %v9994 = vld [vmem:[%s19 + $0x4] sm:$0xf]
        %v9995 = vld [vmem:[%s19 + $0x8] sm:$0xf]
        %v9996 = vld [vmem:[%s19 + $0xc] sm:$0xf]
        %v9997 = vld [vmem:[%s19 + $0x10] sm:$0xf]
        %v9998 = vld [vmem:[%s19 + $0x14] sm:$0xf]
        %v9999 = vld [vmem:[%s19 + $0x18] sm:$0xf]
        %v10000 = vld [vmem:[%s19 + $0x1c] sm:$0xf]
        %v10001 = vld [vmem:[%s19 + $0x20] sm:$0xf]
        %v10002 = vld [vmem:[%s19 + $0x24] sm:$0xf]
        %v10003 = vld [vmem:[%s19 + $0x28] sm:$0xf]
        %v10004 = vld [vmem:[%s19 + $0x2c] sm:$0xf]
        %v10005 = vld [vmem:[%s19 + $0x30] sm:$0xf]
        %v10006 = vld [vmem:[%s19 + $0x34] sm:$0xf]
        %v10007 = vld [vmem:[%s19 + $0x38] sm:$0xf]
        %v10008 = vld [vmem:[%s19 + $0x3c] sm:$0xf]
        %v10009 = vld [vmem:[%s20] sm:$0x1]
        %v10026 = vunpack.c.l.b16 %v9993
        %v10027 = vunpack.c.l.b16 %v9994
        %v10028 = vunpack.c.l.b16 %v9995
        %v10029 = vunpack.c.l.b16 %v9996
        %v10030 = vunpack.c.l.b16 %v9997
        %v10031 = vunpack.c.l.b16 %v9998
        %v10032 = vunpack.c.l.b16 %v9999
        %v10033 = vunpack.c.l.b16 %v10000
        %v10034 = vunpack.c.l.b16 %v10001
        %v10035 = vunpack.c.l.b16 %v10002
        %v10036 = vunpack.c.l.b16 %v10003
        %v10037 = vunpack.c.l.b16 %v10004
        %v10038 = vunpack.c.l.b16 %v10005
        %v10039 = vunpack.c.l.b16 %v10006
        %v10040 = vunpack.c.l.b16 %v10007
        %v10041 = vunpack.c.l.b16 %v10008
        %v10042 = vpack.c.b16 %v10027, %v10026
        %v10043 = vpack.c.b16 %v10029, %v10028
        %v10044 = vpack.c.b16 %v10031, %v10030
        %v10045 = vpack.c.b16 %v10033, %v10032
        %v10046 = vpack.c.b16 %v10035, %v10034
        %v10047 = vpack.c.b16 %v10037, %v10036
        %v10048 = vpack.c.b16 %v10039, %v10038
        %v10049 = vpack.c.b16 %v10041, %v10040
        %10058 = vmatpush.bf16.msra.mxu0 %v10049
        %10059 = vmatpush.bf16.msra.mxu0 %v10048
        %10060 = vmatpush.bf16.msra.mxu0 %v10047
        %10061 = vmatpush.bf16.msra.mxu0 %v10046
        %10062 = vmatpush.bf16.msra.mxu0 %v10045
        %10063 = vmatpush.bf16.msra.mxu0 %v10044
        %10064 = vmatpush.bf16.msra.mxu0 %v10043
        %10065 = vmatpush.bf16.msra.mxu0 %v10042
        %10066 = vmatmul.bf16.gmra.mxu0 %v9992
        %v10067 = vpop.f32.mrf.mxu0
        %v10068 = vadd.f32 %v10009, %v10067
        %v10069 = vpop.f32.mrf.mxu0
        %10070 = vdwg.mxu0
        %v10071 = vadd.f32 %v10068, %v9911
        %v10072 = vmax.f32 %v10071, 0.0
        %v10073 = vpack.c.bf16 %v10072, %v10072
        %v10074 = vld [vmem:[%s21] sm:$0xf]
        %v10075 = vld [vmem:[%s21 + $0x4] sm:$0xf]
        %v10076 = vld [vmem:[%s21 + $0x8] sm:$0xf]
        %v10077 = vld [vmem:[%s21 + $0xc] sm:$0xf]
        %v10078 = vld [vmem:[%s21 + $0x10] sm:$0xf]
        %v10079 = vld [vmem:[%s21 + $0x14] sm:$0xf]
        %v10080 = vld [vmem:[%s21 + $0x18] sm:$0xf]
        %v10081 = vld [vmem:[%s21 + $0x1c] sm:$0xf]
        %v10082 = vld [vmem:[%s21 + $0x20] sm:$0xf]
        %v10083 = vld [vmem:[%s21 + $0x24] sm:$0xf]
        %v10084 = vld [vmem:[%s21 + $0x28] sm:$0xf]
        %v10085 = vld [vmem:[%s21 + $0x2c] sm:$0xf]
        %v10086 = vld [vmem:[%s21 + $0x30] sm:$0xf]
        %v10087 = vld [vmem:[%s21 + $0x34] sm:$0xf]
        %v10088 = vld [vmem:[%s21 + $0x38] sm:$0xf]
        %v10089 = vld [vmem:[%s21 + $0x3c] sm:$0xf]
        %v10090 = vld [vmem:[%s22] sm:$0x1]
        %v10107 = vunpack.c.l.b16 %v10074
        %v10108 = vunpack.c.l.b16 %v10075
        %v10109 = vunpack.c.l.b16 %v10076
        %v10110 = vunpack.c.l.b16 %v10077
        %v10111 = vunpack.c.l.b16 %v10078
        %v10112 = vunpack.c.l.b16 %v10079
        %v10113 = vunpack.c.l.b16 %v10080
        %v10114 = vunpack.c.l.b16 %v10081
        %v10115 = vunpack.c.l.b16 %v10082
        %v10116 = vunpack.c.l.b16 %v10083
        %v10117 = vunpack.c.l.b16 %v10084
        %v10118 = vunpack.c.l.b16 %v10085
        %v10119 = vunpack.c.l.b16 %v10086
        %v10120 = vunpack.c.l.b16 %v10087
        %v10121 = vunpack.c.l.b16 %v10088
        %v10122 = vunpack.c.l.b16 %v10089
        %v10123 = vpack.c.b16 %v10108, %v10107
        %v10124 = vpack.c.b16 %v10110, %v10109
        %v10125 = vpack.c.b16 %v10112, %v10111
        %v10126 = vpack.c.b16 %v10114, %v10113
        %v10127 = vpack.c.b16 %v10116, %v10115
        %v10128 = vpack.c.b16 %v10118, %v10117
        %v10129 = vpack.c.b16 %v10120, %v10119
        %v10130 = vpack.c.b16 %v10122, %v10121
        %10139 = vmatpush.bf16.msra.mxu0 %v10130
        %10140 = vmatpush.bf16.msra.mxu0 %v10129
        %10141 = vmatpush.bf16.msra.mxu0 %v10128
        %10142 = vmatpush.bf16.msra.mxu0 %v10127
        %10143 = vmatpush.bf16.msra.mxu0 %v10126
        %10144 = vmatpush.bf16.msra.mxu0 %v10125
        %10145 = vmatpush.bf16.msra.mxu0 %v10124
        %10146 = vmatpush.bf16.msra.mxu0 %v10123
        %10147 = vmatmul.bf16.gmra.mxu0 %v10073
        %v10148 = vpop.f32.mrf.mxu0
        %v10149 = vadd.f32 %v10090, %v10148
        %v10150 = vpop.f32.mrf.mxu0
        %10151 = vdwg.mxu0
        %v10152 = vmax.f32 %v10149, 0.0
        %v10153 = vpack.c.bf16 %v10152, %v10152
        %v10154 = vld [vmem:[%s23] sm:$0xf]
        %v10155 = vld [vmem:[%s23 + $0x4] sm:$0xf]
        %v10156 = vld [vmem:[%s23 + $0x8] sm:$0xf]
        %v10157 = vld [vmem:[%s23 + $0xc] sm:$0xf]
        %v10158 = vld [vmem:[%s23 + $0x10] sm:$0xf]
        %v10159 = vld [vmem:[%s23 + $0x14] sm:$0xf]
        %v10160 = vld [vmem:[%s23 + $0x18] sm:$0xf]
        %v10161 = vld [vmem:[%s23 + $0x1c] sm:$0xf]
        %v10162 = vld [vmem:[%s23 + $0x20] sm:$0xf]
        %v10163 = vld [vmem:[%s23 + $0x24] sm:$0xf]
        %v10164 = vld [vmem:[%s23 + $0x28] sm:$0xf]
        %v10165 = vld [vmem:[%s23 + $0x2c] sm:$0xf]
        %v10166 = vld [vmem:[%s23 + $0x30] sm:$0xf]
        %v10167 = vld [vmem:[%s23 + $0x34] sm:$0xf]
        %v10168 = vld [vmem:[%s23 + $0x38] sm:$0xf]
        %v10169 = vld [vmem:[%s23 + $0x3c] sm:$0xf]
        %v10170 = vld [vmem:[%s24] sm:$0x1]
        %v10187 = vunpack.c.l.b16 %v10154
        %v10188 = vunpack.c.l.b16 %v10155
        %v10189 = vunpack.c.l.b16 %v10156
        %v10190 = vunpack.c.l.b16 %v10157
        %v10191 = vunpack.c.l.b16 %v10158
        %v10192 = vunpack.c.l.b16 %v10159
        %v10193 = vunpack.c.l.b16 %v10160
        %v10194 = vunpack.c.l.b16 %v10161
        %v10195 = vunpack.c.l.b16 %v10162
        %v10196 = vunpack.c.l.b16 %v10163
        %v10197 = vunpack.c.l.b16 %v10164
        %v10198 = vunpack.c.l.b16 %v10165
        %v10199 = vunpack.c.l.b16 %v10166
        %v10200 = vunpack.c.l.b16 %v10167
        %v10201 = vunpack.c.l.b16 %v10168
        %v10202 = vunpack.c.l.b16 %v10169
        %v10203 = vpack.c.b16 %v10188, %v10187
        %v10204 = vpack.c.b16 %v10190, %v10189
        %v10205 = vpack.c.b16 %v10192, %v10191
        %v10206 = vpack.c.b16 %v10194, %v10193
        %v10207 = vpack.c.b16 %v10196, %v10195
        %v10208 = vpack.c.b16 %v10198, %v10197
        %v10209 = vpack.c.b16 %v10200, %v10199
        %v10210 = vpack.c.b16 %v10202, %v10201
        %10219 = vmatpush.bf16.msra.mxu0 %v10210
        %10220 = vmatpush.bf16.msra.mxu0 %v10209
        %10221 = vmatpush.bf16.msra.mxu0 %v10208
        %10222 = vmatpush.bf16.msra.mxu0 %v10207
        %10223 = vmatpush.bf16.msra.mxu0 %v10206
        %10224 = vmatpush.bf16.msra.mxu0 %v10205
        %10225 = vmatpush.bf16.msra.mxu0 %v10204
        %10226 = vmatpush.bf16.msra.mxu0 %v10203
        %10227 = vmatmul.bf16.gmra.mxu0 %v10153
        %v10228 = vpop.f32.mrf.mxu0
        %v10229 = vadd.f32 %v10170, %v10228
        %v10230 = vpop.f32.mrf.mxu0
        %10231 = vdwg.mxu0
        %10232 = vst [vmem:[%s756] sm:$0x1] %v10229
        %s10233 = sand.u32 %s577, 1
        %s10234 = scalar_lea.sflag [#allocation10], %s10233
        %s10235 = sand.u32 %s577, 1
        %s10236 = scalar_lea.vmem [#allocation9], %s10235
        // Predicated region
        $region121: #{mini_resnet.1} parent=119 // pred_check
          %p10237 = pneg %p587
        $region122: #{mini_resnet.1} parent=119 // pred_check_branch
          %10239 = sbr.rel (%p10237) target = $region124
        $region123: #{mini_resnet.1} parent=119 // pred_region
          %10241 = vsyncadd %s10234, 0
          %s10242 = scalar_lea.hbm %s25, %s39
          %s10244 = sshll.u32 %s10236, 4
          %s10245 = int_to_ptr.vmem [resolvable:$true] %s10244
          %s10246 = sshll.u32 %s10242, 4
          %s10247 = int_to_ptr.hbm [resolvable:$true] %s10246
          %10249 = dma.vmem_to_hbm [thread:$0]  %s10245, 16, %s10247, %s10234
        $region124: #{mini_resnet.1} parent=119 // pred_fallthru
          _
      $region120: #{mini_resnet.1} parent=5 // pred_fallthru
        _
      %p10250 = scmp.le.s32.totalorder 2, %s34
      // Predicated region
      $region125: #{mini_resnet.1} parent=5 // pred_check
        %p10251 = pneg %p10250
      $region126: #{mini_resnet.1} parent=5 // pred_check_branch
        %10253 = sbr.rel (%p10251) target = $region128
      $region127: #{mini_resnet.1} parent=5 // pred_region
        %s10254 = ssub.s32 %s34, 2
        // Predicated region
        $region129: #{mini_resnet.1} parent=127 // pred_check
          %p10255 = pneg %p593
        $region130: #{mini_resnet.1} parent=127 // pred_check_branch
          %10257 = sbr.rel (%p10255) target = $region132
        $region131: #{mini_resnet.1} parent=127 // pred_region
          %s10258 = sand.u32 %s578, 1
          %s10259 = scalar_lea.sflag [#allocation10], %s10258
          %s10260 = sand.u32 %s578, 1
          %s10261 = scalar_lea.vmem [#allocation9], %s10260
          %10263 = dma.done %s10259, 16
        $region132: #{mini_resnet.1} parent=127 // pred_fallthru
          _
      $region128: #{mini_resnet.1} parent=5 // pred_fallthru
        _
    $region6: #{mini_resnet.1} parent=1 // loop_footer
      %s38 = sadd.s32 1, %s34
    $region7: #{mini_resnet.1} parent=1 // loop_footer_branch
      %33 = sbr.rel target = $region3
    $region8: #{mini_resnet.1} parent=1 // loop_exit
      _
    %10264 = vsyncpa [#allocation10], 1
    %s10265 = scalar_lea.sflag [#allocation10], 1
    %10266 = vsyncpa %s10265, 1

</llo_original>
